<compile_context>
chip_gen: v7x
topology: tpu7x:2x2x1
jax: 0.10.0
libtpu: 0.0.40
codegen_flags: <defaults>
</compile_context>

<pallas_src>
import math
import jax
import jax.numpy as jnp
from jax.experimental import pallas as pl
from jax.experimental.pallas import tpu as pltpu


_SQRT_2_OVER_PI = 0.7978845608028654
_GELU_COEFF = 0.044715


def _gelu_tanh(x):
    # tanh-approximation GELU: 0.5*x*(1 + tanh(sqrt(2/pi)*(x + 0.044715*x^3))).
    # tanh lands on the EUP; remaining ~8 ops/elem on the VPU.
    u = _SQRT_2_OVER_PI * x * (1.0 + _GELU_COEFF * (x * x))
    return 0.5 * x * (1.0 + jnp.tanh(u))


def _bias_gelu_store(acc, b_ref, o_ref, row_chunk=8):
    # Bias + GELU + store over (row_chunk, TL) sublane slabs: keeps each slab's elementwise
    # chain in vregs (guards against spill/VMEM-roundtrip traffic at TL=2048-4096).
    C = acc.shape[0]
    for c0 in range(0, C, row_chunk):
        c1 = min(c0 + row_chunk, C)
        blk = acc[c0:c1, :]
        if b_ref is not None:
            blk = blk + b_ref[c0:c1, :]
        o_ref[c0:c1, :] = _gelu_tanh(blk).astype(o_ref.dtype)


def _make_fast_kernel(r, has_bias):
    """Fast path for K % stride == 0 (r = K // stride): builds the (K, TL) frame tile
    in-kernel from the (TL, stride) chunk block + (r-1, stride) halo."""
    def kernel(*refs):
        it = iter(refs)
        w_ref = next(it)                       # (C, K)
        b_ref = next(it) if has_bias else None  # (C, 1)
        chunks_ref = next(it)                  # (TL, stride)
        halo_ref = next(it) if r > 1 else None  # (1, 1, r-1, stride)
        o_ref = next(it)                       # (C, TL)

        tl = chunks_ref.shape[0]
        main_t = jnp.transpose(chunks_ref[...])            # (stride, TL)   XLU transpose
        if r > 1:
            halo_t = jnp.transpose(halo_ref[0, 0])          # (stride, r-1)
            ext = jnp.concatenate([main_t, halo_t], axis=1)  # (stride, TL + r - 1)
            # frames_t[q*stride + s, l] = chunks[l0 + l + q, s]
            frames_t = jnp.concatenate([ext[:, q:q + tl] for q in range(r)], axis=0)
        else:
            frames_t = main_t                                # K == stride

        acc = jnp.dot(w_ref[...], frames_t, preferred_element_type=jnp.float32)  # (C, TL)
        _bias_gelu_store(acc, b_ref, o_ref)
    return kernel


def _make_im2col_kernel(has_bias):
    """General fallback: frames pre-gathered in the wrapper as [B, K, L]."""
    def kernel(*refs):
        it = iter(refs)
        w_ref = next(it)                       # (C, K)
        b_ref = next(it) if has_bias else None  # (C, 1)
        f_ref = next(it)                       # (K, TL)
        o_ref = next(it)                       # (C, TL)
        acc = jnp.dot(w_ref[...], f_ref[...], preferred_element_type=jnp.float32)
        _bias_gelu_store(acc, b_ref, o_ref)
    return kernel


def _round_up(n, m):
    return ((n + m - 1) // m) * m


def audio_encoder_forward(x, weight, bias, stride, *, l_tile_cap=4096):
    """x: [B, T] or [T] float32; weight: [C_out, 1, K] (PyTorch Conv1d layout);
    bias: [C_out] or None.  Returns [B, C_out, L] (or [C_out, L] for 1-D input)."""
    assert l_tile_cap % 128 == 0
    squeeze_batch = (x.ndim == 1)
    if squeeze_batch:
        x = x[None, :]
    B, T = x.shape
    C, cin, K = weight.shape
    assert cin == 1, "forward() unsqueezes a single channel; in_channels must be 1"
    L = (T - K) // stride + 1
    assert L >= 1

    # L tile: multiple of 128 (lane-dense output stores), capped; big tiles amortize
    # the per-grid-step overhead.
    TL = min(l_tile_cap, _round_up(L, 128))
    n_lt = pl.cdiv(L, TL)

    w = weight.reshape(C, K).astype(x.dtype)
    has_bias = bias is not None

    in_specs = [pl.BlockSpec((C, K), lambda li, bi: (0, 0))]              # VMEM-resident W
    args = [w]
    if has_bias:
        in_specs.append(pl.BlockSpec((C, 1), lambda li, bi: (0, 0)))      # VMEM-resident bias
        args.append(bias.reshape(C, 1).astype(x.dtype))

    fast = (K % stride == 0)
    if fast:
        r = K // stride
        n_chunks = T // stride
        xt = x if n_chunks * stride == T else x[:, :n_chunks * stride]
        chunks = xt.reshape(B, n_chunks, stride)                          # free reshape of x
        in_specs.append(pl.BlockSpec((None, TL, stride), lambda li, bi: (bi, li, 0)))
        args.append(chunks)
        if r > 1:
            # Tiny per-tile halo: the r-1 chunk rows just past each L-tile (clamped at end).
            l0 = jnp.arange(n_lt, dtype=jnp.int32) * TL
            hidx = jnp.minimum(
                l0[:, None] + TL + jnp.arange(r - 1, dtype=jnp.int32)[None, :],
                n_chunks - 1)                                              # (n_lt, r-1)
            halo = chunks[:, hidx, :]                                      # (B, n_lt, r-1, stride)
            in_specs.append(
                pl.BlockSpec((1, 1, r - 1, stride), lambda li, bi: (bi, li, 0, 0)))
            args.append(halo)
        kern = _make_fast_kernel(r, has_bias)
    else:
        # General K/stride fallback: K-major im2col in the wrapper.
        idx_t = jnp.arange(K)[:, None] + jnp.arange(L)[None, :] * stride  # (K, L)
        frames_t = x[:, idx_t]                                            # (B, K, L)
        in_specs.append(pl.BlockSpec((None, K, TL), lambda li, bi: (bi, 0, li)))
        args.append(frames_t)
        kern = _make_im2col_kernel(has_bias)

    out = pl.pallas_call(
        kern,
        out_shape=jax.ShapeDtypeStruct((B, C, L), x.dtype),
        grid=(n_lt, B),
        in_specs=in_specs,
        out_specs=pl.BlockSpec((None, C, TL), lambda li, bi: (bi, 0, li)),
        compiler_params=pltpu.CompilerParams(
            dimension_semantics=("parallel", "parallel")),
    )(*args)
    return out[0] if squeeze_batch else out


def _reference(x, weight, bias, stride):
    # Pure-JAX reference: im2col matmul + exact-erf GELU (PyTorch nn.GELU() default).
    squeeze = (x.ndim == 1)
    if squeeze:
        x = x[None, :]
    C, _, K = weight.shape
    B, T = x.shape
    L = (T - K) // stride + 1
    idx = jnp.arange(L)[:, None] * stride + jnp.arange(K)[None, :]
    frames = x[:, idx]                                                     # (B, L, K)
    y = jnp.einsum("blk,ck->bcl", frames, weight.reshape(C, K))
    if bias is not None:
        y = y + bias[None, :, None]
    y = jax.nn.gelu(y, approximate=False)
    return y[0] if squeeze else y


if __name__ == "__main__":
    key = jax.random.PRNGKey(0)
    k_w1, k_x1, k_w2, k_b2, k_x2 = jax.random.split(key, 5)

    # --- Config 1: SepReformer AudioEncoder (Conv1d(1->64, K=16, stride=8, bias=False)). ---
    in_channels, out_channels, kernel_size, stride, groups, use_bias = 1, 64, 16, 8, 1, False
    bound = 1.0 / math.sqrt(in_channels * kernel_size)
    weight = jax.random.uniform(
        k_w1, (out_channels, in_channels // groups, kernel_size),
        dtype=jnp.float32, minval=-bound, maxval=bound)
    bias = jnp.zeros((out_channels,), jnp.float32) if use_bias else None

    # L = 4224 -> 2 L-tiles at TL=4096 (exercises the halo, multi-tile and partial-tile masking).
    B, L = 2, 4224
    T = stride * (L - 1) + kernel_size
    x = jax.random.normal(k_x1, (B, T), dtype=jnp.float32)

    out = jax.block_until_ready(audio_encoder_forward(x, weight, bias, stride))
    assert out.shape == (B, out_channels, L), out.shape
    ref = _reference(x, weight, bias, stride)
    # tanh-approx GELU deviates <= ~5e-4 from the exact-erf reference.
    assert jnp.allclose(out, ref, atol=2e-3, rtol=2e-3), float(jnp.max(jnp.abs(out - ref)))

    # --- Config 2: general path (K % stride != 0), bias=True, 1-D input. ---
    C2, K2, S2, L2 = 32, 10, 3, 640
    T2 = S2 * (L2 - 1) + K2
    bound2 = 1.0 / math.sqrt(K2)
    weight2 = jax.random.uniform(k_w2, (C2, 1, K2), dtype=jnp.float32,
                                 minval=-bound2, maxval=bound2)
    bias2 = jax.random.uniform(k_b2, (C2,), dtype=jnp.float32, minval=-bound2, maxval=bound2)
    x2 = jax.random.normal(k_x2, (T2,), dtype=jnp.float32)

    out2 = jax.block_until_ready(audio_encoder_forward(x2, weight2, bias2, S2))
    assert out2.shape == (C2, L2), out2.shape
    ref2 = _reference(x2, weight2, bias2, S2)
    assert jnp.allclose(out2, ref2, atol=2e-3, rtol=2e-3), float(jnp.max(jnp.abs(out2 - ref2)))

    print("KERNEL_OK")
</pallas_src>

<mosaic_0001>
module attributes {stable_mosaic.version = 11 : i64} {
  func.func @kernel(%arg0: i32, %arg1: i32, %arg2: memref<64x16xf32, #tpu.memory_space<vmem>>, %arg3: memref<1x4096x8xf32, #tpu.memory_space<vmem>>, %arg4: memref<1x1x1x8xf32, #tpu.memory_space<vmem>>, %arg5: memref<1x64x4096xf32, #tpu.memory_space<vmem>>) attributes {dimension_semantics = [#tpu.dimension_semantics<parallel>, #tpu.dimension_semantics<parallel>], iteration_bounds = array<i64: 2, 2>, scalar_prefetch = 0 : i64, scratch_operands = 0 : i64, tpu.core_type = #tpu.core_type<tc>, window_params = [{pipeline_mode = #tpu.pipeline_mode<synchronous>, transform_indices = @transform_0, window_bounds = array<i64: 64, 16>}, {transform_indices = @transform_1, window_bounds = array<i64: 1, 4096, 8>}, {transform_indices = @transform_2, window_bounds = array<i64: 1, 1, 1, 8>}, {transform_indices = @transform_3, window_bounds = array<i64: 1, 64, 4096>}]} {
    %c0 = arith.constant 0 : index
    %c0_0 = arith.constant 0 : index
    %c0_1 = arith.constant 0 : index
    %0 = vector.load %arg3[%c0, %c0_0, %c0_1] : memref<1x4096x8xf32, #tpu.memory_space<vmem>>, vector<1x4096x8xf32>
    %1 = vector.shape_cast %0 : vector<1x4096x8xf32> to vector<4096x8xf32>
    %2 = tpu.transpose %1, [1, 0] : vector<4096x8xf32> -> vector<8x4096xf32>
    %c0_2 = arith.constant 0 : index
    %c0_3 = arith.constant 0 : index
    %c0_4 = arith.constant 0 : index
    %c0_5 = arith.constant 0 : index
    %3 = vector.load %arg4[%c0_2, %c0_3, %c0_4, %c0_5] : memref<1x1x1x8xf32, #tpu.memory_space<vmem>>, vector<1x1x1x8xf32>
    %4 = vector.shape_cast %3 : vector<1x1x1x8xf32> to vector<1x8xf32>
    %5 = tpu.transpose %4, [1, 0] : vector<1x8xf32> -> vector<8x1xf32>
    %6 = tpu.concatenate %2, %5 in 1 : vector<8x4096xf32>, vector<8x1xf32> -> vector<8x4097xf32>
    %7 = vector.extract_strided_slice %6 {offsets = [0, 0], sizes = [8, 4096], strides = [1, 1]} : vector<8x4097xf32> to vector<8x4096xf32>
    %8 = vector.extract_strided_slice %6 {offsets = [0, 1], sizes = [8, 4096], strides = [1, 1]} : vector<8x4097xf32> to vector<8x4096xf32>
    %9 = tpu.concatenate %7, %8 in 0 : vector<8x4096xf32>, vector<8x4096xf32> -> vector<16x4096xf32>
    %c0_6 = arith.constant 0 : index
    %c0_7 = arith.constant 0 : index
    %10 = vector.load %arg2[%c0_6, %c0_7] : memref<64x16xf32, #tpu.memory_space<vmem>>, vector<64x16xf32>
    %cst = arith.constant dense<0.000000e+00> : vector<64x4096xf32>
    %11 = tpu.matmul %10, %9, %cst {dimension_numbers = #tpu.dot_dimension_numbers<[1], [0], [0], [1], [0, 0, 1, 1], [], []>} : vector<64x16xf32>, vector<16x4096xf32>, vector<64x4096xf32> -> vector<64x4096xf32>
    %12 = vector.extract_strided_slice %11 {offsets = [0, 0], sizes = [8, 4096], strides = [1, 1]} : vector<64x4096xf32> to vector<8x4096xf32>
    %cst_8 = arith.constant 0.797884583 : f32
    %13 = vector.broadcast %cst_8 : f32 to vector<8x4096xf32>
    %14 = arith.mulf %13, %12 : vector<8x4096xf32>
    %15 = arith.mulf %12, %12 : vector<8x4096xf32>
    %cst_9 = arith.constant 4.471500e-02 : f32
    %16 = vector.broadcast %cst_9 : f32 to vector<8x4096xf32>
    %17 = arith.mulf %16, %15 : vector<8x4096xf32>
    %cst_10 = arith.constant 1.000000e+00 : f32
    %18 = vector.broadcast %cst_10 : f32 to vector<8x4096xf32>
    %19 = arith.addf %18, %17 : vector<8x4096xf32>
    %20 = arith.mulf %14, %19 : vector<8x4096xf32>
    %cst_11 = arith.constant 5.000000e-01 : f32
    %21 = vector.broadcast %cst_11 : f32 to vector<8x4096xf32>
    %22 = arith.mulf %21, %12 : vector<8x4096xf32>
    %23 = math.tanh %20 : vector<8x4096xf32>
    %cst_12 = arith.constant 1.000000e+00 : f32
    %24 = vector.broadcast %cst_12 : f32 to vector<8x4096xf32>
    %25 = arith.addf %24, %23 : vector<8x4096xf32>
    %26 = arith.mulf %22, %25 : vector<8x4096xf32>
    %c0_13 = arith.constant 0 : index
    %c0_14 = arith.constant 0 : index
    %c0_15 = arith.constant 0 : index
    %27 = vector.load %arg5[%c0_13, %c0_14, %c0_15] : memref<1x64x4096xf32, #tpu.memory_space<vmem>>, vector<1x8x4096xf32>
    %28 = vector.shape_cast %27 : vector<1x8x4096xf32> to vector<8x4096xf32>
    %29 = vector.shape_cast %26 : vector<8x4096xf32> to vector<1x8x4096xf32>
    tpu.vector_store %arg5[%c0_13, %c0_14, %c0_15], %29 {strides = array<i32>} : memref<1x64x4096xf32, #tpu.memory_space<vmem>>, vector<1x8x4096xf32>,
    %30 = vector.extract_strided_slice %11 {offsets = [8, 0], sizes = [8, 4096], strides = [1, 1]} : vector<64x4096xf32> to vector<8x4096xf32>
    %cst_16 = arith.constant 0.797884583 : f32
    %31 = vector.broadcast %cst_16 : f32 to vector<8x4096xf32>
    %32 = arith.mulf %31, %30 : vector<8x4096xf32>
    %33 = arith.mulf %30, %30 : vector<8x4096xf32>
    %cst_17 = arith.constant 4.471500e-02 : f32
    %34 = vector.broadcast %cst_17 : f32 to vector<8x4096xf32>
    %35 = arith.mulf %34, %33 : vector<8x4096xf32>
    %cst_18 = arith.constant 1.000000e+00 : f32
    %36 = vector.broadcast %cst_18 : f32 to vector<8x4096xf32>
    %37 = arith.addf %36, %35 : vector<8x4096xf32>
    %38 = arith.mulf %32, %37 : vector<8x4096xf32>
    %cst_19 = arith.constant 5.000000e-01 : f32
    %39 = vector.broadcast %cst_19 : f32 to vector<8x4096xf32>
    %40 = arith.mulf %39, %30 : vector<8x4096xf32>
    %41 = math.tanh %38 : vector<8x4096xf32>
    %cst_20 = arith.constant 1.000000e+00 : f32
    %42 = vector.broadcast %cst_20 : f32 to vector<8x4096xf32>
    %43 = arith.addf %42, %41 : vector<8x4096xf32>
    %44 = arith.mulf %40, %43 : vector<8x4096xf32>
    %c0_21 = arith.constant 0 : index
    %c8 = arith.constant 8 : index
    %c0_22 = arith.constant 0 : index
    %45 = vector.load %arg5[%c0_21, %c8, %c0_22] : memref<1x64x4096xf32, #tpu.memory_space<vmem>>, vector<1x8x4096xf32>
    %46 = vector.shape_cast %45 : vector<1x8x4096xf32> to vector<8x4096xf32>
    %47 = vector.shape_cast %44 : vector<8x4096xf32> to vector<1x8x4096xf32>
    tpu.vector_store %arg5[%c0_21, %c8, %c0_22], %47 {strides = array<i32>} : memref<1x64x4096xf32, #tpu.memory_space<vmem>>, vector<1x8x4096xf32>,
    %48 = vector.extract_strided_slice %11 {offsets = [16, 0], sizes = [8, 4096], strides = [1, 1]} : vector<64x4096xf32> to vector<8x4096xf32>
    %cst_23 = arith.constant 0.797884583 : f32
    %49 = vector.broadcast %cst_23 : f32 to vector<8x4096xf32>
    %50 = arith.mulf %49, %48 : vector<8x4096xf32>
    %51 = arith.mulf %48, %48 : vector<8x4096xf32>
    %cst_24 = arith.constant 4.471500e-02 : f32
    %52 = vector.broadcast %cst_24 : f32 to vector<8x4096xf32>
    %53 = arith.mulf %52, %51 : vector<8x4096xf32>
    %cst_25 = arith.constant 1.000000e+00 : f32
    %54 = vector.broadcast %cst_25 : f32 to vector<8x4096xf32>
    %55 = arith.addf %54, %53 : vector<8x4096xf32>
    %56 = arith.mulf %50, %55 : vector<8x4096xf32>
    %cst_26 = arith.constant 5.000000e-01 : f32
    %57 = vector.broadcast %cst_26 : f32 to vector<8x4096xf32>
    %58 = arith.mulf %57, %48 : vector<8x4096xf32>
    %59 = math.tanh %56 : vector<8x4096xf32>
    %cst_27 = arith.constant 1.000000e+00 : f32
    %60 = vector.broadcast %cst_27 : f32 to vector<8x4096xf32>
    %61 = arith.addf %60, %59 : vector<8x4096xf32>
    %62 = arith.mulf %58, %61 : vector<8x4096xf32>
    %c0_28 = arith.constant 0 : index
    %c16 = arith.constant 16 : index
    %c0_29 = arith.constant 0 : index
    %63 = vector.load %arg5[%c0_28, %c16, %c0_29] : memref<1x64x4096xf32, #tpu.memory_space<vmem>>, vector<1x8x4096xf32>
    %64 = vector.shape_cast %63 : vector<1x8x4096xf32> to vector<8x4096xf32>
    %65 = vector.shape_cast %62 : vector<8x4096xf32> to vector<1x8x4096xf32>
    tpu.vector_store %arg5[%c0_28, %c16, %c0_29], %65 {strides = array<i32>} : memref<1x64x4096xf32, #tpu.memory_space<vmem>>, vector<1x8x4096xf32>,
    %66 = vector.extract_strided_slice %11 {offsets = [24, 0], sizes = [8, 4096], strides = [1, 1]} : vector<64x4096xf32> to vector<8x4096xf32>
    %cst_30 = arith.constant 0.797884583 : f32
    %67 = vector.broadcast %cst_30 : f32 to vector<8x4096xf32>
    %68 = arith.mulf %67, %66 : vector<8x4096xf32>
    %69 = arith.mulf %66, %66 : vector<8x4096xf32>
    %cst_31 = arith.constant 4.471500e-02 : f32
    %70 = vector.broadcast %cst_31 : f32 to vector<8x4096xf32>
    %71 = arith.mulf %70, %69 : vector<8x4096xf32>
    %cst_32 = arith.constant 1.000000e+00 : f32
    %72 = vector.broadcast %cst_32 : f32 to vector<8x4096xf32>
    %73 = arith.addf %72, %71 : vector<8x4096xf32>
    %74 = arith.mulf %68, %73 : vector<8x4096xf32>
    %cst_33 = arith.constant 5.000000e-01 : f32
    %75 = vector.broadcast %cst_33 : f32 to vector<8x4096xf32>
    %76 = arith.mulf %75, %66 : vector<8x4096xf32>
    %77 = math.tanh %74 : vector<8x4096xf32>
    %cst_34 = arith.constant 1.000000e+00 : f32
    %78 = vector.broadcast %cst_34 : f32 to vector<8x4096xf32>
    %79 = arith.addf %78, %77 : vector<8x4096xf32>
    %80 = arith.mulf %76, %79 : vector<8x4096xf32>
    %c0_35 = arith.constant 0 : index
    %c24 = arith.constant 24 : index
    %c0_36 = arith.constant 0 : index
    %81 = vector.load %arg5[%c0_35, %c24, %c0_36] : memref<1x64x4096xf32, #tpu.memory_space<vmem>>, vector<1x8x4096xf32>
    %82 = vector.shape_cast %81 : vector<1x8x4096xf32> to vector<8x4096xf32>
    %83 = vector.shape_cast %80 : vector<8x4096xf32> to vector<1x8x4096xf32>
    tpu.vector_store %arg5[%c0_35, %c24, %c0_36], %83 {strides = array<i32>} : memref<1x64x4096xf32, #tpu.memory_space<vmem>>, vector<1x8x4096xf32>,
    %84 = vector.extract_strided_slice %11 {offsets = [32, 0], sizes = [8, 4096], strides = [1, 1]} : vector<64x4096xf32> to vector<8x4096xf32>
    %cst_37 = arith.constant 0.797884583 : f32
    %85 = vector.broadcast %cst_37 : f32 to vector<8x4096xf32>
    %86 = arith.mulf %85, %84 : vector<8x4096xf32>
    %87 = arith.mulf %84, %84 : vector<8x4096xf32>
    %cst_38 = arith.constant 4.471500e-02 : f32
    %88 = vector.broadcast %cst_38 : f32 to vector<8x4096xf32>
    %89 = arith.mulf %88, %87 : vector<8x4096xf32>
    %cst_39 = arith.constant 1.000000e+00 : f32
    %90 = vector.broadcast %cst_39 : f32 to vector<8x4096xf32>
    %91 = arith.addf %90, %89 : vector<8x4096xf32>
    %92 = arith.mulf %86, %91 : vector<8x4096xf32>
    %cst_40 = arith.constant 5.000000e-01 : f32
    %93 = vector.broadcast %cst_40 : f32 to vector<8x4096xf32>
    %94 = arith.mulf %93, %84 : vector<8x4096xf32>
    %95 = math.tanh %92 : vector<8x4096xf32>
    %cst_41 = arith.constant 1.000000e+00 : f32
    %96 = vector.broadcast %cst_41 : f32 to vector<8x4096xf32>
    %97 = arith.addf %96, %95 : vector<8x4096xf32>
    %98 = arith.mulf %94, %97 : vector<8x4096xf32>
    %c0_42 = arith.constant 0 : index
    %c32 = arith.constant 32 : index
    %c0_43 = arith.constant 0 : index
    %99 = vector.load %arg5[%c0_42, %c32, %c0_43] : memref<1x64x4096xf32, #tpu.memory_space<vmem>>, vector<1x8x4096xf32>
    %100 = vector.shape_cast %99 : vector<1x8x4096xf32> to vector<8x4096xf32>
    %101 = vector.shape_cast %98 : vector<8x4096xf32> to vector<1x8x4096xf32>
    tpu.vector_store %arg5[%c0_42, %c32, %c0_43], %101 {strides = array<i32>} : memref<1x64x4096xf32, #tpu.memory_space<vmem>>, vector<1x8x4096xf32>,
    %102 = vector.extract_strided_slice %11 {offsets = [40, 0], sizes = [8, 4096], strides = [1, 1]} : vector<64x4096xf32> to vector<8x4096xf32>
    %cst_44 = arith.constant 0.797884583 : f32
    %103 = vector.broadcast %cst_44 : f32 to vector<8x4096xf32>
    %104 = arith.mulf %103, %102 : vector<8x4096xf32>
    %105 = arith.mulf %102, %102 : vector<8x4096xf32>
    %cst_45 = arith.constant 4.471500e-02 : f32
    %106 = vector.broadcast %cst_45 : f32 to vector<8x4096xf32>
    %107 = arith.mulf %106, %105 : vector<8x4096xf32>
    %cst_46 = arith.constant 1.000000e+00 : f32
    %108 = vector.broadcast %cst_46 : f32 to vector<8x4096xf32>
    %109 = arith.addf %108, %107 : vector<8x4096xf32>
    %110 = arith.mulf %104, %109 : vector<8x4096xf32>
    %cst_47 = arith.constant 5.000000e-01 : f32
    %111 = vector.broadcast %cst_47 : f32 to vector<8x4096xf32>
    %112 = arith.mulf %111, %102 : vector<8x4096xf32>
    %113 = math.tanh %110 : vector<8x4096xf32>
    %cst_48 = arith.constant 1.000000e+00 : f32
    %114 = vector.broadcast %cst_48 : f32 to vector<8x4096xf32>
    %115 = arith.addf %114, %113 : vector<8x4096xf32>
    %116 = arith.mulf %112, %115 : vector<8x4096xf32>
    %c0_49 = arith.constant 0 : index
    %c40 = arith.constant 40 : index
    %c0_50 = arith.constant 0 : index
    %117 = vector.load %arg5[%c0_49, %c40, %c0_50] : memref<1x64x4096xf32, #tpu.memory_space<vmem>>, vector<1x8x4096xf32>
    %118 = vector.shape_cast %117 : vector<1x8x4096xf32> to vector<8x4096xf32>
    %119 = vector.shape_cast %116 : vector<8x4096xf32> to vector<1x8x4096xf32>
    tpu.vector_store %arg5[%c0_49, %c40, %c0_50], %119 {strides = array<i32>} : memref<1x64x4096xf32, #tpu.memory_space<vmem>>, vector<1x8x4096xf32>,
    %120 = vector.extract_strided_slice %11 {offsets = [48, 0], sizes = [8, 4096], strides = [1, 1]} : vector<64x4096xf32> to vector<8x4096xf32>
    %cst_51 = arith.constant 0.797884583 : f32
    %121 = vector.broadcast %cst_51 : f32 to vector<8x4096xf32>
    %122 = arith.mulf %121, %120 : vector<8x4096xf32>
    %123 = arith.mulf %120, %120 : vector<8x4096xf32>
    %cst_52 = arith.constant 4.471500e-02 : f32
    %124 = vector.broadcast %cst_52 : f32 to vector<8x4096xf32>
    %125 = arith.mulf %124, %123 : vector<8x4096xf32>
    %cst_53 = arith.constant 1.000000e+00 : f32
    %126 = vector.broadcast %cst_53 : f32 to vector<8x4096xf32>
    %127 = arith.addf %126, %125 : vector<8x4096xf32>
    %128 = arith.mulf %122, %127 : vector<8x4096xf32>
    %cst_54 = arith.constant 5.000000e-01 : f32
    %129 = vector.broadcast %cst_54 : f32 to vector<8x4096xf32>
    %130 = arith.mulf %129, %120 : vector<8x4096xf32>
    %131 = math.tanh %128 : vector<8x4096xf32>
    %cst_55 = arith.constant 1.000000e+00 : f32
    %132 = vector.broadcast %cst_55 : f32 to vector<8x4096xf32>
    %133 = arith.addf %132, %131 : vector<8x4096xf32>
    %134 = arith.mulf %130, %133 : vector<8x4096xf32>
    %c0_56 = arith.constant 0 : index
    %c48 = arith.constant 48 : index
    %c0_57 = arith.constant 0 : index
    %135 = vector.load %arg5[%c0_56, %c48, %c0_57] : memref<1x64x4096xf32, #tpu.memory_space<vmem>>, vector<1x8x4096xf32>
    %136 = vector.shape_cast %135 : vector<1x8x4096xf32> to vector<8x4096xf32>
    %137 = vector.shape_cast %134 : vector<8x4096xf32> to vector<1x8x4096xf32>
    tpu.vector_store %arg5[%c0_56, %c48, %c0_57], %137 {strides = array<i32>} : memref<1x64x4096xf32, #tpu.memory_space<vmem>>, vector<1x8x4096xf32>,
    %138 = vector.extract_strided_slice %11 {offsets = [56, 0], sizes = [8, 4096], strides = [1, 1]} : vector<64x4096xf32> to vector<8x4096xf32>
    %cst_58 = arith.constant 0.797884583 : f32
    %139 = vector.broadcast %cst_58 : f32 to vector<8x4096xf32>
    %140 = arith.mulf %139, %138 : vector<8x4096xf32>
    %141 = arith.mulf %138, %138 : vector<8x4096xf32>
    %cst_59 = arith.constant 4.471500e-02 : f32
    %142 = vector.broadcast %cst_59 : f32 to vector<8x4096xf32>
    %143 = arith.mulf %142, %141 : vector<8x4096xf32>
    %cst_60 = arith.constant 1.000000e+00 : f32
    %144 = vector.broadcast %cst_60 : f32 to vector<8x4096xf32>
    %145 = arith.addf %144, %143 : vector<8x4096xf32>
    %146 = arith.mulf %140, %145 : vector<8x4096xf32>
    %cst_61 = arith.constant 5.000000e-01 : f32
    %147 = vector.broadcast %cst_61 : f32 to vector<8x4096xf32>
    %148 = arith.mulf %147, %138 : vector<8x4096xf32>
    %149 = math.tanh %146 : vector<8x4096xf32>
    %cst_62 = arith.constant 1.000000e+00 : f32
    %150 = vector.broadcast %cst_62 : f32 to vector<8x4096xf32>
    %151 = arith.addf %150, %149 : vector<8x4096xf32>
    %152 = arith.mulf %148, %151 : vector<8x4096xf32>
    %c0_63 = arith.constant 0 : index
    %c56 = arith.constant 56 : index
    %c0_64 = arith.constant 0 : index
    %153 = vector.load %arg5[%c0_63, %c56, %c0_64] : memref<1x64x4096xf32, #tpu.memory_space<vmem>>, vector<1x8x4096xf32>
    %154 = vector.shape_cast %153 : vector<1x8x4096xf32> to vector<8x4096xf32>
    %155 = vector.shape_cast %152 : vector<8x4096xf32> to vector<1x8x4096xf32>
    tpu.vector_store %arg5[%c0_63, %c56, %c0_64], %155 {strides = array<i32>} : memref<1x64x4096xf32, #tpu.memory_space<vmem>>, vector<1x8x4096xf32>,
    return
  }
  func.func @transform_0(%arg0: i32, %arg1: i32) -> (i32, i32) {
    %c0_i32 = arith.constant 0 : i32
    %c0_i32_0 = arith.constant 0 : i32
    %c0_i32_1 = arith.constant 0 : i32
    return %c0_i32, %c0_i32_0 : i32, i32
  }
  func.func @transform_1(%arg0: i32, %arg1: i32) -> (i32, i32, i32) {
    %c0_i32 = arith.constant 0 : i32
    %c0_i32_0 = arith.constant 0 : i32
    return %arg1, %arg0, %c0_i32 : i32, i32, i32
  }
  func.func @transform_2(%arg0: i32, %arg1: i32) -> (i32, i32, i32, i32) {
    %c0_i32 = arith.constant 0 : i32
    %c0_i32_0 = arith.constant 0 : i32
    %c0_i32_1 = arith.constant 0 : i32
    return %arg1, %arg0, %c0_i32, %c0_i32_0 : i32, i32, i32, i32
  }
  func.func @transform_3(%arg0: i32, %arg1: i32) -> (i32, i32, i32) {
    %c0_i32 = arith.constant 0 : i32
    %c0_i32_0 = arith.constant 0 : i32
    return %arg1, %c0_i32, %arg0 : i32, i32, i32
  }
}

</mosaic_0001>

<llo_original>
// kernel: tpu_custom_call.1
$region0: #{tpu_custom_call.1}
  #allocation0 [shape = 'u32[]', space=smem, size = 0x4, offset = 0x4, fixed_abs, tag = 'smem constant byte address 0x4 - core index']
  #allocation1 [shape = 'u32[144,128]{1,0:T(1,128)}', space=vmem, size = 0x12000, scoped, tag = 'internal scratch']
  %s0 = inlined_call_operand.vmem [shape: f32[64,16], index: 0, kind: input, shape index: {}]
  %s1 = inlined_call_operand.vmem [shape: f32[2,4225,8], index: 1, kind: input, shape index: {}]
  %s2 = inlined_call_operand.vmem [shape: f32[2,2,1,8], index: 2, kind: input, shape index: {}]
  %s3 = inlined_call_operand.hbm [shape: f32[2,64,4224], index: 3, kind: output, shape index: {}]
  %s4 = sld [smem:[#allocation0]]
  $region45: #{tpu_custom_call.1} parent=0
    _
  %s6 = ssub.s32 1, %s4
  %s7 = scalar_select 0, %s6, %s4
  $region1: #{tpu_custom_call.1} parent=0
    #allocation2 [shape = 'u8[2097152]{0}', space=vmem, size = 0x200000, scoped, tag = 'output window, operand 0']
    #allocation3 [shape = 's32[2]{0}', space=sflag, size = 0x8, scoped, tag = 'scoped memory for tpu_custom_call.1']
    %8 = vsyncpa [#allocation3], 0
    %s9 = scalar_lea.sflag [#allocation3], 1
    %10 = vsyncpa %s9, 0
    loop: start=0, step=1, limit=6
    $region2: #{tpu_custom_call.1} parent=1 // loop_pre_header
      _
    $region3: #{tpu_custom_call.1} parent=1 // loop_header
      %s12 = sphi 0, %s16
      %p13 = scmp.ge.s32.totalorder %s12, 6
      %s19 = sphi 0, %s31
      %s20 = sphi 0, %s27
      %s21 = sphi 0, %s19
      %s22 = sphi 0, %s20
      %s23 = sphi 0, %s21
      %s24 = sphi 0, %s22
      %s32 = sphi 0, %s32
      %s34 = sphi 0, %s32
      %s35 = sphi 0, %s34
      %s49 = sphi 0, %s35
      %s57 = sphi 0, %s59
      %s60 = sphi 0, %s57
      %s61 = sphi 0, %s60
      %s77 = sphi 0, %s61
      %s85 = sphi 0, %s87
      %s88 = sphi 0, %s85
      %s89 = sphi 0, %s88
      %s105 = sphi 0, %s89
      %s113 = sphi 0, %s115
      %s116 = sphi 0, %s113
      %s117 = sphi 0, %s116
      %s133 = sphi 0, %s117
    $region4: #{tpu_custom_call.1} parent=1 // loop_header_branch
      %15 = sbr.rel (%p13) target = $region8
    $region5: #{tpu_custom_call.1} parent=1 // loop_body
      %s17 = ssub.s32 %s12, 1
      %s18 = ssub.s32 %s12, 2
      %s25 = sadd.s32 1, %s20
      %p26 = scmp.ge.s32.totalorder %s25, 2
      %s27 = scalar_select %p26, 0, %s25
      %s28 = sadd.s32 1, %s19
      %s29 = scalar_select %p26, %s28, %s19
      %p30 = scmp.ge.s32.totalorder %s29, 2
      %s31 = scalar_select %p30, 0, %s29
      %s33 = sadd.s32 %s32, 1
      %p36 = scmp.eq.s32.totalorder %s12, 3
      %p37 = scmp.ne.s32.totalorder %s32, %s34
      %p38 = scmp.eq.s32.totalorder %s12, 0
      %p39 = por %p37, %p38
      %p40 = scmp.ne.s32.totalorder %s32, %s34
      %p41 = scmp.eq.s32.totalorder %s17, 3
      %p42 = por %p40, %p41
      %p43 = scmp.ne.s32.totalorder %s34, %s35
      %p44 = scmp.eq.s32.totalorder %s17, 0
      %p45 = por %p43, %p44
      %p46 = scmp.ne.s32.totalorder %s34, %s35
      %p47 = scmp.eq.s32.totalorder %s18, 3
      %p48 = por %p46, %p47
      %p50 = scmp.ne.s32.totalorder %s35, %s49
      %p51 = scmp.eq.s32.totalorder %s18, 0
      %p52 = por %p50, %p51
      %s53 = ssub.s32 %s20, %s27
      %s54 = ssub.s32 %s19, %s31
      %s55 = sor.u32 %s53, %s54
      %p56 = scmp.eq.s32.totalorder %s55, 0
      %s58 = sadd.s32 %s57, 1
      %s59 = scalar_select %p56, %s57, %s58
      %p62 = pneg %p56
      %p63 = scmp.eq.s32.totalorder %s12, 3
      %p64 = por %p62, %p63
      %p65 = scmp.ne.s32.totalorder %s57, %s60
      %p66 = scmp.eq.s32.totalorder %s12, 0
      %p67 = por %p65, %p66
      %p68 = scmp.ne.s32.totalorder %s57, %s60
      %p69 = scmp.eq.s32.totalorder %s17, 3
      %p70 = por %p68, %p69
      %p71 = scmp.ne.s32.totalorder %s60, %s61
      %p72 = scmp.eq.s32.totalorder %s17, 0
      %p73 = por %p71, %p72
      %p74 = scmp.ne.s32.totalorder %s60, %s61
      %p75 = scmp.eq.s32.totalorder %s18, 3
      %p76 = por %p74, %p75
      %p78 = scmp.ne.s32.totalorder %s61, %s77
      %p79 = scmp.eq.s32.totalorder %s18, 0
      %p80 = por %p78, %p79
      %s81 = ssub.s32 %s20, %s27
      %s82 = ssub.s32 %s19, %s31
      %s83 = sor.u32 %s81, %s82
      %p84 = scmp.eq.s32.totalorder %s83, 0
      %s86 = sadd.s32 %s85, 1
      %s87 = scalar_select %p84, %s85, %s86
      %p90 = pneg %p84
      %p91 = scmp.eq.s32.totalorder %s12, 3
      %p92 = por %p90, %p91
      %p93 = scmp.ne.s32.totalorder %s85, %s88
      %p94 = scmp.eq.s32.totalorder %s12, 0
      %p95 = por %p93, %p94
      %p96 = scmp.ne.s32.totalorder %s85, %s88
      %p97 = scmp.eq.s32.totalorder %s17, 3
      %p98 = por %p96, %p97
      %p99 = scmp.ne.s32.totalorder %s88, %s89
      %p100 = scmp.eq.s32.totalorder %s17, 0
      %p101 = por %p99, %p100
      %p102 = scmp.ne.s32.totalorder %s88, %s89
      %p103 = scmp.eq.s32.totalorder %s18, 3
      %p104 = por %p102, %p103
      %p106 = scmp.ne.s32.totalorder %s89, %s105
      %p107 = scmp.eq.s32.totalorder %s18, 0
      %p108 = por %p106, %p107
      %s109 = ssub.s32 %s20, %s27
      %s110 = ssub.s32 %s19, %s31
      %s111 = sor.u32 %s109, %s110
      %p112 = scmp.eq.s32.totalorder %s111, 0
      %s114 = sadd.s32 %s113, 1
      %s115 = scalar_select %p112, %s113, %s114
      %p118 = pneg %p112
      %p119 = scmp.eq.s32.totalorder %s12, 3
      %p120 = por %p118, %p119
      %p121 = scmp.ne.s32.totalorder %s113, %s116
      %p122 = scmp.eq.s32.totalorder %s12, 0
      %p123 = por %p121, %p122
      %p124 = scmp.ne.s32.totalorder %s113, %s116
      %p125 = scmp.eq.s32.totalorder %s17, 3
      %p126 = por %p124, %p125
      %p127 = scmp.ne.s32.totalorder %s116, %s117
      %p128 = scmp.eq.s32.totalorder %s17, 0
      %p129 = por %p127, %p128
      %p130 = scmp.ne.s32.totalorder %s116, %s117
      %p131 = scmp.eq.s32.totalorder %s18, 3
      %p132 = por %p130, %p131
      %p134 = scmp.ne.s32.totalorder %s117, %s133
      %p135 = scmp.eq.s32.totalorder %s18, 0
      %p136 = por %p134, %p135
      %p137 = scmp.le.s32.totalorder 1, %s12
      %p138 = scmp.lt.s32.totalorder %s12, 5
      %p139 = pnand %p137, %p138
      %p140 = pneg %p139
      // Predicated region
      $region9: #{tpu_custom_call.1} parent=5 // pred_check
        _
      $region10: #{tpu_custom_call.1} parent=5 // pred_check_branch
        %142 = sbr.rel (%p139) target = $region12
      $region11: #{tpu_custom_call.1} parent=5 // pred_region
        %s143 = ssub.s32 %s12, 1
        // Predicated region
        $region13: #{tpu_custom_call.1} parent=11 // pred_check
          %p144 = pneg %p45
        $region14: #{tpu_custom_call.1} parent=11 // pred_check_branch
          %146 = sbr.rel (%p144) target = $region16
        $region15: #{tpu_custom_call.1} parent=11 // pred_region
          _
        $region16: #{tpu_custom_call.1} parent=11 // pred_fallthru
          _
      $region12: #{tpu_custom_call.1} parent=5 // pred_fallthru
        _
      %p147 = scmp.lt.s32.totalorder %s12, 4
      // Predicated region
      $region17: #{tpu_custom_call.1} parent=5 // pred_check
        %p148 = pneg %p147
      $region18: #{tpu_custom_call.1} parent=5 // pred_check_branch
        %150 = sbr.rel (%p148) target = $region20
      $region19: #{tpu_custom_call.1} parent=5 // pred_region
        // Predicated region
        $region21: #{tpu_custom_call.1} parent=19 // pred_check
          %p151 = pneg %p67
        $region22: #{tpu_custom_call.1} parent=19 // pred_check_branch
          %153 = sbr.rel (%p151) target = $region24
        $region23: #{tpu_custom_call.1} parent=19 // pred_region
          %s154 = smul.u32 512, %s19
          %s155 = ssub.s32 529, %s154
          %p156 = scmp.lt.s32.totalorder %s155, 512
          %s157 = scalar_select %p156, %s155, 512
          %s158 = smul.u32 128, %s157
          %p159 = scmp.lt.s32.totalorder %s20, 1
          %s160 = scalar_select %p159, %s20, 1
          %p161 = scmp.lt.s32.totalorder %s154, 528
          %s162 = scalar_select %p161, %s154, 528
          %s163 = smul.addr %s160, 529
          %s164 = sadd.s32 %s162, %s163
          %s165 = smul.addr %s164, 8
          %s166 = scalar_lea.vmem %s1, %s165
          %s167 = smul.u32 512, %s19
          %s168 = ssub.s32 529, %s167
          %p169 = scmp.lt.s32.totalorder %s168, 512
          %s170 = scalar_select %p169, %s168, 512
          %s171 = smul.u32 128, %s170
        $region24: #{tpu_custom_call.1} parent=19 // pred_fallthru
          _
        // Predicated region
        $region25: #{tpu_custom_call.1} parent=19 // pred_check
          %p172 = pneg %p95
        $region26: #{tpu_custom_call.1} parent=19 // pred_check_branch
          %174 = sbr.rel (%p172) target = $region28
        $region27: #{tpu_custom_call.1} parent=19 // pred_region
          %p175 = scmp.lt.s32.totalorder %s20, 1
          %s176 = scalar_select %p175, %s20, 1
          %p177 = scmp.lt.s32.totalorder %s19, 1
          %s178 = scalar_select %p177, %s19, 1
          %s179 = smul.addr %s176, 2
          %s180 = sadd.s32 %s178, %s179
          %s181 = scalar_lea.vmem %s2, %s180
        $region28: #{tpu_custom_call.1} parent=19 // pred_fallthru
          _
      $region20: #{tpu_custom_call.1} parent=5 // pred_fallthru
        _
      %p182 = scmp.le.s32.totalorder 1, %s12
      %p183 = scmp.lt.s32.totalorder %s12, 5
      %p184 = pnand %p182, %p183
      %p185 = pneg %p184
      // Predicated region
      $region29: #{tpu_custom_call.1} parent=5 // pred_check
        _
      $region30: #{tpu_custom_call.1} parent=5 // pred_check_branch
        %187 = sbr.rel (%p184) target = $region32
      $region31: #{tpu_custom_call.1} parent=5 // pred_region
        %s188 = ssub.s32 %s12, 1
        %p189 = pneg %p45
        %p190 = pneg %p42
        %s191 = smul.u32 512, %s21
        %s192 = ssub.s32 529, %s191
        %p193 = scmp.lt.s32.totalorder %s192, 512
        %s194 = scalar_select %p193, %s192, 512
        %s195 = smul.u32 128, %s194
        %p196 = scmp.lt.s32.totalorder %s22, 1
        %s197 = scalar_select %p196, %s22, 1
        %p198 = scmp.lt.s32.totalorder %s191, 528
        %s199 = scalar_select %p198, %s191, 528
        %s200 = smul.addr %s197, 529
        %s201 = sadd.s32 %s199, %s200
        %s202 = smul.addr %s201, 8
        %s203 = scalar_lea.vmem %s1, %s202
        %p204 = pneg %p73
        %p205 = pneg %p70
        %p206 = scmp.lt.s32.totalorder %s22, 1
        %s207 = scalar_select %p206, %s22, 1
        %p208 = scmp.lt.s32.totalorder %s21, 1
        %s209 = scalar_select %p208, %s21, 1
        %s210 = smul.addr %s207, 2
        %s211 = sadd.s32 %s209, %s210
        %s212 = scalar_lea.vmem %s2, %s211
        %p213 = pneg %p101
        %p214 = pneg %p98
        %p215 = pneg %p129
        %p216 = pneg %p126
        %s217 = sand.u32 %s116, 1
        %s218 = scalar_lea.sflag [#allocation3], %s217
        %s219 = sand.u32 %s116, 1
        %s220 = smul.addr %s219, 2048
        %s221 = scalar_lea.vmem [#allocation2], %s220
        %s222 = smul.u32 512, %s21
        %s223 = ssub.s32 529, %s222
        %p224 = scmp.lt.s32.totalorder %s223, 512
        %s225 = scalar_select %p224, %s223, 512
        %s226 = smul.u32 128, %s225
        %p227 = scmp.lt.s32.totalorder %s22, 1
        %s228 = scalar_select %p227, %s22, 1
        %p229 = scmp.lt.s32.totalorder %s222, 528
        %s230 = scalar_select %p229, %s222, 528
        %s231 = smul.addr %s228, 529
        %s232 = sadd.s32 %s230, %s231
        %s233 = smul.addr %s232, 8
        %s234 = scalar_lea.vmem %s1, %s233
        %s235 = smul.u32 512, %s21
        %s236 = ssub.s32 529, %s235
        %p237 = scmp.lt.s32.totalorder %s236, 512
        %s238 = scalar_select %p237, %s236, 512
        %s239 = smul.u32 128, %s238
        %p240 = scmp.lt.s32.totalorder %s22, 1
        %s241 = scalar_select %p240, %s22, 1
        %p242 = scmp.lt.s32.totalorder %s21, 1
        %s243 = scalar_select %p242, %s21, 1
        %s244 = smul.addr %s241, 2
        %s245 = sadd.s32 %s243, %s244
        %s246 = scalar_lea.vmem %s2, %s245
        %s247 = smul.u32 32, %s21
        %s248 = ssub.s32 33, %s247
        %p249 = scmp.lt.s32.totalorder %s248, 32
        %s250 = scalar_select %p249, %s248, 32
        %s251 = smul.u32 1024, %s250
        %v252 = vld [vmem:[%s234] sm:$0xff]
        %v253 = vld [vmem:[%s234 + $0x8] sm:$0xff]
        %v254 = vld [vmem:[%s234 + $0x10] sm:$0xff]
        %v255 = vld [vmem:[%s234 + $0x18] sm:$0xff]
        %v256 = vld [vmem:[%s234 + $0x20] sm:$0xff]
        %v257 = vld [vmem:[%s234 + $0x28] sm:$0xff]
        %v258 = vld [vmem:[%s234 + $0x30] sm:$0xff]
        %v259 = vld [vmem:[%s234 + $0x38] sm:$0xff]
        %v260 = vld [vmem:[%s234 + $0x40] sm:$0xff]
        %v261 = vld [vmem:[%s234 + $0x48] sm:$0xff]
        %v262 = vld [vmem:[%s234 + $0x50] sm:$0xff]
        %v263 = vld [vmem:[%s234 + $0x58] sm:$0xff]
        %v264 = vld [vmem:[%s234 + $0x60] sm:$0xff]
        %v265 = vld [vmem:[%s234 + $0x68] sm:$0xff]
        %v266 = vld [vmem:[%s234 + $0x70] sm:$0xff]
        %v267 = vld [vmem:[%s234 + $0x78] sm:$0xff]
        %v268 = vld [vmem:[%s234 + $0x80] sm:$0xff]
        %v269 = vld [vmem:[%s234 + $0x88] sm:$0xff]
        %v270 = vld [vmem:[%s234 + $0x90] sm:$0xff]
        %v271 = vld [vmem:[%s234 + $0x98] sm:$0xff]
        %v272 = vld [vmem:[%s234 + $0xa0] sm:$0xff]
        %v273 = vld [vmem:[%s234 + $0xa8] sm:$0xff]
        %v274 = vld [vmem:[%s234 + $0xb0] sm:$0xff]
        %v275 = vld [vmem:[%s234 + $0xb8] sm:$0xff]
        %v276 = vld [vmem:[%s234 + $0xc0] sm:$0xff]
        %v277 = vld [vmem:[%s234 + $0xc8] sm:$0xff]
        %v278 = vld [vmem:[%s234 + $0xd0] sm:$0xff]
        %v279 = vld [vmem:[%s234 + $0xd8] sm:$0xff]
        %v280 = vld [vmem:[%s234 + $0xe0] sm:$0xff]
        %v281 = vld [vmem:[%s234 + $0xe8] sm:$0xff]
        %v282 = vld [vmem:[%s234 + $0xf0] sm:$0xff]
        %v283 = vld [vmem:[%s234 + $0xf8] sm:$0xff]
        %v284 = vld [vmem:[%s234 + $0x100] sm:$0xff]
        %v285 = vld [vmem:[%s234 + $0x108] sm:$0xff]
        %v286 = vld [vmem:[%s234 + $0x110] sm:$0xff]
        %v287 = vld [vmem:[%s234 + $0x118] sm:$0xff]
        %v288 = vld [vmem:[%s234 + $0x120] sm:$0xff]
        %v289 = vld [vmem:[%s234 + $0x128] sm:$0xff]
        %v290 = vld [vmem:[%s234 + $0x130] sm:$0xff]
        %v291 = vld [vmem:[%s234 + $0x138] sm:$0xff]
        %v292 = vld [vmem:[%s234 + $0x140] sm:$0xff]
        %v293 = vld [vmem:[%s234 + $0x148] sm:$0xff]
        %v294 = vld [vmem:[%s234 + $0x150] sm:$0xff]
        %v295 = vld [vmem:[%s234 + $0x158] sm:$0xff]
        %v296 = vld [vmem:[%s234 + $0x160] sm:$0xff]
        %v297 = vld [vmem:[%s234 + $0x168] sm:$0xff]
        %v298 = vld [vmem:[%s234 + $0x170] sm:$0xff]
        %v299 = vld [vmem:[%s234 + $0x178] sm:$0xff]
        %v300 = vld [vmem:[%s234 + $0x180] sm:$0xff]
        %v301 = vld [vmem:[%s234 + $0x188] sm:$0xff]
        %v302 = vld [vmem:[%s234 + $0x190] sm:$0xff]
        %v303 = vld [vmem:[%s234 + $0x198] sm:$0xff]
        %v304 = vld [vmem:[%s234 + $0x1a0] sm:$0xff]
        %v305 = vld [vmem:[%s234 + $0x1a8] sm:$0xff]
        %v306 = vld [vmem:[%s234 + $0x1b0] sm:$0xff]
        %v307 = vld [vmem:[%s234 + $0x1b8] sm:$0xff]
        %v308 = vld [vmem:[%s234 + $0x1c0] sm:$0xff]
        %v309 = vld [vmem:[%s234 + $0x1c8] sm:$0xff]
        %v310 = vld [vmem:[%s234 + $0x1d0] sm:$0xff]
        %v311 = vld [vmem:[%s234 + $0x1d8] sm:$0xff]
        %v312 = vld [vmem:[%s234 + $0x1e0] sm:$0xff]
        %v313 = vld [vmem:[%s234 + $0x1e8] sm:$0xff]
        %v314 = vld [vmem:[%s234 + $0x1f0] sm:$0xff]
        %v315 = vld [vmem:[%s234 + $0x1f8] sm:$0xff]
        %v316 = vld [vmem:[%s234 + $0x200] sm:$0xff]
        %v317 = vld [vmem:[%s234 + $0x208] sm:$0xff]
        %v318 = vld [vmem:[%s234 + $0x210] sm:$0xff]
        %v319 = vld [vmem:[%s234 + $0x218] sm:$0xff]
        %v320 = vld [vmem:[%s234 + $0x220] sm:$0xff]
        %v321 = vld [vmem:[%s234 + $0x228] sm:$0xff]
        %v322 = vld [vmem:[%s234 + $0x230] sm:$0xff]
        %v323 = vld [vmem:[%s234 + $0x238] sm:$0xff]
        %v324 = vld [vmem:[%s234 + $0x240] sm:$0xff]
        %v325 = vld [vmem:[%s234 + $0x248] sm:$0xff]
        %v326 = vld [vmem:[%s234 + $0x250] sm:$0xff]
        %v327 = vld [vmem:[%s234 + $0x258] sm:$0xff]
        %v328 = vld [vmem:[%s234 + $0x260] sm:$0xff]
        %v329 = vld [vmem:[%s234 + $0x268] sm:$0xff]
        %v330 = vld [vmem:[%s234 + $0x270] sm:$0xff]
        %v331 = vld [vmem:[%s234 + $0x278] sm:$0xff]
        %v332 = vld [vmem:[%s234 + $0x280] sm:$0xff]
        %v333 = vld [vmem:[%s234 + $0x288] sm:$0xff]
        %v334 = vld [vmem:[%s234 + $0x290] sm:$0xff]
        %v335 = vld [vmem:[%s234 + $0x298] sm:$0xff]
        %v336 = vld [vmem:[%s234 + $0x2a0] sm:$0xff]
        %v337 = vld [vmem:[%s234 + $0x2a8] sm:$0xff]
        %v338 = vld [vmem:[%s234 + $0x2b0] sm:$0xff]
        %v339 = vld [vmem:[%s234 + $0x2b8] sm:$0xff]
        %v340 = vld [vmem:[%s234 + $0x2c0] sm:$0xff]
        %v341 = vld [vmem:[%s234 + $0x2c8] sm:$0xff]
        %v342 = vld [vmem:[%s234 + $0x2d0] sm:$0xff]
        %v343 = vld [vmem:[%s234 + $0x2d8] sm:$0xff]
        %v344 = vld [vmem:[%s234 + $0x2e0] sm:$0xff]
        %v345 = vld [vmem:[%s234 + $0x2e8] sm:$0xff]
        %v346 = vld [vmem:[%s234 + $0x2f0] sm:$0xff]
        %v347 = vld [vmem:[%s234 + $0x2f8] sm:$0xff]
        %v348 = vld [vmem:[%s234 + $0x300] sm:$0xff]
        %v349 = vld [vmem:[%s234 + $0x308] sm:$0xff]
        %v350 = vld [vmem:[%s234 + $0x310] sm:$0xff]
        %v351 = vld [vmem:[%s234 + $0x318] sm:$0xff]
        %v352 = vld [vmem:[%s234 + $0x320] sm:$0xff]
        %v353 = vld [vmem:[%s234 + $0x328] sm:$0xff]
        %v354 = vld [vmem:[%s234 + $0x330] sm:$0xff]
        %v355 = vld [vmem:[%s234 + $0x338] sm:$0xff]
        %v356 = vld [vmem:[%s234 + $0x340] sm:$0xff]
        %v357 = vld [vmem:[%s234 + $0x348] sm:$0xff]
        %v358 = vld [vmem:[%s234 + $0x350] sm:$0xff]
        %v359 = vld [vmem:[%s234 + $0x358] sm:$0xff]
        %v360 = vld [vmem:[%s234 + $0x360] sm:$0xff]
        %v361 = vld [vmem:[%s234 + $0x368] sm:$0xff]
        %v362 = vld [vmem:[%s234 + $0x370] sm:$0xff]
        %v363 = vld [vmem:[%s234 + $0x378] sm:$0xff]
        %v364 = vld [vmem:[%s234 + $0x380] sm:$0xff]
        %v365 = vld [vmem:[%s234 + $0x388] sm:$0xff]
        %v366 = vld [vmem:[%s234 + $0x390] sm:$0xff]
        %v367 = vld [vmem:[%s234 + $0x398] sm:$0xff]
        %v368 = vld [vmem:[%s234 + $0x3a0] sm:$0xff]
        %v369 = vld [vmem:[%s234 + $0x3a8] sm:$0xff]
        %v370 = vld [vmem:[%s234 + $0x3b0] sm:$0xff]
        %v371 = vld [vmem:[%s234 + $0x3b8] sm:$0xff]
        %v372 = vld [vmem:[%s234 + $0x3c0] sm:$0xff]
        %v373 = vld [vmem:[%s234 + $0x3c8] sm:$0xff]
        %v374 = vld [vmem:[%s234 + $0x3d0] sm:$0xff]
        %v375 = vld [vmem:[%s234 + $0x3d8] sm:$0xff]
        %v376 = vld [vmem:[%s234 + $0x3e0] sm:$0xff]
        %v377 = vld [vmem:[%s234 + $0x3e8] sm:$0xff]
        %v378 = vld [vmem:[%s234 + $0x3f0] sm:$0xff]
        %v379 = vld [vmem:[%s234 + $0x3f8] sm:$0xff]
        %v380 = vld [vmem:[%s234 + $0x400] sm:$0xff]
        %v381 = vld [vmem:[%s234 + $0x408] sm:$0xff]
        %v382 = vld [vmem:[%s234 + $0x410] sm:$0xff]
        %v383 = vld [vmem:[%s234 + $0x418] sm:$0xff]
        %v384 = vld [vmem:[%s234 + $0x420] sm:$0xff]
        %v385 = vld [vmem:[%s234 + $0x428] sm:$0xff]
        %v386 = vld [vmem:[%s234 + $0x430] sm:$0xff]
        %v387 = vld [vmem:[%s234 + $0x438] sm:$0xff]
        %v388 = vld [vmem:[%s234 + $0x440] sm:$0xff]
        %v389 = vld [vmem:[%s234 + $0x448] sm:$0xff]
        %v390 = vld [vmem:[%s234 + $0x450] sm:$0xff]
        %v391 = vld [vmem:[%s234 + $0x458] sm:$0xff]
        %v392 = vld [vmem:[%s234 + $0x460] sm:$0xff]
        %v393 = vld [vmem:[%s234 + $0x468] sm:$0xff]
        %v394 = vld [vmem:[%s234 + $0x470] sm:$0xff]
        %v395 = vld [vmem:[%s234 + $0x478] sm:$0xff]
        %v396 = vld [vmem:[%s234 + $0x480] sm:$0xff]
        %v397 = vld [vmem:[%s234 + $0x488] sm:$0xff]
        %v398 = vld [vmem:[%s234 + $0x490] sm:$0xff]
        %v399 = vld [vmem:[%s234 + $0x498] sm:$0xff]
        %v400 = vld [vmem:[%s234 + $0x4a0] sm:$0xff]
        %v401 = vld [vmem:[%s234 + $0x4a8] sm:$0xff]
        %v402 = vld [vmem:[%s234 + $0x4b0] sm:$0xff]
        %v403 = vld [vmem:[%s234 + $0x4b8] sm:$0xff]
        %v404 = vld [vmem:[%s234 + $0x4c0] sm:$0xff]
        %v405 = vld [vmem:[%s234 + $0x4c8] sm:$0xff]
        %v406 = vld [vmem:[%s234 + $0x4d0] sm:$0xff]
        %v407 = vld [vmem:[%s234 + $0x4d8] sm:$0xff]
        %v408 = vld [vmem:[%s234 + $0x4e0] sm:$0xff]
        %v409 = vld [vmem:[%s234 + $0x4e8] sm:$0xff]
        %v410 = vld [vmem:[%s234 + $0x4f0] sm:$0xff]
        %v411 = vld [vmem:[%s234 + $0x4f8] sm:$0xff]
        %v412 = vld [vmem:[%s234 + $0x500] sm:$0xff]
        %v413 = vld [vmem:[%s234 + $0x508] sm:$0xff]
        %v414 = vld [vmem:[%s234 + $0x510] sm:$0xff]
        %v415 = vld [vmem:[%s234 + $0x518] sm:$0xff]
        %v416 = vld [vmem:[%s234 + $0x520] sm:$0xff]
        %v417 = vld [vmem:[%s234 + $0x528] sm:$0xff]
        %v418 = vld [vmem:[%s234 + $0x530] sm:$0xff]
        %v419 = vld [vmem:[%s234 + $0x538] sm:$0xff]
        %v420 = vld [vmem:[%s234 + $0x540] sm:$0xff]
        %v421 = vld [vmem:[%s234 + $0x548] sm:$0xff]
        %v422 = vld [vmem:[%s234 + $0x550] sm:$0xff]
        %v423 = vld [vmem:[%s234 + $0x558] sm:$0xff]
        %v424 = vld [vmem:[%s234 + $0x560] sm:$0xff]
        %v425 = vld [vmem:[%s234 + $0x568] sm:$0xff]
        %v426 = vld [vmem:[%s234 + $0x570] sm:$0xff]
        %v427 = vld [vmem:[%s234 + $0x578] sm:$0xff]
        %v428 = vld [vmem:[%s234 + $0x580] sm:$0xff]
        %v429 = vld [vmem:[%s234 + $0x588] sm:$0xff]
        %v430 = vld [vmem:[%s234 + $0x590] sm:$0xff]
        %v431 = vld [vmem:[%s234 + $0x598] sm:$0xff]
        %v432 = vld [vmem:[%s234 + $0x5a0] sm:$0xff]
        %v433 = vld [vmem:[%s234 + $0x5a8] sm:$0xff]
        %v434 = vld [vmem:[%s234 + $0x5b0] sm:$0xff]
        %v435 = vld [vmem:[%s234 + $0x5b8] sm:$0xff]
        %v436 = vld [vmem:[%s234 + $0x5c0] sm:$0xff]
        %v437 = vld [vmem:[%s234 + $0x5c8] sm:$0xff]
        %v438 = vld [vmem:[%s234 + $0x5d0] sm:$0xff]
        %v439 = vld [vmem:[%s234 + $0x5d8] sm:$0xff]
        %v440 = vld [vmem:[%s234 + $0x5e0] sm:$0xff]
        %v441 = vld [vmem:[%s234 + $0x5e8] sm:$0xff]
        %v442 = vld [vmem:[%s234 + $0x5f0] sm:$0xff]
        %v443 = vld [vmem:[%s234 + $0x5f8] sm:$0xff]
        %v444 = vld [vmem:[%s234 + $0x600] sm:$0xff]
        %v445 = vld [vmem:[%s234 + $0x608] sm:$0xff]
        %v446 = vld [vmem:[%s234 + $0x610] sm:$0xff]
        %v447 = vld [vmem:[%s234 + $0x618] sm:$0xff]
        %v448 = vld [vmem:[%s234 + $0x620] sm:$0xff]
        %v449 = vld [vmem:[%s234 + $0x628] sm:$0xff]
        %v450 = vld [vmem:[%s234 + $0x630] sm:$0xff]
        %v451 = vld [vmem:[%s234 + $0x638] sm:$0xff]
        %v452 = vld [vmem:[%s234 + $0x640] sm:$0xff]
        %v453 = vld [vmem:[%s234 + $0x648] sm:$0xff]
        %v454 = vld [vmem:[%s234 + $0x650] sm:$0xff]
        %v455 = vld [vmem:[%s234 + $0x658] sm:$0xff]
        %v456 = vld [vmem:[%s234 + $0x660] sm:$0xff]
        %v457 = vld [vmem:[%s234 + $0x668] sm:$0xff]
        %v458 = vld [vmem:[%s234 + $0x670] sm:$0xff]
        %v459 = vld [vmem:[%s234 + $0x678] sm:$0xff]
        %v460 = vld [vmem:[%s234 + $0x680] sm:$0xff]
        %v461 = vld [vmem:[%s234 + $0x688] sm:$0xff]
        %v462 = vld [vmem:[%s234 + $0x690] sm:$0xff]
        %v463 = vld [vmem:[%s234 + $0x698] sm:$0xff]
        %v464 = vld [vmem:[%s234 + $0x6a0] sm:$0xff]
        %v465 = vld [vmem:[%s234 + $0x6a8] sm:$0xff]
        %v466 = vld [vmem:[%s234 + $0x6b0] sm:$0xff]
        %v467 = vld [vmem:[%s234 + $0x6b8] sm:$0xff]
        %v468 = vld [vmem:[%s234 + $0x6c0] sm:$0xff]
        %v469 = vld [vmem:[%s234 + $0x6c8] sm:$0xff]
        %v470 = vld [vmem:[%s234 + $0x6d0] sm:$0xff]
        %v471 = vld [vmem:[%s234 + $0x6d8] sm:$0xff]
        %v472 = vld [vmem:[%s234 + $0x6e0] sm:$0xff]
        %v473 = vld [vmem:[%s234 + $0x6e8] sm:$0xff]
        %v474 = vld [vmem:[%s234 + $0x6f0] sm:$0xff]
        %v475 = vld [vmem:[%s234 + $0x6f8] sm:$0xff]
        %v476 = vld [vmem:[%s234 + $0x700] sm:$0xff]
        %v477 = vld [vmem:[%s234 + $0x708] sm:$0xff]
        %v478 = vld [vmem:[%s234 + $0x710] sm:$0xff]
        %v479 = vld [vmem:[%s234 + $0x718] sm:$0xff]
        %v480 = vld [vmem:[%s234 + $0x720] sm:$0xff]
        %v481 = vld [vmem:[%s234 + $0x728] sm:$0xff]
        %v482 = vld [vmem:[%s234 + $0x730] sm:$0xff]
        %v483 = vld [vmem:[%s234 + $0x738] sm:$0xff]
        %v484 = vld [vmem:[%s234 + $0x740] sm:$0xff]
        %v485 = vld [vmem:[%s234 + $0x748] sm:$0xff]
        %v486 = vld [vmem:[%s234 + $0x750] sm:$0xff]
        %v487 = vld [vmem:[%s234 + $0x758] sm:$0xff]
        %v488 = vld [vmem:[%s234 + $0x760] sm:$0xff]
        %v489 = vld [vmem:[%s234 + $0x768] sm:$0xff]
        %v490 = vld [vmem:[%s234 + $0x770] sm:$0xff]
        %v491 = vld [vmem:[%s234 + $0x778] sm:$0xff]
        %v492 = vld [vmem:[%s234 + $0x780] sm:$0xff]
        %v493 = vld [vmem:[%s234 + $0x788] sm:$0xff]
        %v494 = vld [vmem:[%s234 + $0x790] sm:$0xff]
        %v495 = vld [vmem:[%s234 + $0x798] sm:$0xff]
        %v496 = vld [vmem:[%s234 + $0x7a0] sm:$0xff]
        %v497 = vld [vmem:[%s234 + $0x7a8] sm:$0xff]
        %v498 = vld [vmem:[%s234 + $0x7b0] sm:$0xff]
        %v499 = vld [vmem:[%s234 + $0x7b8] sm:$0xff]
        %v500 = vld [vmem:[%s234 + $0x7c0] sm:$0xff]
        %v501 = vld [vmem:[%s234 + $0x7c8] sm:$0xff]
        %v502 = vld [vmem:[%s234 + $0x7d0] sm:$0xff]
        %v503 = vld [vmem:[%s234 + $0x7d8] sm:$0xff]
        %v504 = vld [vmem:[%s234 + $0x7e0] sm:$0xff]
        %v505 = vld [vmem:[%s234 + $0x7e8] sm:$0xff]
        %v506 = vld [vmem:[%s234 + $0x7f0] sm:$0xff]
        %v507 = vld [vmem:[%s234 + $0x7f8] sm:$0xff]
        %v508 = vld [vmem:[%s234 + $0x800] sm:$0xff]
        %v509 = vld [vmem:[%s234 + $0x808] sm:$0xff]
        %v510 = vld [vmem:[%s234 + $0x810] sm:$0xff]
        %v511 = vld [vmem:[%s234 + $0x818] sm:$0xff]
        %v512 = vld [vmem:[%s234 + $0x820] sm:$0xff]
        %v513 = vld [vmem:[%s234 + $0x828] sm:$0xff]
        %v514 = vld [vmem:[%s234 + $0x830] sm:$0xff]
        %v515 = vld [vmem:[%s234 + $0x838] sm:$0xff]
        %v516 = vld [vmem:[%s234 + $0x840] sm:$0xff]
        %v517 = vld [vmem:[%s234 + $0x848] sm:$0xff]
        %v518 = vld [vmem:[%s234 + $0x850] sm:$0xff]
        %v519 = vld [vmem:[%s234 + $0x858] sm:$0xff]
        %v520 = vld [vmem:[%s234 + $0x860] sm:$0xff]
        %v521 = vld [vmem:[%s234 + $0x868] sm:$0xff]
        %v522 = vld [vmem:[%s234 + $0x870] sm:$0xff]
        %v523 = vld [vmem:[%s234 + $0x878] sm:$0xff]
        %v524 = vld [vmem:[%s234 + $0x880] sm:$0xff]
        %v525 = vld [vmem:[%s234 + $0x888] sm:$0xff]
        %v526 = vld [vmem:[%s234 + $0x890] sm:$0xff]
        %v527 = vld [vmem:[%s234 + $0x898] sm:$0xff]
        %v528 = vld [vmem:[%s234 + $0x8a0] sm:$0xff]
        %v529 = vld [vmem:[%s234 + $0x8a8] sm:$0xff]
        %v530 = vld [vmem:[%s234 + $0x8b0] sm:$0xff]
        %v531 = vld [vmem:[%s234 + $0x8b8] sm:$0xff]
        %v532 = vld [vmem:[%s234 + $0x8c0] sm:$0xff]
        %v533 = vld [vmem:[%s234 + $0x8c8] sm:$0xff]
        %v534 = vld [vmem:[%s234 + $0x8d0] sm:$0xff]
        %v535 = vld [vmem:[%s234 + $0x8d8] sm:$0xff]
        %v536 = vld [vmem:[%s234 + $0x8e0] sm:$0xff]
        %v537 = vld [vmem:[%s234 + $0x8e8] sm:$0xff]
        %v538 = vld [vmem:[%s234 + $0x8f0] sm:$0xff]
        %v539 = vld [vmem:[%s234 + $0x8f8] sm:$0xff]
        %v540 = vld [vmem:[%s234 + $0x900] sm:$0xff]
        %v541 = vld [vmem:[%s234 + $0x908] sm:$0xff]
        %v542 = vld [vmem:[%s234 + $0x910] sm:$0xff]
        %v543 = vld [vmem:[%s234 + $0x918] sm:$0xff]
        %v544 = vld [vmem:[%s234 + $0x920] sm:$0xff]
        %v545 = vld [vmem:[%s234 + $0x928] sm:$0xff]
        %v546 = vld [vmem:[%s234 + $0x930] sm:$0xff]
        %v547 = vld [vmem:[%s234 + $0x938] sm:$0xff]
        %v548 = vld [vmem:[%s234 + $0x940] sm:$0xff]
        %v549 = vld [vmem:[%s234 + $0x948] sm:$0xff]
        %v550 = vld [vmem:[%s234 + $0x950] sm:$0xff]
        %v551 = vld [vmem:[%s234 + $0x958] sm:$0xff]
        %v552 = vld [vmem:[%s234 + $0x960] sm:$0xff]
        %v553 = vld [vmem:[%s234 + $0x968] sm:$0xff]
        %v554 = vld [vmem:[%s234 + $0x970] sm:$0xff]
        %v555 = vld [vmem:[%s234 + $0x978] sm:$0xff]
        %v556 = vld [vmem:[%s234 + $0x980] sm:$0xff]
        %v557 = vld [vmem:[%s234 + $0x988] sm:$0xff]
        %v558 = vld [vmem:[%s234 + $0x990] sm:$0xff]
        %v559 = vld [vmem:[%s234 + $0x998] sm:$0xff]
        %v560 = vld [vmem:[%s234 + $0x9a0] sm:$0xff]
        %v561 = vld [vmem:[%s234 + $0x9a8] sm:$0xff]
        %v562 = vld [vmem:[%s234 + $0x9b0] sm:$0xff]
        %v563 = vld [vmem:[%s234 + $0x9b8] sm:$0xff]
        %v564 = vld [vmem:[%s234 + $0x9c0] sm:$0xff]
        %v565 = vld [vmem:[%s234 + $0x9c8] sm:$0xff]
        %v566 = vld [vmem:[%s234 + $0x9d0] sm:$0xff]
        %v567 = vld [vmem:[%s234 + $0x9d8] sm:$0xff]
        %v568 = vld [vmem:[%s234 + $0x9e0] sm:$0xff]
        %v569 = vld [vmem:[%s234 + $0x9e8] sm:$0xff]
        %v570 = vld [vmem:[%s234 + $0x9f0] sm:$0xff]
        %v571 = vld [vmem:[%s234 + $0x9f8] sm:$0xff]
        %v572 = vld [vmem:[%s234 + $0xa00] sm:$0xff]
        %v573 = vld [vmem:[%s234 + $0xa08] sm:$0xff]
        %v574 = vld [vmem:[%s234 + $0xa10] sm:$0xff]
        %v575 = vld [vmem:[%s234 + $0xa18] sm:$0xff]
        %v576 = vld [vmem:[%s234 + $0xa20] sm:$0xff]
        %v577 = vld [vmem:[%s234 + $0xa28] sm:$0xff]
        %v578 = vld [vmem:[%s234 + $0xa30] sm:$0xff]
        %v579 = vld [vmem:[%s234 + $0xa38] sm:$0xff]
        %v580 = vld [vmem:[%s234 + $0xa40] sm:$0xff]
        %v581 = vld [vmem:[%s234 + $0xa48] sm:$0xff]
        %v582 = vld [vmem:[%s234 + $0xa50] sm:$0xff]
        %v583 = vld [vmem:[%s234 + $0xa58] sm:$0xff]
        %v584 = vld [vmem:[%s234 + $0xa60] sm:$0xff]
        %v585 = vld [vmem:[%s234 + $0xa68] sm:$0xff]
        %v586 = vld [vmem:[%s234 + $0xa70] sm:$0xff]
        %v587 = vld [vmem:[%s234 + $0xa78] sm:$0xff]
        %v588 = vld [vmem:[%s234 + $0xa80] sm:$0xff]
        %v589 = vld [vmem:[%s234 + $0xa88] sm:$0xff]
        %v590 = vld [vmem:[%s234 + $0xa90] sm:$0xff]
        %v591 = vld [vmem:[%s234 + $0xa98] sm:$0xff]
        %v592 = vld [vmem:[%s234 + $0xaa0] sm:$0xff]
        %v593 = vld [vmem:[%s234 + $0xaa8] sm:$0xff]
        %v594 = vld [vmem:[%s234 + $0xab0] sm:$0xff]
        %v595 = vld [vmem:[%s234 + $0xab8] sm:$0xff]
        %v596 = vld [vmem:[%s234 + $0xac0] sm:$0xff]
        %v597 = vld [vmem:[%s234 + $0xac8] sm:$0xff]
        %v598 = vld [vmem:[%s234 + $0xad0] sm:$0xff]
        %v599 = vld [vmem:[%s234 + $0xad8] sm:$0xff]
        %v600 = vld [vmem:[%s234 + $0xae0] sm:$0xff]
        %v601 = vld [vmem:[%s234 + $0xae8] sm:$0xff]
        %v602 = vld [vmem:[%s234 + $0xaf0] sm:$0xff]
        %v603 = vld [vmem:[%s234 + $0xaf8] sm:$0xff]
        %v604 = vld [vmem:[%s234 + $0xb00] sm:$0xff]
        %v605 = vld [vmem:[%s234 + $0xb08] sm:$0xff]
        %v606 = vld [vmem:[%s234 + $0xb10] sm:$0xff]
        %v607 = vld [vmem:[%s234 + $0xb18] sm:$0xff]
        %v608 = vld [vmem:[%s234 + $0xb20] sm:$0xff]
        %v609 = vld [vmem:[%s234 + $0xb28] sm:$0xff]
        %v610 = vld [vmem:[%s234 + $0xb30] sm:$0xff]
        %v611 = vld [vmem:[%s234 + $0xb38] sm:$0xff]
        %v612 = vld [vmem:[%s234 + $0xb40] sm:$0xff]
        %v613 = vld [vmem:[%s234 + $0xb48] sm:$0xff]
        %v614 = vld [vmem:[%s234 + $0xb50] sm:$0xff]
        %v615 = vld [vmem:[%s234 + $0xb58] sm:$0xff]
        %v616 = vld [vmem:[%s234 + $0xb60] sm:$0xff]
        %v617 = vld [vmem:[%s234 + $0xb68] sm:$0xff]
        %v618 = vld [vmem:[%s234 + $0xb70] sm:$0xff]
        %v619 = vld [vmem:[%s234 + $0xb78] sm:$0xff]
        %v620 = vld [vmem:[%s234 + $0xb80] sm:$0xff]
        %v621 = vld [vmem:[%s234 + $0xb88] sm:$0xff]
        %v622 = vld [vmem:[%s234 + $0xb90] sm:$0xff]
        %v623 = vld [vmem:[%s234 + $0xb98] sm:$0xff]
        %v624 = vld [vmem:[%s234 + $0xba0] sm:$0xff]
        %v625 = vld [vmem:[%s234 + $0xba8] sm:$0xff]
        %v626 = vld [vmem:[%s234 + $0xbb0] sm:$0xff]
        %v627 = vld [vmem:[%s234 + $0xbb8] sm:$0xff]
        %v628 = vld [vmem:[%s234 + $0xbc0] sm:$0xff]
        %v629 = vld [vmem:[%s234 + $0xbc8] sm:$0xff]
        %v630 = vld [vmem:[%s234 + $0xbd0] sm:$0xff]
        %v631 = vld [vmem:[%s234 + $0xbd8] sm:$0xff]
        %v632 = vld [vmem:[%s234 + $0xbe0] sm:$0xff]
        %v633 = vld [vmem:[%s234 + $0xbe8] sm:$0xff]
        %v634 = vld [vmem:[%s234 + $0xbf0] sm:$0xff]
        %v635 = vld [vmem:[%s234 + $0xbf8] sm:$0xff]
        %v636 = vld [vmem:[%s234 + $0xc00] sm:$0xff]
        %v637 = vld [vmem:[%s234 + $0xc08] sm:$0xff]
        %v638 = vld [vmem:[%s234 + $0xc10] sm:$0xff]
        %v639 = vld [vmem:[%s234 + $0xc18] sm:$0xff]
        %v640 = vld [vmem:[%s234 + $0xc20] sm:$0xff]
        %v641 = vld [vmem:[%s234 + $0xc28] sm:$0xff]
        %v642 = vld [vmem:[%s234 + $0xc30] sm:$0xff]
        %v643 = vld [vmem:[%s234 + $0xc38] sm:$0xff]
        %v644 = vld [vmem:[%s234 + $0xc40] sm:$0xff]
        %v645 = vld [vmem:[%s234 + $0xc48] sm:$0xff]
        %v646 = vld [vmem:[%s234 + $0xc50] sm:$0xff]
        %v647 = vld [vmem:[%s234 + $0xc58] sm:$0xff]
        %v648 = vld [vmem:[%s234 + $0xc60] sm:$0xff]
        %v649 = vld [vmem:[%s234 + $0xc68] sm:$0xff]
        %v650 = vld [vmem:[%s234 + $0xc70] sm:$0xff]
        %v651 = vld [vmem:[%s234 + $0xc78] sm:$0xff]
        %v652 = vld [vmem:[%s234 + $0xc80] sm:$0xff]
        %v653 = vld [vmem:[%s234 + $0xc88] sm:$0xff]
        %v654 = vld [vmem:[%s234 + $0xc90] sm:$0xff]
        %v655 = vld [vmem:[%s234 + $0xc98] sm:$0xff]
        %v656 = vld [vmem:[%s234 + $0xca0] sm:$0xff]
        %v657 = vld [vmem:[%s234 + $0xca8] sm:$0xff]
        %v658 = vld [vmem:[%s234 + $0xcb0] sm:$0xff]
        %v659 = vld [vmem:[%s234 + $0xcb8] sm:$0xff]
        %v660 = vld [vmem:[%s234 + $0xcc0] sm:$0xff]
        %v661 = vld [vmem:[%s234 + $0xcc8] sm:$0xff]
        %v662 = vld [vmem:[%s234 + $0xcd0] sm:$0xff]
        %v663 = vld [vmem:[%s234 + $0xcd8] sm:$0xff]
        %v664 = vld [vmem:[%s234 + $0xce0] sm:$0xff]
        %v665 = vld [vmem:[%s234 + $0xce8] sm:$0xff]
        %v666 = vld [vmem:[%s234 + $0xcf0] sm:$0xff]
        %v667 = vld [vmem:[%s234 + $0xcf8] sm:$0xff]
        %v668 = vld [vmem:[%s234 + $0xd00] sm:$0xff]
        %v669 = vld [vmem:[%s234 + $0xd08] sm:$0xff]
        %v670 = vld [vmem:[%s234 + $0xd10] sm:$0xff]
        %v671 = vld [vmem:[%s234 + $0xd18] sm:$0xff]
        %v672 = vld [vmem:[%s234 + $0xd20] sm:$0xff]
        %v673 = vld [vmem:[%s234 + $0xd28] sm:$0xff]
        %v674 = vld [vmem:[%s234 + $0xd30] sm:$0xff]
        %v675 = vld [vmem:[%s234 + $0xd38] sm:$0xff]
        %v676 = vld [vmem:[%s234 + $0xd40] sm:$0xff]
        %v677 = vld [vmem:[%s234 + $0xd48] sm:$0xff]
        %v678 = vld [vmem:[%s234 + $0xd50] sm:$0xff]
        %v679 = vld [vmem:[%s234 + $0xd58] sm:$0xff]
        %v680 = vld [vmem:[%s234 + $0xd60] sm:$0xff]
        %v681 = vld [vmem:[%s234 + $0xd68] sm:$0xff]
        %v682 = vld [vmem:[%s234 + $0xd70] sm:$0xff]
        %v683 = vld [vmem:[%s234 + $0xd78] sm:$0xff]
        %v684 = vld [vmem:[%s234 + $0xd80] sm:$0xff]
        %v685 = vld [vmem:[%s234 + $0xd88] sm:$0xff]
        %v686 = vld [vmem:[%s234 + $0xd90] sm:$0xff]
        %v687 = vld [vmem:[%s234 + $0xd98] sm:$0xff]
        %v688 = vld [vmem:[%s234 + $0xda0] sm:$0xff]
        %v689 = vld [vmem:[%s234 + $0xda8] sm:$0xff]
        %v690 = vld [vmem:[%s234 + $0xdb0] sm:$0xff]
        %v691 = vld [vmem:[%s234 + $0xdb8] sm:$0xff]
        %v692 = vld [vmem:[%s234 + $0xdc0] sm:$0xff]
        %v693 = vld [vmem:[%s234 + $0xdc8] sm:$0xff]
        %v694 = vld [vmem:[%s234 + $0xdd0] sm:$0xff]
        %v695 = vld [vmem:[%s234 + $0xdd8] sm:$0xff]
        %v696 = vld [vmem:[%s234 + $0xde0] sm:$0xff]
        %v697 = vld [vmem:[%s234 + $0xde8] sm:$0xff]
        %v698 = vld [vmem:[%s234 + $0xdf0] sm:$0xff]
        %v699 = vld [vmem:[%s234 + $0xdf8] sm:$0xff]
        %v700 = vld [vmem:[%s234 + $0xe00] sm:$0xff]
        %v701 = vld [vmem:[%s234 + $0xe08] sm:$0xff]
        %v702 = vld [vmem:[%s234 + $0xe10] sm:$0xff]
        %v703 = vld [vmem:[%s234 + $0xe18] sm:$0xff]
        %v704 = vld [vmem:[%s234 + $0xe20] sm:$0xff]
        %v705 = vld [vmem:[%s234 + $0xe28] sm:$0xff]
        %v706 = vld [vmem:[%s234 + $0xe30] sm:$0xff]
        %v707 = vld [vmem:[%s234 + $0xe38] sm:$0xff]
        %v708 = vld [vmem:[%s234 + $0xe40] sm:$0xff]
        %v709 = vld [vmem:[%s234 + $0xe48] sm:$0xff]
        %v710 = vld [vmem:[%s234 + $0xe50] sm:$0xff]
        %v711 = vld [vmem:[%s234 + $0xe58] sm:$0xff]
        %v712 = vld [vmem:[%s234 + $0xe60] sm:$0xff]
        %v713 = vld [vmem:[%s234 + $0xe68] sm:$0xff]
        %v714 = vld [vmem:[%s234 + $0xe70] sm:$0xff]
        %v715 = vld [vmem:[%s234 + $0xe78] sm:$0xff]
        %v716 = vld [vmem:[%s234 + $0xe80] sm:$0xff]
        %v717 = vld [vmem:[%s234 + $0xe88] sm:$0xff]
        %v718 = vld [vmem:[%s234 + $0xe90] sm:$0xff]
        %v719 = vld [vmem:[%s234 + $0xe98] sm:$0xff]
        %v720 = vld [vmem:[%s234 + $0xea0] sm:$0xff]
        %v721 = vld [vmem:[%s234 + $0xea8] sm:$0xff]
        %v722 = vld [vmem:[%s234 + $0xeb0] sm:$0xff]
        %v723 = vld [vmem:[%s234 + $0xeb8] sm:$0xff]
        %v724 = vld [vmem:[%s234 + $0xec0] sm:$0xff]
        %v725 = vld [vmem:[%s234 + $0xec8] sm:$0xff]
        %v726 = vld [vmem:[%s234 + $0xed0] sm:$0xff]
        %v727 = vld [vmem:[%s234 + $0xed8] sm:$0xff]
        %v728 = vld [vmem:[%s234 + $0xee0] sm:$0xff]
        %v729 = vld [vmem:[%s234 + $0xee8] sm:$0xff]
        %v730 = vld [vmem:[%s234 + $0xef0] sm:$0xff]
        %v731 = vld [vmem:[%s234 + $0xef8] sm:$0xff]
        %v732 = vld [vmem:[%s234 + $0xf00] sm:$0xff]
        %v733 = vld [vmem:[%s234 + $0xf08] sm:$0xff]
        %v734 = vld [vmem:[%s234 + $0xf10] sm:$0xff]
        %v735 = vld [vmem:[%s234 + $0xf18] sm:$0xff]
        %v736 = vld [vmem:[%s234 + $0xf20] sm:$0xff]
        %v737 = vld [vmem:[%s234 + $0xf28] sm:$0xff]
        %v738 = vld [vmem:[%s234 + $0xf30] sm:$0xff]
        %v739 = vld [vmem:[%s234 + $0xf38] sm:$0xff]
        %v740 = vld [vmem:[%s234 + $0xf40] sm:$0xff]
        %v741 = vld [vmem:[%s234 + $0xf48] sm:$0xff]
        %v742 = vld [vmem:[%s234 + $0xf50] sm:$0xff]
        %v743 = vld [vmem:[%s234 + $0xf58] sm:$0xff]
        %v744 = vld [vmem:[%s234 + $0xf60] sm:$0xff]
        %v745 = vld [vmem:[%s234 + $0xf68] sm:$0xff]
        %v746 = vld [vmem:[%s234 + $0xf70] sm:$0xff]
        %v747 = vld [vmem:[%s234 + $0xf78] sm:$0xff]
        %v748 = vld [vmem:[%s234 + $0xf80] sm:$0xff]
        %v749 = vld [vmem:[%s234 + $0xf88] sm:$0xff]
        %v750 = vld [vmem:[%s234 + $0xf90] sm:$0xff]
        %v751 = vld [vmem:[%s234 + $0xf98] sm:$0xff]
        %v752 = vld [vmem:[%s234 + $0xfa0] sm:$0xff]
        %v753 = vld [vmem:[%s234 + $0xfa8] sm:$0xff]
        %v754 = vld [vmem:[%s234 + $0xfb0] sm:$0xff]
        %v755 = vld [vmem:[%s234 + $0xfb8] sm:$0xff]
        %v756 = vld [vmem:[%s234 + $0xfc0] sm:$0xff]
        %v757 = vld [vmem:[%s234 + $0xfc8] sm:$0xff]
        %v758 = vld [vmem:[%s234 + $0xfd0] sm:$0xff]
        %v759 = vld [vmem:[%s234 + $0xfd8] sm:$0xff]
        %v760 = vld [vmem:[%s234 + $0xfe0] sm:$0xff]
        %v761 = vld [vmem:[%s234 + $0xfe8] sm:$0xff]
        %v762 = vld [vmem:[%s234 + $0xff0] sm:$0xff]
        %v763 = vld [vmem:[%s234 + $0xff8] sm:$0xff]
        %764 = vxpose.xlu0.b32.start [1/16] %v252, 128
        %765 = vxpose.xlu0.b32.cont [2/16] %v253, 128
        %766 = vxpose.xlu0.b32.cont [3/16] %v254, 128
        %767 = vxpose.xlu0.b32.cont [4/16] %v255, 128
        %768 = vxpose.xlu0.b32.cont [5/16] %v256, 128
        %769 = vxpose.xlu0.b32.cont [6/16] %v257, 128
        %770 = vxpose.xlu0.b32.cont [7/16] %v258, 128
        %771 = vxpose.xlu0.b32.cont [8/16] %v259, 128
        %772 = vxpose.xlu0.b32.cont [9/16] %v260, 128
        %773 = vxpose.xlu0.b32.cont [10/16] %v261, 128
        %774 = vxpose.xlu0.b32.cont [11/16] %v262, 128
        %775 = vxpose.xlu0.b32.cont [12/16] %v263, 128
        %776 = vxpose.xlu0.b32.cont [13/16] %v264, 128
        %777 = vxpose.xlu0.b32.cont [14/16] %v265, 128
        %778 = vxpose.xlu0.b32.cont [15/16] %v266, 128
        %779 = vxpose.xlu0.b32.end [16/16] %v267, 128
        %v780 = vpop.trf.xlu0
        %v781 = vpop.trf.xlu0
        %v782 = vpop.trf.xlu0
        %v783 = vpop.trf.xlu0
        %v784 = vpop.trf.xlu0
        %v785 = vpop.trf.xlu0
        %v786 = vpop.trf.xlu0
        %v787 = vpop.trf.xlu0
        %v788 = vpop.trf.xlu0
        %v789 = vpop.trf.xlu0
        %v790 = vpop.trf.xlu0
        %v791 = vpop.trf.xlu0
        %v792 = vpop.trf.xlu0
        %v793 = vpop.trf.xlu0
        %v794 = vpop.trf.xlu0
        %v795 = vpop.trf.xlu0
        %796 = vxpose.xlu0.b32.start [1/16] %v268, 128
        %797 = vxpose.xlu0.b32.cont [2/16] %v269, 128
        %798 = vxpose.xlu0.b32.cont [3/16] %v270, 128
        %799 = vxpose.xlu0.b32.cont [4/16] %v271, 128
        %800 = vxpose.xlu0.b32.cont [5/16] %v272, 128
        %801 = vxpose.xlu0.b32.cont [6/16] %v273, 128
        %802 = vxpose.xlu0.b32.cont [7/16] %v274, 128
        %803 = vxpose.xlu0.b32.cont [8/16] %v275, 128
        %804 = vxpose.xlu0.b32.cont [9/16] %v276, 128
        %805 = vxpose.xlu0.b32.cont [10/16] %v277, 128
        %806 = vxpose.xlu0.b32.cont [11/16] %v278, 128
        %807 = vxpose.xlu0.b32.cont [12/16] %v279, 128
        %808 = vxpose.xlu0.b32.cont [13/16] %v280, 128
        %809 = vxpose.xlu0.b32.cont [14/16] %v281, 128
        %810 = vxpose.xlu0.b32.cont [15/16] %v282, 128
        %811 = vxpose.xlu0.b32.end [16/16] %v283, 128
        %v812 = vpop.trf.xlu0
        %v813 = vpop.trf.xlu0
        %v814 = vpop.trf.xlu0
        %v815 = vpop.trf.xlu0
        %v816 = vpop.trf.xlu0
        %v817 = vpop.trf.xlu0
        %v818 = vpop.trf.xlu0
        %v819 = vpop.trf.xlu0
        %v820 = vpop.trf.xlu0
        %v821 = vpop.trf.xlu0
        %v822 = vpop.trf.xlu0
        %v823 = vpop.trf.xlu0
        %v824 = vpop.trf.xlu0
        %v825 = vpop.trf.xlu0
        %v826 = vpop.trf.xlu0
        %v827 = vpop.trf.xlu0
        %828 = vxpose.xlu0.b32.start [1/16] %v284, 128
        %829 = vxpose.xlu0.b32.cont [2/16] %v285, 128
        %830 = vxpose.xlu0.b32.cont [3/16] %v286, 128
        %831 = vxpose.xlu0.b32.cont [4/16] %v287, 128
        %832 = vxpose.xlu0.b32.cont [5/16] %v288, 128
        %833 = vxpose.xlu0.b32.cont [6/16] %v289, 128
        %834 = vxpose.xlu0.b32.cont [7/16] %v290, 128
        %835 = vxpose.xlu0.b32.cont [8/16] %v291, 128
        %836 = vxpose.xlu0.b32.cont [9/16] %v292, 128
        %837 = vxpose.xlu0.b32.cont [10/16] %v293, 128
        %838 = vxpose.xlu0.b32.cont [11/16] %v294, 128
        %839 = vxpose.xlu0.b32.cont [12/16] %v295, 128
        %840 = vxpose.xlu0.b32.cont [13/16] %v296, 128
        %841 = vxpose.xlu0.b32.cont [14/16] %v297, 128
        %842 = vxpose.xlu0.b32.cont [15/16] %v298, 128
        %843 = vxpose.xlu0.b32.end [16/16] %v299, 128
        %v844 = vpop.trf.xlu0
        %v845 = vpop.trf.xlu0
        %v846 = vpop.trf.xlu0
        %v847 = vpop.trf.xlu0
        %v848 = vpop.trf.xlu0
        %v849 = vpop.trf.xlu0
        %v850 = vpop.trf.xlu0
        %v851 = vpop.trf.xlu0
        %v852 = vpop.trf.xlu0
        %v853 = vpop.trf.xlu0
        %v854 = vpop.trf.xlu0
        %v855 = vpop.trf.xlu0
        %v856 = vpop.trf.xlu0
        %v857 = vpop.trf.xlu0
        %v858 = vpop.trf.xlu0
        %v859 = vpop.trf.xlu0
        %860 = vxpose.xlu0.b32.start [1/16] %v300, 128
        %861 = vxpose.xlu0.b32.cont [2/16] %v301, 128
        %862 = vxpose.xlu0.b32.cont [3/16] %v302, 128
        %863 = vxpose.xlu0.b32.cont [4/16] %v303, 128
        %864 = vxpose.xlu0.b32.cont [5/16] %v304, 128
        %865 = vxpose.xlu0.b32.cont [6/16] %v305, 128
        %866 = vxpose.xlu0.b32.cont [7/16] %v306, 128
        %867 = vxpose.xlu0.b32.cont [8/16] %v307, 128
        %868 = vxpose.xlu0.b32.cont [9/16] %v308, 128
        %869 = vxpose.xlu0.b32.cont [10/16] %v309, 128
        %870 = vxpose.xlu0.b32.cont [11/16] %v310, 128
        %871 = vxpose.xlu0.b32.cont [12/16] %v311, 128
        %872 = vxpose.xlu0.b32.cont [13/16] %v312, 128
        %873 = vxpose.xlu0.b32.cont [14/16] %v313, 128
        %874 = vxpose.xlu0.b32.cont [15/16] %v314, 128
        %875 = vxpose.xlu0.b32.end [16/16] %v315, 128
        %v876 = vpop.trf.xlu0
        %v877 = vpop.trf.xlu0
        %v878 = vpop.trf.xlu0
        %v879 = vpop.trf.xlu0
        %v880 = vpop.trf.xlu0
        %v881 = vpop.trf.xlu0
        %v882 = vpop.trf.xlu0
        %v883 = vpop.trf.xlu0
        %v884 = vpop.trf.xlu0
        %v885 = vpop.trf.xlu0
        %v886 = vpop.trf.xlu0
        %v887 = vpop.trf.xlu0
        %v888 = vpop.trf.xlu0
        %v889 = vpop.trf.xlu0
        %v890 = vpop.trf.xlu0
        %v891 = vpop.trf.xlu0
        %892 = vxpose.xlu0.b32.start [1/16] %v316, 128
        %893 = vxpose.xlu0.b32.cont [2/16] %v317, 128
        %894 = vxpose.xlu0.b32.cont [3/16] %v318, 128
        %895 = vxpose.xlu0.b32.cont [4/16] %v319, 128
        %896 = vxpose.xlu0.b32.cont [5/16] %v320, 128
        %897 = vxpose.xlu0.b32.cont [6/16] %v321, 128
        %898 = vxpose.xlu0.b32.cont [7/16] %v322, 128
        %899 = vxpose.xlu0.b32.cont [8/16] %v323, 128
        %900 = vxpose.xlu0.b32.cont [9/16] %v324, 128
        %901 = vxpose.xlu0.b32.cont [10/16] %v325, 128
        %902 = vxpose.xlu0.b32.cont [11/16] %v326, 128
        %903 = vxpose.xlu0.b32.cont [12/16] %v327, 128
        %904 = vxpose.xlu0.b32.cont [13/16] %v328, 128
        %905 = vxpose.xlu0.b32.cont [14/16] %v329, 128
        %906 = vxpose.xlu0.b32.cont [15/16] %v330, 128
        %907 = vxpose.xlu0.b32.end [16/16] %v331, 128
        %v908 = vpop.trf.xlu0
        %v909 = vpop.trf.xlu0
        %v910 = vpop.trf.xlu0
        %v911 = vpop.trf.xlu0
        %v912 = vpop.trf.xlu0
        %v913 = vpop.trf.xlu0
        %v914 = vpop.trf.xlu0
        %v915 = vpop.trf.xlu0
        %v916 = vpop.trf.xlu0
        %v917 = vpop.trf.xlu0
        %v918 = vpop.trf.xlu0
        %v919 = vpop.trf.xlu0
        %v920 = vpop.trf.xlu0
        %v921 = vpop.trf.xlu0
        %v922 = vpop.trf.xlu0
        %v923 = vpop.trf.xlu0
        %924 = vxpose.xlu0.b32.start [1/16] %v332, 128
        %925 = vxpose.xlu0.b32.cont [2/16] %v333, 128
        %926 = vxpose.xlu0.b32.cont [3/16] %v334, 128
        %927 = vxpose.xlu0.b32.cont [4/16] %v335, 128
        %928 = vxpose.xlu0.b32.cont [5/16] %v336, 128
        %929 = vxpose.xlu0.b32.cont [6/16] %v337, 128
        %930 = vxpose.xlu0.b32.cont [7/16] %v338, 128
        %931 = vxpose.xlu0.b32.cont [8/16] %v339, 128
        %932 = vxpose.xlu0.b32.cont [9/16] %v340, 128
        %933 = vxpose.xlu0.b32.cont [10/16] %v341, 128
        %934 = vxpose.xlu0.b32.cont [11/16] %v342, 128
        %935 = vxpose.xlu0.b32.cont [12/16] %v343, 128
        %936 = vxpose.xlu0.b32.cont [13/16] %v344, 128
        %937 = vxpose.xlu0.b32.cont [14/16] %v345, 128
        %938 = vxpose.xlu0.b32.cont [15/16] %v346, 128
        %939 = vxpose.xlu0.b32.end [16/16] %v347, 128
        %v940 = vpop.trf.xlu0
        %v941 = vpop.trf.xlu0
        %v942 = vpop.trf.xlu0
        %v943 = vpop.trf.xlu0
        %v944 = vpop.trf.xlu0
        %v945 = vpop.trf.xlu0
        %v946 = vpop.trf.xlu0
        %v947 = vpop.trf.xlu0
        %v948 = vpop.trf.xlu0
        %v949 = vpop.trf.xlu0
        %v950 = vpop.trf.xlu0
        %v951 = vpop.trf.xlu0
        %v952 = vpop.trf.xlu0
        %v953 = vpop.trf.xlu0
        %v954 = vpop.trf.xlu0
        %v955 = vpop.trf.xlu0
        %956 = vxpose.xlu0.b32.start [1/16] %v348, 128
        %957 = vxpose.xlu0.b32.cont [2/16] %v349, 128
        %958 = vxpose.xlu0.b32.cont [3/16] %v350, 128
        %959 = vxpose.xlu0.b32.cont [4/16] %v351, 128
        %960 = vxpose.xlu0.b32.cont [5/16] %v352, 128
        %961 = vxpose.xlu0.b32.cont [6/16] %v353, 128
        %962 = vxpose.xlu0.b32.cont [7/16] %v354, 128
        %963 = vxpose.xlu0.b32.cont [8/16] %v355, 128
        %964 = vxpose.xlu0.b32.cont [9/16] %v356, 128
        %965 = vxpose.xlu0.b32.cont [10/16] %v357, 128
        %966 = vxpose.xlu0.b32.cont [11/16] %v358, 128
        %967 = vxpose.xlu0.b32.cont [12/16] %v359, 128
        %968 = vxpose.xlu0.b32.cont [13/16] %v360, 128
        %969 = vxpose.xlu0.b32.cont [14/16] %v361, 128
        %970 = vxpose.xlu0.b32.cont [15/16] %v362, 128
        %971 = vxpose.xlu0.b32.end [16/16] %v363, 128
        %v972 = vpop.trf.xlu0
        %v973 = vpop.trf.xlu0
        %v974 = vpop.trf.xlu0
        %v975 = vpop.trf.xlu0
        %v976 = vpop.trf.xlu0
        %v977 = vpop.trf.xlu0
        %v978 = vpop.trf.xlu0
        %v979 = vpop.trf.xlu0
        %v980 = vpop.trf.xlu0
        %v981 = vpop.trf.xlu0
        %v982 = vpop.trf.xlu0
        %v983 = vpop.trf.xlu0
        %v984 = vpop.trf.xlu0
        %v985 = vpop.trf.xlu0
        %v986 = vpop.trf.xlu0
        %v987 = vpop.trf.xlu0
        %988 = vxpose.xlu0.b32.start [1/16] %v364, 128
        %989 = vxpose.xlu0.b32.cont [2/16] %v365, 128
        %990 = vxpose.xlu0.b32.cont [3/16] %v366, 128
        %991 = vxpose.xlu0.b32.cont [4/16] %v367, 128
        %992 = vxpose.xlu0.b32.cont [5/16] %v368, 128
        %993 = vxpose.xlu0.b32.cont [6/16] %v369, 128
        %994 = vxpose.xlu0.b32.cont [7/16] %v370, 128
        %995 = vxpose.xlu0.b32.cont [8/16] %v371, 128
        %996 = vxpose.xlu0.b32.cont [9/16] %v372, 128
        %997 = vxpose.xlu0.b32.cont [10/16] %v373, 128
        %998 = vxpose.xlu0.b32.cont [11/16] %v374, 128
        %999 = vxpose.xlu0.b32.cont [12/16] %v375, 128
        %1000 = vxpose.xlu0.b32.cont [13/16] %v376, 128
        %1001 = vxpose.xlu0.b32.cont [14/16] %v377, 128
        %1002 = vxpose.xlu0.b32.cont [15/16] %v378, 128
        %1003 = vxpose.xlu0.b32.end [16/16] %v379, 128
        %v1004 = vpop.trf.xlu0
        %v1005 = vpop.trf.xlu0
        %v1006 = vpop.trf.xlu0
        %v1007 = vpop.trf.xlu0
        %v1008 = vpop.trf.xlu0
        %v1009 = vpop.trf.xlu0
        %v1010 = vpop.trf.xlu0
        %v1011 = vpop.trf.xlu0
        %v1012 = vpop.trf.xlu0
        %v1013 = vpop.trf.xlu0
        %v1014 = vpop.trf.xlu0
        %v1015 = vpop.trf.xlu0
        %v1016 = vpop.trf.xlu0
        %v1017 = vpop.trf.xlu0
        %v1018 = vpop.trf.xlu0
        %v1019 = vpop.trf.xlu0
        %1020 = vxpose.xlu0.b32.start [1/16] %v380, 128
        %1021 = vxpose.xlu0.b32.cont [2/16] %v381, 128
        %1022 = vxpose.xlu0.b32.cont [3/16] %v382, 128
        %1023 = vxpose.xlu0.b32.cont [4/16] %v383, 128
        %1024 = vxpose.xlu0.b32.cont [5/16] %v384, 128
        %1025 = vxpose.xlu0.b32.cont [6/16] %v385, 128
        %1026 = vxpose.xlu0.b32.cont [7/16] %v386, 128
        %1027 = vxpose.xlu0.b32.cont [8/16] %v387, 128
        %1028 = vxpose.xlu0.b32.cont [9/16] %v388, 128
        %1029 = vxpose.xlu0.b32.cont [10/16] %v389, 128
        %1030 = vxpose.xlu0.b32.cont [11/16] %v390, 128
        %1031 = vxpose.xlu0.b32.cont [12/16] %v391, 128
        %1032 = vxpose.xlu0.b32.cont [13/16] %v392, 128
        %1033 = vxpose.xlu0.b32.cont [14/16] %v393, 128
        %1034 = vxpose.xlu0.b32.cont [15/16] %v394, 128
        %1035 = vxpose.xlu0.b32.end [16/16] %v395, 128
        %v1036 = vpop.trf.xlu0
        %v1037 = vpop.trf.xlu0
        %v1038 = vpop.trf.xlu0
        %v1039 = vpop.trf.xlu0
        %v1040 = vpop.trf.xlu0
        %v1041 = vpop.trf.xlu0
        %v1042 = vpop.trf.xlu0
        %v1043 = vpop.trf.xlu0
        %v1044 = vpop.trf.xlu0
        %v1045 = vpop.trf.xlu0
        %v1046 = vpop.trf.xlu0
        %v1047 = vpop.trf.xlu0
        %v1048 = vpop.trf.xlu0
        %v1049 = vpop.trf.xlu0
        %v1050 = vpop.trf.xlu0
        %v1051 = vpop.trf.xlu0
        %1052 = vxpose.xlu0.b32.start [1/16] %v396, 128
        %1053 = vxpose.xlu0.b32.cont [2/16] %v397, 128
        %1054 = vxpose.xlu0.b32.cont [3/16] %v398, 128
        %1055 = vxpose.xlu0.b32.cont [4/16] %v399, 128
        %1056 = vxpose.xlu0.b32.cont [5/16] %v400, 128
        %1057 = vxpose.xlu0.b32.cont [6/16] %v401, 128
        %1058 = vxpose.xlu0.b32.cont [7/16] %v402, 128
        %1059 = vxpose.xlu0.b32.cont [8/16] %v403, 128
        %1060 = vxpose.xlu0.b32.cont [9/16] %v404, 128
        %1061 = vxpose.xlu0.b32.cont [10/16] %v405, 128
        %1062 = vxpose.xlu0.b32.cont [11/16] %v406, 128
        %1063 = vxpose.xlu0.b32.cont [12/16] %v407, 128
        %1064 = vxpose.xlu0.b32.cont [13/16] %v408, 128
        %1065 = vxpose.xlu0.b32.cont [14/16] %v409, 128
        %1066 = vxpose.xlu0.b32.cont [15/16] %v410, 128
        %1067 = vxpose.xlu0.b32.end [16/16] %v411, 128
        %v1068 = vpop.trf.xlu0
        %v1069 = vpop.trf.xlu0
        %v1070 = vpop.trf.xlu0
        %v1071 = vpop.trf.xlu0
        %v1072 = vpop.trf.xlu0
        %v1073 = vpop.trf.xlu0
        %v1074 = vpop.trf.xlu0
        %v1075 = vpop.trf.xlu0
        %v1076 = vpop.trf.xlu0
        %v1077 = vpop.trf.xlu0
        %v1078 = vpop.trf.xlu0
        %v1079 = vpop.trf.xlu0
        %v1080 = vpop.trf.xlu0
        %v1081 = vpop.trf.xlu0
        %v1082 = vpop.trf.xlu0
        %v1083 = vpop.trf.xlu0
        %1084 = vxpose.xlu0.b32.start [1/16] %v412, 128
        %1085 = vxpose.xlu0.b32.cont [2/16] %v413, 128
        %1086 = vxpose.xlu0.b32.cont [3/16] %v414, 128
        %1087 = vxpose.xlu0.b32.cont [4/16] %v415, 128
        %1088 = vxpose.xlu0.b32.cont [5/16] %v416, 128
        %1089 = vxpose.xlu0.b32.cont [6/16] %v417, 128
        %1090 = vxpose.xlu0.b32.cont [7/16] %v418, 128
        %1091 = vxpose.xlu0.b32.cont [8/16] %v419, 128
        %1092 = vxpose.xlu0.b32.cont [9/16] %v420, 128
        %1093 = vxpose.xlu0.b32.cont [10/16] %v421, 128
        %1094 = vxpose.xlu0.b32.cont [11/16] %v422, 128
        %1095 = vxpose.xlu0.b32.cont [12/16] %v423, 128
        %1096 = vxpose.xlu0.b32.cont [13/16] %v424, 128
        %1097 = vxpose.xlu0.b32.cont [14/16] %v425, 128
        %1098 = vxpose.xlu0.b32.cont [15/16] %v426, 128
        %1099 = vxpose.xlu0.b32.end [16/16] %v427, 128
        %v1100 = vpop.trf.xlu0
        %v1101 = vpop.trf.xlu0
        %v1102 = vpop.trf.xlu0
        %v1103 = vpop.trf.xlu0
        %v1104 = vpop.trf.xlu0
        %v1105 = vpop.trf.xlu0
        %v1106 = vpop.trf.xlu0
        %v1107 = vpop.trf.xlu0
        %v1108 = vpop.trf.xlu0
        %v1109 = vpop.trf.xlu0
        %v1110 = vpop.trf.xlu0
        %v1111 = vpop.trf.xlu0
        %v1112 = vpop.trf.xlu0
        %v1113 = vpop.trf.xlu0
        %v1114 = vpop.trf.xlu0
        %v1115 = vpop.trf.xlu0
        %1116 = vxpose.xlu0.b32.start [1/16] %v428, 128
        %1117 = vxpose.xlu0.b32.cont [2/16] %v429, 128
        %1118 = vxpose.xlu0.b32.cont [3/16] %v430, 128
        %1119 = vxpose.xlu0.b32.cont [4/16] %v431, 128
        %1120 = vxpose.xlu0.b32.cont [5/16] %v432, 128
        %1121 = vxpose.xlu0.b32.cont [6/16] %v433, 128
        %1122 = vxpose.xlu0.b32.cont [7/16] %v434, 128
        %1123 = vxpose.xlu0.b32.cont [8/16] %v435, 128
        %1124 = vxpose.xlu0.b32.cont [9/16] %v436, 128
        %1125 = vxpose.xlu0.b32.cont [10/16] %v437, 128
        %1126 = vxpose.xlu0.b32.cont [11/16] %v438, 128
        %1127 = vxpose.xlu0.b32.cont [12/16] %v439, 128
        %1128 = vxpose.xlu0.b32.cont [13/16] %v440, 128
        %1129 = vxpose.xlu0.b32.cont [14/16] %v441, 128
        %1130 = vxpose.xlu0.b32.cont [15/16] %v442, 128
        %1131 = vxpose.xlu0.b32.end [16/16] %v443, 128
        %v1132 = vpop.trf.xlu0
        %v1133 = vpop.trf.xlu0
        %v1134 = vpop.trf.xlu0
        %v1135 = vpop.trf.xlu0
        %v1136 = vpop.trf.xlu0
        %v1137 = vpop.trf.xlu0
        %v1138 = vpop.trf.xlu0
        %v1139 = vpop.trf.xlu0
        %v1140 = vpop.trf.xlu0
        %v1141 = vpop.trf.xlu0
        %v1142 = vpop.trf.xlu0
        %v1143 = vpop.trf.xlu0
        %v1144 = vpop.trf.xlu0
        %v1145 = vpop.trf.xlu0
        %v1146 = vpop.trf.xlu0
        %v1147 = vpop.trf.xlu0
        %1148 = vxpose.xlu0.b32.start [1/16] %v444, 128
        %1149 = vxpose.xlu0.b32.cont [2/16] %v445, 128
        %1150 = vxpose.xlu0.b32.cont [3/16] %v446, 128
        %1151 = vxpose.xlu0.b32.cont [4/16] %v447, 128
        %1152 = vxpose.xlu0.b32.cont [5/16] %v448, 128
        %1153 = vxpose.xlu0.b32.cont [6/16] %v449, 128
        %1154 = vxpose.xlu0.b32.cont [7/16] %v450, 128
        %1155 = vxpose.xlu0.b32.cont [8/16] %v451, 128
        %1156 = vxpose.xlu0.b32.cont [9/16] %v452, 128
        %1157 = vxpose.xlu0.b32.cont [10/16] %v453, 128
        %1158 = vxpose.xlu0.b32.cont [11/16] %v454, 128
        %1159 = vxpose.xlu0.b32.cont [12/16] %v455, 128
        %1160 = vxpose.xlu0.b32.cont [13/16] %v456, 128
        %1161 = vxpose.xlu0.b32.cont [14/16] %v457, 128
        %1162 = vxpose.xlu0.b32.cont [15/16] %v458, 128
        %1163 = vxpose.xlu0.b32.end [16/16] %v459, 128
        %v1164 = vpop.trf.xlu0
        %v1165 = vpop.trf.xlu0
        %v1166 = vpop.trf.xlu0
        %v1167 = vpop.trf.xlu0
        %v1168 = vpop.trf.xlu0
        %v1169 = vpop.trf.xlu0
        %v1170 = vpop.trf.xlu0
        %v1171 = vpop.trf.xlu0
        %v1172 = vpop.trf.xlu0
        %v1173 = vpop.trf.xlu0
        %v1174 = vpop.trf.xlu0
        %v1175 = vpop.trf.xlu0
        %v1176 = vpop.trf.xlu0
        %v1177 = vpop.trf.xlu0
        %v1178 = vpop.trf.xlu0
        %v1179 = vpop.trf.xlu0
        %1180 = vxpose.xlu0.b32.start [1/16] %v460, 128
        %1181 = vxpose.xlu0.b32.cont [2/16] %v461, 128
        %1182 = vxpose.xlu0.b32.cont [3/16] %v462, 128
        %1183 = vxpose.xlu0.b32.cont [4/16] %v463, 128
        %1184 = vxpose.xlu0.b32.cont [5/16] %v464, 128
        %1185 = vxpose.xlu0.b32.cont [6/16] %v465, 128
        %1186 = vxpose.xlu0.b32.cont [7/16] %v466, 128
        %1187 = vxpose.xlu0.b32.cont [8/16] %v467, 128
        %1188 = vxpose.xlu0.b32.cont [9/16] %v468, 128
        %1189 = vxpose.xlu0.b32.cont [10/16] %v469, 128
        %1190 = vxpose.xlu0.b32.cont [11/16] %v470, 128
        %1191 = vxpose.xlu0.b32.cont [12/16] %v471, 128
        %1192 = vxpose.xlu0.b32.cont [13/16] %v472, 128
        %1193 = vxpose.xlu0.b32.cont [14/16] %v473, 128
        %1194 = vxpose.xlu0.b32.cont [15/16] %v474, 128
        %1195 = vxpose.xlu0.b32.end [16/16] %v475, 128
        %v1196 = vpop.trf.xlu0
        %v1197 = vpop.trf.xlu0
        %v1198 = vpop.trf.xlu0
        %v1199 = vpop.trf.xlu0
        %v1200 = vpop.trf.xlu0
        %v1201 = vpop.trf.xlu0
        %v1202 = vpop.trf.xlu0
        %v1203 = vpop.trf.xlu0
        %v1204 = vpop.trf.xlu0
        %v1205 = vpop.trf.xlu0
        %v1206 = vpop.trf.xlu0
        %v1207 = vpop.trf.xlu0
        %v1208 = vpop.trf.xlu0
        %v1209 = vpop.trf.xlu0
        %v1210 = vpop.trf.xlu0
        %v1211 = vpop.trf.xlu0
        %1212 = vxpose.xlu0.b32.start [1/16] %v476, 128
        %1213 = vxpose.xlu0.b32.cont [2/16] %v477, 128
        %1214 = vxpose.xlu0.b32.cont [3/16] %v478, 128
        %1215 = vxpose.xlu0.b32.cont [4/16] %v479, 128
        %1216 = vxpose.xlu0.b32.cont [5/16] %v480, 128
        %1217 = vxpose.xlu0.b32.cont [6/16] %v481, 128
        %1218 = vxpose.xlu0.b32.cont [7/16] %v482, 128
        %1219 = vxpose.xlu0.b32.cont [8/16] %v483, 128
        %1220 = vxpose.xlu0.b32.cont [9/16] %v484, 128
        %1221 = vxpose.xlu0.b32.cont [10/16] %v485, 128
        %1222 = vxpose.xlu0.b32.cont [11/16] %v486, 128
        %1223 = vxpose.xlu0.b32.cont [12/16] %v487, 128
        %1224 = vxpose.xlu0.b32.cont [13/16] %v488, 128
        %1225 = vxpose.xlu0.b32.cont [14/16] %v489, 128
        %1226 = vxpose.xlu0.b32.cont [15/16] %v490, 128
        %1227 = vxpose.xlu0.b32.end [16/16] %v491, 128
        %v1228 = vpop.trf.xlu0
        %v1229 = vpop.trf.xlu0
        %v1230 = vpop.trf.xlu0
        %v1231 = vpop.trf.xlu0
        %v1232 = vpop.trf.xlu0
        %v1233 = vpop.trf.xlu0
        %v1234 = vpop.trf.xlu0
        %v1235 = vpop.trf.xlu0
        %v1236 = vpop.trf.xlu0
        %v1237 = vpop.trf.xlu0
        %v1238 = vpop.trf.xlu0
        %v1239 = vpop.trf.xlu0
        %v1240 = vpop.trf.xlu0
        %v1241 = vpop.trf.xlu0
        %v1242 = vpop.trf.xlu0
        %v1243 = vpop.trf.xlu0
        %1244 = vxpose.xlu0.b32.start [1/16] %v492, 128
        %1245 = vxpose.xlu0.b32.cont [2/16] %v493, 128
        %1246 = vxpose.xlu0.b32.cont [3/16] %v494, 128
        %1247 = vxpose.xlu0.b32.cont [4/16] %v495, 128
        %1248 = vxpose.xlu0.b32.cont [5/16] %v496, 128
        %1249 = vxpose.xlu0.b32.cont [6/16] %v497, 128
        %1250 = vxpose.xlu0.b32.cont [7/16] %v498, 128
        %1251 = vxpose.xlu0.b32.cont [8/16] %v499, 128
        %1252 = vxpose.xlu0.b32.cont [9/16] %v500, 128
        %1253 = vxpose.xlu0.b32.cont [10/16] %v501, 128
        %1254 = vxpose.xlu0.b32.cont [11/16] %v502, 128
        %1255 = vxpose.xlu0.b32.cont [12/16] %v503, 128
        %1256 = vxpose.xlu0.b32.cont [13/16] %v504, 128
        %1257 = vxpose.xlu0.b32.cont [14/16] %v505, 128
        %1258 = vxpose.xlu0.b32.cont [15/16] %v506, 128
        %1259 = vxpose.xlu0.b32.end [16/16] %v507, 128
        %v1260 = vpop.trf.xlu0
        %v1261 = vpop.trf.xlu0
        %v1262 = vpop.trf.xlu0
        %v1263 = vpop.trf.xlu0
        %v1264 = vpop.trf.xlu0
        %v1265 = vpop.trf.xlu0
        %v1266 = vpop.trf.xlu0
        %v1267 = vpop.trf.xlu0
        %v1268 = vpop.trf.xlu0
        %v1269 = vpop.trf.xlu0
        %v1270 = vpop.trf.xlu0
        %v1271 = vpop.trf.xlu0
        %v1272 = vpop.trf.xlu0
        %v1273 = vpop.trf.xlu0
        %v1274 = vpop.trf.xlu0
        %v1275 = vpop.trf.xlu0
        %1276 = vxpose.xlu0.b32.start [1/16] %v508, 128
        %1277 = vxpose.xlu0.b32.cont [2/16] %v509, 128
        %1278 = vxpose.xlu0.b32.cont [3/16] %v510, 128
        %1279 = vxpose.xlu0.b32.cont [4/16] %v511, 128
        %1280 = vxpose.xlu0.b32.cont [5/16] %v512, 128
        %1281 = vxpose.xlu0.b32.cont [6/16] %v513, 128
        %1282 = vxpose.xlu0.b32.cont [7/16] %v514, 128
        %1283 = vxpose.xlu0.b32.cont [8/16] %v515, 128
        %1284 = vxpose.xlu0.b32.cont [9/16] %v516, 128
        %1285 = vxpose.xlu0.b32.cont [10/16] %v517, 128
        %1286 = vxpose.xlu0.b32.cont [11/16] %v518, 128
        %1287 = vxpose.xlu0.b32.cont [12/16] %v519, 128
        %1288 = vxpose.xlu0.b32.cont [13/16] %v520, 128
        %1289 = vxpose.xlu0.b32.cont [14/16] %v521, 128
        %1290 = vxpose.xlu0.b32.cont [15/16] %v522, 128
        %1291 = vxpose.xlu0.b32.end [16/16] %v523, 128
        %v1292 = vpop.trf.xlu0
        %v1293 = vpop.trf.xlu0
        %v1294 = vpop.trf.xlu0
        %v1295 = vpop.trf.xlu0
        %v1296 = vpop.trf.xlu0
        %v1297 = vpop.trf.xlu0
        %v1298 = vpop.trf.xlu0
        %v1299 = vpop.trf.xlu0
        %v1300 = vpop.trf.xlu0
        %v1301 = vpop.trf.xlu0
        %v1302 = vpop.trf.xlu0
        %v1303 = vpop.trf.xlu0
        %v1304 = vpop.trf.xlu0
        %v1305 = vpop.trf.xlu0
        %v1306 = vpop.trf.xlu0
        %v1307 = vpop.trf.xlu0
        %1308 = vxpose.xlu0.b32.start [1/16] %v524, 128
        %1309 = vxpose.xlu0.b32.cont [2/16] %v525, 128
        %1310 = vxpose.xlu0.b32.cont [3/16] %v526, 128
        %1311 = vxpose.xlu0.b32.cont [4/16] %v527, 128
        %1312 = vxpose.xlu0.b32.cont [5/16] %v528, 128
        %1313 = vxpose.xlu0.b32.cont [6/16] %v529, 128
        %1314 = vxpose.xlu0.b32.cont [7/16] %v530, 128
        %1315 = vxpose.xlu0.b32.cont [8/16] %v531, 128
        %1316 = vxpose.xlu0.b32.cont [9/16] %v532, 128
        %1317 = vxpose.xlu0.b32.cont [10/16] %v533, 128
        %1318 = vxpose.xlu0.b32.cont [11/16] %v534, 128
        %1319 = vxpose.xlu0.b32.cont [12/16] %v535, 128
        %1320 = vxpose.xlu0.b32.cont [13/16] %v536, 128
        %1321 = vxpose.xlu0.b32.cont [14/16] %v537, 128
        %1322 = vxpose.xlu0.b32.cont [15/16] %v538, 128
        %1323 = vxpose.xlu0.b32.end [16/16] %v539, 128
        %v1324 = vpop.trf.xlu0
        %v1325 = vpop.trf.xlu0
        %v1326 = vpop.trf.xlu0
        %v1327 = vpop.trf.xlu0
        %v1328 = vpop.trf.xlu0
        %v1329 = vpop.trf.xlu0
        %v1330 = vpop.trf.xlu0
        %v1331 = vpop.trf.xlu0
        %v1332 = vpop.trf.xlu0
        %v1333 = vpop.trf.xlu0
        %v1334 = vpop.trf.xlu0
        %v1335 = vpop.trf.xlu0
        %v1336 = vpop.trf.xlu0
        %v1337 = vpop.trf.xlu0
        %v1338 = vpop.trf.xlu0
        %v1339 = vpop.trf.xlu0
        %1340 = vxpose.xlu0.b32.start [1/16] %v540, 128
        %1341 = vxpose.xlu0.b32.cont [2/16] %v541, 128
        %1342 = vxpose.xlu0.b32.cont [3/16] %v542, 128
        %1343 = vxpose.xlu0.b32.cont [4/16] %v543, 128
        %1344 = vxpose.xlu0.b32.cont [5/16] %v544, 128
        %1345 = vxpose.xlu0.b32.cont [6/16] %v545, 128
        %1346 = vxpose.xlu0.b32.cont [7/16] %v546, 128
        %1347 = vxpose.xlu0.b32.cont [8/16] %v547, 128
        %1348 = vxpose.xlu0.b32.cont [9/16] %v548, 128
        %1349 = vxpose.xlu0.b32.cont [10/16] %v549, 128
        %1350 = vxpose.xlu0.b32.cont [11/16] %v550, 128
        %1351 = vxpose.xlu0.b32.cont [12/16] %v551, 128
        %1352 = vxpose.xlu0.b32.cont [13/16] %v552, 128
        %1353 = vxpose.xlu0.b32.cont [14/16] %v553, 128
        %1354 = vxpose.xlu0.b32.cont [15/16] %v554, 128
        %1355 = vxpose.xlu0.b32.end [16/16] %v555, 128
        %v1356 = vpop.trf.xlu0
        %v1357 = vpop.trf.xlu0
        %v1358 = vpop.trf.xlu0
        %v1359 = vpop.trf.xlu0
        %v1360 = vpop.trf.xlu0
        %v1361 = vpop.trf.xlu0
        %v1362 = vpop.trf.xlu0
        %v1363 = vpop.trf.xlu0
        %v1364 = vpop.trf.xlu0
        %v1365 = vpop.trf.xlu0
        %v1366 = vpop.trf.xlu0
        %v1367 = vpop.trf.xlu0
        %v1368 = vpop.trf.xlu0
        %v1369 = vpop.trf.xlu0
        %v1370 = vpop.trf.xlu0
        %v1371 = vpop.trf.xlu0
        %1372 = vxpose.xlu0.b32.start [1/16] %v556, 128
        %1373 = vxpose.xlu0.b32.cont [2/16] %v557, 128
        %1374 = vxpose.xlu0.b32.cont [3/16] %v558, 128
        %1375 = vxpose.xlu0.b32.cont [4/16] %v559, 128
        %1376 = vxpose.xlu0.b32.cont [5/16] %v560, 128
        %1377 = vxpose.xlu0.b32.cont [6/16] %v561, 128
        %1378 = vxpose.xlu0.b32.cont [7/16] %v562, 128
        %1379 = vxpose.xlu0.b32.cont [8/16] %v563, 128
        %1380 = vxpose.xlu0.b32.cont [9/16] %v564, 128
        %1381 = vxpose.xlu0.b32.cont [10/16] %v565, 128
        %1382 = vxpose.xlu0.b32.cont [11/16] %v566, 128
        %1383 = vxpose.xlu0.b32.cont [12/16] %v567, 128
        %1384 = vxpose.xlu0.b32.cont [13/16] %v568, 128
        %1385 = vxpose.xlu0.b32.cont [14/16] %v569, 128
        %1386 = vxpose.xlu0.b32.cont [15/16] %v570, 128
        %1387 = vxpose.xlu0.b32.end [16/16] %v571, 128
        %v1388 = vpop.trf.xlu0
        %v1389 = vpop.trf.xlu0
        %v1390 = vpop.trf.xlu0
        %v1391 = vpop.trf.xlu0
        %v1392 = vpop.trf.xlu0
        %v1393 = vpop.trf.xlu0
        %v1394 = vpop.trf.xlu0
        %v1395 = vpop.trf.xlu0
        %v1396 = vpop.trf.xlu0
        %v1397 = vpop.trf.xlu0
        %v1398 = vpop.trf.xlu0
        %v1399 = vpop.trf.xlu0
        %v1400 = vpop.trf.xlu0
        %v1401 = vpop.trf.xlu0
        %v1402 = vpop.trf.xlu0
        %v1403 = vpop.trf.xlu0
        %1404 = vxpose.xlu0.b32.start [1/16] %v572, 128
        %1405 = vxpose.xlu0.b32.cont [2/16] %v573, 128
        %1406 = vxpose.xlu0.b32.cont [3/16] %v574, 128
        %1407 = vxpose.xlu0.b32.cont [4/16] %v575, 128
        %1408 = vxpose.xlu0.b32.cont [5/16] %v576, 128
        %1409 = vxpose.xlu0.b32.cont [6/16] %v577, 128
        %1410 = vxpose.xlu0.b32.cont [7/16] %v578, 128
        %1411 = vxpose.xlu0.b32.cont [8/16] %v579, 128
        %1412 = vxpose.xlu0.b32.cont [9/16] %v580, 128
        %1413 = vxpose.xlu0.b32.cont [10/16] %v581, 128
        %1414 = vxpose.xlu0.b32.cont [11/16] %v582, 128
        %1415 = vxpose.xlu0.b32.cont [12/16] %v583, 128
        %1416 = vxpose.xlu0.b32.cont [13/16] %v584, 128
        %1417 = vxpose.xlu0.b32.cont [14/16] %v585, 128
        %1418 = vxpose.xlu0.b32.cont [15/16] %v586, 128
        %1419 = vxpose.xlu0.b32.end [16/16] %v587, 128
        %v1420 = vpop.trf.xlu0
        %v1421 = vpop.trf.xlu0
        %v1422 = vpop.trf.xlu0
        %v1423 = vpop.trf.xlu0
        %v1424 = vpop.trf.xlu0
        %v1425 = vpop.trf.xlu0
        %v1426 = vpop.trf.xlu0
        %v1427 = vpop.trf.xlu0
        %v1428 = vpop.trf.xlu0
        %v1429 = vpop.trf.xlu0
        %v1430 = vpop.trf.xlu0
        %v1431 = vpop.trf.xlu0
        %v1432 = vpop.trf.xlu0
        %v1433 = vpop.trf.xlu0
        %v1434 = vpop.trf.xlu0
        %v1435 = vpop.trf.xlu0
        %1436 = vxpose.xlu0.b32.start [1/16] %v588, 128
        %1437 = vxpose.xlu0.b32.cont [2/16] %v589, 128
        %1438 = vxpose.xlu0.b32.cont [3/16] %v590, 128
        %1439 = vxpose.xlu0.b32.cont [4/16] %v591, 128
        %1440 = vxpose.xlu0.b32.cont [5/16] %v592, 128
        %1441 = vxpose.xlu0.b32.cont [6/16] %v593, 128
        %1442 = vxpose.xlu0.b32.cont [7/16] %v594, 128
        %1443 = vxpose.xlu0.b32.cont [8/16] %v595, 128
        %1444 = vxpose.xlu0.b32.cont [9/16] %v596, 128
        %1445 = vxpose.xlu0.b32.cont [10/16] %v597, 128
        %1446 = vxpose.xlu0.b32.cont [11/16] %v598, 128
        %1447 = vxpose.xlu0.b32.cont [12/16] %v599, 128
        %1448 = vxpose.xlu0.b32.cont [13/16] %v600, 128
        %1449 = vxpose.xlu0.b32.cont [14/16] %v601, 128
        %1450 = vxpose.xlu0.b32.cont [15/16] %v602, 128
        %1451 = vxpose.xlu0.b32.end [16/16] %v603, 128
        %v1452 = vpop.trf.xlu0
        %v1453 = vpop.trf.xlu0
        %v1454 = vpop.trf.xlu0
        %v1455 = vpop.trf.xlu0
        %v1456 = vpop.trf.xlu0
        %v1457 = vpop.trf.xlu0
        %v1458 = vpop.trf.xlu0
        %v1459 = vpop.trf.xlu0
        %v1460 = vpop.trf.xlu0
        %v1461 = vpop.trf.xlu0
        %v1462 = vpop.trf.xlu0
        %v1463 = vpop.trf.xlu0
        %v1464 = vpop.trf.xlu0
        %v1465 = vpop.trf.xlu0
        %v1466 = vpop.trf.xlu0
        %v1467 = vpop.trf.xlu0
        %1468 = vxpose.xlu0.b32.start [1/16] %v604, 128
        %1469 = vxpose.xlu0.b32.cont [2/16] %v605, 128
        %1470 = vxpose.xlu0.b32.cont [3/16] %v606, 128
        %1471 = vxpose.xlu0.b32.cont [4/16] %v607, 128
        %1472 = vxpose.xlu0.b32.cont [5/16] %v608, 128
        %1473 = vxpose.xlu0.b32.cont [6/16] %v609, 128
        %1474 = vxpose.xlu0.b32.cont [7/16] %v610, 128
        %1475 = vxpose.xlu0.b32.cont [8/16] %v611, 128
        %1476 = vxpose.xlu0.b32.cont [9/16] %v612, 128
        %1477 = vxpose.xlu0.b32.cont [10/16] %v613, 128
        %1478 = vxpose.xlu0.b32.cont [11/16] %v614, 128
        %1479 = vxpose.xlu0.b32.cont [12/16] %v615, 128
        %1480 = vxpose.xlu0.b32.cont [13/16] %v616, 128
        %1481 = vxpose.xlu0.b32.cont [14/16] %v617, 128
        %1482 = vxpose.xlu0.b32.cont [15/16] %v618, 128
        %1483 = vxpose.xlu0.b32.end [16/16] %v619, 128
        %v1484 = vpop.trf.xlu0
        %v1485 = vpop.trf.xlu0
        %v1486 = vpop.trf.xlu0
        %v1487 = vpop.trf.xlu0
        %v1488 = vpop.trf.xlu0
        %v1489 = vpop.trf.xlu0
        %v1490 = vpop.trf.xlu0
        %v1491 = vpop.trf.xlu0
        %v1492 = vpop.trf.xlu0
        %v1493 = vpop.trf.xlu0
        %v1494 = vpop.trf.xlu0
        %v1495 = vpop.trf.xlu0
        %v1496 = vpop.trf.xlu0
        %v1497 = vpop.trf.xlu0
        %v1498 = vpop.trf.xlu0
        %v1499 = vpop.trf.xlu0
        %1500 = vxpose.xlu0.b32.start [1/16] %v620, 128
        %1501 = vxpose.xlu0.b32.cont [2/16] %v621, 128
        %1502 = vxpose.xlu0.b32.cont [3/16] %v622, 128
        %1503 = vxpose.xlu0.b32.cont [4/16] %v623, 128
        %1504 = vxpose.xlu0.b32.cont [5/16] %v624, 128
        %1505 = vxpose.xlu0.b32.cont [6/16] %v625, 128
        %1506 = vxpose.xlu0.b32.cont [7/16] %v626, 128
        %1507 = vxpose.xlu0.b32.cont [8/16] %v627, 128
        %1508 = vxpose.xlu0.b32.cont [9/16] %v628, 128
        %1509 = vxpose.xlu0.b32.cont [10/16] %v629, 128
        %1510 = vxpose.xlu0.b32.cont [11/16] %v630, 128
        %1511 = vxpose.xlu0.b32.cont [12/16] %v631, 128
        %1512 = vxpose.xlu0.b32.cont [13/16] %v632, 128
        %1513 = vxpose.xlu0.b32.cont [14/16] %v633, 128
        %1514 = vxpose.xlu0.b32.cont [15/16] %v634, 128
        %1515 = vxpose.xlu0.b32.end [16/16] %v635, 128
        %v1516 = vpop.trf.xlu0
        %v1517 = vpop.trf.xlu0
        %v1518 = vpop.trf.xlu0
        %v1519 = vpop.trf.xlu0
        %v1520 = vpop.trf.xlu0
        %v1521 = vpop.trf.xlu0
        %v1522 = vpop.trf.xlu0
        %v1523 = vpop.trf.xlu0
        %v1524 = vpop.trf.xlu0
        %v1525 = vpop.trf.xlu0
        %v1526 = vpop.trf.xlu0
        %v1527 = vpop.trf.xlu0
        %v1528 = vpop.trf.xlu0
        %v1529 = vpop.trf.xlu0
        %v1530 = vpop.trf.xlu0
        %v1531 = vpop.trf.xlu0
        %1532 = vxpose.xlu0.b32.start [1/16] %v636, 128
        %1533 = vxpose.xlu0.b32.cont [2/16] %v637, 128
        %1534 = vxpose.xlu0.b32.cont [3/16] %v638, 128
        %1535 = vxpose.xlu0.b32.cont [4/16] %v639, 128
        %1536 = vxpose.xlu0.b32.cont [5/16] %v640, 128
        %1537 = vxpose.xlu0.b32.cont [6/16] %v641, 128
        %1538 = vxpose.xlu0.b32.cont [7/16] %v642, 128
        %1539 = vxpose.xlu0.b32.cont [8/16] %v643, 128
        %1540 = vxpose.xlu0.b32.cont [9/16] %v644, 128
        %1541 = vxpose.xlu0.b32.cont [10/16] %v645, 128
        %1542 = vxpose.xlu0.b32.cont [11/16] %v646, 128
        %1543 = vxpose.xlu0.b32.cont [12/16] %v647, 128
        %1544 = vxpose.xlu0.b32.cont [13/16] %v648, 128
        %1545 = vxpose.xlu0.b32.cont [14/16] %v649, 128
        %1546 = vxpose.xlu0.b32.cont [15/16] %v650, 128
        %1547 = vxpose.xlu0.b32.end [16/16] %v651, 128
        %v1548 = vpop.trf.xlu0
        %v1549 = vpop.trf.xlu0
        %v1550 = vpop.trf.xlu0
        %v1551 = vpop.trf.xlu0
        %v1552 = vpop.trf.xlu0
        %v1553 = vpop.trf.xlu0
        %v1554 = vpop.trf.xlu0
        %v1555 = vpop.trf.xlu0
        %v1556 = vpop.trf.xlu0
        %v1557 = vpop.trf.xlu0
        %v1558 = vpop.trf.xlu0
        %v1559 = vpop.trf.xlu0
        %v1560 = vpop.trf.xlu0
        %v1561 = vpop.trf.xlu0
        %v1562 = vpop.trf.xlu0
        %v1563 = vpop.trf.xlu0
        %1564 = vxpose.xlu0.b32.start [1/16] %v652, 128
        %1565 = vxpose.xlu0.b32.cont [2/16] %v653, 128
        %1566 = vxpose.xlu0.b32.cont [3/16] %v654, 128
        %1567 = vxpose.xlu0.b32.cont [4/16] %v655, 128
        %1568 = vxpose.xlu0.b32.cont [5/16] %v656, 128
        %1569 = vxpose.xlu0.b32.cont [6/16] %v657, 128
        %1570 = vxpose.xlu0.b32.cont [7/16] %v658, 128
        %1571 = vxpose.xlu0.b32.cont [8/16] %v659, 128
        %1572 = vxpose.xlu0.b32.cont [9/16] %v660, 128
        %1573 = vxpose.xlu0.b32.cont [10/16] %v661, 128
        %1574 = vxpose.xlu0.b32.cont [11/16] %v662, 128
        %1575 = vxpose.xlu0.b32.cont [12/16] %v663, 128
        %1576 = vxpose.xlu0.b32.cont [13/16] %v664, 128
        %1577 = vxpose.xlu0.b32.cont [14/16] %v665, 128
        %1578 = vxpose.xlu0.b32.cont [15/16] %v666, 128
        %1579 = vxpose.xlu0.b32.end [16/16] %v667, 128
        %v1580 = vpop.trf.xlu0
        %v1581 = vpop.trf.xlu0
        %v1582 = vpop.trf.xlu0
        %v1583 = vpop.trf.xlu0
        %v1584 = vpop.trf.xlu0
        %v1585 = vpop.trf.xlu0
        %v1586 = vpop.trf.xlu0
        %v1587 = vpop.trf.xlu0
        %v1588 = vpop.trf.xlu0
        %v1589 = vpop.trf.xlu0
        %v1590 = vpop.trf.xlu0
        %v1591 = vpop.trf.xlu0
        %v1592 = vpop.trf.xlu0
        %v1593 = vpop.trf.xlu0
        %v1594 = vpop.trf.xlu0
        %v1595 = vpop.trf.xlu0
        %1596 = vxpose.xlu0.b32.start [1/16] %v668, 128
        %1597 = vxpose.xlu0.b32.cont [2/16] %v669, 128
        %1598 = vxpose.xlu0.b32.cont [3/16] %v670, 128
        %1599 = vxpose.xlu0.b32.cont [4/16] %v671, 128
        %1600 = vxpose.xlu0.b32.cont [5/16] %v672, 128
        %1601 = vxpose.xlu0.b32.cont [6/16] %v673, 128
        %1602 = vxpose.xlu0.b32.cont [7/16] %v674, 128
        %1603 = vxpose.xlu0.b32.cont [8/16] %v675, 128
        %1604 = vxpose.xlu0.b32.cont [9/16] %v676, 128
        %1605 = vxpose.xlu0.b32.cont [10/16] %v677, 128
        %1606 = vxpose.xlu0.b32.cont [11/16] %v678, 128
        %1607 = vxpose.xlu0.b32.cont [12/16] %v679, 128
        %1608 = vxpose.xlu0.b32.cont [13/16] %v680, 128
        %1609 = vxpose.xlu0.b32.cont [14/16] %v681, 128
        %1610 = vxpose.xlu0.b32.cont [15/16] %v682, 128
        %1611 = vxpose.xlu0.b32.end [16/16] %v683, 128
        %v1612 = vpop.trf.xlu0
        %v1613 = vpop.trf.xlu0
        %v1614 = vpop.trf.xlu0
        %v1615 = vpop.trf.xlu0
        %v1616 = vpop.trf.xlu0
        %v1617 = vpop.trf.xlu0
        %v1618 = vpop.trf.xlu0
        %v1619 = vpop.trf.xlu0
        %v1620 = vpop.trf.xlu0
        %v1621 = vpop.trf.xlu0
        %v1622 = vpop.trf.xlu0
        %v1623 = vpop.trf.xlu0
        %v1624 = vpop.trf.xlu0
        %v1625 = vpop.trf.xlu0
        %v1626 = vpop.trf.xlu0
        %v1627 = vpop.trf.xlu0
        %1628 = vxpose.xlu0.b32.start [1/16] %v684, 128
        %1629 = vxpose.xlu0.b32.cont [2/16] %v685, 128
        %1630 = vxpose.xlu0.b32.cont [3/16] %v686, 128
        %1631 = vxpose.xlu0.b32.cont [4/16] %v687, 128
        %1632 = vxpose.xlu0.b32.cont [5/16] %v688, 128
        %1633 = vxpose.xlu0.b32.cont [6/16] %v689, 128
        %1634 = vxpose.xlu0.b32.cont [7/16] %v690, 128
        %1635 = vxpose.xlu0.b32.cont [8/16] %v691, 128
        %1636 = vxpose.xlu0.b32.cont [9/16] %v692, 128
        %1637 = vxpose.xlu0.b32.cont [10/16] %v693, 128
        %1638 = vxpose.xlu0.b32.cont [11/16] %v694, 128
        %1639 = vxpose.xlu0.b32.cont [12/16] %v695, 128
        %1640 = vxpose.xlu0.b32.cont [13/16] %v696, 128
        %1641 = vxpose.xlu0.b32.cont [14/16] %v697, 128
        %1642 = vxpose.xlu0.b32.cont [15/16] %v698, 128
        %1643 = vxpose.xlu0.b32.end [16/16] %v699, 128
        %v1644 = vpop.trf.xlu0
        %v1645 = vpop.trf.xlu0
        %v1646 = vpop.trf.xlu0
        %v1647 = vpop.trf.xlu0
        %v1648 = vpop.trf.xlu0
        %v1649 = vpop.trf.xlu0
        %v1650 = vpop.trf.xlu0
        %v1651 = vpop.trf.xlu0
        %v1652 = vpop.trf.xlu0
        %v1653 = vpop.trf.xlu0
        %v1654 = vpop.trf.xlu0
        %v1655 = vpop.trf.xlu0
        %v1656 = vpop.trf.xlu0
        %v1657 = vpop.trf.xlu0
        %v1658 = vpop.trf.xlu0
        %v1659 = vpop.trf.xlu0
        %1660 = vxpose.xlu0.b32.start [1/16] %v700, 128
        %1661 = vxpose.xlu0.b32.cont [2/16] %v701, 128
        %1662 = vxpose.xlu0.b32.cont [3/16] %v702, 128
        %1663 = vxpose.xlu0.b32.cont [4/16] %v703, 128
        %1664 = vxpose.xlu0.b32.cont [5/16] %v704, 128
        %1665 = vxpose.xlu0.b32.cont [6/16] %v705, 128
        %1666 = vxpose.xlu0.b32.cont [7/16] %v706, 128
        %1667 = vxpose.xlu0.b32.cont [8/16] %v707, 128
        %1668 = vxpose.xlu0.b32.cont [9/16] %v708, 128
        %1669 = vxpose.xlu0.b32.cont [10/16] %v709, 128
        %1670 = vxpose.xlu0.b32.cont [11/16] %v710, 128
        %1671 = vxpose.xlu0.b32.cont [12/16] %v711, 128
        %1672 = vxpose.xlu0.b32.cont [13/16] %v712, 128
        %1673 = vxpose.xlu0.b32.cont [14/16] %v713, 128
        %1674 = vxpose.xlu0.b32.cont [15/16] %v714, 128
        %1675 = vxpose.xlu0.b32.end [16/16] %v715, 128
        %v1676 = vpop.trf.xlu0
        %v1677 = vpop.trf.xlu0
        %v1678 = vpop.trf.xlu0
        %v1679 = vpop.trf.xlu0
        %v1680 = vpop.trf.xlu0
        %v1681 = vpop.trf.xlu0
        %v1682 = vpop.trf.xlu0
        %v1683 = vpop.trf.xlu0
        %v1684 = vpop.trf.xlu0
        %v1685 = vpop.trf.xlu0
        %v1686 = vpop.trf.xlu0
        %v1687 = vpop.trf.xlu0
        %v1688 = vpop.trf.xlu0
        %v1689 = vpop.trf.xlu0
        %v1690 = vpop.trf.xlu0
        %v1691 = vpop.trf.xlu0
        %1692 = vxpose.xlu0.b32.start [1/16] %v716, 128
        %1693 = vxpose.xlu0.b32.cont [2/16] %v717, 128
        %1694 = vxpose.xlu0.b32.cont [3/16] %v718, 128
        %1695 = vxpose.xlu0.b32.cont [4/16] %v719, 128
        %1696 = vxpose.xlu0.b32.cont [5/16] %v720, 128
        %1697 = vxpose.xlu0.b32.cont [6/16] %v721, 128
        %1698 = vxpose.xlu0.b32.cont [7/16] %v722, 128
        %1699 = vxpose.xlu0.b32.cont [8/16] %v723, 128
        %1700 = vxpose.xlu0.b32.cont [9/16] %v724, 128
        %1701 = vxpose.xlu0.b32.cont [10/16] %v725, 128
        %1702 = vxpose.xlu0.b32.cont [11/16] %v726, 128
        %1703 = vxpose.xlu0.b32.cont [12/16] %v727, 128
        %1704 = vxpose.xlu0.b32.cont [13/16] %v728, 128
        %1705 = vxpose.xlu0.b32.cont [14/16] %v729, 128
        %1706 = vxpose.xlu0.b32.cont [15/16] %v730, 128
        %1707 = vxpose.xlu0.b32.end [16/16] %v731, 128
        %v1708 = vpop.trf.xlu0
        %v1709 = vpop.trf.xlu0
        %v1710 = vpop.trf.xlu0
        %v1711 = vpop.trf.xlu0
        %v1712 = vpop.trf.xlu0
        %v1713 = vpop.trf.xlu0
        %v1714 = vpop.trf.xlu0
        %v1715 = vpop.trf.xlu0
        %v1716 = vpop.trf.xlu0
        %v1717 = vpop.trf.xlu0
        %v1718 = vpop.trf.xlu0
        %v1719 = vpop.trf.xlu0
        %v1720 = vpop.trf.xlu0
        %v1721 = vpop.trf.xlu0
        %v1722 = vpop.trf.xlu0
        %v1723 = vpop.trf.xlu0
        %1724 = vxpose.xlu0.b32.start [1/16] %v732, 128
        %1725 = vxpose.xlu0.b32.cont [2/16] %v733, 128
        %1726 = vxpose.xlu0.b32.cont [3/16] %v734, 128
        %1727 = vxpose.xlu0.b32.cont [4/16] %v735, 128
        %1728 = vxpose.xlu0.b32.cont [5/16] %v736, 128
        %1729 = vxpose.xlu0.b32.cont [6/16] %v737, 128
        %1730 = vxpose.xlu0.b32.cont [7/16] %v738, 128
        %1731 = vxpose.xlu0.b32.cont [8/16] %v739, 128
        %1732 = vxpose.xlu0.b32.cont [9/16] %v740, 128
        %1733 = vxpose.xlu0.b32.cont [10/16] %v741, 128
        %1734 = vxpose.xlu0.b32.cont [11/16] %v742, 128
        %1735 = vxpose.xlu0.b32.cont [12/16] %v743, 128
        %1736 = vxpose.xlu0.b32.cont [13/16] %v744, 128
        %1737 = vxpose.xlu0.b32.cont [14/16] %v745, 128
        %1738 = vxpose.xlu0.b32.cont [15/16] %v746, 128
        %1739 = vxpose.xlu0.b32.end [16/16] %v747, 128
        %v1740 = vpop.trf.xlu0
        %v1741 = vpop.trf.xlu0
        %v1742 = vpop.trf.xlu0
        %v1743 = vpop.trf.xlu0
        %v1744 = vpop.trf.xlu0
        %v1745 = vpop.trf.xlu0
        %v1746 = vpop.trf.xlu0
        %v1747 = vpop.trf.xlu0
        %v1748 = vpop.trf.xlu0
        %v1749 = vpop.trf.xlu0
        %v1750 = vpop.trf.xlu0
        %v1751 = vpop.trf.xlu0
        %v1752 = vpop.trf.xlu0
        %v1753 = vpop.trf.xlu0
        %v1754 = vpop.trf.xlu0
        %v1755 = vpop.trf.xlu0
        %1756 = vxpose.xlu0.b32.start [1/16] %v748, 128
        %1757 = vxpose.xlu0.b32.cont [2/16] %v749, 128
        %1758 = vxpose.xlu0.b32.cont [3/16] %v750, 128
        %1759 = vxpose.xlu0.b32.cont [4/16] %v751, 128
        %1760 = vxpose.xlu0.b32.cont [5/16] %v752, 128
        %1761 = vxpose.xlu0.b32.cont [6/16] %v753, 128
        %1762 = vxpose.xlu0.b32.cont [7/16] %v754, 128
        %1763 = vxpose.xlu0.b32.cont [8/16] %v755, 128
        %1764 = vxpose.xlu0.b32.cont [9/16] %v756, 128
        %1765 = vxpose.xlu0.b32.cont [10/16] %v757, 128
        %1766 = vxpose.xlu0.b32.cont [11/16] %v758, 128
        %1767 = vxpose.xlu0.b32.cont [12/16] %v759, 128
        %1768 = vxpose.xlu0.b32.cont [13/16] %v760, 128
        %1769 = vxpose.xlu0.b32.cont [14/16] %v761, 128
        %1770 = vxpose.xlu0.b32.cont [15/16] %v762, 128
        %1771 = vxpose.xlu0.b32.end [16/16] %v763, 128
        %v1772 = vpop.trf.xlu0
        %v1773 = vpop.trf.xlu0
        %v1774 = vpop.trf.xlu0
        %v1775 = vpop.trf.xlu0
        %v1776 = vpop.trf.xlu0
        %v1777 = vpop.trf.xlu0
        %v1778 = vpop.trf.xlu0
        %v1779 = vpop.trf.xlu0
        %v1780 = vpop.trf.xlu0
        %v1781 = vpop.trf.xlu0
        %v1782 = vpop.trf.xlu0
        %v1783 = vpop.trf.xlu0
        %v1784 = vpop.trf.xlu0
        %v1785 = vpop.trf.xlu0
        %v1786 = vpop.trf.xlu0
        %v1787 = vpop.trf.xlu0
        %v1788 = vld [vmem:[%s246] sm:$0x1]
        %1789 = vxpose.xlu0.b32.start [1/16] %v1788, 128
        %1790 = vxpose.xlu0.b32.cont [2/16] 0.0, 128
        %1791 = vxpose.xlu0.b32.cont [3/16] 0.0, 128
        %1792 = vxpose.xlu0.b32.cont [4/16] 0.0, 128
        %1793 = vxpose.xlu0.b32.cont [5/16] 0.0, 128
        %1794 = vxpose.xlu0.b32.cont [6/16] 0.0, 128
        %1795 = vxpose.xlu0.b32.cont [7/16] 0.0, 128
        %1796 = vxpose.xlu0.b32.cont [8/16] 0.0, 128
        %1797 = vxpose.xlu0.b32.cont [9/16] 0.0, 128
        %1798 = vxpose.xlu0.b32.cont [10/16] 0.0, 128
        %1799 = vxpose.xlu0.b32.cont [11/16] 0.0, 128
        %1800 = vxpose.xlu0.b32.cont [12/16] 0.0, 128
        %1801 = vxpose.xlu0.b32.cont [13/16] 0.0, 128
        %1802 = vxpose.xlu0.b32.cont [14/16] 0.0, 128
        %1803 = vxpose.xlu0.b32.cont [15/16] 0.0, 128
        %1804 = vxpose.xlu0.b32.end [16/16] 0.0, 128
        %v1805 = vpop.trf.xlu0
        %v1806 = vpop.trf.xlu0
        %v1807 = vpop.trf.xlu0
        %v1808 = vpop.trf.xlu0
        %v1809 = vpop.trf.xlu0
        %v1810 = vpop.trf.xlu0
        %v1811 = vpop.trf.xlu0
        %v1812 = vpop.trf.xlu0
        %v1813 = vpop.trf.xlu0
        %v1814 = vpop.trf.xlu0
        %v1815 = vpop.trf.xlu0
        %v1816 = vpop.trf.xlu0
        %v1817 = vpop.trf.xlu0
        %v1818 = vpop.trf.xlu0
        %v1819 = vpop.trf.xlu0
        %v1820 = vpop.trf.xlu0
        %1854 = vrot.lane.b32.xlu0 %v780, 127
        %v1855 = vpop.permute.xlu0 %1854
        %1856 = vrot.lane.b32.xlu0 %v812, 127
        %v1857 = vpop.permute.xlu0 %1856
        %1858 = vrot.lane.b32.xlu0 %v844, 127
        %v1859 = vpop.permute.xlu0 %1858
        %1860 = vrot.lane.b32.xlu0 %v876, 127
        %v1861 = vpop.permute.xlu0 %1860
        %1862 = vrot.lane.b32.xlu0 %v908, 127
        %v1863 = vpop.permute.xlu0 %1862
        %1864 = vrot.lane.b32.xlu0 %v940, 127
        %v1865 = vpop.permute.xlu0 %1864
        %1866 = vrot.lane.b32.xlu0 %v972, 127
        %v1867 = vpop.permute.xlu0 %1866
        %1868 = vrot.lane.b32.xlu0 %v1004, 127
        %v1869 = vpop.permute.xlu0 %1868
        %1870 = vrot.lane.b32.xlu0 %v1036, 127
        %v1871 = vpop.permute.xlu0 %1870
        %1872 = vrot.lane.b32.xlu0 %v1068, 127
        %v1873 = vpop.permute.xlu0 %1872
        %1874 = vrot.lane.b32.xlu0 %v1100, 127
        %v1875 = vpop.permute.xlu0 %1874
        %1876 = vrot.lane.b32.xlu0 %v1132, 127
        %v1877 = vpop.permute.xlu0 %1876
        %1878 = vrot.lane.b32.xlu0 %v1164, 127
        %v1879 = vpop.permute.xlu0 %1878
        %1880 = vrot.lane.b32.xlu0 %v1196, 127
        %v1881 = vpop.permute.xlu0 %1880
        %1882 = vrot.lane.b32.xlu0 %v1228, 127
        %v1883 = vpop.permute.xlu0 %1882
        %1884 = vrot.lane.b32.xlu0 %v1260, 127
        %v1885 = vpop.permute.xlu0 %1884
        %1886 = vrot.lane.b32.xlu0 %v1292, 127
        %v1887 = vpop.permute.xlu0 %1886
        %1888 = vrot.lane.b32.xlu0 %v1324, 127
        %v1889 = vpop.permute.xlu0 %1888
        %1890 = vrot.lane.b32.xlu0 %v1356, 127
        %v1891 = vpop.permute.xlu0 %1890
        %1892 = vrot.lane.b32.xlu0 %v1388, 127
        %v1893 = vpop.permute.xlu0 %1892
        %1894 = vrot.lane.b32.xlu0 %v1420, 127
        %v1895 = vpop.permute.xlu0 %1894
        %1896 = vrot.lane.b32.xlu0 %v1452, 127
        %v1897 = vpop.permute.xlu0 %1896
        %1898 = vrot.lane.b32.xlu0 %v1484, 127
        %v1899 = vpop.permute.xlu0 %1898
        %1900 = vrot.lane.b32.xlu0 %v1516, 127
        %v1901 = vpop.permute.xlu0 %1900
        %1902 = vrot.lane.b32.xlu0 %v1548, 127
        %v1903 = vpop.permute.xlu0 %1902
        %1904 = vrot.lane.b32.xlu0 %v1580, 127
        %v1905 = vpop.permute.xlu0 %1904
        %1906 = vrot.lane.b32.xlu0 %v1612, 127
        %v1907 = vpop.permute.xlu0 %1906
        %1908 = vrot.lane.b32.xlu0 %v1644, 127
        %v1909 = vpop.permute.xlu0 %1908
        %1910 = vrot.lane.b32.xlu0 %v1676, 127
        %v1911 = vpop.permute.xlu0 %1910
        %1912 = vrot.lane.b32.xlu0 %v1708, 127
        %v1913 = vpop.permute.xlu0 %1912
        %1914 = vrot.lane.b32.xlu0 %v1740, 127
        %v1915 = vpop.permute.xlu0 %1914
        %1916 = vrot.lane.b32.xlu0 %v1772, 127
        %v1917 = vpop.permute.xlu0 %1916
        %1918 = vrot.lane.b32.xlu0 %v1805, 127
        %v1919 = vpop.permute.xlu0 %1918
        %vm1920 = vcmask 1039360
        %v1921 = vsel %vm1920, %v1855, %v1857
        %v1922 = vsel %vm1920, %v1857, %v1859
        %v1923 = vsel %vm1920, %v1859, %v1861
        %v1924 = vsel %vm1920, %v1861, %v1863
        %v1925 = vsel %vm1920, %v1863, %v1865
        %v1926 = vsel %vm1920, %v1865, %v1867
        %v1927 = vsel %vm1920, %v1867, %v1869
        %v1928 = vsel %vm1920, %v1869, %v1871
        %v1929 = vsel %vm1920, %v1871, %v1873
        %v1930 = vsel %vm1920, %v1873, %v1875
        %v1931 = vsel %vm1920, %v1875, %v1877
        %v1932 = vsel %vm1920, %v1877, %v1879
        %v1933 = vsel %vm1920, %v1879, %v1881
        %v1934 = vsel %vm1920, %v1881, %v1883
        %v1935 = vsel %vm1920, %v1883, %v1885
        %v1936 = vsel %vm1920, %v1885, %v1887
        %v1937 = vsel %vm1920, %v1887, %v1889
        %v1938 = vsel %vm1920, %v1889, %v1891
        %v1939 = vsel %vm1920, %v1891, %v1893
        %v1940 = vsel %vm1920, %v1893, %v1895
        %v1941 = vsel %vm1920, %v1895, %v1897
        %v1942 = vsel %vm1920, %v1897, %v1899
        %v1943 = vsel %vm1920, %v1899, %v1901
        %v1944 = vsel %vm1920, %v1901, %v1903
        %v1945 = vsel %vm1920, %v1903, %v1905
        %v1946 = vsel %vm1920, %v1905, %v1907
        %v1947 = vsel %vm1920, %v1907, %v1909
        %v1948 = vsel %vm1920, %v1909, %v1911
        %v1949 = vsel %vm1920, %v1911, %v1913
        %v1950 = vsel %vm1920, %v1913, %v1915
        %v1951 = vsel %vm1920, %v1915, %v1917
        %v1952 = vsel %vm1920, %v1917, %v1919
        %v1985 = vld [vmem:[%s0] sm:$0xff]
        %v1986 = vld [vmem:[%s0 + $0x8] sm:$0xff]
        %v1987 = vld [vmem:[%s0 + $0x10] sm:$0xff]
        %v1988 = vld [vmem:[%s0 + $0x18] sm:$0xff]
        %v1989 = vld [vmem:[%s0 + $0x20] sm:$0xff]
        %v1990 = vld [vmem:[%s0 + $0x28] sm:$0xff]
        %v1991 = vld [vmem:[%s0 + $0x30] sm:$0xff]
        %v1992 = vld [vmem:[%s0 + $0x38] sm:$0xff]
        %vm1993 = vcmask 130048
        %v1995 = vsel %vm1993, %v1985, 0
        %v1998 = vsel %vm1993, %v1986, 0
        %v2001 = vsel %vm1993, %v1987, 0
        %v2004 = vsel %vm1993, %v1988, 0
        %v2007 = vsel %vm1993, %v1989, 0
        %v2010 = vsel %vm1993, %v1990, 0
        %v2013 = vsel %vm1993, %v1991, 0
        %v2016 = vsel %vm1993, %v1992, 0
        %2018 = vmatprep.subr.mxu0 %v812
        %2019 = vmatpush1.msra.mxu0 %v780
        %2020 = vmatprep.subr.mxu0 %v1922
        %2021 = vmatpush1.msra.mxu0 %v1921
        %2022 = vmatprep.subr.mxu0 0.0
        %2023 = vmatpush1.msra.mxu0 0.0
        %2024 = vmatprep.subr.mxu0 0.0
        %2025 = vmatpush1.msra.mxu0 0.0
        %2026 = vmatprep.subr.mxu0 0.0
        %2027 = vmatpush1.msra.mxu0 0.0
        %2028 = vmatprep.subr.mxu0 0.0
        %2029 = vmatpush1.msra.mxu0 0.0
        %2030 = vmatprep.subr.mxu0 0.0
        %2031 = vmatpush1.msra.mxu0 0.0
        %2032 = vmatprep.subr.mxu0 0.0
        %2033 = vmatpush1.msra.mxu0 0.0
        %2034 = vmatprep.subr.mxu0 0.0
        %2035 = vmatpush1.msra.mxu0 0.0
        %2036 = vmatprep.subr.mxu0 0.0
        %2037 = vmatpush1.msra.mxu0 0.0
        %2038 = vmatprep.subr.mxu0 0.0
        %2039 = vmatpush1.msra.mxu0 0.0
        %2040 = vmatprep.subr.mxu0 0.0
        %2041 = vmatpush1.msra.mxu0 0.0
        %2042 = vmatprep.subr.mxu0 0.0
        %2043 = vmatpush1.msra.mxu0 0.0
        %2044 = vmatprep.subr.mxu0 0.0
        %2045 = vmatpush1.msra.mxu0 0.0
        %2046 = vmatprep.subr.mxu0 0.0
        %2047 = vmatpush1.msra.mxu0 0.0
        %2048 = vmatprep.subr.mxu0 0.0
        %2049 = vmatpush1.msra.mxu0 0.0
        %2050 = vmatprep.subr.mxu0 0.0
        %2051 = vmatpush1.msra.mxu0 0.0
        %2052 = vmatprep.subr.mxu0 0.0
        %2053 = vmatpush1.msra.mxu0 0.0
        %2054 = vmatprep.subr.mxu0 0.0
        %2055 = vmatpush1.msra.mxu0 0.0
        %2056 = vmatprep.subr.mxu0 0.0
        %2057 = vmatpush1.msra.mxu0 0.0
        %2058 = vmatprep.subr.mxu0 0.0
        %2059 = vmatpush1.msra.mxu0 0.0
        %2060 = vmatprep.subr.mxu0 0.0
        %2061 = vmatpush1.msra.mxu0 0.0
        %2062 = vmatprep.subr.mxu0 0.0
        %2063 = vmatpush1.msra.mxu0 0.0
        %2064 = vmatprep.subr.mxu0 0.0
        %2065 = vmatpush1.msra.mxu0 0.0
        %2066 = vmatprep.subr.mxu0 0.0
        %2067 = vmatpush1.msra.mxu0 0.0
        %2068 = vmatprep.subr.mxu0 0.0
        %2069 = vmatpush1.msra.mxu0 0.0
        %2070 = vmatprep.subr.mxu0 0.0
        %2071 = vmatpush1.msra.mxu0 0.0
        %2072 = vmatprep.subr.mxu0 0.0
        %2073 = vmatpush1.msra.mxu0 0.0
        %2074 = vmatprep.subr.mxu0 0.0
        %2075 = vmatpush1.msra.mxu0 0.0
        %2076 = vmatprep.subr.mxu0 0.0
        %2077 = vmatpush1.msra.mxu0 0.0
        %2078 = vmatprep.subr.mxu0 0.0
        %2079 = vmatpush1.msra.mxu0 0.0
        %2080 = vmatprep.subr.mxu0 0.0
        %2081 = vmatpush1.msra.mxu0 0.0
        %2082 = vmatprep.mubr.f32.mxu0 0.0
        %2083 = vmatmul.mubr.f32.gmra.mrb[0].mxu0 %v1995
        %v2084 = vpop.f32.mrb[0].mxu0
        %v2085 = vadd.f32 0.0, %v2084
        %v2086 = vpop.f32.mrb[0].mxu0
        %v2087 = vadd.f32 0.0, %v2086
        %2088 = vmatprep.mubr.f32.mxu0 0.0
        %2089 = vmatmul.mubr.f32.gmra.mrb[0].mxu0 %v1998
        %v2090 = vpop.f32.mrb[0].mxu0
        %v2091 = vadd.f32 0.0, %v2090
        %v2092 = vpop.f32.mrb[0].mxu0
        %v2093 = vadd.f32 0.0, %v2092
        %2094 = vmatprep.mubr.f32.mxu0 0.0
        %2095 = vmatmul.mubr.f32.gmra.mrb[0].mxu0 %v2001
        %v2096 = vpop.f32.mrb[0].mxu0
        %v2097 = vadd.f32 0.0, %v2096
        %v2098 = vpop.f32.mrb[0].mxu0
        %v2099 = vadd.f32 0.0, %v2098
        %2100 = vmatprep.mubr.f32.mxu0 0.0
        %2101 = vmatmul.mubr.f32.gmra.mrb[0].mxu0 %v2004
        %v2102 = vpop.f32.mrb[0].mxu0
        %v2103 = vadd.f32 0.0, %v2102
        %v2104 = vpop.f32.mrb[0].mxu0
        %v2105 = vadd.f32 0.0, %v2104
        %2106 = vmatprep.mubr.f32.mxu0 0.0
        %2107 = vmatmul.mubr.f32.gmra.mrb[0].mxu0 %v2007
        %v2108 = vpop.f32.mrb[0].mxu0
        %v2109 = vadd.f32 0.0, %v2108
        %v2110 = vpop.f32.mrb[0].mxu0
        %v2111 = vadd.f32 0.0, %v2110
        %2112 = vmatprep.mubr.f32.mxu0 0.0
        %2113 = vmatmul.mubr.f32.gmra.mrb[0].mxu0 %v2010
        %v2114 = vpop.f32.mrb[0].mxu0
        %v2115 = vadd.f32 0.0, %v2114
        %v2116 = vpop.f32.mrb[0].mxu0
        %v2117 = vadd.f32 0.0, %v2116
        %2118 = vmatprep.mubr.f32.mxu0 0.0
        %2119 = vmatmul.mubr.f32.gmra.mrb[0].mxu0 %v2013
        %v2120 = vpop.f32.mrb[0].mxu0
        %v2121 = vadd.f32 0.0, %v2120
        %v2122 = vpop.f32.mrb[0].mxu0
        %v2123 = vadd.f32 0.0, %v2122
        %2124 = vmatprep.mubr.f32.mxu0 0.0
        %2125 = vmatmul.mubr.f32.gmra.mrb[0].mxu0 %v2016
        %v2126 = vpop.f32.mrb[0].mxu0
        %v2127 = vadd.f32 0.0, %v2126
        %v2128 = vpop.f32.mrb[0].mxu0
        %v2129 = vadd.f32 0.0, %v2128
        %2130 = vdwg.mxu0
        %2131 = vmatprep.subr.mxu0 %v876
        %2132 = vmatpush1.msra.mxu0 %v844
        %2133 = vmatprep.subr.mxu0 %v1924
        %2134 = vmatpush1.msra.mxu0 %v1923
        %2135 = vmatprep.subr.mxu0 0.0
        %2136 = vmatpush1.msra.mxu0 0.0
        %2137 = vmatprep.subr.mxu0 0.0
        %2138 = vmatpush1.msra.mxu0 0.0
        %2139 = vmatprep.subr.mxu0 0.0
        %2140 = vmatpush1.msra.mxu0 0.0
        %2141 = vmatprep.subr.mxu0 0.0
        %2142 = vmatpush1.msra.mxu0 0.0
        %2143 = vmatprep.subr.mxu0 0.0
        %2144 = vmatpush1.msra.mxu0 0.0
        %2145 = vmatprep.subr.mxu0 0.0
        %2146 = vmatpush1.msra.mxu0 0.0
        %2147 = vmatprep.subr.mxu0 0.0
        %2148 = vmatpush1.msra.mxu0 0.0
        %2149 = vmatprep.subr.mxu0 0.0
        %2150 = vmatpush1.msra.mxu0 0.0
        %2151 = vmatprep.subr.mxu0 0.0
        %2152 = vmatpush1.msra.mxu0 0.0
        %2153 = vmatprep.subr.mxu0 0.0
        %2154 = vmatpush1.msra.mxu0 0.0
        %2155 = vmatprep.subr.mxu0 0.0
        %2156 = vmatpush1.msra.mxu0 0.0
        %2157 = vmatprep.subr.mxu0 0.0
        %2158 = vmatpush1.msra.mxu0 0.0
        %2159 = vmatprep.subr.mxu0 0.0
        %2160 = vmatpush1.msra.mxu0 0.0
        %2161 = vmatprep.subr.mxu0 0.0
        %2162 = vmatpush1.msra.mxu0 0.0
        %2163 = vmatprep.subr.mxu0 0.0
        %2164 = vmatpush1.msra.mxu0 0.0
        %2165 = vmatprep.subr.mxu0 0.0
        %2166 = vmatpush1.msra.mxu0 0.0
        %2167 = vmatprep.subr.mxu0 0.0
        %2168 = vmatpush1.msra.mxu0 0.0
        %2169 = vmatprep.subr.mxu0 0.0
        %2170 = vmatpush1.msra.mxu0 0.0
        %2171 = vmatprep.subr.mxu0 0.0
        %2172 = vmatpush1.msra.mxu0 0.0
        %2173 = vmatprep.subr.mxu0 0.0
        %2174 = vmatpush1.msra.mxu0 0.0
        %2175 = vmatprep.subr.mxu0 0.0
        %2176 = vmatpush1.msra.mxu0 0.0
        %2177 = vmatprep.subr.mxu0 0.0
        %2178 = vmatpush1.msra.mxu0 0.0
        %2179 = vmatprep.subr.mxu0 0.0
        %2180 = vmatpush1.msra.mxu0 0.0
        %2181 = vmatprep.subr.mxu0 0.0
        %2182 = vmatpush1.msra.mxu0 0.0
        %2183 = vmatprep.subr.mxu0 0.0
        %2184 = vmatpush1.msra.mxu0 0.0
        %2185 = vmatprep.subr.mxu0 0.0
        %2186 = vmatpush1.msra.mxu0 0.0
        %2187 = vmatprep.subr.mxu0 0.0
        %2188 = vmatpush1.msra.mxu0 0.0
        %2189 = vmatprep.subr.mxu0 0.0
        %2190 = vmatpush1.msra.mxu0 0.0
        %2191 = vmatprep.subr.mxu0 0.0
        %2192 = vmatpush1.msra.mxu0 0.0
        %2193 = vmatprep.subr.mxu0 0.0
        %2194 = vmatpush1.msra.mxu0 0.0
        %2195 = vmatprep.mubr.f32.mxu0 0.0
        %2196 = vmatmul.mubr.f32.gmra.mrb[0].mxu0 %v1995
        %v2197 = vpop.f32.mrb[0].mxu0
        %v2198 = vadd.f32 0.0, %v2197
        %v2199 = vpop.f32.mrb[0].mxu0
        %v2200 = vadd.f32 0.0, %v2199
        %2201 = vmatprep.mubr.f32.mxu0 0.0
        %2202 = vmatmul.mubr.f32.gmra.mrb[0].mxu0 %v1998
        %v2203 = vpop.f32.mrb[0].mxu0
        %v2204 = vadd.f32 0.0, %v2203
        %v2205 = vpop.f32.mrb[0].mxu0
        %v2206 = vadd.f32 0.0, %v2205
        %2207 = vmatprep.mubr.f32.mxu0 0.0
        %2208 = vmatmul.mubr.f32.gmra.mrb[0].mxu0 %v2001
        %v2209 = vpop.f32.mrb[0].mxu0
        %v2210 = vadd.f32 0.0, %v2209
        %v2211 = vpop.f32.mrb[0].mxu0
        %v2212 = vadd.f32 0.0, %v2211
        %2213 = vmatprep.mubr.f32.mxu0 0.0
        %2214 = vmatmul.mubr.f32.gmra.mrb[0].mxu0 %v2004
        %v2215 = vpop.f32.mrb[0].mxu0
        %v2216 = vadd.f32 0.0, %v2215
        %v2217 = vpop.f32.mrb[0].mxu0
        %v2218 = vadd.f32 0.0, %v2217
        %2219 = vmatprep.mubr.f32.mxu0 0.0
        %2220 = vmatmul.mubr.f32.gmra.mrb[0].mxu0 %v2007
        %v2221 = vpop.f32.mrb[0].mxu0
        %v2222 = vadd.f32 0.0, %v2221
        %v2223 = vpop.f32.mrb[0].mxu0
        %v2224 = vadd.f32 0.0, %v2223
        %2225 = vmatprep.mubr.f32.mxu0 0.0
        %2226 = vmatmul.mubr.f32.gmra.mrb[0].mxu0 %v2010
        %v2227 = vpop.f32.mrb[0].mxu0
        %v2228 = vadd.f32 0.0, %v2227
        %v2229 = vpop.f32.mrb[0].mxu0
        %v2230 = vadd.f32 0.0, %v2229
        %2231 = vmatprep.mubr.f32.mxu0 0.0
        %2232 = vmatmul.mubr.f32.gmra.mrb[0].mxu0 %v2013
        %v2233 = vpop.f32.mrb[0].mxu0
        %v2234 = vadd.f32 0.0, %v2233
        %v2235 = vpop.f32.mrb[0].mxu0
        %v2236 = vadd.f32 0.0, %v2235
        %2237 = vmatprep.mubr.f32.mxu0 0.0
        %2238 = vmatmul.mubr.f32.gmra.mrb[0].mxu0 %v2016
        %v2239 = vpop.f32.mrb[0].mxu0
        %v2240 = vadd.f32 0.0, %v2239
        %v2241 = vpop.f32.mrb[0].mxu0
        %v2242 = vadd.f32 0.0, %v2241
        %2243 = vdwg.mxu0
        %2244 = vmatprep.subr.mxu0 %v940
        %2245 = vmatpush1.msra.mxu0 %v908
        %2246 = vmatprep.subr.mxu0 %v1926
        %2247 = vmatpush1.msra.mxu0 %v1925
        %2248 = vmatprep.subr.mxu0 0.0
        %2249 = vmatpush1.msra.mxu0 0.0
        %2250 = vmatprep.subr.mxu0 0.0
        %2251 = vmatpush1.msra.mxu0 0.0
        %2252 = vmatprep.subr.mxu0 0.0
        %2253 = vmatpush1.msra.mxu0 0.0
        %2254 = vmatprep.subr.mxu0 0.0
        %2255 = vmatpush1.msra.mxu0 0.0
        %2256 = vmatprep.subr.mxu0 0.0
        %2257 = vmatpush1.msra.mxu0 0.0
        %2258 = vmatprep.subr.mxu0 0.0
        %2259 = vmatpush1.msra.mxu0 0.0
        %2260 = vmatprep.subr.mxu0 0.0
        %2261 = vmatpush1.msra.mxu0 0.0
        %2262 = vmatprep.subr.mxu0 0.0
        %2263 = vmatpush1.msra.mxu0 0.0
        %2264 = vmatprep.subr.mxu0 0.0
        %2265 = vmatpush1.msra.mxu0 0.0
        %2266 = vmatprep.subr.mxu0 0.0
        %2267 = vmatpush1.msra.mxu0 0.0
        %2268 = vmatprep.subr.mxu0 0.0
        %2269 = vmatpush1.msra.mxu0 0.0
        %2270 = vmatprep.subr.mxu0 0.0
        %2271 = vmatpush1.msra.mxu0 0.0
        %2272 = vmatprep.subr.mxu0 0.0
        %2273 = vmatpush1.msra.mxu0 0.0
        %2274 = vmatprep.subr.mxu0 0.0
        %2275 = vmatpush1.msra.mxu0 0.0
        %2276 = vmatprep.subr.mxu0 0.0
        %2277 = vmatpush1.msra.mxu0 0.0
        %2278 = vmatprep.subr.mxu0 0.0
        %2279 = vmatpush1.msra.mxu0 0.0
        %2280 = vmatprep.subr.mxu0 0.0
        %2281 = vmatpush1.msra.mxu0 0.0
        %2282 = vmatprep.subr.mxu0 0.0
        %2283 = vmatpush1.msra.mxu0 0.0
        %2284 = vmatprep.subr.mxu0 0.0
        %2285 = vmatpush1.msra.mxu0 0.0
        %2286 = vmatprep.subr.mxu0 0.0
        %2287 = vmatpush1.msra.mxu0 0.0
        %2288 = vmatprep.subr.mxu0 0.0
        %2289 = vmatpush1.msra.mxu0 0.0
        %2290 = vmatprep.subr.mxu0 0.0
        %2291 = vmatpush1.msra.mxu0 0.0
        %2292 = vmatprep.subr.mxu0 0.0
        %2293 = vmatpush1.msra.mxu0 0.0
        %2294 = vmatprep.subr.mxu0 0.0
        %2295 = vmatpush1.msra.mxu0 0.0
        %2296 = vmatprep.subr.mxu0 0.0
        %2297 = vmatpush1.msra.mxu0 0.0
        %2298 = vmatprep.subr.mxu0 0.0
        %2299 = vmatpush1.msra.mxu0 0.0
        %2300 = vmatprep.subr.mxu0 0.0
        %2301 = vmatpush1.msra.mxu0 0.0
        %2302 = vmatprep.subr.mxu0 0.0
        %2303 = vmatpush1.msra.mxu0 0.0
        %2304 = vmatprep.subr.mxu0 0.0
        %2305 = vmatpush1.msra.mxu0 0.0
        %2306 = vmatprep.subr.mxu0 0.0
        %2307 = vmatpush1.msra.mxu0 0.0
        %2308 = vmatprep.mubr.f32.mxu0 0.0
        %2309 = vmatmul.mubr.f32.gmra.mrb[0].mxu0 %v1995
        %v2310 = vpop.f32.mrb[0].mxu0
        %v2311 = vadd.f32 0.0, %v2310
        %v2312 = vpop.f32.mrb[0].mxu0
        %v2313 = vadd.f32 0.0, %v2312
        %2314 = vmatprep.mubr.f32.mxu0 0.0
        %2315 = vmatmul.mubr.f32.gmra.mrb[0].mxu0 %v1998
        %v2316 = vpop.f32.mrb[0].mxu0
        %v2317 = vadd.f32 0.0, %v2316
        %v2318 = vpop.f32.mrb[0].mxu0
        %v2319 = vadd.f32 0.0, %v2318
        %2320 = vmatprep.mubr.f32.mxu0 0.0
        %2321 = vmatmul.mubr.f32.gmra.mrb[0].mxu0 %v2001
        %v2322 = vpop.f32.mrb[0].mxu0
        %v2323 = vadd.f32 0.0, %v2322
        %v2324 = vpop.f32.mrb[0].mxu0
        %v2325 = vadd.f32 0.0, %v2324
        %2326 = vmatprep.mubr.f32.mxu0 0.0
        %2327 = vmatmul.mubr.f32.gmra.mrb[0].mxu0 %v2004
        %v2328 = vpop.f32.mrb[0].mxu0
        %v2329 = vadd.f32 0.0, %v2328
        %v2330 = vpop.f32.mrb[0].mxu0
        %v2331 = vadd.f32 0.0, %v2330
        %2332 = vmatprep.mubr.f32.mxu0 0.0
        %2333 = vmatmul.mubr.f32.gmra.mrb[0].mxu0 %v2007
        %v2334 = vpop.f32.mrb[0].mxu0
        %v2335 = vadd.f32 0.0, %v2334
        %v2336 = vpop.f32.mrb[0].mxu0
        %v2337 = vadd.f32 0.0, %v2336
        %2338 = vmatprep.mubr.f32.mxu0 0.0
        %2339 = vmatmul.mubr.f32.gmra.mrb[0].mxu0 %v2010
        %v2340 = vpop.f32.mrb[0].mxu0
        %v2341 = vadd.f32 0.0, %v2340
        %v2342 = vpop.f32.mrb[0].mxu0
        %v2343 = vadd.f32 0.0, %v2342
        %2344 = vmatprep.mubr.f32.mxu0 0.0
        %2345 = vmatmul.mubr.f32.gmra.mrb[0].mxu0 %v2013
        %v2346 = vpop.f32.mrb[0].mxu0
        %v2347 = vadd.f32 0.0, %v2346
        %v2348 = vpop.f32.mrb[0].mxu0
        %v2349 = vadd.f32 0.0, %v2348
        %2350 = vmatprep.mubr.f32.mxu0 0.0
        %2351 = vmatmul.mubr.f32.gmra.mrb[0].mxu0 %v2016
        %v2352 = vpop.f32.mrb[0].mxu0
        %v2353 = vadd.f32 0.0, %v2352
        %v2354 = vpop.f32.mrb[0].mxu0
        %v2355 = vadd.f32 0.0, %v2354
        %2356 = vdwg.mxu0
        %2357 = vmatprep.subr.mxu0 %v1004
        %2358 = vmatpush1.msra.mxu0 %v972
        %2359 = vmatprep.subr.mxu0 %v1928
        %2360 = vmatpush1.msra.mxu0 %v1927
        %2361 = vmatprep.subr.mxu0 0.0
        %2362 = vmatpush1.msra.mxu0 0.0
        %2363 = vmatprep.subr.mxu0 0.0
        %2364 = vmatpush1.msra.mxu0 0.0
        %2365 = vmatprep.subr.mxu0 0.0
        %2366 = vmatpush1.msra.mxu0 0.0
        %2367 = vmatprep.subr.mxu0 0.0
        %2368 = vmatpush1.msra.mxu0 0.0
        %2369 = vmatprep.subr.mxu0 0.0
        %2370 = vmatpush1.msra.mxu0 0.0
        %2371 = vmatprep.subr.mxu0 0.0
        %2372 = vmatpush1.msra.mxu0 0.0
        %2373 = vmatprep.subr.mxu0 0.0
        %2374 = vmatpush1.msra.mxu0 0.0
        %2375 = vmatprep.subr.mxu0 0.0
        %2376 = vmatpush1.msra.mxu0 0.0
        %2377 = vmatprep.subr.mxu0 0.0
        %2378 = vmatpush1.msra.mxu0 0.0
        %2379 = vmatprep.subr.mxu0 0.0
        %2380 = vmatpush1.msra.mxu0 0.0
        %2381 = vmatprep.subr.mxu0 0.0
        %2382 = vmatpush1.msra.mxu0 0.0
        %2383 = vmatprep.subr.mxu0 0.0
        %2384 = vmatpush1.msra.mxu0 0.0
        %2385 = vmatprep.subr.mxu0 0.0
        %2386 = vmatpush1.msra.mxu0 0.0
        %2387 = vmatprep.subr.mxu0 0.0
        %2388 = vmatpush1.msra.mxu0 0.0
        %2389 = vmatprep.subr.mxu0 0.0
        %2390 = vmatpush1.msra.mxu0 0.0
        %2391 = vmatprep.subr.mxu0 0.0
        %2392 = vmatpush1.msra.mxu0 0.0
        %2393 = vmatprep.subr.mxu0 0.0
        %2394 = vmatpush1.msra.mxu0 0.0
        %2395 = vmatprep.subr.mxu0 0.0
        %2396 = vmatpush1.msra.mxu0 0.0
        %2397 = vmatprep.subr.mxu0 0.0
        %2398 = vmatpush1.msra.mxu0 0.0
        %2399 = vmatprep.subr.mxu0 0.0
        %2400 = vmatpush1.msra.mxu0 0.0
        %2401 = vmatprep.subr.mxu0 0.0
        %2402 = vmatpush1.msra.mxu0 0.0
        %2403 = vmatprep.subr.mxu0 0.0
        %2404 = vmatpush1.msra.mxu0 0.0
        %2405 = vmatprep.subr.mxu0 0.0
        %2406 = vmatpush1.msra.mxu0 0.0
        %2407 = vmatprep.subr.mxu0 0.0
        %2408 = vmatpush1.msra.mxu0 0.0
        %2409 = vmatprep.subr.mxu0 0.0
        %2410 = vmatpush1.msra.mxu0 0.0
        %2411 = vmatprep.subr.mxu0 0.0
        %2412 = vmatpush1.msra.mxu0 0.0
        %2413 = vmatprep.subr.mxu0 0.0
        %2414 = vmatpush1.msra.mxu0 0.0
        %2415 = vmatprep.subr.mxu0 0.0
        %2416 = vmatpush1.msra.mxu0 0.0
        %2417 = vmatprep.subr.mxu0 0.0
        %2418 = vmatpush1.msra.mxu0 0.0
        %2419 = vmatprep.subr.mxu0 0.0
        %2420 = vmatpush1.msra.mxu0 0.0
        %2421 = vmatprep.mubr.f32.mxu0 0.0
        %2422 = vmatmul.mubr.f32.gmra.mrb[0].mxu0 %v1995
        %v2423 = vpop.f32.mrb[0].mxu0
        %v2424 = vadd.f32 0.0, %v2423
        %v2425 = vpop.f32.mrb[0].mxu0
        %v2426 = vadd.f32 0.0, %v2425
        %2427 = vmatprep.mubr.f32.mxu0 0.0
        %2428 = vmatmul.mubr.f32.gmra.mrb[0].mxu0 %v1998
        %v2429 = vpop.f32.mrb[0].mxu0
        %v2430 = vadd.f32 0.0, %v2429
        %v2431 = vpop.f32.mrb[0].mxu0
        %v2432 = vadd.f32 0.0, %v2431
        %2433 = vmatprep.mubr.f32.mxu0 0.0
        %2434 = vmatmul.mubr.f32.gmra.mrb[0].mxu0 %v2001
        %v2435 = vpop.f32.mrb[0].mxu0
        %v2436 = vadd.f32 0.0, %v2435
        %v2437 = vpop.f32.mrb[0].mxu0
        %v2438 = vadd.f32 0.0, %v2437
        %2439 = vmatprep.mubr.f32.mxu0 0.0
        %2440 = vmatmul.mubr.f32.gmra.mrb[0].mxu0 %v2004
        %v2441 = vpop.f32.mrb[0].mxu0
        %v2442 = vadd.f32 0.0, %v2441
        %v2443 = vpop.f32.mrb[0].mxu0
        %v2444 = vadd.f32 0.0, %v2443
        %2445 = vmatprep.mubr.f32.mxu0 0.0
        %2446 = vmatmul.mubr.f32.gmra.mrb[0].mxu0 %v2007
        %v2447 = vpop.f32.mrb[0].mxu0
        %v2448 = vadd.f32 0.0, %v2447
        %v2449 = vpop.f32.mrb[0].mxu0
        %v2450 = vadd.f32 0.0, %v2449
        %2451 = vmatprep.mubr.f32.mxu0 0.0
        %2452 = vmatmul.mubr.f32.gmra.mrb[0].mxu0 %v2010
        %v2453 = vpop.f32.mrb[0].mxu0
        %v2454 = vadd.f32 0.0, %v2453
        %v2455 = vpop.f32.mrb[0].mxu0
        %v2456 = vadd.f32 0.0, %v2455
        %2457 = vmatprep.mubr.f32.mxu0 0.0
        %2458 = vmatmul.mubr.f32.gmra.mrb[0].mxu0 %v2013
        %v2459 = vpop.f32.mrb[0].mxu0
        %v2460 = vadd.f32 0.0, %v2459
        %v2461 = vpop.f32.mrb[0].mxu0
        %v2462 = vadd.f32 0.0, %v2461
        %2463 = vmatprep.mubr.f32.mxu0 0.0
        %2464 = vmatmul.mubr.f32.gmra.mrb[0].mxu0 %v2016
        %v2465 = vpop.f32.mrb[0].mxu0
        %v2466 = vadd.f32 0.0, %v2465
        %v2467 = vpop.f32.mrb[0].mxu0
        %v2468 = vadd.f32 0.0, %v2467
        %2469 = vdwg.mxu0
        %2470 = vmatprep.subr.mxu0 %v1068
        %2471 = vmatpush1.msra.mxu0 %v1036
        %2472 = vmatprep.subr.mxu0 %v1930
        %2473 = vmatpush1.msra.mxu0 %v1929
        %2474 = vmatprep.subr.mxu0 0.0
        %2475 = vmatpush1.msra.mxu0 0.0
        %2476 = vmatprep.subr.mxu0 0.0
        %2477 = vmatpush1.msra.mxu0 0.0
        %2478 = vmatprep.subr.mxu0 0.0
        %2479 = vmatpush1.msra.mxu0 0.0
        %2480 = vmatprep.subr.mxu0 0.0
        %2481 = vmatpush1.msra.mxu0 0.0
        %2482 = vmatprep.subr.mxu0 0.0
        %2483 = vmatpush1.msra.mxu0 0.0
        %2484 = vmatprep.subr.mxu0 0.0
        %2485 = vmatpush1.msra.mxu0 0.0
        %2486 = vmatprep.subr.mxu0 0.0
        %2487 = vmatpush1.msra.mxu0 0.0
        %2488 = vmatprep.subr.mxu0 0.0
        %2489 = vmatpush1.msra.mxu0 0.0
        %2490 = vmatprep.subr.mxu0 0.0
        %2491 = vmatpush1.msra.mxu0 0.0
        %2492 = vmatprep.subr.mxu0 0.0
        %2493 = vmatpush1.msra.mxu0 0.0
        %2494 = vmatprep.subr.mxu0 0.0
        %2495 = vmatpush1.msra.mxu0 0.0
        %2496 = vmatprep.subr.mxu0 0.0
        %2497 = vmatpush1.msra.mxu0 0.0
        %2498 = vmatprep.subr.mxu0 0.0
        %2499 = vmatpush1.msra.mxu0 0.0
        %2500 = vmatprep.subr.mxu0 0.0
        %2501 = vmatpush1.msra.mxu0 0.0
        %2502 = vmatprep.subr.mxu0 0.0
        %2503 = vmatpush1.msra.mxu0 0.0
        %2504 = vmatprep.subr.mxu0 0.0
        %2505 = vmatpush1.msra.mxu0 0.0
        %2506 = vmatprep.subr.mxu0 0.0
        %2507 = vmatpush1.msra.mxu0 0.0
        %2508 = vmatprep.subr.mxu0 0.0
        %2509 = vmatpush1.msra.mxu0 0.0
        %2510 = vmatprep.subr.mxu0 0.0
        %2511 = vmatpush1.msra.mxu0 0.0
        %2512 = vmatprep.subr.mxu0 0.0
        %2513 = vmatpush1.msra.mxu0 0.0
        %2514 = vmatprep.subr.mxu0 0.0
        %2515 = vmatpush1.msra.mxu0 0.0
        %2516 = vmatprep.subr.mxu0 0.0
        %2517 = vmatpush1.msra.mxu0 0.0
        %2518 = vmatprep.subr.mxu0 0.0
        %2519 = vmatpush1.msra.mxu0 0.0
        %2520 = vmatprep.subr.mxu0 0.0
        %2521 = vmatpush1.msra.mxu0 0.0
        %2522 = vmatprep.subr.mxu0 0.0
        %2523 = vmatpush1.msra.mxu0 0.0
        %2524 = vmatprep.subr.mxu0 0.0
        %2525 = vmatpush1.msra.mxu0 0.0
        %2526 = vmatprep.subr.mxu0 0.0
        %2527 = vmatpush1.msra.mxu0 0.0
        %2528 = vmatprep.subr.mxu0 0.0
        %2529 = vmatpush1.msra.mxu0 0.0
        %2530 = vmatprep.subr.mxu0 0.0
        %2531 = vmatpush1.msra.mxu0 0.0
        %2532 = vmatprep.subr.mxu0 0.0
        %2533 = vmatpush1.msra.mxu0 0.0
        %2534 = vmatprep.mubr.f32.mxu0 0.0
        %2535 = vmatmul.mubr.f32.gmra.mrb[0].mxu0 %v1995
        %v2536 = vpop.f32.mrb[0].mxu0
        %v2537 = vadd.f32 0.0, %v2536
        %v2538 = vpop.f32.mrb[0].mxu0
        %v2539 = vadd.f32 0.0, %v2538
        %2540 = vmatprep.mubr.f32.mxu0 0.0
        %2541 = vmatmul.mubr.f32.gmra.mrb[0].mxu0 %v1998
        %v2542 = vpop.f32.mrb[0].mxu0
        %v2543 = vadd.f32 0.0, %v2542
        %v2544 = vpop.f32.mrb[0].mxu0
        %v2545 = vadd.f32 0.0, %v2544
        %2546 = vmatprep.mubr.f32.mxu0 0.0
        %2547 = vmatmul.mubr.f32.gmra.mrb[0].mxu0 %v2001
        %v2548 = vpop.f32.mrb[0].mxu0
        %v2549 = vadd.f32 0.0, %v2548
        %v2550 = vpop.f32.mrb[0].mxu0
        %v2551 = vadd.f32 0.0, %v2550
        %2552 = vmatprep.mubr.f32.mxu0 0.0
        %2553 = vmatmul.mubr.f32.gmra.mrb[0].mxu0 %v2004
        %v2554 = vpop.f32.mrb[0].mxu0
        %v2555 = vadd.f32 0.0, %v2554
        %v2556 = vpop.f32.mrb[0].mxu0
        %v2557 = vadd.f32 0.0, %v2556
        %2558 = vmatprep.mubr.f32.mxu0 0.0
        %2559 = vmatmul.mubr.f32.gmra.mrb[0].mxu0 %v2007
        %v2560 = vpop.f32.mrb[0].mxu0
        %v2561 = vadd.f32 0.0, %v2560
        %v2562 = vpop.f32.mrb[0].mxu0
        %v2563 = vadd.f32 0.0, %v2562
        %2564 = vmatprep.mubr.f32.mxu0 0.0
        %2565 = vmatmul.mubr.f32.gmra.mrb[0].mxu0 %v2010
        %v2566 = vpop.f32.mrb[0].mxu0
        %v2567 = vadd.f32 0.0, %v2566
        %v2568 = vpop.f32.mrb[0].mxu0
        %v2569 = vadd.f32 0.0, %v2568
        %2570 = vmatprep.mubr.f32.mxu0 0.0
        %2571 = vmatmul.mubr.f32.gmra.mrb[0].mxu0 %v2013
        %v2572 = vpop.f32.mrb[0].mxu0
        %v2573 = vadd.f32 0.0, %v2572
        %v2574 = vpop.f32.mrb[0].mxu0
        %v2575 = vadd.f32 0.0, %v2574
        %2576 = vmatprep.mubr.f32.mxu0 0.0
        %2577 = vmatmul.mubr.f32.gmra.mrb[0].mxu0 %v2016
        %v2578 = vpop.f32.mrb[0].mxu0
        %v2579 = vadd.f32 0.0, %v2578
        %v2580 = vpop.f32.mrb[0].mxu0
        %v2581 = vadd.f32 0.0, %v2580
        %2582 = vdwg.mxu0
        %2583 = vmatprep.subr.mxu0 %v1132
        %2584 = vmatpush1.msra.mxu0 %v1100
        %2585 = vmatprep.subr.mxu0 %v1932
        %2586 = vmatpush1.msra.mxu0 %v1931
        %2587 = vmatprep.subr.mxu0 0.0
        %2588 = vmatpush1.msra.mxu0 0.0
        %2589 = vmatprep.subr.mxu0 0.0
        %2590 = vmatpush1.msra.mxu0 0.0
        %2591 = vmatprep.subr.mxu0 0.0
        %2592 = vmatpush1.msra.mxu0 0.0
        %2593 = vmatprep.subr.mxu0 0.0
        %2594 = vmatpush1.msra.mxu0 0.0
        %2595 = vmatprep.subr.mxu0 0.0
        %2596 = vmatpush1.msra.mxu0 0.0
        %2597 = vmatprep.subr.mxu0 0.0
        %2598 = vmatpush1.msra.mxu0 0.0
        %2599 = vmatprep.subr.mxu0 0.0
        %2600 = vmatpush1.msra.mxu0 0.0
        %2601 = vmatprep.subr.mxu0 0.0
        %2602 = vmatpush1.msra.mxu0 0.0
        %2603 = vmatprep.subr.mxu0 0.0
        %2604 = vmatpush1.msra.mxu0 0.0
        %2605 = vmatprep.subr.mxu0 0.0
        %2606 = vmatpush1.msra.mxu0 0.0
        %2607 = vmatprep.subr.mxu0 0.0
        %2608 = vmatpush1.msra.mxu0 0.0
        %2609 = vmatprep.subr.mxu0 0.0
        %2610 = vmatpush1.msra.mxu0 0.0
        %2611 = vmatprep.subr.mxu0 0.0
        %2612 = vmatpush1.msra.mxu0 0.0
        %2613 = vmatprep.subr.mxu0 0.0
        %2614 = vmatpush1.msra.mxu0 0.0
        %2615 = vmatprep.subr.mxu0 0.0
        %2616 = vmatpush1.msra.mxu0 0.0
        %2617 = vmatprep.subr.mxu0 0.0
        %2618 = vmatpush1.msra.mxu0 0.0
        %2619 = vmatprep.subr.mxu0 0.0
        %2620 = vmatpush1.msra.mxu0 0.0
        %2621 = vmatprep.subr.mxu0 0.0
        %2622 = vmatpush1.msra.mxu0 0.0
        %2623 = vmatprep.subr.mxu0 0.0
        %2624 = vmatpush1.msra.mxu0 0.0
        %2625 = vmatprep.subr.mxu0 0.0
        %2626 = vmatpush1.msra.mxu0 0.0
        %2627 = vmatprep.subr.mxu0 0.0
        %2628 = vmatpush1.msra.mxu0 0.0
        %2629 = vmatprep.subr.mxu0 0.0
        %2630 = vmatpush1.msra.mxu0 0.0
        %2631 = vmatprep.subr.mxu0 0.0
        %2632 = vmatpush1.msra.mxu0 0.0
        %2633 = vmatprep.subr.mxu0 0.0
        %2634 = vmatpush1.msra.mxu0 0.0
        %2635 = vmatprep.subr.mxu0 0.0
        %2636 = vmatpush1.msra.mxu0 0.0
        %2637 = vmatprep.subr.mxu0 0.0
        %2638 = vmatpush1.msra.mxu0 0.0
        %2639 = vmatprep.subr.mxu0 0.0
        %2640 = vmatpush1.msra.mxu0 0.0
        %2641 = vmatprep.subr.mxu0 0.0
        %2642 = vmatpush1.msra.mxu0 0.0
        %2643 = vmatprep.subr.mxu0 0.0
        %2644 = vmatpush1.msra.mxu0 0.0
        %2645 = vmatprep.subr.mxu0 0.0
        %2646 = vmatpush1.msra.mxu0 0.0
        %2647 = vmatprep.mubr.f32.mxu0 0.0
        %2648 = vmatmul.mubr.f32.gmra.mrb[0].mxu0 %v1995
        %v2649 = vpop.f32.mrb[0].mxu0
        %v2650 = vadd.f32 0.0, %v2649
        %v2651 = vpop.f32.mrb[0].mxu0
        %v2652 = vadd.f32 0.0, %v2651
        %2653 = vmatprep.mubr.f32.mxu0 0.0
        %2654 = vmatmul.mubr.f32.gmra.mrb[0].mxu0 %v1998
        %v2655 = vpop.f32.mrb[0].mxu0
        %v2656 = vadd.f32 0.0, %v2655
        %v2657 = vpop.f32.mrb[0].mxu0
        %v2658 = vadd.f32 0.0, %v2657
        %2659 = vmatprep.mubr.f32.mxu0 0.0
        %2660 = vmatmul.mubr.f32.gmra.mrb[0].mxu0 %v2001
        %v2661 = vpop.f32.mrb[0].mxu0
        %v2662 = vadd.f32 0.0, %v2661
        %v2663 = vpop.f32.mrb[0].mxu0
        %v2664 = vadd.f32 0.0, %v2663
        %2665 = vmatprep.mubr.f32.mxu0 0.0
        %2666 = vmatmul.mubr.f32.gmra.mrb[0].mxu0 %v2004
        %v2667 = vpop.f32.mrb[0].mxu0
        %v2668 = vadd.f32 0.0, %v2667
        %v2669 = vpop.f32.mrb[0].mxu0
        %v2670 = vadd.f32 0.0, %v2669
        %2671 = vmatprep.mubr.f32.mxu0 0.0
        %2672 = vmatmul.mubr.f32.gmra.mrb[0].mxu0 %v2007
        %v2673 = vpop.f32.mrb[0].mxu0
        %v2674 = vadd.f32 0.0, %v2673
        %v2675 = vpop.f32.mrb[0].mxu0
        %v2676 = vadd.f32 0.0, %v2675
        %2677 = vmatprep.mubr.f32.mxu0 0.0
        %2678 = vmatmul.mubr.f32.gmra.mrb[0].mxu0 %v2010
        %v2679 = vpop.f32.mrb[0].mxu0
        %v2680 = vadd.f32 0.0, %v2679
        %v2681 = vpop.f32.mrb[0].mxu0
        %v2682 = vadd.f32 0.0, %v2681
        %2683 = vmatprep.mubr.f32.mxu0 0.0
        %2684 = vmatmul.mubr.f32.gmra.mrb[0].mxu0 %v2013
        %v2685 = vpop.f32.mrb[0].mxu0
        %v2686 = vadd.f32 0.0, %v2685
        %v2687 = vpop.f32.mrb[0].mxu0
        %v2688 = vadd.f32 0.0, %v2687
        %2689 = vmatprep.mubr.f32.mxu0 0.0
        %2690 = vmatmul.mubr.f32.gmra.mrb[0].mxu0 %v2016
        %v2691 = vpop.f32.mrb[0].mxu0
        %v2692 = vadd.f32 0.0, %v2691
        %v2693 = vpop.f32.mrb[0].mxu0
        %v2694 = vadd.f32 0.0, %v2693
        %2695 = vdwg.mxu0
        %2696 = vmatprep.subr.mxu0 %v1196
        %2697 = vmatpush1.msra.mxu0 %v1164
        %2698 = vmatprep.subr.mxu0 %v1934
        %2699 = vmatpush1.msra.mxu0 %v1933
        %2700 = vmatprep.subr.mxu0 0.0
        %2701 = vmatpush1.msra.mxu0 0.0
        %2702 = vmatprep.subr.mxu0 0.0
        %2703 = vmatpush1.msra.mxu0 0.0
        %2704 = vmatprep.subr.mxu0 0.0
        %2705 = vmatpush1.msra.mxu0 0.0
        %2706 = vmatprep.subr.mxu0 0.0
        %2707 = vmatpush1.msra.mxu0 0.0
        %2708 = vmatprep.subr.mxu0 0.0
        %2709 = vmatpush1.msra.mxu0 0.0
        %2710 = vmatprep.subr.mxu0 0.0
        %2711 = vmatpush1.msra.mxu0 0.0
        %2712 = vmatprep.subr.mxu0 0.0
        %2713 = vmatpush1.msra.mxu0 0.0
        %2714 = vmatprep.subr.mxu0 0.0
        %2715 = vmatpush1.msra.mxu0 0.0
        %2716 = vmatprep.subr.mxu0 0.0
        %2717 = vmatpush1.msra.mxu0 0.0
        %2718 = vmatprep.subr.mxu0 0.0
        %2719 = vmatpush1.msra.mxu0 0.0
        %2720 = vmatprep.subr.mxu0 0.0
        %2721 = vmatpush1.msra.mxu0 0.0
        %2722 = vmatprep.subr.mxu0 0.0
        %2723 = vmatpush1.msra.mxu0 0.0
        %2724 = vmatprep.subr.mxu0 0.0
        %2725 = vmatpush1.msra.mxu0 0.0
        %2726 = vmatprep.subr.mxu0 0.0
        %2727 = vmatpush1.msra.mxu0 0.0
        %2728 = vmatprep.subr.mxu0 0.0
        %2729 = vmatpush1.msra.mxu0 0.0
        %2730 = vmatprep.subr.mxu0 0.0
        %2731 = vmatpush1.msra.mxu0 0.0
        %2732 = vmatprep.subr.mxu0 0.0
        %2733 = vmatpush1.msra.mxu0 0.0
        %2734 = vmatprep.subr.mxu0 0.0
        %2735 = vmatpush1.msra.mxu0 0.0
        %2736 = vmatprep.subr.mxu0 0.0
        %2737 = vmatpush1.msra.mxu0 0.0
        %2738 = vmatprep.subr.mxu0 0.0
        %2739 = vmatpush1.msra.mxu0 0.0
        %2740 = vmatprep.subr.mxu0 0.0
        %2741 = vmatpush1.msra.mxu0 0.0
        %2742 = vmatprep.subr.mxu0 0.0
        %2743 = vmatpush1.msra.mxu0 0.0
        %2744 = vmatprep.subr.mxu0 0.0
        %2745 = vmatpush1.msra.mxu0 0.0
        %2746 = vmatprep.subr.mxu0 0.0
        %2747 = vmatpush1.msra.mxu0 0.0
        %2748 = vmatprep.subr.mxu0 0.0
        %2749 = vmatpush1.msra.mxu0 0.0
        %2750 = vmatprep.subr.mxu0 0.0
        %2751 = vmatpush1.msra.mxu0 0.0
        %2752 = vmatprep.subr.mxu0 0.0
        %2753 = vmatpush1.msra.mxu0 0.0
        %2754 = vmatprep.subr.mxu0 0.0
        %2755 = vmatpush1.msra.mxu0 0.0
        %2756 = vmatprep.subr.mxu0 0.0
        %2757 = vmatpush1.msra.mxu0 0.0
        %2758 = vmatprep.subr.mxu0 0.0
        %2759 = vmatpush1.msra.mxu0 0.0
        %2760 = vmatprep.mubr.f32.mxu0 0.0
        %2761 = vmatmul.mubr.f32.gmra.mrb[0].mxu0 %v1995
        %v2762 = vpop.f32.mrb[0].mxu0
        %v2763 = vadd.f32 0.0, %v2762
        %v2764 = vpop.f32.mrb[0].mxu0
        %v2765 = vadd.f32 0.0, %v2764
        %2766 = vmatprep.mubr.f32.mxu0 0.0
        %2767 = vmatmul.mubr.f32.gmra.mrb[0].mxu0 %v1998
        %v2768 = vpop.f32.mrb[0].mxu0
        %v2769 = vadd.f32 0.0, %v2768
        %v2770 = vpop.f32.mrb[0].mxu0
        %v2771 = vadd.f32 0.0, %v2770
        %2772 = vmatprep.mubr.f32.mxu0 0.0
        %2773 = vmatmul.mubr.f32.gmra.mrb[0].mxu0 %v2001
        %v2774 = vpop.f32.mrb[0].mxu0
        %v2775 = vadd.f32 0.0, %v2774
        %v2776 = vpop.f32.mrb[0].mxu0
        %v2777 = vadd.f32 0.0, %v2776
        %2778 = vmatprep.mubr.f32.mxu0 0.0
        %2779 = vmatmul.mubr.f32.gmra.mrb[0].mxu0 %v2004
        %v2780 = vpop.f32.mrb[0].mxu0
        %v2781 = vadd.f32 0.0, %v2780
        %v2782 = vpop.f32.mrb[0].mxu0
        %v2783 = vadd.f32 0.0, %v2782
        %2784 = vmatprep.mubr.f32.mxu0 0.0
        %2785 = vmatmul.mubr.f32.gmra.mrb[0].mxu0 %v2007
        %v2786 = vpop.f32.mrb[0].mxu0
        %v2787 = vadd.f32 0.0, %v2786
        %v2788 = vpop.f32.mrb[0].mxu0
        %v2789 = vadd.f32 0.0, %v2788
        %2790 = vmatprep.mubr.f32.mxu0 0.0
        %2791 = vmatmul.mubr.f32.gmra.mrb[0].mxu0 %v2010
        %v2792 = vpop.f32.mrb[0].mxu0
        %v2793 = vadd.f32 0.0, %v2792
        %v2794 = vpop.f32.mrb[0].mxu0
        %v2795 = vadd.f32 0.0, %v2794
        %2796 = vmatprep.mubr.f32.mxu0 0.0
        %2797 = vmatmul.mubr.f32.gmra.mrb[0].mxu0 %v2013
        %v2798 = vpop.f32.mrb[0].mxu0
        %v2799 = vadd.f32 0.0, %v2798
        %v2800 = vpop.f32.mrb[0].mxu0
        %v2801 = vadd.f32 0.0, %v2800
        %2802 = vmatprep.mubr.f32.mxu0 0.0
        %2803 = vmatmul.mubr.f32.gmra.mrb[0].mxu0 %v2016
        %v2804 = vpop.f32.mrb[0].mxu0
        %v2805 = vadd.f32 0.0, %v2804
        %v2806 = vpop.f32.mrb[0].mxu0
        %v2807 = vadd.f32 0.0, %v2806
        %2808 = vdwg.mxu0
        %2809 = vmatprep.subr.mxu0 %v1260
        %2810 = vmatpush1.msra.mxu0 %v1228
        %2811 = vmatprep.subr.mxu0 %v1936
        %2812 = vmatpush1.msra.mxu0 %v1935
        %2813 = vmatprep.subr.mxu0 0.0
        %2814 = vmatpush1.msra.mxu0 0.0
        %2815 = vmatprep.subr.mxu0 0.0
        %2816 = vmatpush1.msra.mxu0 0.0
        %2817 = vmatprep.subr.mxu0 0.0
        %2818 = vmatpush1.msra.mxu0 0.0
        %2819 = vmatprep.subr.mxu0 0.0
        %2820 = vmatpush1.msra.mxu0 0.0
        %2821 = vmatprep.subr.mxu0 0.0
        %2822 = vmatpush1.msra.mxu0 0.0
        %2823 = vmatprep.subr.mxu0 0.0
        %2824 = vmatpush1.msra.mxu0 0.0
        %2825 = vmatprep.subr.mxu0 0.0
        %2826 = vmatpush1.msra.mxu0 0.0
        %2827 = vmatprep.subr.mxu0 0.0
        %2828 = vmatpush1.msra.mxu0 0.0
        %2829 = vmatprep.subr.mxu0 0.0
        %2830 = vmatpush1.msra.mxu0 0.0
        %2831 = vmatprep.subr.mxu0 0.0
        %2832 = vmatpush1.msra.mxu0 0.0
        %2833 = vmatprep.subr.mxu0 0.0
        %2834 = vmatpush1.msra.mxu0 0.0
        %2835 = vmatprep.subr.mxu0 0.0
        %2836 = vmatpush1.msra.mxu0 0.0
        %2837 = vmatprep.subr.mxu0 0.0
        %2838 = vmatpush1.msra.mxu0 0.0
        %2839 = vmatprep.subr.mxu0 0.0
        %2840 = vmatpush1.msra.mxu0 0.0
        %2841 = vmatprep.subr.mxu0 0.0
        %2842 = vmatpush1.msra.mxu0 0.0
        %2843 = vmatprep.subr.mxu0 0.0
        %2844 = vmatpush1.msra.mxu0 0.0
        %2845 = vmatprep.subr.mxu0 0.0
        %2846 = vmatpush1.msra.mxu0 0.0
        %2847 = vmatprep.subr.mxu0 0.0
        %2848 = vmatpush1.msra.mxu0 0.0
        %2849 = vmatprep.subr.mxu0 0.0
        %2850 = vmatpush1.msra.mxu0 0.0
        %2851 = vmatprep.subr.mxu0 0.0
        %2852 = vmatpush1.msra.mxu0 0.0
        %2853 = vmatprep.subr.mxu0 0.0
        %2854 = vmatpush1.msra.mxu0 0.0
        %2855 = vmatprep.subr.mxu0 0.0
        %2856 = vmatpush1.msra.mxu0 0.0
        %2857 = vmatprep.subr.mxu0 0.0
        %2858 = vmatpush1.msra.mxu0 0.0
        %2859 = vmatprep.subr.mxu0 0.0
        %2860 = vmatpush1.msra.mxu0 0.0
        %2861 = vmatprep.subr.mxu0 0.0
        %2862 = vmatpush1.msra.mxu0 0.0
        %2863 = vmatprep.subr.mxu0 0.0
        %2864 = vmatpush1.msra.mxu0 0.0
        %2865 = vmatprep.subr.mxu0 0.0
        %2866 = vmatpush1.msra.mxu0 0.0
        %2867 = vmatprep.subr.mxu0 0.0
        %2868 = vmatpush1.msra.mxu0 0.0
        %2869 = vmatprep.subr.mxu0 0.0
        %2870 = vmatpush1.msra.mxu0 0.0
        %2871 = vmatprep.subr.mxu0 0.0
        %2872 = vmatpush1.msra.mxu0 0.0
        %2873 = vmatprep.mubr.f32.mxu0 0.0
        %2874 = vmatmul.mubr.f32.gmra.mrb[0].mxu0 %v1995
        %v2875 = vpop.f32.mrb[0].mxu0
        %v2876 = vadd.f32 0.0, %v2875
        %v2877 = vpop.f32.mrb[0].mxu0
        %v2878 = vadd.f32 0.0, %v2877
        %2879 = vmatprep.mubr.f32.mxu0 0.0
        %2880 = vmatmul.mubr.f32.gmra.mrb[0].mxu0 %v1998
        %v2881 = vpop.f32.mrb[0].mxu0
        %v2882 = vadd.f32 0.0, %v2881
        %v2883 = vpop.f32.mrb[0].mxu0
        %v2884 = vadd.f32 0.0, %v2883
        %2885 = vmatprep.mubr.f32.mxu0 0.0
        %2886 = vmatmul.mubr.f32.gmra.mrb[0].mxu0 %v2001
        %v2887 = vpop.f32.mrb[0].mxu0
        %v2888 = vadd.f32 0.0, %v2887
        %v2889 = vpop.f32.mrb[0].mxu0
        %v2890 = vadd.f32 0.0, %v2889
        %2891 = vmatprep.mubr.f32.mxu0 0.0
        %2892 = vmatmul.mubr.f32.gmra.mrb[0].mxu0 %v2004
        %v2893 = vpop.f32.mrb[0].mxu0
        %v2894 = vadd.f32 0.0, %v2893
        %v2895 = vpop.f32.mrb[0].mxu0
        %v2896 = vadd.f32 0.0, %v2895
        %2897 = vmatprep.mubr.f32.mxu0 0.0
        %2898 = vmatmul.mubr.f32.gmra.mrb[0].mxu0 %v2007
        %v2899 = vpop.f32.mrb[0].mxu0
        %v2900 = vadd.f32 0.0, %v2899
        %v2901 = vpop.f32.mrb[0].mxu0
        %v2902 = vadd.f32 0.0, %v2901
        %2903 = vmatprep.mubr.f32.mxu0 0.0
        %2904 = vmatmul.mubr.f32.gmra.mrb[0].mxu0 %v2010
        %v2905 = vpop.f32.mrb[0].mxu0
        %v2906 = vadd.f32 0.0, %v2905
        %v2907 = vpop.f32.mrb[0].mxu0
        %v2908 = vadd.f32 0.0, %v2907
        %2909 = vmatprep.mubr.f32.mxu0 0.0
        %2910 = vmatmul.mubr.f32.gmra.mrb[0].mxu0 %v2013
        %v2911 = vpop.f32.mrb[0].mxu0
        %v2912 = vadd.f32 0.0, %v2911
        %v2913 = vpop.f32.mrb[0].mxu0
        %v2914 = vadd.f32 0.0, %v2913
        %2915 = vmatprep.mubr.f32.mxu0 0.0
        %2916 = vmatmul.mubr.f32.gmra.mrb[0].mxu0 %v2016
        %v2917 = vpop.f32.mrb[0].mxu0
        %v2918 = vadd.f32 0.0, %v2917
        %v2919 = vpop.f32.mrb[0].mxu0
        %v2920 = vadd.f32 0.0, %v2919
        %2921 = vdwg.mxu0
        %2922 = vmatprep.subr.mxu0 %v1324
        %2923 = vmatpush1.msra.mxu0 %v1292
        %2924 = vmatprep.subr.mxu0 %v1938
        %2925 = vmatpush1.msra.mxu0 %v1937
        %2926 = vmatprep.subr.mxu0 0.0
        %2927 = vmatpush1.msra.mxu0 0.0
        %2928 = vmatprep.subr.mxu0 0.0
        %2929 = vmatpush1.msra.mxu0 0.0
        %2930 = vmatprep.subr.mxu0 0.0
        %2931 = vmatpush1.msra.mxu0 0.0
        %2932 = vmatprep.subr.mxu0 0.0
        %2933 = vmatpush1.msra.mxu0 0.0
        %2934 = vmatprep.subr.mxu0 0.0
        %2935 = vmatpush1.msra.mxu0 0.0
        %2936 = vmatprep.subr.mxu0 0.0
        %2937 = vmatpush1.msra.mxu0 0.0
        %2938 = vmatprep.subr.mxu0 0.0
        %2939 = vmatpush1.msra.mxu0 0.0
        %2940 = vmatprep.subr.mxu0 0.0
        %2941 = vmatpush1.msra.mxu0 0.0
        %2942 = vmatprep.subr.mxu0 0.0
        %2943 = vmatpush1.msra.mxu0 0.0
        %2944 = vmatprep.subr.mxu0 0.0
        %2945 = vmatpush1.msra.mxu0 0.0
        %2946 = vmatprep.subr.mxu0 0.0
        %2947 = vmatpush1.msra.mxu0 0.0
        %2948 = vmatprep.subr.mxu0 0.0
        %2949 = vmatpush1.msra.mxu0 0.0
        %2950 = vmatprep.subr.mxu0 0.0
        %2951 = vmatpush1.msra.mxu0 0.0
        %2952 = vmatprep.subr.mxu0 0.0
        %2953 = vmatpush1.msra.mxu0 0.0
        %2954 = vmatprep.subr.mxu0 0.0
        %2955 = vmatpush1.msra.mxu0 0.0
        %2956 = vmatprep.subr.mxu0 0.0
        %2957 = vmatpush1.msra.mxu0 0.0
        %2958 = vmatprep.subr.mxu0 0.0
        %2959 = vmatpush1.msra.mxu0 0.0
        %2960 = vmatprep.subr.mxu0 0.0
        %2961 = vmatpush1.msra.mxu0 0.0
        %2962 = vmatprep.subr.mxu0 0.0
        %2963 = vmatpush1.msra.mxu0 0.0
        %2964 = vmatprep.subr.mxu0 0.0
        %2965 = vmatpush1.msra.mxu0 0.0
        %2966 = vmatprep.subr.mxu0 0.0
        %2967 = vmatpush1.msra.mxu0 0.0
        %2968 = vmatprep.subr.mxu0 0.0
        %2969 = vmatpush1.msra.mxu0 0.0
        %2970 = vmatprep.subr.mxu0 0.0
        %2971 = vmatpush1.msra.mxu0 0.0
        %2972 = vmatprep.subr.mxu0 0.0
        %2973 = vmatpush1.msra.mxu0 0.0
        %2974 = vmatprep.subr.mxu0 0.0
        %2975 = vmatpush1.msra.mxu0 0.0
        %2976 = vmatprep.subr.mxu0 0.0
        %2977 = vmatpush1.msra.mxu0 0.0
        %2978 = vmatprep.subr.mxu0 0.0
        %2979 = vmatpush1.msra.mxu0 0.0
        %2980 = vmatprep.subr.mxu0 0.0
        %2981 = vmatpush1.msra.mxu0 0.0
        %2982 = vmatprep.subr.mxu0 0.0
        %2983 = vmatpush1.msra.mxu0 0.0
        %2984 = vmatprep.subr.mxu0 0.0
        %2985 = vmatpush1.msra.mxu0 0.0
        %2986 = vmatprep.mubr.f32.mxu0 0.0
        %2987 = vmatmul.mubr.f32.gmra.mrb[0].mxu0 %v1995
        %v2988 = vpop.f32.mrb[0].mxu0
        %v2989 = vadd.f32 0.0, %v2988
        %v2990 = vpop.f32.mrb[0].mxu0
        %v2991 = vadd.f32 0.0, %v2990
        %2992 = vmatprep.mubr.f32.mxu0 0.0
        %2993 = vmatmul.mubr.f32.gmra.mrb[0].mxu0 %v1998
        %v2994 = vpop.f32.mrb[0].mxu0
        %v2995 = vadd.f32 0.0, %v2994
        %v2996 = vpop.f32.mrb[0].mxu0
        %v2997 = vadd.f32 0.0, %v2996
        %2998 = vmatprep.mubr.f32.mxu0 0.0
        %2999 = vmatmul.mubr.f32.gmra.mrb[0].mxu0 %v2001
        %v3000 = vpop.f32.mrb[0].mxu0
        %v3001 = vadd.f32 0.0, %v3000
        %v3002 = vpop.f32.mrb[0].mxu0
        %v3003 = vadd.f32 0.0, %v3002
        %3004 = vmatprep.mubr.f32.mxu0 0.0
        %3005 = vmatmul.mubr.f32.gmra.mrb[0].mxu0 %v2004
        %v3006 = vpop.f32.mrb[0].mxu0
        %v3007 = vadd.f32 0.0, %v3006
        %v3008 = vpop.f32.mrb[0].mxu0
        %v3009 = vadd.f32 0.0, %v3008
        %3010 = vmatprep.mubr.f32.mxu0 0.0
        %3011 = vmatmul.mubr.f32.gmra.mrb[0].mxu0 %v2007
        %v3012 = vpop.f32.mrb[0].mxu0
        %v3013 = vadd.f32 0.0, %v3012
        %v3014 = vpop.f32.mrb[0].mxu0
        %v3015 = vadd.f32 0.0, %v3014
        %3016 = vmatprep.mubr.f32.mxu0 0.0
        %3017 = vmatmul.mubr.f32.gmra.mrb[0].mxu0 %v2010
        %v3018 = vpop.f32.mrb[0].mxu0
        %v3019 = vadd.f32 0.0, %v3018
        %v3020 = vpop.f32.mrb[0].mxu0
        %v3021 = vadd.f32 0.0, %v3020
        %3022 = vmatprep.mubr.f32.mxu0 0.0
        %3023 = vmatmul.mubr.f32.gmra.mrb[0].mxu0 %v2013
        %v3024 = vpop.f32.mrb[0].mxu0
        %v3025 = vadd.f32 0.0, %v3024
        %v3026 = vpop.f32.mrb[0].mxu0
        %v3027 = vadd.f32 0.0, %v3026
        %3028 = vmatprep.mubr.f32.mxu0 0.0
        %3029 = vmatmul.mubr.f32.gmra.mrb[0].mxu0 %v2016
        %v3030 = vpop.f32.mrb[0].mxu0
        %v3031 = vadd.f32 0.0, %v3030
        %v3032 = vpop.f32.mrb[0].mxu0
        %v3033 = vadd.f32 0.0, %v3032
        %3034 = vdwg.mxu0
        %3035 = vmatprep.subr.mxu0 %v1388
        %3036 = vmatpush1.msra.mxu0 %v1356
        %3037 = vmatprep.subr.mxu0 %v1940
        %3038 = vmatpush1.msra.mxu0 %v1939
        %3039 = vmatprep.subr.mxu0 0.0
        %3040 = vmatpush1.msra.mxu0 0.0
        %3041 = vmatprep.subr.mxu0 0.0
        %3042 = vmatpush1.msra.mxu0 0.0
        %3043 = vmatprep.subr.mxu0 0.0
        %3044 = vmatpush1.msra.mxu0 0.0
        %3045 = vmatprep.subr.mxu0 0.0
        %3046 = vmatpush1.msra.mxu0 0.0
        %3047 = vmatprep.subr.mxu0 0.0
        %3048 = vmatpush1.msra.mxu0 0.0
        %3049 = vmatprep.subr.mxu0 0.0
        %3050 = vmatpush1.msra.mxu0 0.0
        %3051 = vmatprep.subr.mxu0 0.0
        %3052 = vmatpush1.msra.mxu0 0.0
        %3053 = vmatprep.subr.mxu0 0.0
        %3054 = vmatpush1.msra.mxu0 0.0
        %3055 = vmatprep.subr.mxu0 0.0
        %3056 = vmatpush1.msra.mxu0 0.0
        %3057 = vmatprep.subr.mxu0 0.0
        %3058 = vmatpush1.msra.mxu0 0.0
        %3059 = vmatprep.subr.mxu0 0.0
        %3060 = vmatpush1.msra.mxu0 0.0
        %3061 = vmatprep.subr.mxu0 0.0
        %3062 = vmatpush1.msra.mxu0 0.0
        %3063 = vmatprep.subr.mxu0 0.0
        %3064 = vmatpush1.msra.mxu0 0.0
        %3065 = vmatprep.subr.mxu0 0.0
        %3066 = vmatpush1.msra.mxu0 0.0
        %3067 = vmatprep.subr.mxu0 0.0
        %3068 = vmatpush1.msra.mxu0 0.0
        %3069 = vmatprep.subr.mxu0 0.0
        %3070 = vmatpush1.msra.mxu0 0.0
        %3071 = vmatprep.subr.mxu0 0.0
        %3072 = vmatpush1.msra.mxu0 0.0
        %3073 = vmatprep.subr.mxu0 0.0
        %3074 = vmatpush1.msra.mxu0 0.0
        %3075 = vmatprep.subr.mxu0 0.0
        %3076 = vmatpush1.msra.mxu0 0.0
        %3077 = vmatprep.subr.mxu0 0.0
        %3078 = vmatpush1.msra.mxu0 0.0
        %3079 = vmatprep.subr.mxu0 0.0
        %3080 = vmatpush1.msra.mxu0 0.0
        %3081 = vmatprep.subr.mxu0 0.0
        %3082 = vmatpush1.msra.mxu0 0.0
        %3083 = vmatprep.subr.mxu0 0.0
        %3084 = vmatpush1.msra.mxu0 0.0
        %3085 = vmatprep.subr.mxu0 0.0
        %3086 = vmatpush1.msra.mxu0 0.0
        %3087 = vmatprep.subr.mxu0 0.0
        %3088 = vmatpush1.msra.mxu0 0.0
        %3089 = vmatprep.subr.mxu0 0.0
        %3090 = vmatpush1.msra.mxu0 0.0
        %3091 = vmatprep.subr.mxu0 0.0
        %3092 = vmatpush1.msra.mxu0 0.0
        %3093 = vmatprep.subr.mxu0 0.0
        %3094 = vmatpush1.msra.mxu0 0.0
        %3095 = vmatprep.subr.mxu0 0.0
        %3096 = vmatpush1.msra.mxu0 0.0
        %3097 = vmatprep.subr.mxu0 0.0
        %3098 = vmatpush1.msra.mxu0 0.0
        %3099 = vmatprep.mubr.f32.mxu0 0.0
        %3100 = vmatmul.mubr.f32.gmra.mrb[0].mxu0 %v1995
        %v3101 = vpop.f32.mrb[0].mxu0
        %v3102 = vadd.f32 0.0, %v3101
        %v3103 = vpop.f32.mrb[0].mxu0
        %v3104 = vadd.f32 0.0, %v3103
        %3105 = vmatprep.mubr.f32.mxu0 0.0
        %3106 = vmatmul.mubr.f32.gmra.mrb[0].mxu0 %v1998
        %v3107 = vpop.f32.mrb[0].mxu0
        %v3108 = vadd.f32 0.0, %v3107
        %v3109 = vpop.f32.mrb[0].mxu0
        %v3110 = vadd.f32 0.0, %v3109
        %3111 = vmatprep.mubr.f32.mxu0 0.0
        %3112 = vmatmul.mubr.f32.gmra.mrb[0].mxu0 %v2001
        %v3113 = vpop.f32.mrb[0].mxu0
        %v3114 = vadd.f32 0.0, %v3113
        %v3115 = vpop.f32.mrb[0].mxu0
        %v3116 = vadd.f32 0.0, %v3115
        %3117 = vmatprep.mubr.f32.mxu0 0.0
        %3118 = vmatmul.mubr.f32.gmra.mrb[0].mxu0 %v2004
        %v3119 = vpop.f32.mrb[0].mxu0
        %v3120 = vadd.f32 0.0, %v3119
        %v3121 = vpop.f32.mrb[0].mxu0
        %v3122 = vadd.f32 0.0, %v3121
        %3123 = vmatprep.mubr.f32.mxu0 0.0
        %3124 = vmatmul.mubr.f32.gmra.mrb[0].mxu0 %v2007
        %v3125 = vpop.f32.mrb[0].mxu0
        %v3126 = vadd.f32 0.0, %v3125
        %v3127 = vpop.f32.mrb[0].mxu0
        %v3128 = vadd.f32 0.0, %v3127
        %3129 = vmatprep.mubr.f32.mxu0 0.0
        %3130 = vmatmul.mubr.f32.gmra.mrb[0].mxu0 %v2010
        %v3131 = vpop.f32.mrb[0].mxu0
        %v3132 = vadd.f32 0.0, %v3131
        %v3133 = vpop.f32.mrb[0].mxu0
        %v3134 = vadd.f32 0.0, %v3133
        %3135 = vmatprep.mubr.f32.mxu0 0.0
        %3136 = vmatmul.mubr.f32.gmra.mrb[0].mxu0 %v2013
        %v3137 = vpop.f32.mrb[0].mxu0
        %v3138 = vadd.f32 0.0, %v3137
        %v3139 = vpop.f32.mrb[0].mxu0
        %v3140 = vadd.f32 0.0, %v3139
        %3141 = vmatprep.mubr.f32.mxu0 0.0
        %3142 = vmatmul.mubr.f32.gmra.mrb[0].mxu0 %v2016
        %v3143 = vpop.f32.mrb[0].mxu0
        %v3144 = vadd.f32 0.0, %v3143
        %v3145 = vpop.f32.mrb[0].mxu0
        %v3146 = vadd.f32 0.0, %v3145
        %3147 = vdwg.mxu0
        %3148 = vmatprep.subr.mxu0 %v1452
        %3149 = vmatpush1.msra.mxu0 %v1420
        %3150 = vmatprep.subr.mxu0 %v1942
        %3151 = vmatpush1.msra.mxu0 %v1941
        %3152 = vmatprep.subr.mxu0 0.0
        %3153 = vmatpush1.msra.mxu0 0.0
        %3154 = vmatprep.subr.mxu0 0.0
        %3155 = vmatpush1.msra.mxu0 0.0
        %3156 = vmatprep.subr.mxu0 0.0
        %3157 = vmatpush1.msra.mxu0 0.0
        %3158 = vmatprep.subr.mxu0 0.0
        %3159 = vmatpush1.msra.mxu0 0.0
        %3160 = vmatprep.subr.mxu0 0.0
        %3161 = vmatpush1.msra.mxu0 0.0
        %3162 = vmatprep.subr.mxu0 0.0
        %3163 = vmatpush1.msra.mxu0 0.0
        %3164 = vmatprep.subr.mxu0 0.0
        %3165 = vmatpush1.msra.mxu0 0.0
        %3166 = vmatprep.subr.mxu0 0.0
        %3167 = vmatpush1.msra.mxu0 0.0
        %3168 = vmatprep.subr.mxu0 0.0
        %3169 = vmatpush1.msra.mxu0 0.0
        %3170 = vmatprep.subr.mxu0 0.0
        %3171 = vmatpush1.msra.mxu0 0.0
        %3172 = vmatprep.subr.mxu0 0.0
        %3173 = vmatpush1.msra.mxu0 0.0
        %3174 = vmatprep.subr.mxu0 0.0
        %3175 = vmatpush1.msra.mxu0 0.0
        %3176 = vmatprep.subr.mxu0 0.0
        %3177 = vmatpush1.msra.mxu0 0.0
        %3178 = vmatprep.subr.mxu0 0.0
        %3179 = vmatpush1.msra.mxu0 0.0
        %3180 = vmatprep.subr.mxu0 0.0
        %3181 = vmatpush1.msra.mxu0 0.0
        %3182 = vmatprep.subr.mxu0 0.0
        %3183 = vmatpush1.msra.mxu0 0.0
        %3184 = vmatprep.subr.mxu0 0.0
        %3185 = vmatpush1.msra.mxu0 0.0
        %3186 = vmatprep.subr.mxu0 0.0
        %3187 = vmatpush1.msra.mxu0 0.0
        %3188 = vmatprep.subr.mxu0 0.0
        %3189 = vmatpush1.msra.mxu0 0.0
        %3190 = vmatprep.subr.mxu0 0.0
        %3191 = vmatpush1.msra.mxu0 0.0
        %3192 = vmatprep.subr.mxu0 0.0
        %3193 = vmatpush1.msra.mxu0 0.0
        %3194 = vmatprep.subr.mxu0 0.0
        %3195 = vmatpush1.msra.mxu0 0.0
        %3196 = vmatprep.subr.mxu0 0.0
        %3197 = vmatpush1.msra.mxu0 0.0
        %3198 = vmatprep.subr.mxu0 0.0
        %3199 = vmatpush1.msra.mxu0 0.0
        %3200 = vmatprep.subr.mxu0 0.0
        %3201 = vmatpush1.msra.mxu0 0.0
        %3202 = vmatprep.subr.mxu0 0.0
        %3203 = vmatpush1.msra.mxu0 0.0
        %3204 = vmatprep.subr.mxu0 0.0
        %3205 = vmatpush1.msra.mxu0 0.0
        %3206 = vmatprep.subr.mxu0 0.0
        %3207 = vmatpush1.msra.mxu0 0.0
        %3208 = vmatprep.subr.mxu0 0.0
        %3209 = vmatpush1.msra.mxu0 0.0
        %3210 = vmatprep.subr.mxu0 0.0
        %3211 = vmatpush1.msra.mxu0 0.0
        %3212 = vmatprep.mubr.f32.mxu0 0.0
        %3213 = vmatmul.mubr.f32.gmra.mrb[0].mxu0 %v1995
        %v3214 = vpop.f32.mrb[0].mxu0
        %v3215 = vadd.f32 0.0, %v3214
        %v3216 = vpop.f32.mrb[0].mxu0
        %v3217 = vadd.f32 0.0, %v3216
        %3218 = vmatprep.mubr.f32.mxu0 0.0
        %3219 = vmatmul.mubr.f32.gmra.mrb[0].mxu0 %v1998
        %v3220 = vpop.f32.mrb[0].mxu0
        %v3221 = vadd.f32 0.0, %v3220
        %v3222 = vpop.f32.mrb[0].mxu0
        %v3223 = vadd.f32 0.0, %v3222
        %3224 = vmatprep.mubr.f32.mxu0 0.0
        %3225 = vmatmul.mubr.f32.gmra.mrb[0].mxu0 %v2001
        %v3226 = vpop.f32.mrb[0].mxu0
        %v3227 = vadd.f32 0.0, %v3226
        %v3228 = vpop.f32.mrb[0].mxu0
        %v3229 = vadd.f32 0.0, %v3228
        %3230 = vmatprep.mubr.f32.mxu0 0.0
        %3231 = vmatmul.mubr.f32.gmra.mrb[0].mxu0 %v2004
        %v3232 = vpop.f32.mrb[0].mxu0
        %v3233 = vadd.f32 0.0, %v3232
        %v3234 = vpop.f32.mrb[0].mxu0
        %v3235 = vadd.f32 0.0, %v3234
        %3236 = vmatprep.mubr.f32.mxu0 0.0
        %3237 = vmatmul.mubr.f32.gmra.mrb[0].mxu0 %v2007
        %v3238 = vpop.f32.mrb[0].mxu0
        %v3239 = vadd.f32 0.0, %v3238
        %v3240 = vpop.f32.mrb[0].mxu0
        %v3241 = vadd.f32 0.0, %v3240
        %3242 = vmatprep.mubr.f32.mxu0 0.0
        %3243 = vmatmul.mubr.f32.gmra.mrb[0].mxu0 %v2010
        %v3244 = vpop.f32.mrb[0].mxu0
        %v3245 = vadd.f32 0.0, %v3244
        %v3246 = vpop.f32.mrb[0].mxu0
        %v3247 = vadd.f32 0.0, %v3246
        %3248 = vmatprep.mubr.f32.mxu0 0.0
        %3249 = vmatmul.mubr.f32.gmra.mrb[0].mxu0 %v2013
        %v3250 = vpop.f32.mrb[0].mxu0
        %v3251 = vadd.f32 0.0, %v3250
        %v3252 = vpop.f32.mrb[0].mxu0
        %v3253 = vadd.f32 0.0, %v3252
        %3254 = vmatprep.mubr.f32.mxu0 0.0
        %3255 = vmatmul.mubr.f32.gmra.mrb[0].mxu0 %v2016
        %v3256 = vpop.f32.mrb[0].mxu0
        %v3257 = vadd.f32 0.0, %v3256
        %v3258 = vpop.f32.mrb[0].mxu0
        %v3259 = vadd.f32 0.0, %v3258
        %3260 = vdwg.mxu0
        %3261 = vmatprep.subr.mxu0 %v1516
        %3262 = vmatpush1.msra.mxu0 %v1484
        %3263 = vmatprep.subr.mxu0 %v1944
        %3264 = vmatpush1.msra.mxu0 %v1943
        %3265 = vmatprep.subr.mxu0 0.0
        %3266 = vmatpush1.msra.mxu0 0.0
        %3267 = vmatprep.subr.mxu0 0.0
        %3268 = vmatpush1.msra.mxu0 0.0
        %3269 = vmatprep.subr.mxu0 0.0
        %3270 = vmatpush1.msra.mxu0 0.0
        %3271 = vmatprep.subr.mxu0 0.0
        %3272 = vmatpush1.msra.mxu0 0.0
        %3273 = vmatprep.subr.mxu0 0.0
        %3274 = vmatpush1.msra.mxu0 0.0
        %3275 = vmatprep.subr.mxu0 0.0
        %3276 = vmatpush1.msra.mxu0 0.0
        %3277 = vmatprep.subr.mxu0 0.0
        %3278 = vmatpush1.msra.mxu0 0.0
        %3279 = vmatprep.subr.mxu0 0.0
        %3280 = vmatpush1.msra.mxu0 0.0
        %3281 = vmatprep.subr.mxu0 0.0
        %3282 = vmatpush1.msra.mxu0 0.0
        %3283 = vmatprep.subr.mxu0 0.0
        %3284 = vmatpush1.msra.mxu0 0.0
        %3285 = vmatprep.subr.mxu0 0.0
        %3286 = vmatpush1.msra.mxu0 0.0
        %3287 = vmatprep.subr.mxu0 0.0
        %3288 = vmatpush1.msra.mxu0 0.0
        %3289 = vmatprep.subr.mxu0 0.0
        %3290 = vmatpush1.msra.mxu0 0.0
        %3291 = vmatprep.subr.mxu0 0.0
        %3292 = vmatpush1.msra.mxu0 0.0
        %3293 = vmatprep.subr.mxu0 0.0
        %3294 = vmatpush1.msra.mxu0 0.0
        %3295 = vmatprep.subr.mxu0 0.0
        %3296 = vmatpush1.msra.mxu0 0.0
        %3297 = vmatprep.subr.mxu0 0.0
        %3298 = vmatpush1.msra.mxu0 0.0
        %3299 = vmatprep.subr.mxu0 0.0
        %3300 = vmatpush1.msra.mxu0 0.0
        %3301 = vmatprep.subr.mxu0 0.0
        %3302 = vmatpush1.msra.mxu0 0.0
        %3303 = vmatprep.subr.mxu0 0.0
        %3304 = vmatpush1.msra.mxu0 0.0
        %3305 = vmatprep.subr.mxu0 0.0
        %3306 = vmatpush1.msra.mxu0 0.0
        %3307 = vmatprep.subr.mxu0 0.0
        %3308 = vmatpush1.msra.mxu0 0.0
        %3309 = vmatprep.subr.mxu0 0.0
        %3310 = vmatpush1.msra.mxu0 0.0
        %3311 = vmatprep.subr.mxu0 0.0
        %3312 = vmatpush1.msra.mxu0 0.0
        %3313 = vmatprep.subr.mxu0 0.0
        %3314 = vmatpush1.msra.mxu0 0.0
        %3315 = vmatprep.subr.mxu0 0.0
        %3316 = vmatpush1.msra.mxu0 0.0
        %3317 = vmatprep.subr.mxu0 0.0
        %3318 = vmatpush1.msra.mxu0 0.0
        %3319 = vmatprep.subr.mxu0 0.0
        %3320 = vmatpush1.msra.mxu0 0.0
        %3321 = vmatprep.subr.mxu0 0.0
        %3322 = vmatpush1.msra.mxu0 0.0
        %3323 = vmatprep.subr.mxu0 0.0
        %3324 = vmatpush1.msra.mxu0 0.0
        %3325 = vmatprep.mubr.f32.mxu0 0.0
        %3326 = vmatmul.mubr.f32.gmra.mrb[0].mxu0 %v1995
        %v3327 = vpop.f32.mrb[0].mxu0
        %v3328 = vadd.f32 0.0, %v3327
        %v3329 = vpop.f32.mrb[0].mxu0
        %v3330 = vadd.f32 0.0, %v3329
        %3331 = vmatprep.mubr.f32.mxu0 0.0
        %3332 = vmatmul.mubr.f32.gmra.mrb[0].mxu0 %v1998
        %v3333 = vpop.f32.mrb[0].mxu0
        %v3334 = vadd.f32 0.0, %v3333
        %v3335 = vpop.f32.mrb[0].mxu0
        %v3336 = vadd.f32 0.0, %v3335
        %3337 = vmatprep.mubr.f32.mxu0 0.0
        %3338 = vmatmul.mubr.f32.gmra.mrb[0].mxu0 %v2001
        %v3339 = vpop.f32.mrb[0].mxu0
        %v3340 = vadd.f32 0.0, %v3339
        %v3341 = vpop.f32.mrb[0].mxu0
        %v3342 = vadd.f32 0.0, %v3341
        %3343 = vmatprep.mubr.f32.mxu0 0.0
        %3344 = vmatmul.mubr.f32.gmra.mrb[0].mxu0 %v2004
        %v3345 = vpop.f32.mrb[0].mxu0
        %v3346 = vadd.f32 0.0, %v3345
        %v3347 = vpop.f32.mrb[0].mxu0
        %v3348 = vadd.f32 0.0, %v3347
        %3349 = vmatprep.mubr.f32.mxu0 0.0
        %3350 = vmatmul.mubr.f32.gmra.mrb[0].mxu0 %v2007
        %v3351 = vpop.f32.mrb[0].mxu0
        %v3352 = vadd.f32 0.0, %v3351
        %v3353 = vpop.f32.mrb[0].mxu0
        %v3354 = vadd.f32 0.0, %v3353
        %3355 = vmatprep.mubr.f32.mxu0 0.0
        %3356 = vmatmul.mubr.f32.gmra.mrb[0].mxu0 %v2010
        %v3357 = vpop.f32.mrb[0].mxu0
        %v3358 = vadd.f32 0.0, %v3357
        %v3359 = vpop.f32.mrb[0].mxu0
        %v3360 = vadd.f32 0.0, %v3359
        %3361 = vmatprep.mubr.f32.mxu0 0.0
        %3362 = vmatmul.mubr.f32.gmra.mrb[0].mxu0 %v2013
        %v3363 = vpop.f32.mrb[0].mxu0
        %v3364 = vadd.f32 0.0, %v3363
        %v3365 = vpop.f32.mrb[0].mxu0
        %v3366 = vadd.f32 0.0, %v3365
        %3367 = vmatprep.mubr.f32.mxu0 0.0
        %3368 = vmatmul.mubr.f32.gmra.mrb[0].mxu0 %v2016
        %v3369 = vpop.f32.mrb[0].mxu0
        %v3370 = vadd.f32 0.0, %v3369
        %v3371 = vpop.f32.mrb[0].mxu0
        %v3372 = vadd.f32 0.0, %v3371
        %3373 = vdwg.mxu0
        %3374 = vmatprep.subr.mxu0 %v1580
        %3375 = vmatpush1.msra.mxu0 %v1548
        %3376 = vmatprep.subr.mxu0 %v1946
        %3377 = vmatpush1.msra.mxu0 %v1945
        %3378 = vmatprep.subr.mxu0 0.0
        %3379 = vmatpush1.msra.mxu0 0.0
        %3380 = vmatprep.subr.mxu0 0.0
        %3381 = vmatpush1.msra.mxu0 0.0
        %3382 = vmatprep.subr.mxu0 0.0
        %3383 = vmatpush1.msra.mxu0 0.0
        %3384 = vmatprep.subr.mxu0 0.0
        %3385 = vmatpush1.msra.mxu0 0.0
        %3386 = vmatprep.subr.mxu0 0.0
        %3387 = vmatpush1.msra.mxu0 0.0
        %3388 = vmatprep.subr.mxu0 0.0
        %3389 = vmatpush1.msra.mxu0 0.0
        %3390 = vmatprep.subr.mxu0 0.0
        %3391 = vmatpush1.msra.mxu0 0.0
        %3392 = vmatprep.subr.mxu0 0.0
        %3393 = vmatpush1.msra.mxu0 0.0
        %3394 = vmatprep.subr.mxu0 0.0
        %3395 = vmatpush1.msra.mxu0 0.0
        %3396 = vmatprep.subr.mxu0 0.0
        %3397 = vmatpush1.msra.mxu0 0.0
        %3398 = vmatprep.subr.mxu0 0.0
        %3399 = vmatpush1.msra.mxu0 0.0
        %3400 = vmatprep.subr.mxu0 0.0
        %3401 = vmatpush1.msra.mxu0 0.0
        %3402 = vmatprep.subr.mxu0 0.0
        %3403 = vmatpush1.msra.mxu0 0.0
        %3404 = vmatprep.subr.mxu0 0.0
        %3405 = vmatpush1.msra.mxu0 0.0
        %3406 = vmatprep.subr.mxu0 0.0
        %3407 = vmatpush1.msra.mxu0 0.0
        %3408 = vmatprep.subr.mxu0 0.0
        %3409 = vmatpush1.msra.mxu0 0.0
        %3410 = vmatprep.subr.mxu0 0.0
        %3411 = vmatpush1.msra.mxu0 0.0
        %3412 = vmatprep.subr.mxu0 0.0
        %3413 = vmatpush1.msra.mxu0 0.0
        %3414 = vmatprep.subr.mxu0 0.0
        %3415 = vmatpush1.msra.mxu0 0.0
        %3416 = vmatprep.subr.mxu0 0.0
        %3417 = vmatpush1.msra.mxu0 0.0
        %3418 = vmatprep.subr.mxu0 0.0
        %3419 = vmatpush1.msra.mxu0 0.0
        %3420 = vmatprep.subr.mxu0 0.0
        %3421 = vmatpush1.msra.mxu0 0.0
        %3422 = vmatprep.subr.mxu0 0.0
        %3423 = vmatpush1.msra.mxu0 0.0
        %3424 = vmatprep.subr.mxu0 0.0
        %3425 = vmatpush1.msra.mxu0 0.0
        %3426 = vmatprep.subr.mxu0 0.0
        %3427 = vmatpush1.msra.mxu0 0.0
        %3428 = vmatprep.subr.mxu0 0.0
        %3429 = vmatpush1.msra.mxu0 0.0
        %3430 = vmatprep.subr.mxu0 0.0
        %3431 = vmatpush1.msra.mxu0 0.0
        %3432 = vmatprep.subr.mxu0 0.0
        %3433 = vmatpush1.msra.mxu0 0.0
        %3434 = vmatprep.subr.mxu0 0.0
        %3435 = vmatpush1.msra.mxu0 0.0
        %3436 = vmatprep.subr.mxu0 0.0
        %3437 = vmatpush1.msra.mxu0 0.0
        %3438 = vmatprep.mubr.f32.mxu0 0.0
        %3439 = vmatmul.mubr.f32.gmra.mrb[0].mxu0 %v1995
        %v3440 = vpop.f32.mrb[0].mxu0
        %v3441 = vadd.f32 0.0, %v3440
        %v3442 = vpop.f32.mrb[0].mxu0
        %v3443 = vadd.f32 0.0, %v3442
        %3444 = vmatprep.mubr.f32.mxu0 0.0
        %3445 = vmatmul.mubr.f32.gmra.mrb[0].mxu0 %v1998
        %v3446 = vpop.f32.mrb[0].mxu0
        %v3447 = vadd.f32 0.0, %v3446
        %v3448 = vpop.f32.mrb[0].mxu0
        %v3449 = vadd.f32 0.0, %v3448
        %3450 = vmatprep.mubr.f32.mxu0 0.0
        %3451 = vmatmul.mubr.f32.gmra.mrb[0].mxu0 %v2001
        %v3452 = vpop.f32.mrb[0].mxu0
        %v3453 = vadd.f32 0.0, %v3452
        %v3454 = vpop.f32.mrb[0].mxu0
        %v3455 = vadd.f32 0.0, %v3454
        %3456 = vmatprep.mubr.f32.mxu0 0.0
        %3457 = vmatmul.mubr.f32.gmra.mrb[0].mxu0 %v2004
        %v3458 = vpop.f32.mrb[0].mxu0
        %v3459 = vadd.f32 0.0, %v3458
        %v3460 = vpop.f32.mrb[0].mxu0
        %v3461 = vadd.f32 0.0, %v3460
        %3462 = vmatprep.mubr.f32.mxu0 0.0
        %3463 = vmatmul.mubr.f32.gmra.mrb[0].mxu0 %v2007
        %v3464 = vpop.f32.mrb[0].mxu0
        %v3465 = vadd.f32 0.0, %v3464
        %v3466 = vpop.f32.mrb[0].mxu0
        %v3467 = vadd.f32 0.0, %v3466
        %3468 = vmatprep.mubr.f32.mxu0 0.0
        %3469 = vmatmul.mubr.f32.gmra.mrb[0].mxu0 %v2010
        %v3470 = vpop.f32.mrb[0].mxu0
        %v3471 = vadd.f32 0.0, %v3470
        %v3472 = vpop.f32.mrb[0].mxu0
        %v3473 = vadd.f32 0.0, %v3472
        %3474 = vmatprep.mubr.f32.mxu0 0.0
        %3475 = vmatmul.mubr.f32.gmra.mrb[0].mxu0 %v2013
        %v3476 = vpop.f32.mrb[0].mxu0
        %v3477 = vadd.f32 0.0, %v3476
        %v3478 = vpop.f32.mrb[0].mxu0
        %v3479 = vadd.f32 0.0, %v3478
        %3480 = vmatprep.mubr.f32.mxu0 0.0
        %3481 = vmatmul.mubr.f32.gmra.mrb[0].mxu0 %v2016
        %v3482 = vpop.f32.mrb[0].mxu0
        %v3483 = vadd.f32 0.0, %v3482
        %v3484 = vpop.f32.mrb[0].mxu0
        %v3485 = vadd.f32 0.0, %v3484
        %3486 = vdwg.mxu0
        %3487 = vmatprep.subr.mxu0 %v1644
        %3488 = vmatpush1.msra.mxu0 %v1612
        %3489 = vmatprep.subr.mxu0 %v1948
        %3490 = vmatpush1.msra.mxu0 %v1947
        %3491 = vmatprep.subr.mxu0 0.0
        %3492 = vmatpush1.msra.mxu0 0.0
        %3493 = vmatprep.subr.mxu0 0.0
        %3494 = vmatpush1.msra.mxu0 0.0
        %3495 = vmatprep.subr.mxu0 0.0
        %3496 = vmatpush1.msra.mxu0 0.0
        %3497 = vmatprep.subr.mxu0 0.0
        %3498 = vmatpush1.msra.mxu0 0.0
        %3499 = vmatprep.subr.mxu0 0.0
        %3500 = vmatpush1.msra.mxu0 0.0
        %3501 = vmatprep.subr.mxu0 0.0
        %3502 = vmatpush1.msra.mxu0 0.0
        %3503 = vmatprep.subr.mxu0 0.0
        %3504 = vmatpush1.msra.mxu0 0.0
        %3505 = vmatprep.subr.mxu0 0.0
        %3506 = vmatpush1.msra.mxu0 0.0
        %3507 = vmatprep.subr.mxu0 0.0
        %3508 = vmatpush1.msra.mxu0 0.0
        %3509 = vmatprep.subr.mxu0 0.0
        %3510 = vmatpush1.msra.mxu0 0.0
        %3511 = vmatprep.subr.mxu0 0.0
        %3512 = vmatpush1.msra.mxu0 0.0
        %3513 = vmatprep.subr.mxu0 0.0
        %3514 = vmatpush1.msra.mxu0 0.0
        %3515 = vmatprep.subr.mxu0 0.0
        %3516 = vmatpush1.msra.mxu0 0.0
        %3517 = vmatprep.subr.mxu0 0.0
        %3518 = vmatpush1.msra.mxu0 0.0
        %3519 = vmatprep.subr.mxu0 0.0
        %3520 = vmatpush1.msra.mxu0 0.0
        %3521 = vmatprep.subr.mxu0 0.0
        %3522 = vmatpush1.msra.mxu0 0.0
        %3523 = vmatprep.subr.mxu0 0.0
        %3524 = vmatpush1.msra.mxu0 0.0
        %3525 = vmatprep.subr.mxu0 0.0
        %3526 = vmatpush1.msra.mxu0 0.0
        %3527 = vmatprep.subr.mxu0 0.0
        %3528 = vmatpush1.msra.mxu0 0.0
        %3529 = vmatprep.subr.mxu0 0.0
        %3530 = vmatpush1.msra.mxu0 0.0
        %3531 = vmatprep.subr.mxu0 0.0
        %3532 = vmatpush1.msra.mxu0 0.0
        %3533 = vmatprep.subr.mxu0 0.0
        %3534 = vmatpush1.msra.mxu0 0.0
        %3535 = vmatprep.subr.mxu0 0.0
        %3536 = vmatpush1.msra.mxu0 0.0
        %3537 = vmatprep.subr.mxu0 0.0
        %3538 = vmatpush1.msra.mxu0 0.0
        %3539 = vmatprep.subr.mxu0 0.0
        %3540 = vmatpush1.msra.mxu0 0.0
        %3541 = vmatprep.subr.mxu0 0.0
        %3542 = vmatpush1.msra.mxu0 0.0
        %3543 = vmatprep.subr.mxu0 0.0
        %3544 = vmatpush1.msra.mxu0 0.0
        %3545 = vmatprep.subr.mxu0 0.0
        %3546 = vmatpush1.msra.mxu0 0.0
        %3547 = vmatprep.subr.mxu0 0.0
        %3548 = vmatpush1.msra.mxu0 0.0
        %3549 = vmatprep.subr.mxu0 0.0
        %3550 = vmatpush1.msra.mxu0 0.0
        %3551 = vmatprep.mubr.f32.mxu0 0.0
        %3552 = vmatmul.mubr.f32.gmra.mrb[0].mxu0 %v1995
        %v3553 = vpop.f32.mrb[0].mxu0
        %v3554 = vadd.f32 0.0, %v3553
        %v3555 = vpop.f32.mrb[0].mxu0
        %v3556 = vadd.f32 0.0, %v3555
        %3557 = vmatprep.mubr.f32.mxu0 0.0
        %3558 = vmatmul.mubr.f32.gmra.mrb[0].mxu0 %v1998
        %v3559 = vpop.f32.mrb[0].mxu0
        %v3560 = vadd.f32 0.0, %v3559
        %v3561 = vpop.f32.mrb[0].mxu0
        %v3562 = vadd.f32 0.0, %v3561
        %3563 = vmatprep.mubr.f32.mxu0 0.0
        %3564 = vmatmul.mubr.f32.gmra.mrb[0].mxu0 %v2001
        %v3565 = vpop.f32.mrb[0].mxu0
        %v3566 = vadd.f32 0.0, %v3565
        %v3567 = vpop.f32.mrb[0].mxu0
        %v3568 = vadd.f32 0.0, %v3567
        %3569 = vmatprep.mubr.f32.mxu0 0.0
        %3570 = vmatmul.mubr.f32.gmra.mrb[0].mxu0 %v2004
        %v3571 = vpop.f32.mrb[0].mxu0
        %v3572 = vadd.f32 0.0, %v3571
        %v3573 = vpop.f32.mrb[0].mxu0
        %v3574 = vadd.f32 0.0, %v3573
        %3575 = vmatprep.mubr.f32.mxu0 0.0
        %3576 = vmatmul.mubr.f32.gmra.mrb[0].mxu0 %v2007
        %v3577 = vpop.f32.mrb[0].mxu0
        %v3578 = vadd.f32 0.0, %v3577
        %v3579 = vpop.f32.mrb[0].mxu0
        %v3580 = vadd.f32 0.0, %v3579
        %3581 = vmatprep.mubr.f32.mxu0 0.0
        %3582 = vmatmul.mubr.f32.gmra.mrb[0].mxu0 %v2010
        %v3583 = vpop.f32.mrb[0].mxu0
        %v3584 = vadd.f32 0.0, %v3583
        %v3585 = vpop.f32.mrb[0].mxu0
        %v3586 = vadd.f32 0.0, %v3585
        %3587 = vmatprep.mubr.f32.mxu0 0.0
        %3588 = vmatmul.mubr.f32.gmra.mrb[0].mxu0 %v2013
        %v3589 = vpop.f32.mrb[0].mxu0
        %v3590 = vadd.f32 0.0, %v3589
        %v3591 = vpop.f32.mrb[0].mxu0
        %v3592 = vadd.f32 0.0, %v3591
        %3593 = vmatprep.mubr.f32.mxu0 0.0
        %3594 = vmatmul.mubr.f32.gmra.mrb[0].mxu0 %v2016
        %v3595 = vpop.f32.mrb[0].mxu0
        %v3596 = vadd.f32 0.0, %v3595
        %v3597 = vpop.f32.mrb[0].mxu0
        %v3598 = vadd.f32 0.0, %v3597
        %3599 = vdwg.mxu0
        %3600 = vmatprep.subr.mxu0 %v1708
        %3601 = vmatpush1.msra.mxu0 %v1676
        %3602 = vmatprep.subr.mxu0 %v1950
        %3603 = vmatpush1.msra.mxu0 %v1949
        %3604 = vmatprep.subr.mxu0 0.0
        %3605 = vmatpush1.msra.mxu0 0.0
        %3606 = vmatprep.subr.mxu0 0.0
        %3607 = vmatpush1.msra.mxu0 0.0
        %3608 = vmatprep.subr.mxu0 0.0
        %3609 = vmatpush1.msra.mxu0 0.0
        %3610 = vmatprep.subr.mxu0 0.0
        %3611 = vmatpush1.msra.mxu0 0.0
        %3612 = vmatprep.subr.mxu0 0.0
        %3613 = vmatpush1.msra.mxu0 0.0
        %3614 = vmatprep.subr.mxu0 0.0
        %3615 = vmatpush1.msra.mxu0 0.0
        %3616 = vmatprep.subr.mxu0 0.0
        %3617 = vmatpush1.msra.mxu0 0.0
        %3618 = vmatprep.subr.mxu0 0.0
        %3619 = vmatpush1.msra.mxu0 0.0
        %3620 = vmatprep.subr.mxu0 0.0
        %3621 = vmatpush1.msra.mxu0 0.0
        %3622 = vmatprep.subr.mxu0 0.0
        %3623 = vmatpush1.msra.mxu0 0.0
        %3624 = vmatprep.subr.mxu0 0.0
        %3625 = vmatpush1.msra.mxu0 0.0
        %3626 = vmatprep.subr.mxu0 0.0
        %3627 = vmatpush1.msra.mxu0 0.0
        %3628 = vmatprep.subr.mxu0 0.0
        %3629 = vmatpush1.msra.mxu0 0.0
        %3630 = vmatprep.subr.mxu0 0.0
        %3631 = vmatpush1.msra.mxu0 0.0
        %3632 = vmatprep.subr.mxu0 0.0
        %3633 = vmatpush1.msra.mxu0 0.0
        %3634 = vmatprep.subr.mxu0 0.0
        %3635 = vmatpush1.msra.mxu0 0.0
        %3636 = vmatprep.subr.mxu0 0.0
        %3637 = vmatpush1.msra.mxu0 0.0
        %3638 = vmatprep.subr.mxu0 0.0
        %3639 = vmatpush1.msra.mxu0 0.0
        %3640 = vmatprep.subr.mxu0 0.0
        %3641 = vmatpush1.msra.mxu0 0.0
        %3642 = vmatprep.subr.mxu0 0.0
        %3643 = vmatpush1.msra.mxu0 0.0
        %3644 = vmatprep.subr.mxu0 0.0
        %3645 = vmatpush1.msra.mxu0 0.0
        %3646 = vmatprep.subr.mxu0 0.0
        %3647 = vmatpush1.msra.mxu0 0.0
        %3648 = vmatprep.subr.mxu0 0.0
        %3649 = vmatpush1.msra.mxu0 0.0
        %3650 = vmatprep.subr.mxu0 0.0
        %3651 = vmatpush1.msra.mxu0 0.0
        %3652 = vmatprep.subr.mxu0 0.0
        %3653 = vmatpush1.msra.mxu0 0.0
        %3654 = vmatprep.subr.mxu0 0.0
        %3655 = vmatpush1.msra.mxu0 0.0
        %3656 = vmatprep.subr.mxu0 0.0
        %3657 = vmatpush1.msra.mxu0 0.0
        %3658 = vmatprep.subr.mxu0 0.0
        %3659 = vmatpush1.msra.mxu0 0.0
        %3660 = vmatprep.subr.mxu0 0.0
        %3661 = vmatpush1.msra.mxu0 0.0
        %3662 = vmatprep.subr.mxu0 0.0
        %3663 = vmatpush1.msra.mxu0 0.0
        %3664 = vmatprep.mubr.f32.mxu0 0.0
        %3665 = vmatmul.mubr.f32.gmra.mrb[0].mxu0 %v1995
        %v3666 = vpop.f32.mrb[0].mxu0
        %v3667 = vadd.f32 0.0, %v3666
        %v3668 = vpop.f32.mrb[0].mxu0
        %v3669 = vadd.f32 0.0, %v3668
        %3670 = vmatprep.mubr.f32.mxu0 0.0
        %3671 = vmatmul.mubr.f32.gmra.mrb[0].mxu0 %v1998
        %v3672 = vpop.f32.mrb[0].mxu0
        %v3673 = vadd.f32 0.0, %v3672
        %v3674 = vpop.f32.mrb[0].mxu0
        %v3675 = vadd.f32 0.0, %v3674
        %3676 = vmatprep.mubr.f32.mxu0 0.0
        %3677 = vmatmul.mubr.f32.gmra.mrb[0].mxu0 %v2001
        %v3678 = vpop.f32.mrb[0].mxu0
        %v3679 = vadd.f32 0.0, %v3678
        %v3680 = vpop.f32.mrb[0].mxu0
        %v3681 = vadd.f32 0.0, %v3680
        %3682 = vmatprep.mubr.f32.mxu0 0.0
        %3683 = vmatmul.mubr.f32.gmra.mrb[0].mxu0 %v2004
        %v3684 = vpop.f32.mrb[0].mxu0
        %v3685 = vadd.f32 0.0, %v3684
        %v3686 = vpop.f32.mrb[0].mxu0
        %v3687 = vadd.f32 0.0, %v3686
        %3688 = vmatprep.mubr.f32.mxu0 0.0
        %3689 = vmatmul.mubr.f32.gmra.mrb[0].mxu0 %v2007
        %v3690 = vpop.f32.mrb[0].mxu0
        %v3691 = vadd.f32 0.0, %v3690
        %v3692 = vpop.f32.mrb[0].mxu0
        %v3693 = vadd.f32 0.0, %v3692
        %3694 = vmatprep.mubr.f32.mxu0 0.0
        %3695 = vmatmul.mubr.f32.gmra.mrb[0].mxu0 %v2010
        %v3696 = vpop.f32.mrb[0].mxu0
        %v3697 = vadd.f32 0.0, %v3696
        %v3698 = vpop.f32.mrb[0].mxu0
        %v3699 = vadd.f32 0.0, %v3698
        %3700 = vmatprep.mubr.f32.mxu0 0.0
        %3701 = vmatmul.mubr.f32.gmra.mrb[0].mxu0 %v2013
        %v3702 = vpop.f32.mrb[0].mxu0
        %v3703 = vadd.f32 0.0, %v3702
        %v3704 = vpop.f32.mrb[0].mxu0
        %v3705 = vadd.f32 0.0, %v3704
        %3706 = vmatprep.mubr.f32.mxu0 0.0
        %3707 = vmatmul.mubr.f32.gmra.mrb[0].mxu0 %v2016
        %v3708 = vpop.f32.mrb[0].mxu0
        %v3709 = vadd.f32 0.0, %v3708
        %v3710 = vpop.f32.mrb[0].mxu0
        %v3711 = vadd.f32 0.0, %v3710
        %3712 = vdwg.mxu0
        %3713 = vmatprep.subr.mxu0 %v1772
        %3714 = vmatpush1.msra.mxu0 %v1740
        %3715 = vmatprep.subr.mxu0 %v1952
        %3716 = vmatpush1.msra.mxu0 %v1951
        %3717 = vmatprep.subr.mxu0 0.0
        %3718 = vmatpush1.msra.mxu0 0.0
        %3719 = vmatprep.subr.mxu0 0.0
        %3720 = vmatpush1.msra.mxu0 0.0
        %3721 = vmatprep.subr.mxu0 0.0
        %3722 = vmatpush1.msra.mxu0 0.0
        %3723 = vmatprep.subr.mxu0 0.0
        %3724 = vmatpush1.msra.mxu0 0.0
        %3725 = vmatprep.subr.mxu0 0.0
        %3726 = vmatpush1.msra.mxu0 0.0
        %3727 = vmatprep.subr.mxu0 0.0
        %3728 = vmatpush1.msra.mxu0 0.0
        %3729 = vmatprep.subr.mxu0 0.0
        %3730 = vmatpush1.msra.mxu0 0.0
        %3731 = vmatprep.subr.mxu0 0.0
        %3732 = vmatpush1.msra.mxu0 0.0
        %3733 = vmatprep.subr.mxu0 0.0
        %3734 = vmatpush1.msra.mxu0 0.0
        %3735 = vmatprep.subr.mxu0 0.0
        %3736 = vmatpush1.msra.mxu0 0.0
        %3737 = vmatprep.subr.mxu0 0.0
        %3738 = vmatpush1.msra.mxu0 0.0
        %3739 = vmatprep.subr.mxu0 0.0
        %3740 = vmatpush1.msra.mxu0 0.0
        %3741 = vmatprep.subr.mxu0 0.0
        %3742 = vmatpush1.msra.mxu0 0.0
        %3743 = vmatprep.subr.mxu0 0.0
        %3744 = vmatpush1.msra.mxu0 0.0
        %3745 = vmatprep.subr.mxu0 0.0
        %3746 = vmatpush1.msra.mxu0 0.0
        %3747 = vmatprep.subr.mxu0 0.0
        %3748 = vmatpush1.msra.mxu0 0.0
        %3749 = vmatprep.subr.mxu0 0.0
        %3750 = vmatpush1.msra.mxu0 0.0
        %3751 = vmatprep.subr.mxu0 0.0
        %3752 = vmatpush1.msra.mxu0 0.0
        %3753 = vmatprep.subr.mxu0 0.0
        %3754 = vmatpush1.msra.mxu0 0.0
        %3755 = vmatprep.subr.mxu0 0.0
        %3756 = vmatpush1.msra.mxu0 0.0
        %3757 = vmatprep.subr.mxu0 0.0
        %3758 = vmatpush1.msra.mxu0 0.0
        %3759 = vmatprep.subr.mxu0 0.0
        %3760 = vmatpush1.msra.mxu0 0.0
        %3761 = vmatprep.subr.mxu0 0.0
        %3762 = vmatpush1.msra.mxu0 0.0
        %3763 = vmatprep.subr.mxu0 0.0
        %3764 = vmatpush1.msra.mxu0 0.0
        %3765 = vmatprep.subr.mxu0 0.0
        %3766 = vmatpush1.msra.mxu0 0.0
        %3767 = vmatprep.subr.mxu0 0.0
        %3768 = vmatpush1.msra.mxu0 0.0
        %3769 = vmatprep.subr.mxu0 0.0
        %3770 = vmatpush1.msra.mxu0 0.0
        %3771 = vmatprep.subr.mxu0 0.0
        %3772 = vmatpush1.msra.mxu0 0.0
        %3773 = vmatprep.subr.mxu0 0.0
        %3774 = vmatpush1.msra.mxu0 0.0
        %3775 = vmatprep.subr.mxu0 0.0
        %3776 = vmatpush1.msra.mxu0 0.0
        %3777 = vmatprep.mubr.f32.mxu0 0.0
        %3778 = vmatmul.mubr.f32.gmra.mrb[0].mxu0 %v1995
        %v3779 = vpop.f32.mrb[0].mxu0
        %v3780 = vadd.f32 0.0, %v3779
        %v3781 = vpop.f32.mrb[0].mxu0
        %v3782 = vadd.f32 0.0, %v3781
        %3783 = vmatprep.mubr.f32.mxu0 0.0
        %3784 = vmatmul.mubr.f32.gmra.mrb[0].mxu0 %v1998
        %v3785 = vpop.f32.mrb[0].mxu0
        %v3786 = vadd.f32 0.0, %v3785
        %v3787 = vpop.f32.mrb[0].mxu0
        %v3788 = vadd.f32 0.0, %v3787
        %3789 = vmatprep.mubr.f32.mxu0 0.0
        %3790 = vmatmul.mubr.f32.gmra.mrb[0].mxu0 %v2001
        %v3791 = vpop.f32.mrb[0].mxu0
        %v3792 = vadd.f32 0.0, %v3791
        %v3793 = vpop.f32.mrb[0].mxu0
        %v3794 = vadd.f32 0.0, %v3793
        %3795 = vmatprep.mubr.f32.mxu0 0.0
        %3796 = vmatmul.mubr.f32.gmra.mrb[0].mxu0 %v2004
        %v3797 = vpop.f32.mrb[0].mxu0
        %v3798 = vadd.f32 0.0, %v3797
        %v3799 = vpop.f32.mrb[0].mxu0
        %v3800 = vadd.f32 0.0, %v3799
        %3801 = vmatprep.mubr.f32.mxu0 0.0
        %3802 = vmatmul.mubr.f32.gmra.mrb[0].mxu0 %v2007
        %v3803 = vpop.f32.mrb[0].mxu0
        %v3804 = vadd.f32 0.0, %v3803
        %v3805 = vpop.f32.mrb[0].mxu0
        %v3806 = vadd.f32 0.0, %v3805
        %3807 = vmatprep.mubr.f32.mxu0 0.0
        %3808 = vmatmul.mubr.f32.gmra.mrb[0].mxu0 %v2010
        %v3809 = vpop.f32.mrb[0].mxu0
        %v3810 = vadd.f32 0.0, %v3809
        %v3811 = vpop.f32.mrb[0].mxu0
        %v3812 = vadd.f32 0.0, %v3811
        %3813 = vmatprep.mubr.f32.mxu0 0.0
        %3814 = vmatmul.mubr.f32.gmra.mrb[0].mxu0 %v2013
        %v3815 = vpop.f32.mrb[0].mxu0
        %v3816 = vadd.f32 0.0, %v3815
        %v3817 = vpop.f32.mrb[0].mxu0
        %v3818 = vadd.f32 0.0, %v3817
        %3819 = vmatprep.mubr.f32.mxu0 0.0
        %3820 = vmatmul.mubr.f32.gmra.mrb[0].mxu0 %v2016
        %v3821 = vpop.f32.mrb[0].mxu0
        %v3822 = vadd.f32 0.0, %v3821
        %v3823 = vpop.f32.mrb[0].mxu0
        %v3824 = vadd.f32 0.0, %v3823
        %3825 = vdwg.mxu0
        %v3826 = vmul.f32 %v2085, 0.7978846
        %v3827 = vmul.f32 %v2087, 0.7978846
        %v3828 = vmul.f32 %v2198, 0.7978846
        %v3829 = vmul.f32 %v2200, 0.7978846
        %v3830 = vmul.f32 %v2311, 0.7978846
        %v3831 = vmul.f32 %v2313, 0.7978846
        %v3832 = vmul.f32 %v2424, 0.7978846
        %v3833 = vmul.f32 %v2426, 0.7978846
        %v3834 = vmul.f32 %v2537, 0.7978846
        %v3835 = vmul.f32 %v2539, 0.7978846
        %v3836 = vmul.f32 %v2650, 0.7978846
        %v3837 = vmul.f32 %v2652, 0.7978846
        %v3838 = vmul.f32 %v2763, 0.7978846
        %v3839 = vmul.f32 %v2765, 0.7978846
        %v3840 = vmul.f32 %v2876, 0.7978846
        %v3841 = vmul.f32 %v2878, 0.7978846
        %v3842 = vmul.f32 %v2989, 0.7978846
        %v3843 = vmul.f32 %v2991, 0.7978846
        %v3844 = vmul.f32 %v3102, 0.7978846
        %v3845 = vmul.f32 %v3104, 0.7978846
        %v3846 = vmul.f32 %v3215, 0.7978846
        %v3847 = vmul.f32 %v3217, 0.7978846
        %v3848 = vmul.f32 %v3328, 0.7978846
        %v3849 = vmul.f32 %v3330, 0.7978846
        %v3850 = vmul.f32 %v3441, 0.7978846
        %v3851 = vmul.f32 %v3443, 0.7978846
        %v3852 = vmul.f32 %v3554, 0.7978846
        %v3853 = vmul.f32 %v3556, 0.7978846
        %v3854 = vmul.f32 %v3667, 0.7978846
        %v3855 = vmul.f32 %v3669, 0.7978846
        %v3856 = vmul.f32 %v3780, 0.7978846
        %v3857 = vmul.f32 %v3782, 0.7978846
        %v3858 = vmul.f32 %v2085, %v2085
        %v3859 = vmul.f32 %v2087, %v2087
        %v3860 = vmul.f32 %v2198, %v2198
        %v3861 = vmul.f32 %v2200, %v2200
        %v3862 = vmul.f32 %v2311, %v2311
        %v3863 = vmul.f32 %v2313, %v2313
        %v3864 = vmul.f32 %v2424, %v2424
        %v3865 = vmul.f32 %v2426, %v2426
        %v3866 = vmul.f32 %v2537, %v2537
        %v3867 = vmul.f32 %v2539, %v2539
        %v3868 = vmul.f32 %v2650, %v2650
        %v3869 = vmul.f32 %v2652, %v2652
        %v3870 = vmul.f32 %v2763, %v2763
        %v3871 = vmul.f32 %v2765, %v2765
        %v3872 = vmul.f32 %v2876, %v2876
        %v3873 = vmul.f32 %v2878, %v2878
        %v3874 = vmul.f32 %v2989, %v2989
        %v3875 = vmul.f32 %v2991, %v2991
        %v3876 = vmul.f32 %v3102, %v3102
        %v3877 = vmul.f32 %v3104, %v3104
        %v3878 = vmul.f32 %v3215, %v3215
        %v3879 = vmul.f32 %v3217, %v3217
        %v3880 = vmul.f32 %v3328, %v3328
        %v3881 = vmul.f32 %v3330, %v3330
        %v3882 = vmul.f32 %v3441, %v3441
        %v3883 = vmul.f32 %v3443, %v3443
        %v3884 = vmul.f32 %v3554, %v3554
        %v3885 = vmul.f32 %v3556, %v3556
        %v3886 = vmul.f32 %v3667, %v3667
        %v3887 = vmul.f32 %v3669, %v3669
        %v3888 = vmul.f32 %v3780, %v3780
        %v3889 = vmul.f32 %v3782, %v3782
        %v3890 = vmul.f32 %v3858, 0.044715
        %v3891 = vmul.f32 %v3859, 0.044715
        %v3892 = vmul.f32 %v3860, 0.044715
        %v3893 = vmul.f32 %v3861, 0.044715
        %v3894 = vmul.f32 %v3862, 0.044715
        %v3895 = vmul.f32 %v3863, 0.044715
        %v3896 = vmul.f32 %v3864, 0.044715
        %v3897 = vmul.f32 %v3865, 0.044715
        %v3898 = vmul.f32 %v3866, 0.044715
        %v3899 = vmul.f32 %v3867, 0.044715
        %v3900 = vmul.f32 %v3868, 0.044715
        %v3901 = vmul.f32 %v3869, 0.044715
        %v3902 = vmul.f32 %v3870, 0.044715
        %v3903 = vmul.f32 %v3871, 0.044715
        %v3904 = vmul.f32 %v3872, 0.044715
        %v3905 = vmul.f32 %v3873, 0.044715
        %v3906 = vmul.f32 %v3874, 0.044715
        %v3907 = vmul.f32 %v3875, 0.044715
        %v3908 = vmul.f32 %v3876, 0.044715
        %v3909 = vmul.f32 %v3877, 0.044715
        %v3910 = vmul.f32 %v3878, 0.044715
        %v3911 = vmul.f32 %v3879, 0.044715
        %v3912 = vmul.f32 %v3880, 0.044715
        %v3913 = vmul.f32 %v3881, 0.044715
        %v3914 = vmul.f32 %v3882, 0.044715
        %v3915 = vmul.f32 %v3883, 0.044715
        %v3916 = vmul.f32 %v3884, 0.044715
        %v3917 = vmul.f32 %v3885, 0.044715
        %v3918 = vmul.f32 %v3886, 0.044715
        %v3919 = vmul.f32 %v3887, 0.044715
        %v3920 = vmul.f32 %v3888, 0.044715
        %v3921 = vmul.f32 %v3889, 0.044715
        %v3922 = vadd.f32 %v3890, 1.0
        %v3923 = vadd.f32 %v3891, 1.0
        %v3924 = vadd.f32 %v3892, 1.0
        %v3925 = vadd.f32 %v3893, 1.0
        %v3926 = vadd.f32 %v3894, 1.0
        %v3927 = vadd.f32 %v3895, 1.0
        %v3928 = vadd.f32 %v3896, 1.0
        %v3929 = vadd.f32 %v3897, 1.0
        %v3930 = vadd.f32 %v3898, 1.0
        %v3931 = vadd.f32 %v3899, 1.0
        %v3932 = vadd.f32 %v3900, 1.0
        %v3933 = vadd.f32 %v3901, 1.0
        %v3934 = vadd.f32 %v3902, 1.0
        %v3935 = vadd.f32 %v3903, 1.0
        %v3936 = vadd.f32 %v3904, 1.0
        %v3937 = vadd.f32 %v3905, 1.0
        %v3938 = vadd.f32 %v3906, 1.0
        %v3939 = vadd.f32 %v3907, 1.0
        %v3940 = vadd.f32 %v3908, 1.0
        %v3941 = vadd.f32 %v3909, 1.0
        %v3942 = vadd.f32 %v3910, 1.0
        %v3943 = vadd.f32 %v3911, 1.0
        %v3944 = vadd.f32 %v3912, 1.0
        %v3945 = vadd.f32 %v3913, 1.0
        %v3946 = vadd.f32 %v3914, 1.0
        %v3947 = vadd.f32 %v3915, 1.0
        %v3948 = vadd.f32 %v3916, 1.0
        %v3949 = vadd.f32 %v3917, 1.0
        %v3950 = vadd.f32 %v3918, 1.0
        %v3951 = vadd.f32 %v3919, 1.0
        %v3952 = vadd.f32 %v3920, 1.0
        %v3953 = vadd.f32 %v3921, 1.0
        %v3954 = vmul.f32 %v3826, %v3922
        %v3955 = vmul.f32 %v3827, %v3923
        %v3956 = vmul.f32 %v3828, %v3924
        %v3957 = vmul.f32 %v3829, %v3925
        %v3958 = vmul.f32 %v3830, %v3926
        %v3959 = vmul.f32 %v3831, %v3927
        %v3960 = vmul.f32 %v3832, %v3928
        %v3961 = vmul.f32 %v3833, %v3929
        %v3962 = vmul.f32 %v3834, %v3930
        %v3963 = vmul.f32 %v3835, %v3931
        %v3964 = vmul.f32 %v3836, %v3932
        %v3965 = vmul.f32 %v3837, %v3933
        %v3966 = vmul.f32 %v3838, %v3934
        %v3967 = vmul.f32 %v3839, %v3935
        %v3968 = vmul.f32 %v3840, %v3936
        %v3969 = vmul.f32 %v3841, %v3937
        %v3970 = vmul.f32 %v3842, %v3938
        %v3971 = vmul.f32 %v3843, %v3939
        %v3972 = vmul.f32 %v3844, %v3940
        %v3973 = vmul.f32 %v3845, %v3941
        %v3974 = vmul.f32 %v3846, %v3942
        %v3975 = vmul.f32 %v3847, %v3943
        %v3976 = vmul.f32 %v3848, %v3944
        %v3977 = vmul.f32 %v3849, %v3945
        %v3978 = vmul.f32 %v3850, %v3946
        %v3979 = vmul.f32 %v3851, %v3947
        %v3980 = vmul.f32 %v3852, %v3948
        %v3981 = vmul.f32 %v3853, %v3949
        %v3982 = vmul.f32 %v3854, %v3950
        %v3983 = vmul.f32 %v3855, %v3951
        %v3984 = vmul.f32 %v3856, %v3952
        %v3985 = vmul.f32 %v3857, %v3953
        %v3986 = vmul.f32 %v2085, 0.5
        %v3987 = vmul.f32 %v2087, 0.5
        %v3988 = vmul.f32 %v2198, 0.5
        %v3989 = vmul.f32 %v2200, 0.5
        %v3990 = vmul.f32 %v2311, 0.5
        %v3991 = vmul.f32 %v2313, 0.5
        %v3992 = vmul.f32 %v2424, 0.5
        %v3993 = vmul.f32 %v2426, 0.5
        %v3994 = vmul.f32 %v2537, 0.5
        %v3995 = vmul.f32 %v2539, 0.5
        %v3996 = vmul.f32 %v2650, 0.5
        %v3997 = vmul.f32 %v2652, 0.5
        %v3998 = vmul.f32 %v2763, 0.5
        %v3999 = vmul.f32 %v2765, 0.5
        %v4000 = vmul.f32 %v2876, 0.5
        %v4001 = vmul.f32 %v2878, 0.5
        %v4002 = vmul.f32 %v2989, 0.5
        %v4003 = vmul.f32 %v2991, 0.5
        %v4004 = vmul.f32 %v3102, 0.5
        %v4005 = vmul.f32 %v3104, 0.5
        %v4006 = vmul.f32 %v3215, 0.5
        %v4007 = vmul.f32 %v3217, 0.5
        %v4008 = vmul.f32 %v3328, 0.5
        %v4009 = vmul.f32 %v3330, 0.5
        %v4010 = vmul.f32 %v3441, 0.5
        %v4011 = vmul.f32 %v3443, 0.5
        %v4012 = vmul.f32 %v3554, 0.5
        %v4013 = vmul.f32 %v3556, 0.5
        %v4014 = vmul.f32 %v3667, 0.5
        %v4015 = vmul.f32 %v3669, 0.5
        %v4016 = vmul.f32 %v3780, 0.5
        %v4017 = vmul.f32 %v3782, 0.5
        %v4018 = vtanh.pop %v3954
        %v4019 = vtanh.pop %v3955
        %v4020 = vtanh.pop %v3956
        %v4021 = vtanh.pop %v3957
        %v4022 = vtanh.pop %v3958
        %v4023 = vtanh.pop %v3959
        %v4024 = vtanh.pop %v3960
        %v4025 = vtanh.pop %v3961
        %v4026 = vtanh.pop %v3962
        %v4027 = vtanh.pop %v3963
        %v4028 = vtanh.pop %v3964
        %v4029 = vtanh.pop %v3965
        %v4030 = vtanh.pop %v3966
        %v4031 = vtanh.pop %v3967
        %v4032 = vtanh.pop %v3968
        %v4033 = vtanh.pop %v3969
        %v4034 = vtanh.pop %v3970
        %v4035 = vtanh.pop %v3971
        %v4036 = vtanh.pop %v3972
        %v4037 = vtanh.pop %v3973
        %v4038 = vtanh.pop %v3974
        %v4039 = vtanh.pop %v3975
        %v4040 = vtanh.pop %v3976
        %v4041 = vtanh.pop %v3977
        %v4042 = vtanh.pop %v3978
        %v4043 = vtanh.pop %v3979
        %v4044 = vtanh.pop %v3980
        %v4045 = vtanh.pop %v3981
        %v4046 = vtanh.pop %v3982
        %v4047 = vtanh.pop %v3983
        %v4048 = vtanh.pop %v3984
        %v4049 = vtanh.pop %v3985
        %v4050 = vadd.f32 %v4018, 1.0
        %v4051 = vadd.f32 %v4019, 1.0
        %v4052 = vadd.f32 %v4020, 1.0
        %v4053 = vadd.f32 %v4021, 1.0
        %v4054 = vadd.f32 %v4022, 1.0
        %v4055 = vadd.f32 %v4023, 1.0
        %v4056 = vadd.f32 %v4024, 1.0
        %v4057 = vadd.f32 %v4025, 1.0
        %v4058 = vadd.f32 %v4026, 1.0
        %v4059 = vadd.f32 %v4027, 1.0
        %v4060 = vadd.f32 %v4028, 1.0
        %v4061 = vadd.f32 %v4029, 1.0
        %v4062 = vadd.f32 %v4030, 1.0
        %v4063 = vadd.f32 %v4031, 1.0
        %v4064 = vadd.f32 %v4032, 1.0
        %v4065 = vadd.f32 %v4033, 1.0
        %v4066 = vadd.f32 %v4034, 1.0
        %v4067 = vadd.f32 %v4035, 1.0
        %v4068 = vadd.f32 %v4036, 1.0
        %v4069 = vadd.f32 %v4037, 1.0
        %v4070 = vadd.f32 %v4038, 1.0
        %v4071 = vadd.f32 %v4039, 1.0
        %v4072 = vadd.f32 %v4040, 1.0
        %v4073 = vadd.f32 %v4041, 1.0
        %v4074 = vadd.f32 %v4042, 1.0
        %v4075 = vadd.f32 %v4043, 1.0
        %v4076 = vadd.f32 %v4044, 1.0
        %v4077 = vadd.f32 %v4045, 1.0
        %v4078 = vadd.f32 %v4046, 1.0
        %v4079 = vadd.f32 %v4047, 1.0
        %v4080 = vadd.f32 %v4048, 1.0
        %v4081 = vadd.f32 %v4049, 1.0
        %v4082 = vmul.f32 %v3986, %v4050
        %v4083 = vmul.f32 %v3987, %v4051
        %v4084 = vmul.f32 %v3988, %v4052
        %v4085 = vmul.f32 %v3989, %v4053
        %v4086 = vmul.f32 %v3990, %v4054
        %v4087 = vmul.f32 %v3991, %v4055
        %v4088 = vmul.f32 %v3992, %v4056
        %v4089 = vmul.f32 %v3993, %v4057
        %v4090 = vmul.f32 %v3994, %v4058
        %v4091 = vmul.f32 %v3995, %v4059
        %v4092 = vmul.f32 %v3996, %v4060
        %v4093 = vmul.f32 %v3997, %v4061
        %v4094 = vmul.f32 %v3998, %v4062
        %v4095 = vmul.f32 %v3999, %v4063
        %v4096 = vmul.f32 %v4000, %v4064
        %v4097 = vmul.f32 %v4001, %v4065
        %v4098 = vmul.f32 %v4002, %v4066
        %v4099 = vmul.f32 %v4003, %v4067
        %v4100 = vmul.f32 %v4004, %v4068
        %v4101 = vmul.f32 %v4005, %v4069
        %v4102 = vmul.f32 %v4006, %v4070
        %v4103 = vmul.f32 %v4007, %v4071
        %v4104 = vmul.f32 %v4008, %v4072
        %v4105 = vmul.f32 %v4009, %v4073
        %v4106 = vmul.f32 %v4010, %v4074
        %v4107 = vmul.f32 %v4011, %v4075
        %v4108 = vmul.f32 %v4012, %v4076
        %v4109 = vmul.f32 %v4013, %v4077
        %v4110 = vmul.f32 %v4014, %v4078
        %v4111 = vmul.f32 %v4015, %v4079
        %v4112 = vmul.f32 %v4016, %v4080
        %v4113 = vmul.f32 %v4017, %v4081
        %4114 = vst [vmem:[%s221] sm:$0xff] %v4082
        %4115 = vst [vmem:[%s221 + $0x8] sm:$0xff] %v4083
        %4116 = vst [vmem:[%s221 + $0x10] sm:$0xff] %v4084
        %4117 = vst [vmem:[%s221 + $0x18] sm:$0xff] %v4085
        %4118 = vst [vmem:[%s221 + $0x20] sm:$0xff] %v4086
        %4119 = vst [vmem:[%s221 + $0x28] sm:$0xff] %v4087
        %4120 = vst [vmem:[%s221 + $0x30] sm:$0xff] %v4088
        %4121 = vst [vmem:[%s221 + $0x38] sm:$0xff] %v4089
        %4122 = vst [vmem:[%s221 + $0x40] sm:$0xff] %v4090
        %4123 = vst [vmem:[%s221 + $0x48] sm:$0xff] %v4091
        %4124 = vst [vmem:[%s221 + $0x50] sm:$0xff] %v4092
        %4125 = vst [vmem:[%s221 + $0x58] sm:$0xff] %v4093
        %4126 = vst [vmem:[%s221 + $0x60] sm:$0xff] %v4094
        %4127 = vst [vmem:[%s221 + $0x68] sm:$0xff] %v4095
        %4128 = vst [vmem:[%s221 + $0x70] sm:$0xff] %v4096
        %4129 = vst [vmem:[%s221 + $0x78] sm:$0xff] %v4097
        %4130 = vst [vmem:[%s221 + $0x80] sm:$0xff] %v4098
        %4131 = vst [vmem:[%s221 + $0x88] sm:$0xff] %v4099
        %4132 = vst [vmem:[%s221 + $0x90] sm:$0xff] %v4100
        %4133 = vst [vmem:[%s221 + $0x98] sm:$0xff] %v4101
        %4134 = vst [vmem:[%s221 + $0xa0] sm:$0xff] %v4102
        %4135 = vst [vmem:[%s221 + $0xa8] sm:$0xff] %v4103
        %4136 = vst [vmem:[%s221 + $0xb0] sm:$0xff] %v4104
        %4137 = vst [vmem:[%s221 + $0xb8] sm:$0xff] %v4105
        %4138 = vst [vmem:[%s221 + $0xc0] sm:$0xff] %v4106
        %4139 = vst [vmem:[%s221 + $0xc8] sm:$0xff] %v4107
        %4140 = vst [vmem:[%s221 + $0xd0] sm:$0xff] %v4108
        %4141 = vst [vmem:[%s221 + $0xd8] sm:$0xff] %v4109
        %4142 = vst [vmem:[%s221 + $0xe0] sm:$0xff] %v4110
        %4143 = vst [vmem:[%s221 + $0xe8] sm:$0xff] %v4111
        %4144 = vst [vmem:[%s221 + $0xf0] sm:$0xff] %v4112
        %4145 = vst [vmem:[%s221 + $0xf8] sm:$0xff] %v4113
        %v4146 = vmul.f32 %v2091, 0.7978846
        %v4147 = vmul.f32 %v2093, 0.7978846
        %v4148 = vmul.f32 %v2204, 0.7978846
        %v4149 = vmul.f32 %v2206, 0.7978846
        %v4150 = vmul.f32 %v2317, 0.7978846
        %v4151 = vmul.f32 %v2319, 0.7978846
        %v4152 = vmul.f32 %v2430, 0.7978846
        %v4153 = vmul.f32 %v2432, 0.7978846
        %v4154 = vmul.f32 %v2543, 0.7978846
        %v4155 = vmul.f32 %v2545, 0.7978846
        %v4156 = vmul.f32 %v2656, 0.7978846
        %v4157 = vmul.f32 %v2658, 0.7978846
        %v4158 = vmul.f32 %v2769, 0.7978846
        %v4159 = vmul.f32 %v2771, 0.7978846
        %v4160 = vmul.f32 %v2882, 0.7978846
        %v4161 = vmul.f32 %v2884, 0.7978846
        %v4162 = vmul.f32 %v2995, 0.7978846
        %v4163 = vmul.f32 %v2997, 0.7978846
        %v4164 = vmul.f32 %v3108, 0.7978846
        %v4165 = vmul.f32 %v3110, 0.7978846
        %v4166 = vmul.f32 %v3221, 0.7978846
        %v4167 = vmul.f32 %v3223, 0.7978846
        %v4168 = vmul.f32 %v3334, 0.7978846
        %v4169 = vmul.f32 %v3336, 0.7978846
        %v4170 = vmul.f32 %v3447, 0.7978846
        %v4171 = vmul.f32 %v3449, 0.7978846
        %v4172 = vmul.f32 %v3560, 0.7978846
        %v4173 = vmul.f32 %v3562, 0.7978846
        %v4174 = vmul.f32 %v3673, 0.7978846
        %v4175 = vmul.f32 %v3675, 0.7978846
        %v4176 = vmul.f32 %v3786, 0.7978846
        %v4177 = vmul.f32 %v3788, 0.7978846
        %v4178 = vmul.f32 %v2091, %v2091
        %v4179 = vmul.f32 %v2093, %v2093
        %v4180 = vmul.f32 %v2204, %v2204
        %v4181 = vmul.f32 %v2206, %v2206
        %v4182 = vmul.f32 %v2317, %v2317
        %v4183 = vmul.f32 %v2319, %v2319
        %v4184 = vmul.f32 %v2430, %v2430
        %v4185 = vmul.f32 %v2432, %v2432
        %v4186 = vmul.f32 %v2543, %v2543
        %v4187 = vmul.f32 %v2545, %v2545
        %v4188 = vmul.f32 %v2656, %v2656
        %v4189 = vmul.f32 %v2658, %v2658
        %v4190 = vmul.f32 %v2769, %v2769
        %v4191 = vmul.f32 %v2771, %v2771
        %v4192 = vmul.f32 %v2882, %v2882
        %v4193 = vmul.f32 %v2884, %v2884
        %v4194 = vmul.f32 %v2995, %v2995
        %v4195 = vmul.f32 %v2997, %v2997
        %v4196 = vmul.f32 %v3108, %v3108
        %v4197 = vmul.f32 %v3110, %v3110
        %v4198 = vmul.f32 %v3221, %v3221
        %v4199 = vmul.f32 %v3223, %v3223
        %v4200 = vmul.f32 %v3334, %v3334
        %v4201 = vmul.f32 %v3336, %v3336
        %v4202 = vmul.f32 %v3447, %v3447
        %v4203 = vmul.f32 %v3449, %v3449
        %v4204 = vmul.f32 %v3560, %v3560
        %v4205 = vmul.f32 %v3562, %v3562
        %v4206 = vmul.f32 %v3673, %v3673
        %v4207 = vmul.f32 %v3675, %v3675
        %v4208 = vmul.f32 %v3786, %v3786
        %v4209 = vmul.f32 %v3788, %v3788
        %v4210 = vmul.f32 %v4178, 0.044715
        %v4211 = vmul.f32 %v4179, 0.044715
        %v4212 = vmul.f32 %v4180, 0.044715
        %v4213 = vmul.f32 %v4181, 0.044715
        %v4214 = vmul.f32 %v4182, 0.044715
        %v4215 = vmul.f32 %v4183, 0.044715
        %v4216 = vmul.f32 %v4184, 0.044715
        %v4217 = vmul.f32 %v4185, 0.044715
        %v4218 = vmul.f32 %v4186, 0.044715
        %v4219 = vmul.f32 %v4187, 0.044715
        %v4220 = vmul.f32 %v4188, 0.044715
        %v4221 = vmul.f32 %v4189, 0.044715
        %v4222 = vmul.f32 %v4190, 0.044715
        %v4223 = vmul.f32 %v4191, 0.044715
        %v4224 = vmul.f32 %v4192, 0.044715
        %v4225 = vmul.f32 %v4193, 0.044715
        %v4226 = vmul.f32 %v4194, 0.044715
        %v4227 = vmul.f32 %v4195, 0.044715
        %v4228 = vmul.f32 %v4196, 0.044715
        %v4229 = vmul.f32 %v4197, 0.044715
        %v4230 = vmul.f32 %v4198, 0.044715
        %v4231 = vmul.f32 %v4199, 0.044715
        %v4232 = vmul.f32 %v4200, 0.044715
        %v4233 = vmul.f32 %v4201, 0.044715
        %v4234 = vmul.f32 %v4202, 0.044715
        %v4235 = vmul.f32 %v4203, 0.044715
        %v4236 = vmul.f32 %v4204, 0.044715
        %v4237 = vmul.f32 %v4205, 0.044715
        %v4238 = vmul.f32 %v4206, 0.044715
        %v4239 = vmul.f32 %v4207, 0.044715
        %v4240 = vmul.f32 %v4208, 0.044715
        %v4241 = vmul.f32 %v4209, 0.044715
        %v4242 = vadd.f32 %v4210, 1.0
        %v4243 = vadd.f32 %v4211, 1.0
        %v4244 = vadd.f32 %v4212, 1.0
        %v4245 = vadd.f32 %v4213, 1.0
        %v4246 = vadd.f32 %v4214, 1.0
        %v4247 = vadd.f32 %v4215, 1.0
        %v4248 = vadd.f32 %v4216, 1.0
        %v4249 = vadd.f32 %v4217, 1.0
        %v4250 = vadd.f32 %v4218, 1.0
        %v4251 = vadd.f32 %v4219, 1.0
        %v4252 = vadd.f32 %v4220, 1.0
        %v4253 = vadd.f32 %v4221, 1.0
        %v4254 = vadd.f32 %v4222, 1.0
        %v4255 = vadd.f32 %v4223, 1.0
        %v4256 = vadd.f32 %v4224, 1.0
        %v4257 = vadd.f32 %v4225, 1.0
        %v4258 = vadd.f32 %v4226, 1.0
        %v4259 = vadd.f32 %v4227, 1.0
        %v4260 = vadd.f32 %v4228, 1.0
        %v4261 = vadd.f32 %v4229, 1.0
        %v4262 = vadd.f32 %v4230, 1.0
        %v4263 = vadd.f32 %v4231, 1.0
        %v4264 = vadd.f32 %v4232, 1.0
        %v4265 = vadd.f32 %v4233, 1.0
        %v4266 = vadd.f32 %v4234, 1.0
        %v4267 = vadd.f32 %v4235, 1.0
        %v4268 = vadd.f32 %v4236, 1.0
        %v4269 = vadd.f32 %v4237, 1.0
        %v4270 = vadd.f32 %v4238, 1.0
        %v4271 = vadd.f32 %v4239, 1.0
        %v4272 = vadd.f32 %v4240, 1.0
        %v4273 = vadd.f32 %v4241, 1.0
        %v4274 = vmul.f32 %v4146, %v4242
        %v4275 = vmul.f32 %v4147, %v4243
        %v4276 = vmul.f32 %v4148, %v4244
        %v4277 = vmul.f32 %v4149, %v4245
        %v4278 = vmul.f32 %v4150, %v4246
        %v4279 = vmul.f32 %v4151, %v4247
        %v4280 = vmul.f32 %v4152, %v4248
        %v4281 = vmul.f32 %v4153, %v4249
        %v4282 = vmul.f32 %v4154, %v4250
        %v4283 = vmul.f32 %v4155, %v4251
        %v4284 = vmul.f32 %v4156, %v4252
        %v4285 = vmul.f32 %v4157, %v4253
        %v4286 = vmul.f32 %v4158, %v4254
        %v4287 = vmul.f32 %v4159, %v4255
        %v4288 = vmul.f32 %v4160, %v4256
        %v4289 = vmul.f32 %v4161, %v4257
        %v4290 = vmul.f32 %v4162, %v4258
        %v4291 = vmul.f32 %v4163, %v4259
        %v4292 = vmul.f32 %v4164, %v4260
        %v4293 = vmul.f32 %v4165, %v4261
        %v4294 = vmul.f32 %v4166, %v4262
        %v4295 = vmul.f32 %v4167, %v4263
        %v4296 = vmul.f32 %v4168, %v4264
        %v4297 = vmul.f32 %v4169, %v4265
        %v4298 = vmul.f32 %v4170, %v4266
        %v4299 = vmul.f32 %v4171, %v4267
        %v4300 = vmul.f32 %v4172, %v4268
        %v4301 = vmul.f32 %v4173, %v4269
        %v4302 = vmul.f32 %v4174, %v4270
        %v4303 = vmul.f32 %v4175, %v4271
        %v4304 = vmul.f32 %v4176, %v4272
        %v4305 = vmul.f32 %v4177, %v4273
        %v4306 = vmul.f32 %v2091, 0.5
        %v4307 = vmul.f32 %v2093, 0.5
        %v4308 = vmul.f32 %v2204, 0.5
        %v4309 = vmul.f32 %v2206, 0.5
        %v4310 = vmul.f32 %v2317, 0.5
        %v4311 = vmul.f32 %v2319, 0.5
        %v4312 = vmul.f32 %v2430, 0.5
        %v4313 = vmul.f32 %v2432, 0.5
        %v4314 = vmul.f32 %v2543, 0.5
        %v4315 = vmul.f32 %v2545, 0.5
        %v4316 = vmul.f32 %v2656, 0.5
        %v4317 = vmul.f32 %v2658, 0.5
        %v4318 = vmul.f32 %v2769, 0.5
        %v4319 = vmul.f32 %v2771, 0.5
        %v4320 = vmul.f32 %v2882, 0.5
        %v4321 = vmul.f32 %v2884, 0.5
        %v4322 = vmul.f32 %v2995, 0.5
        %v4323 = vmul.f32 %v2997, 0.5
        %v4324 = vmul.f32 %v3108, 0.5
        %v4325 = vmul.f32 %v3110, 0.5
        %v4326 = vmul.f32 %v3221, 0.5
        %v4327 = vmul.f32 %v3223, 0.5
        %v4328 = vmul.f32 %v3334, 0.5
        %v4329 = vmul.f32 %v3336, 0.5
        %v4330 = vmul.f32 %v3447, 0.5
        %v4331 = vmul.f32 %v3449, 0.5
        %v4332 = vmul.f32 %v3560, 0.5
        %v4333 = vmul.f32 %v3562, 0.5
        %v4334 = vmul.f32 %v3673, 0.5
        %v4335 = vmul.f32 %v3675, 0.5
        %v4336 = vmul.f32 %v3786, 0.5
        %v4337 = vmul.f32 %v3788, 0.5
        %v4338 = vtanh.pop %v4274
        %v4339 = vtanh.pop %v4275
        %v4340 = vtanh.pop %v4276
        %v4341 = vtanh.pop %v4277
        %v4342 = vtanh.pop %v4278
        %v4343 = vtanh.pop %v4279
        %v4344 = vtanh.pop %v4280
        %v4345 = vtanh.pop %v4281
        %v4346 = vtanh.pop %v4282
        %v4347 = vtanh.pop %v4283
        %v4348 = vtanh.pop %v4284
        %v4349 = vtanh.pop %v4285
        %v4350 = vtanh.pop %v4286
        %v4351 = vtanh.pop %v4287
        %v4352 = vtanh.pop %v4288
        %v4353 = vtanh.pop %v4289
        %v4354 = vtanh.pop %v4290
        %v4355 = vtanh.pop %v4291
        %v4356 = vtanh.pop %v4292
        %v4357 = vtanh.pop %v4293
        %v4358 = vtanh.pop %v4294
        %v4359 = vtanh.pop %v4295
        %v4360 = vtanh.pop %v4296
        %v4361 = vtanh.pop %v4297
        %v4362 = vtanh.pop %v4298
        %v4363 = vtanh.pop %v4299
        %v4364 = vtanh.pop %v4300
        %v4365 = vtanh.pop %v4301
        %v4366 = vtanh.pop %v4302
        %v4367 = vtanh.pop %v4303
        %v4368 = vtanh.pop %v4304
        %v4369 = vtanh.pop %v4305
        %v4370 = vadd.f32 %v4338, 1.0
        %v4371 = vadd.f32 %v4339, 1.0
        %v4372 = vadd.f32 %v4340, 1.0
        %v4373 = vadd.f32 %v4341, 1.0
        %v4374 = vadd.f32 %v4342, 1.0
        %v4375 = vadd.f32 %v4343, 1.0
        %v4376 = vadd.f32 %v4344, 1.0
        %v4377 = vadd.f32 %v4345, 1.0
        %v4378 = vadd.f32 %v4346, 1.0
        %v4379 = vadd.f32 %v4347, 1.0
        %v4380 = vadd.f32 %v4348, 1.0
        %v4381 = vadd.f32 %v4349, 1.0
        %v4382 = vadd.f32 %v4350, 1.0
        %v4383 = vadd.f32 %v4351, 1.0
        %v4384 = vadd.f32 %v4352, 1.0
        %v4385 = vadd.f32 %v4353, 1.0
        %v4386 = vadd.f32 %v4354, 1.0
        %v4387 = vadd.f32 %v4355, 1.0
        %v4388 = vadd.f32 %v4356, 1.0
        %v4389 = vadd.f32 %v4357, 1.0
        %v4390 = vadd.f32 %v4358, 1.0
        %v4391 = vadd.f32 %v4359, 1.0
        %v4392 = vadd.f32 %v4360, 1.0
        %v4393 = vadd.f32 %v4361, 1.0
        %v4394 = vadd.f32 %v4362, 1.0
        %v4395 = vadd.f32 %v4363, 1.0
        %v4396 = vadd.f32 %v4364, 1.0
        %v4397 = vadd.f32 %v4365, 1.0
        %v4398 = vadd.f32 %v4366, 1.0
        %v4399 = vadd.f32 %v4367, 1.0
        %v4400 = vadd.f32 %v4368, 1.0
        %v4401 = vadd.f32 %v4369, 1.0
        %v4402 = vmul.f32 %v4306, %v4370
        %v4403 = vmul.f32 %v4307, %v4371
        %v4404 = vmul.f32 %v4308, %v4372
        %v4405 = vmul.f32 %v4309, %v4373
        %v4406 = vmul.f32 %v4310, %v4374
        %v4407 = vmul.f32 %v4311, %v4375
        %v4408 = vmul.f32 %v4312, %v4376
        %v4409 = vmul.f32 %v4313, %v4377
        %v4410 = vmul.f32 %v4314, %v4378
        %v4411 = vmul.f32 %v4315, %v4379
        %v4412 = vmul.f32 %v4316, %v4380
        %v4413 = vmul.f32 %v4317, %v4381
        %v4414 = vmul.f32 %v4318, %v4382
        %v4415 = vmul.f32 %v4319, %v4383
        %v4416 = vmul.f32 %v4320, %v4384
        %v4417 = vmul.f32 %v4321, %v4385
        %v4418 = vmul.f32 %v4322, %v4386
        %v4419 = vmul.f32 %v4323, %v4387
        %v4420 = vmul.f32 %v4324, %v4388
        %v4421 = vmul.f32 %v4325, %v4389
        %v4422 = vmul.f32 %v4326, %v4390
        %v4423 = vmul.f32 %v4327, %v4391
        %v4424 = vmul.f32 %v4328, %v4392
        %v4425 = vmul.f32 %v4329, %v4393
        %v4426 = vmul.f32 %v4330, %v4394
        %v4427 = vmul.f32 %v4331, %v4395
        %v4428 = vmul.f32 %v4332, %v4396
        %v4429 = vmul.f32 %v4333, %v4397
        %v4430 = vmul.f32 %v4334, %v4398
        %v4431 = vmul.f32 %v4335, %v4399
        %v4432 = vmul.f32 %v4336, %v4400
        %v4433 = vmul.f32 %v4337, %v4401
        %4434 = vst [vmem:[%s221 + $0x100] sm:$0xff] %v4402
        %4435 = vst [vmem:[%s221 + $0x108] sm:$0xff] %v4403
        %4436 = vst [vmem:[%s221 + $0x110] sm:$0xff] %v4404
        %4437 = vst [vmem:[%s221 + $0x118] sm:$0xff] %v4405
        %4438 = vst [vmem:[%s221 + $0x120] sm:$0xff] %v4406
        %4439 = vst [vmem:[%s221 + $0x128] sm:$0xff] %v4407
        %4440 = vst [vmem:[%s221 + $0x130] sm:$0xff] %v4408
        %4441 = vst [vmem:[%s221 + $0x138] sm:$0xff] %v4409
        %4442 = vst [vmem:[%s221 + $0x140] sm:$0xff] %v4410
        %4443 = vst [vmem:[%s221 + $0x148] sm:$0xff] %v4411
        %4444 = vst [vmem:[%s221 + $0x150] sm:$0xff] %v4412
        %4445 = vst [vmem:[%s221 + $0x158] sm:$0xff] %v4413
        %4446 = vst [vmem:[%s221 + $0x160] sm:$0xff] %v4414
        %4447 = vst [vmem:[%s221 + $0x168] sm:$0xff] %v4415
        %4448 = vst [vmem:[%s221 + $0x170] sm:$0xff] %v4416
        %4449 = vst [vmem:[%s221 + $0x178] sm:$0xff] %v4417
        %4450 = vst [vmem:[%s221 + $0x180] sm:$0xff] %v4418
        %4451 = vst [vmem:[%s221 + $0x188] sm:$0xff] %v4419
        %4452 = vst [vmem:[%s221 + $0x190] sm:$0xff] %v4420
        %4453 = vst [vmem:[%s221 + $0x198] sm:$0xff] %v4421
        %4454 = vst [vmem:[%s221 + $0x1a0] sm:$0xff] %v4422
        %4455 = vst [vmem:[%s221 + $0x1a8] sm:$0xff] %v4423
        %4456 = vst [vmem:[%s221 + $0x1b0] sm:$0xff] %v4424
        %4457 = vst [vmem:[%s221 + $0x1b8] sm:$0xff] %v4425
        %4458 = vst [vmem:[%s221 + $0x1c0] sm:$0xff] %v4426
        %4459 = vst [vmem:[%s221 + $0x1c8] sm:$0xff] %v4427
        %4460 = vst [vmem:[%s221 + $0x1d0] sm:$0xff] %v4428
        %4461 = vst [vmem:[%s221 + $0x1d8] sm:$0xff] %v4429
        %4462 = vst [vmem:[%s221 + $0x1e0] sm:$0xff] %v4430
        %4463 = vst [vmem:[%s221 + $0x1e8] sm:$0xff] %v4431
        %4464 = vst [vmem:[%s221 + $0x1f0] sm:$0xff] %v4432
        %4465 = vst [vmem:[%s221 + $0x1f8] sm:$0xff] %v4433
        %v4466 = vmul.f32 %v2097, 0.7978846
        %v4467 = vmul.f32 %v2099, 0.7978846
        %v4468 = vmul.f32 %v2210, 0.7978846
        %v4469 = vmul.f32 %v2212, 0.7978846
        %v4470 = vmul.f32 %v2323, 0.7978846
        %v4471 = vmul.f32 %v2325, 0.7978846
        %v4472 = vmul.f32 %v2436, 0.7978846
        %v4473 = vmul.f32 %v2438, 0.7978846
        %v4474 = vmul.f32 %v2549, 0.7978846
        %v4475 = vmul.f32 %v2551, 0.7978846
        %v4476 = vmul.f32 %v2662, 0.7978846
        %v4477 = vmul.f32 %v2664, 0.7978846
        %v4478 = vmul.f32 %v2775, 0.7978846
        %v4479 = vmul.f32 %v2777, 0.7978846
        %v4480 = vmul.f32 %v2888, 0.7978846
        %v4481 = vmul.f32 %v2890, 0.7978846
        %v4482 = vmul.f32 %v3001, 0.7978846
        %v4483 = vmul.f32 %v3003, 0.7978846
        %v4484 = vmul.f32 %v3114, 0.7978846
        %v4485 = vmul.f32 %v3116, 0.7978846
        %v4486 = vmul.f32 %v3227, 0.7978846
        %v4487 = vmul.f32 %v3229, 0.7978846
        %v4488 = vmul.f32 %v3340, 0.7978846
        %v4489 = vmul.f32 %v3342, 0.7978846
        %v4490 = vmul.f32 %v3453, 0.7978846
        %v4491 = vmul.f32 %v3455, 0.7978846
        %v4492 = vmul.f32 %v3566, 0.7978846
        %v4493 = vmul.f32 %v3568, 0.7978846
        %v4494 = vmul.f32 %v3679, 0.7978846
        %v4495 = vmul.f32 %v3681, 0.7978846
        %v4496 = vmul.f32 %v3792, 0.7978846
        %v4497 = vmul.f32 %v3794, 0.7978846
        %v4498 = vmul.f32 %v2097, %v2097
        %v4499 = vmul.f32 %v2099, %v2099
        %v4500 = vmul.f32 %v2210, %v2210
        %v4501 = vmul.f32 %v2212, %v2212
        %v4502 = vmul.f32 %v2323, %v2323
        %v4503 = vmul.f32 %v2325, %v2325
        %v4504 = vmul.f32 %v2436, %v2436
        %v4505 = vmul.f32 %v2438, %v2438
        %v4506 = vmul.f32 %v2549, %v2549
        %v4507 = vmul.f32 %v2551, %v2551
        %v4508 = vmul.f32 %v2662, %v2662
        %v4509 = vmul.f32 %v2664, %v2664
        %v4510 = vmul.f32 %v2775, %v2775
        %v4511 = vmul.f32 %v2777, %v2777
        %v4512 = vmul.f32 %v2888, %v2888
        %v4513 = vmul.f32 %v2890, %v2890
        %v4514 = vmul.f32 %v3001, %v3001
        %v4515 = vmul.f32 %v3003, %v3003
        %v4516 = vmul.f32 %v3114, %v3114
        %v4517 = vmul.f32 %v3116, %v3116
        %v4518 = vmul.f32 %v3227, %v3227
        %v4519 = vmul.f32 %v3229, %v3229
        %v4520 = vmul.f32 %v3340, %v3340
        %v4521 = vmul.f32 %v3342, %v3342
        %v4522 = vmul.f32 %v3453, %v3453
        %v4523 = vmul.f32 %v3455, %v3455
        %v4524 = vmul.f32 %v3566, %v3566
        %v4525 = vmul.f32 %v3568, %v3568
        %v4526 = vmul.f32 %v3679, %v3679
        %v4527 = vmul.f32 %v3681, %v3681
        %v4528 = vmul.f32 %v3792, %v3792
        %v4529 = vmul.f32 %v3794, %v3794
        %v4530 = vmul.f32 %v4498, 0.044715
        %v4531 = vmul.f32 %v4499, 0.044715
        %v4532 = vmul.f32 %v4500, 0.044715
        %v4533 = vmul.f32 %v4501, 0.044715
        %v4534 = vmul.f32 %v4502, 0.044715
        %v4535 = vmul.f32 %v4503, 0.044715
        %v4536 = vmul.f32 %v4504, 0.044715
        %v4537 = vmul.f32 %v4505, 0.044715
        %v4538 = vmul.f32 %v4506, 0.044715
        %v4539 = vmul.f32 %v4507, 0.044715
        %v4540 = vmul.f32 %v4508, 0.044715
        %v4541 = vmul.f32 %v4509, 0.044715
        %v4542 = vmul.f32 %v4510, 0.044715
        %v4543 = vmul.f32 %v4511, 0.044715
        %v4544 = vmul.f32 %v4512, 0.044715
        %v4545 = vmul.f32 %v4513, 0.044715
        %v4546 = vmul.f32 %v4514, 0.044715
        %v4547 = vmul.f32 %v4515, 0.044715
        %v4548 = vmul.f32 %v4516, 0.044715
        %v4549 = vmul.f32 %v4517, 0.044715
        %v4550 = vmul.f32 %v4518, 0.044715
        %v4551 = vmul.f32 %v4519, 0.044715
        %v4552 = vmul.f32 %v4520, 0.044715
        %v4553 = vmul.f32 %v4521, 0.044715
        %v4554 = vmul.f32 %v4522, 0.044715
        %v4555 = vmul.f32 %v4523, 0.044715
        %v4556 = vmul.f32 %v4524, 0.044715
        %v4557 = vmul.f32 %v4525, 0.044715
        %v4558 = vmul.f32 %v4526, 0.044715
        %v4559 = vmul.f32 %v4527, 0.044715
        %v4560 = vmul.f32 %v4528, 0.044715
        %v4561 = vmul.f32 %v4529, 0.044715
        %v4562 = vadd.f32 %v4530, 1.0
        %v4563 = vadd.f32 %v4531, 1.0
        %v4564 = vadd.f32 %v4532, 1.0
        %v4565 = vadd.f32 %v4533, 1.0
        %v4566 = vadd.f32 %v4534, 1.0
        %v4567 = vadd.f32 %v4535, 1.0
        %v4568 = vadd.f32 %v4536, 1.0
        %v4569 = vadd.f32 %v4537, 1.0
        %v4570 = vadd.f32 %v4538, 1.0
        %v4571 = vadd.f32 %v4539, 1.0
        %v4572 = vadd.f32 %v4540, 1.0
        %v4573 = vadd.f32 %v4541, 1.0
        %v4574 = vadd.f32 %v4542, 1.0
        %v4575 = vadd.f32 %v4543, 1.0
        %v4576 = vadd.f32 %v4544, 1.0
        %v4577 = vadd.f32 %v4545, 1.0
        %v4578 = vadd.f32 %v4546, 1.0
        %v4579 = vadd.f32 %v4547, 1.0
        %v4580 = vadd.f32 %v4548, 1.0
        %v4581 = vadd.f32 %v4549, 1.0
        %v4582 = vadd.f32 %v4550, 1.0
        %v4583 = vadd.f32 %v4551, 1.0
        %v4584 = vadd.f32 %v4552, 1.0
        %v4585 = vadd.f32 %v4553, 1.0
        %v4586 = vadd.f32 %v4554, 1.0
        %v4587 = vadd.f32 %v4555, 1.0
        %v4588 = vadd.f32 %v4556, 1.0
        %v4589 = vadd.f32 %v4557, 1.0
        %v4590 = vadd.f32 %v4558, 1.0
        %v4591 = vadd.f32 %v4559, 1.0
        %v4592 = vadd.f32 %v4560, 1.0
        %v4593 = vadd.f32 %v4561, 1.0
        %v4594 = vmul.f32 %v4466, %v4562
        %v4595 = vmul.f32 %v4467, %v4563
        %v4596 = vmul.f32 %v4468, %v4564
        %v4597 = vmul.f32 %v4469, %v4565
        %v4598 = vmul.f32 %v4470, %v4566
        %v4599 = vmul.f32 %v4471, %v4567
        %v4600 = vmul.f32 %v4472, %v4568
        %v4601 = vmul.f32 %v4473, %v4569
        %v4602 = vmul.f32 %v4474, %v4570
        %v4603 = vmul.f32 %v4475, %v4571
        %v4604 = vmul.f32 %v4476, %v4572
        %v4605 = vmul.f32 %v4477, %v4573
        %v4606 = vmul.f32 %v4478, %v4574
        %v4607 = vmul.f32 %v4479, %v4575
        %v4608 = vmul.f32 %v4480, %v4576
        %v4609 = vmul.f32 %v4481, %v4577
        %v4610 = vmul.f32 %v4482, %v4578
        %v4611 = vmul.f32 %v4483, %v4579
        %v4612 = vmul.f32 %v4484, %v4580
        %v4613 = vmul.f32 %v4485, %v4581
        %v4614 = vmul.f32 %v4486, %v4582
        %v4615 = vmul.f32 %v4487, %v4583
        %v4616 = vmul.f32 %v4488, %v4584
        %v4617 = vmul.f32 %v4489, %v4585
        %v4618 = vmul.f32 %v4490, %v4586
        %v4619 = vmul.f32 %v4491, %v4587
        %v4620 = vmul.f32 %v4492, %v4588
        %v4621 = vmul.f32 %v4493, %v4589
        %v4622 = vmul.f32 %v4494, %v4590
        %v4623 = vmul.f32 %v4495, %v4591
        %v4624 = vmul.f32 %v4496, %v4592
        %v4625 = vmul.f32 %v4497, %v4593
        %v4626 = vmul.f32 %v2097, 0.5
        %v4627 = vmul.f32 %v2099, 0.5
        %v4628 = vmul.f32 %v2210, 0.5
        %v4629 = vmul.f32 %v2212, 0.5
        %v4630 = vmul.f32 %v2323, 0.5
        %v4631 = vmul.f32 %v2325, 0.5
        %v4632 = vmul.f32 %v2436, 0.5
        %v4633 = vmul.f32 %v2438, 0.5
        %v4634 = vmul.f32 %v2549, 0.5
        %v4635 = vmul.f32 %v2551, 0.5
        %v4636 = vmul.f32 %v2662, 0.5
        %v4637 = vmul.f32 %v2664, 0.5
        %v4638 = vmul.f32 %v2775, 0.5
        %v4639 = vmul.f32 %v2777, 0.5
        %v4640 = vmul.f32 %v2888, 0.5
        %v4641 = vmul.f32 %v2890, 0.5
        %v4642 = vmul.f32 %v3001, 0.5
        %v4643 = vmul.f32 %v3003, 0.5
        %v4644 = vmul.f32 %v3114, 0.5
        %v4645 = vmul.f32 %v3116, 0.5
        %v4646 = vmul.f32 %v3227, 0.5
        %v4647 = vmul.f32 %v3229, 0.5
        %v4648 = vmul.f32 %v3340, 0.5
        %v4649 = vmul.f32 %v3342, 0.5
        %v4650 = vmul.f32 %v3453, 0.5
        %v4651 = vmul.f32 %v3455, 0.5
        %v4652 = vmul.f32 %v3566, 0.5
        %v4653 = vmul.f32 %v3568, 0.5
        %v4654 = vmul.f32 %v3679, 0.5
        %v4655 = vmul.f32 %v3681, 0.5
        %v4656 = vmul.f32 %v3792, 0.5
        %v4657 = vmul.f32 %v3794, 0.5
        %v4658 = vtanh.pop %v4594
        %v4659 = vtanh.pop %v4595
        %v4660 = vtanh.pop %v4596
        %v4661 = vtanh.pop %v4597
        %v4662 = vtanh.pop %v4598
        %v4663 = vtanh.pop %v4599
        %v4664 = vtanh.pop %v4600
        %v4665 = vtanh.pop %v4601
        %v4666 = vtanh.pop %v4602
        %v4667 = vtanh.pop %v4603
        %v4668 = vtanh.pop %v4604
        %v4669 = vtanh.pop %v4605
        %v4670 = vtanh.pop %v4606
        %v4671 = vtanh.pop %v4607
        %v4672 = vtanh.pop %v4608
        %v4673 = vtanh.pop %v4609
        %v4674 = vtanh.pop %v4610
        %v4675 = vtanh.pop %v4611
        %v4676 = vtanh.pop %v4612
        %v4677 = vtanh.pop %v4613
        %v4678 = vtanh.pop %v4614
        %v4679 = vtanh.pop %v4615
        %v4680 = vtanh.pop %v4616
        %v4681 = vtanh.pop %v4617
        %v4682 = vtanh.pop %v4618
        %v4683 = vtanh.pop %v4619
        %v4684 = vtanh.pop %v4620
        %v4685 = vtanh.pop %v4621
        %v4686 = vtanh.pop %v4622
        %v4687 = vtanh.pop %v4623
        %v4688 = vtanh.pop %v4624
        %v4689 = vtanh.pop %v4625
        %v4690 = vadd.f32 %v4658, 1.0
        %v4691 = vadd.f32 %v4659, 1.0
        %v4692 = vadd.f32 %v4660, 1.0
        %v4693 = vadd.f32 %v4661, 1.0
        %v4694 = vadd.f32 %v4662, 1.0
        %v4695 = vadd.f32 %v4663, 1.0
        %v4696 = vadd.f32 %v4664, 1.0
        %v4697 = vadd.f32 %v4665, 1.0
        %v4698 = vadd.f32 %v4666, 1.0
        %v4699 = vadd.f32 %v4667, 1.0
        %v4700 = vadd.f32 %v4668, 1.0
        %v4701 = vadd.f32 %v4669, 1.0
        %v4702 = vadd.f32 %v4670, 1.0
        %v4703 = vadd.f32 %v4671, 1.0
        %v4704 = vadd.f32 %v4672, 1.0
        %v4705 = vadd.f32 %v4673, 1.0
        %v4706 = vadd.f32 %v4674, 1.0
        %v4707 = vadd.f32 %v4675, 1.0
        %v4708 = vadd.f32 %v4676, 1.0
        %v4709 = vadd.f32 %v4677, 1.0
        %v4710 = vadd.f32 %v4678, 1.0
        %v4711 = vadd.f32 %v4679, 1.0
        %v4712 = vadd.f32 %v4680, 1.0
        %v4713 = vadd.f32 %v4681, 1.0
        %v4714 = vadd.f32 %v4682, 1.0
        %v4715 = vadd.f32 %v4683, 1.0
        %v4716 = vadd.f32 %v4684, 1.0
        %v4717 = vadd.f32 %v4685, 1.0
        %v4718 = vadd.f32 %v4686, 1.0
        %v4719 = vadd.f32 %v4687, 1.0
        %v4720 = vadd.f32 %v4688, 1.0
        %v4721 = vadd.f32 %v4689, 1.0
        %v4722 = vmul.f32 %v4626, %v4690
        %v4723 = vmul.f32 %v4627, %v4691
        %v4724 = vmul.f32 %v4628, %v4692
        %v4725 = vmul.f32 %v4629, %v4693
        %v4726 = vmul.f32 %v4630, %v4694
        %v4727 = vmul.f32 %v4631, %v4695
        %v4728 = vmul.f32 %v4632, %v4696
        %v4729 = vmul.f32 %v4633, %v4697
        %v4730 = vmul.f32 %v4634, %v4698
        %v4731 = vmul.f32 %v4635, %v4699
        %v4732 = vmul.f32 %v4636, %v4700
        %v4733 = vmul.f32 %v4637, %v4701
        %v4734 = vmul.f32 %v4638, %v4702
        %v4735 = vmul.f32 %v4639, %v4703
        %v4736 = vmul.f32 %v4640, %v4704
        %v4737 = vmul.f32 %v4641, %v4705
        %v4738 = vmul.f32 %v4642, %v4706
        %v4739 = vmul.f32 %v4643, %v4707
        %v4740 = vmul.f32 %v4644, %v4708
        %v4741 = vmul.f32 %v4645, %v4709
        %v4742 = vmul.f32 %v4646, %v4710
        %v4743 = vmul.f32 %v4647, %v4711
        %v4744 = vmul.f32 %v4648, %v4712
        %v4745 = vmul.f32 %v4649, %v4713
        %v4746 = vmul.f32 %v4650, %v4714
        %v4747 = vmul.f32 %v4651, %v4715
        %v4748 = vmul.f32 %v4652, %v4716
        %v4749 = vmul.f32 %v4653, %v4717
        %v4750 = vmul.f32 %v4654, %v4718
        %v4751 = vmul.f32 %v4655, %v4719
        %v4752 = vmul.f32 %v4656, %v4720
        %v4753 = vmul.f32 %v4657, %v4721
        %4754 = vst [vmem:[%s221 + $0x200] sm:$0xff] %v4722
        %4755 = vst [vmem:[%s221 + $0x208] sm:$0xff] %v4723
        %4756 = vst [vmem:[%s221 + $0x210] sm:$0xff] %v4724
        %4757 = vst [vmem:[%s221 + $0x218] sm:$0xff] %v4725
        %4758 = vst [vmem:[%s221 + $0x220] sm:$0xff] %v4726
        %4759 = vst [vmem:[%s221 + $0x228] sm:$0xff] %v4727
        %4760 = vst [vmem:[%s221 + $0x230] sm:$0xff] %v4728
        %4761 = vst [vmem:[%s221 + $0x238] sm:$0xff] %v4729
        %4762 = vst [vmem:[%s221 + $0x240] sm:$0xff] %v4730
        %4763 = vst [vmem:[%s221 + $0x248] sm:$0xff] %v4731
        %4764 = vst [vmem:[%s221 + $0x250] sm:$0xff] %v4732
        %4765 = vst [vmem:[%s221 + $0x258] sm:$0xff] %v4733
        %4766 = vst [vmem:[%s221 + $0x260] sm:$0xff] %v4734
        %4767 = vst [vmem:[%s221 + $0x268] sm:$0xff] %v4735
        %4768 = vst [vmem:[%s221 + $0x270] sm:$0xff] %v4736
        %4769 = vst [vmem:[%s221 + $0x278] sm:$0xff] %v4737
        %4770 = vst [vmem:[%s221 + $0x280] sm:$0xff] %v4738
        %4771 = vst [vmem:[%s221 + $0x288] sm:$0xff] %v4739
        %4772 = vst [vmem:[%s221 + $0x290] sm:$0xff] %v4740
        %4773 = vst [vmem:[%s221 + $0x298] sm:$0xff] %v4741
        %4774 = vst [vmem:[%s221 + $0x2a0] sm:$0xff] %v4742
        %4775 = vst [vmem:[%s221 + $0x2a8] sm:$0xff] %v4743
        %4776 = vst [vmem:[%s221 + $0x2b0] sm:$0xff] %v4744
        %4777 = vst [vmem:[%s221 + $0x2b8] sm:$0xff] %v4745
        %4778 = vst [vmem:[%s221 + $0x2c0] sm:$0xff] %v4746
        %4779 = vst [vmem:[%s221 + $0x2c8] sm:$0xff] %v4747
        %4780 = vst [vmem:[%s221 + $0x2d0] sm:$0xff] %v4748
        %4781 = vst [vmem:[%s221 + $0x2d8] sm:$0xff] %v4749
        %4782 = vst [vmem:[%s221 + $0x2e0] sm:$0xff] %v4750
        %4783 = vst [vmem:[%s221 + $0x2e8] sm:$0xff] %v4751
        %4784 = vst [vmem:[%s221 + $0x2f0] sm:$0xff] %v4752
        %4785 = vst [vmem:[%s221 + $0x2f8] sm:$0xff] %v4753
        %v4786 = vmul.f32 %v2103, 0.7978846
        %v4787 = vmul.f32 %v2105, 0.7978846
        %v4788 = vmul.f32 %v2216, 0.7978846
        %v4789 = vmul.f32 %v2218, 0.7978846
        %v4790 = vmul.f32 %v2329, 0.7978846
        %v4791 = vmul.f32 %v2331, 0.7978846
        %v4792 = vmul.f32 %v2442, 0.7978846
        %v4793 = vmul.f32 %v2444, 0.7978846
        %v4794 = vmul.f32 %v2555, 0.7978846
        %v4795 = vmul.f32 %v2557, 0.7978846
        %v4796 = vmul.f32 %v2668, 0.7978846
        %v4797 = vmul.f32 %v2670, 0.7978846
        %v4798 = vmul.f32 %v2781, 0.7978846
        %v4799 = vmul.f32 %v2783, 0.7978846
        %v4800 = vmul.f32 %v2894, 0.7978846
        %v4801 = vmul.f32 %v2896, 0.7978846
        %v4802 = vmul.f32 %v3007, 0.7978846
        %v4803 = vmul.f32 %v3009, 0.7978846
        %v4804 = vmul.f32 %v3120, 0.7978846
        %v4805 = vmul.f32 %v3122, 0.7978846
        %v4806 = vmul.f32 %v3233, 0.7978846
        %v4807 = vmul.f32 %v3235, 0.7978846
        %v4808 = vmul.f32 %v3346, 0.7978846
        %v4809 = vmul.f32 %v3348, 0.7978846
        %v4810 = vmul.f32 %v3459, 0.7978846
        %v4811 = vmul.f32 %v3461, 0.7978846
        %v4812 = vmul.f32 %v3572, 0.7978846
        %v4813 = vmul.f32 %v3574, 0.7978846
        %v4814 = vmul.f32 %v3685, 0.7978846
        %v4815 = vmul.f32 %v3687, 0.7978846
        %v4816 = vmul.f32 %v3798, 0.7978846
        %v4817 = vmul.f32 %v3800, 0.7978846
        %v4818 = vmul.f32 %v2103, %v2103
        %v4819 = vmul.f32 %v2105, %v2105
        %v4820 = vmul.f32 %v2216, %v2216
        %v4821 = vmul.f32 %v2218, %v2218
        %v4822 = vmul.f32 %v2329, %v2329
        %v4823 = vmul.f32 %v2331, %v2331
        %v4824 = vmul.f32 %v2442, %v2442
        %v4825 = vmul.f32 %v2444, %v2444
        %v4826 = vmul.f32 %v2555, %v2555
        %v4827 = vmul.f32 %v2557, %v2557
        %v4828 = vmul.f32 %v2668, %v2668
        %v4829 = vmul.f32 %v2670, %v2670
        %v4830 = vmul.f32 %v2781, %v2781
        %v4831 = vmul.f32 %v2783, %v2783
        %v4832 = vmul.f32 %v2894, %v2894
        %v4833 = vmul.f32 %v2896, %v2896
        %v4834 = vmul.f32 %v3007, %v3007
        %v4835 = vmul.f32 %v3009, %v3009
        %v4836 = vmul.f32 %v3120, %v3120
        %v4837 = vmul.f32 %v3122, %v3122
        %v4838 = vmul.f32 %v3233, %v3233
        %v4839 = vmul.f32 %v3235, %v3235
        %v4840 = vmul.f32 %v3346, %v3346
        %v4841 = vmul.f32 %v3348, %v3348
        %v4842 = vmul.f32 %v3459, %v3459
        %v4843 = vmul.f32 %v3461, %v3461
        %v4844 = vmul.f32 %v3572, %v3572
        %v4845 = vmul.f32 %v3574, %v3574
        %v4846 = vmul.f32 %v3685, %v3685
        %v4847 = vmul.f32 %v3687, %v3687
        %v4848 = vmul.f32 %v3798, %v3798
        %v4849 = vmul.f32 %v3800, %v3800
        %v4850 = vmul.f32 %v4818, 0.044715
        %v4851 = vmul.f32 %v4819, 0.044715
        %v4852 = vmul.f32 %v4820, 0.044715
        %v4853 = vmul.f32 %v4821, 0.044715
        %v4854 = vmul.f32 %v4822, 0.044715
        %v4855 = vmul.f32 %v4823, 0.044715
        %v4856 = vmul.f32 %v4824, 0.044715
        %v4857 = vmul.f32 %v4825, 0.044715
        %v4858 = vmul.f32 %v4826, 0.044715
        %v4859 = vmul.f32 %v4827, 0.044715
        %v4860 = vmul.f32 %v4828, 0.044715
        %v4861 = vmul.f32 %v4829, 0.044715
        %v4862 = vmul.f32 %v4830, 0.044715
        %v4863 = vmul.f32 %v4831, 0.044715
        %v4864 = vmul.f32 %v4832, 0.044715
        %v4865 = vmul.f32 %v4833, 0.044715
        %v4866 = vmul.f32 %v4834, 0.044715
        %v4867 = vmul.f32 %v4835, 0.044715
        %v4868 = vmul.f32 %v4836, 0.044715
        %v4869 = vmul.f32 %v4837, 0.044715
        %v4870 = vmul.f32 %v4838, 0.044715
        %v4871 = vmul.f32 %v4839, 0.044715
        %v4872 = vmul.f32 %v4840, 0.044715
        %v4873 = vmul.f32 %v4841, 0.044715
        %v4874 = vmul.f32 %v4842, 0.044715
        %v4875 = vmul.f32 %v4843, 0.044715
        %v4876 = vmul.f32 %v4844, 0.044715
        %v4877 = vmul.f32 %v4845, 0.044715
        %v4878 = vmul.f32 %v4846, 0.044715
        %v4879 = vmul.f32 %v4847, 0.044715
        %v4880 = vmul.f32 %v4848, 0.044715
        %v4881 = vmul.f32 %v4849, 0.044715
        %v4882 = vadd.f32 %v4850, 1.0
        %v4883 = vadd.f32 %v4851, 1.0
        %v4884 = vadd.f32 %v4852, 1.0
        %v4885 = vadd.f32 %v4853, 1.0
        %v4886 = vadd.f32 %v4854, 1.0
        %v4887 = vadd.f32 %v4855, 1.0
        %v4888 = vadd.f32 %v4856, 1.0
        %v4889 = vadd.f32 %v4857, 1.0
        %v4890 = vadd.f32 %v4858, 1.0
        %v4891 = vadd.f32 %v4859, 1.0
        %v4892 = vadd.f32 %v4860, 1.0
        %v4893 = vadd.f32 %v4861, 1.0
        %v4894 = vadd.f32 %v4862, 1.0
        %v4895 = vadd.f32 %v4863, 1.0
        %v4896 = vadd.f32 %v4864, 1.0
        %v4897 = vadd.f32 %v4865, 1.0
        %v4898 = vadd.f32 %v4866, 1.0
        %v4899 = vadd.f32 %v4867, 1.0
        %v4900 = vadd.f32 %v4868, 1.0
        %v4901 = vadd.f32 %v4869, 1.0
        %v4902 = vadd.f32 %v4870, 1.0
        %v4903 = vadd.f32 %v4871, 1.0
        %v4904 = vadd.f32 %v4872, 1.0
        %v4905 = vadd.f32 %v4873, 1.0
        %v4906 = vadd.f32 %v4874, 1.0
        %v4907 = vadd.f32 %v4875, 1.0
        %v4908 = vadd.f32 %v4876, 1.0
        %v4909 = vadd.f32 %v4877, 1.0
        %v4910 = vadd.f32 %v4878, 1.0
        %v4911 = vadd.f32 %v4879, 1.0
        %v4912 = vadd.f32 %v4880, 1.0
        %v4913 = vadd.f32 %v4881, 1.0
        %v4914 = vmul.f32 %v4786, %v4882
        %v4915 = vmul.f32 %v4787, %v4883
        %v4916 = vmul.f32 %v4788, %v4884
        %v4917 = vmul.f32 %v4789, %v4885
        %v4918 = vmul.f32 %v4790, %v4886
        %v4919 = vmul.f32 %v4791, %v4887
        %v4920 = vmul.f32 %v4792, %v4888
        %v4921 = vmul.f32 %v4793, %v4889
        %v4922 = vmul.f32 %v4794, %v4890
        %v4923 = vmul.f32 %v4795, %v4891
        %v4924 = vmul.f32 %v4796, %v4892
        %v4925 = vmul.f32 %v4797, %v4893
        %v4926 = vmul.f32 %v4798, %v4894
        %v4927 = vmul.f32 %v4799, %v4895
        %v4928 = vmul.f32 %v4800, %v4896
        %v4929 = vmul.f32 %v4801, %v4897
        %v4930 = vmul.f32 %v4802, %v4898
        %v4931 = vmul.f32 %v4803, %v4899
        %v4932 = vmul.f32 %v4804, %v4900
        %v4933 = vmul.f32 %v4805, %v4901
        %v4934 = vmul.f32 %v4806, %v4902
        %v4935 = vmul.f32 %v4807, %v4903
        %v4936 = vmul.f32 %v4808, %v4904
        %v4937 = vmul.f32 %v4809, %v4905
        %v4938 = vmul.f32 %v4810, %v4906
        %v4939 = vmul.f32 %v4811, %v4907
        %v4940 = vmul.f32 %v4812, %v4908
        %v4941 = vmul.f32 %v4813, %v4909
        %v4942 = vmul.f32 %v4814, %v4910
        %v4943 = vmul.f32 %v4815, %v4911
        %v4944 = vmul.f32 %v4816, %v4912
        %v4945 = vmul.f32 %v4817, %v4913
        %v4946 = vmul.f32 %v2103, 0.5
        %v4947 = vmul.f32 %v2105, 0.5
        %v4948 = vmul.f32 %v2216, 0.5
        %v4949 = vmul.f32 %v2218, 0.5
        %v4950 = vmul.f32 %v2329, 0.5
        %v4951 = vmul.f32 %v2331, 0.5
        %v4952 = vmul.f32 %v2442, 0.5
        %v4953 = vmul.f32 %v2444, 0.5
        %v4954 = vmul.f32 %v2555, 0.5
        %v4955 = vmul.f32 %v2557, 0.5
        %v4956 = vmul.f32 %v2668, 0.5
        %v4957 = vmul.f32 %v2670, 0.5
        %v4958 = vmul.f32 %v2781, 0.5
        %v4959 = vmul.f32 %v2783, 0.5
        %v4960 = vmul.f32 %v2894, 0.5
        %v4961 = vmul.f32 %v2896, 0.5
        %v4962 = vmul.f32 %v3007, 0.5
        %v4963 = vmul.f32 %v3009, 0.5
        %v4964 = vmul.f32 %v3120, 0.5
        %v4965 = vmul.f32 %v3122, 0.5
        %v4966 = vmul.f32 %v3233, 0.5
        %v4967 = vmul.f32 %v3235, 0.5
        %v4968 = vmul.f32 %v3346, 0.5
        %v4969 = vmul.f32 %v3348, 0.5
        %v4970 = vmul.f32 %v3459, 0.5
        %v4971 = vmul.f32 %v3461, 0.5
        %v4972 = vmul.f32 %v3572, 0.5
        %v4973 = vmul.f32 %v3574, 0.5
        %v4974 = vmul.f32 %v3685, 0.5
        %v4975 = vmul.f32 %v3687, 0.5
        %v4976 = vmul.f32 %v3798, 0.5
        %v4977 = vmul.f32 %v3800, 0.5
        %v4978 = vtanh.pop %v4914
        %v4979 = vtanh.pop %v4915
        %v4980 = vtanh.pop %v4916
        %v4981 = vtanh.pop %v4917
        %v4982 = vtanh.pop %v4918
        %v4983 = vtanh.pop %v4919
        %v4984 = vtanh.pop %v4920
        %v4985 = vtanh.pop %v4921
        %v4986 = vtanh.pop %v4922
        %v4987 = vtanh.pop %v4923
        %v4988 = vtanh.pop %v4924
        %v4989 = vtanh.pop %v4925
        %v4990 = vtanh.pop %v4926
        %v4991 = vtanh.pop %v4927
        %v4992 = vtanh.pop %v4928
        %v4993 = vtanh.pop %v4929
        %v4994 = vtanh.pop %v4930
        %v4995 = vtanh.pop %v4931
        %v4996 = vtanh.pop %v4932
        %v4997 = vtanh.pop %v4933
        %v4998 = vtanh.pop %v4934
        %v4999 = vtanh.pop %v4935
        %v5000 = vtanh.pop %v4936
        %v5001 = vtanh.pop %v4937
        %v5002 = vtanh.pop %v4938
        %v5003 = vtanh.pop %v4939
        %v5004 = vtanh.pop %v4940
        %v5005 = vtanh.pop %v4941
        %v5006 = vtanh.pop %v4942
        %v5007 = vtanh.pop %v4943
        %v5008 = vtanh.pop %v4944
        %v5009 = vtanh.pop %v4945
        %v5010 = vadd.f32 %v4978, 1.0
        %v5011 = vadd.f32 %v4979, 1.0
        %v5012 = vadd.f32 %v4980, 1.0
        %v5013 = vadd.f32 %v4981, 1.0
        %v5014 = vadd.f32 %v4982, 1.0
        %v5015 = vadd.f32 %v4983, 1.0
        %v5016 = vadd.f32 %v4984, 1.0
        %v5017 = vadd.f32 %v4985, 1.0
        %v5018 = vadd.f32 %v4986, 1.0
        %v5019 = vadd.f32 %v4987, 1.0
        %v5020 = vadd.f32 %v4988, 1.0
        %v5021 = vadd.f32 %v4989, 1.0
        %v5022 = vadd.f32 %v4990, 1.0
        %v5023 = vadd.f32 %v4991, 1.0
        %v5024 = vadd.f32 %v4992, 1.0
        %v5025 = vadd.f32 %v4993, 1.0
        %v5026 = vadd.f32 %v4994, 1.0
        %v5027 = vadd.f32 %v4995, 1.0
        %v5028 = vadd.f32 %v4996, 1.0
        %v5029 = vadd.f32 %v4997, 1.0
        %v5030 = vadd.f32 %v4998, 1.0
        %v5031 = vadd.f32 %v4999, 1.0
        %v5032 = vadd.f32 %v5000, 1.0
        %v5033 = vadd.f32 %v5001, 1.0
        %v5034 = vadd.f32 %v5002, 1.0
        %v5035 = vadd.f32 %v5003, 1.0
        %v5036 = vadd.f32 %v5004, 1.0
        %v5037 = vadd.f32 %v5005, 1.0
        %v5038 = vadd.f32 %v5006, 1.0
        %v5039 = vadd.f32 %v5007, 1.0
        %v5040 = vadd.f32 %v5008, 1.0
        %v5041 = vadd.f32 %v5009, 1.0
        %v5042 = vmul.f32 %v4946, %v5010
        %v5043 = vmul.f32 %v4947, %v5011
        %v5044 = vmul.f32 %v4948, %v5012
        %v5045 = vmul.f32 %v4949, %v5013
        %v5046 = vmul.f32 %v4950, %v5014
        %v5047 = vmul.f32 %v4951, %v5015
        %v5048 = vmul.f32 %v4952, %v5016
        %v5049 = vmul.f32 %v4953, %v5017
        %v5050 = vmul.f32 %v4954, %v5018
        %v5051 = vmul.f32 %v4955, %v5019
        %v5052 = vmul.f32 %v4956, %v5020
        %v5053 = vmul.f32 %v4957, %v5021
        %v5054 = vmul.f32 %v4958, %v5022
        %v5055 = vmul.f32 %v4959, %v5023
        %v5056 = vmul.f32 %v4960, %v5024
        %v5057 = vmul.f32 %v4961, %v5025
        %v5058 = vmul.f32 %v4962, %v5026
        %v5059 = vmul.f32 %v4963, %v5027
        %v5060 = vmul.f32 %v4964, %v5028
        %v5061 = vmul.f32 %v4965, %v5029
        %v5062 = vmul.f32 %v4966, %v5030
        %v5063 = vmul.f32 %v4967, %v5031
        %v5064 = vmul.f32 %v4968, %v5032
        %v5065 = vmul.f32 %v4969, %v5033
        %v5066 = vmul.f32 %v4970, %v5034
        %v5067 = vmul.f32 %v4971, %v5035
        %v5068 = vmul.f32 %v4972, %v5036
        %v5069 = vmul.f32 %v4973, %v5037
        %v5070 = vmul.f32 %v4974, %v5038
        %v5071 = vmul.f32 %v4975, %v5039
        %v5072 = vmul.f32 %v4976, %v5040
        %v5073 = vmul.f32 %v4977, %v5041
        %5074 = vst [vmem:[%s221 + $0x300] sm:$0xff] %v5042
        %5075 = vst [vmem:[%s221 + $0x308] sm:$0xff] %v5043
        %5076 = vst [vmem:[%s221 + $0x310] sm:$0xff] %v5044
        %5077 = vst [vmem:[%s221 + $0x318] sm:$0xff] %v5045
        %5078 = vst [vmem:[%s221 + $0x320] sm:$0xff] %v5046
        %5079 = vst [vmem:[%s221 + $0x328] sm:$0xff] %v5047
        %5080 = vst [vmem:[%s221 + $0x330] sm:$0xff] %v5048
        %5081 = vst [vmem:[%s221 + $0x338] sm:$0xff] %v5049
        %5082 = vst [vmem:[%s221 + $0x340] sm:$0xff] %v5050
        %5083 = vst [vmem:[%s221 + $0x348] sm:$0xff] %v5051
        %5084 = vst [vmem:[%s221 + $0x350] sm:$0xff] %v5052
        %5085 = vst [vmem:[%s221 + $0x358] sm:$0xff] %v5053
        %5086 = vst [vmem:[%s221 + $0x360] sm:$0xff] %v5054
        %5087 = vst [vmem:[%s221 + $0x368] sm:$0xff] %v5055
        %5088 = vst [vmem:[%s221 + $0x370] sm:$0xff] %v5056
        %5089 = vst [vmem:[%s221 + $0x378] sm:$0xff] %v5057
        %5090 = vst [vmem:[%s221 + $0x380] sm:$0xff] %v5058
        %5091 = vst [vmem:[%s221 + $0x388] sm:$0xff] %v5059
        %5092 = vst [vmem:[%s221 + $0x390] sm:$0xff] %v5060
        %5093 = vst [vmem:[%s221 + $0x398] sm:$0xff] %v5061
        %5094 = vst [vmem:[%s221 + $0x3a0] sm:$0xff] %v5062
        %5095 = vst [vmem:[%s221 + $0x3a8] sm:$0xff] %v5063
        %5096 = vst [vmem:[%s221 + $0x3b0] sm:$0xff] %v5064
        %5097 = vst [vmem:[%s221 + $0x3b8] sm:$0xff] %v5065
        %5098 = vst [vmem:[%s221 + $0x3c0] sm:$0xff] %v5066
        %5099 = vst [vmem:[%s221 + $0x3c8] sm:$0xff] %v5067
        %5100 = vst [vmem:[%s221 + $0x3d0] sm:$0xff] %v5068
        %5101 = vst [vmem:[%s221 + $0x3d8] sm:$0xff] %v5069
        %5102 = vst [vmem:[%s221 + $0x3e0] sm:$0xff] %v5070
        %5103 = vst [vmem:[%s221 + $0x3e8] sm:$0xff] %v5071
        %5104 = vst [vmem:[%s221 + $0x3f0] sm:$0xff] %v5072
        %5105 = vst [vmem:[%s221 + $0x3f8] sm:$0xff] %v5073
        %v5106 = vmul.f32 %v2109, 0.7978846
        %v5107 = vmul.f32 %v2111, 0.7978846
        %v5108 = vmul.f32 %v2222, 0.7978846
        %v5109 = vmul.f32 %v2224, 0.7978846
        %v5110 = vmul.f32 %v2335, 0.7978846
        %v5111 = vmul.f32 %v2337, 0.7978846
        %v5112 = vmul.f32 %v2448, 0.7978846
        %v5113 = vmul.f32 %v2450, 0.7978846
        %v5114 = vmul.f32 %v2561, 0.7978846
        %v5115 = vmul.f32 %v2563, 0.7978846
        %v5116 = vmul.f32 %v2674, 0.7978846
        %v5117 = vmul.f32 %v2676, 0.7978846
        %v5118 = vmul.f32 %v2787, 0.7978846
        %v5119 = vmul.f32 %v2789, 0.7978846
        %v5120 = vmul.f32 %v2900, 0.7978846
        %v5121 = vmul.f32 %v2902, 0.7978846
        %v5122 = vmul.f32 %v3013, 0.7978846
        %v5123 = vmul.f32 %v3015, 0.7978846
        %v5124 = vmul.f32 %v3126, 0.7978846
        %v5125 = vmul.f32 %v3128, 0.7978846
        %v5126 = vmul.f32 %v3239, 0.7978846
        %v5127 = vmul.f32 %v3241, 0.7978846
        %v5128 = vmul.f32 %v3352, 0.7978846
        %v5129 = vmul.f32 %v3354, 0.7978846
        %v5130 = vmul.f32 %v3465, 0.7978846
        %v5131 = vmul.f32 %v3467, 0.7978846
        %v5132 = vmul.f32 %v3578, 0.7978846
        %v5133 = vmul.f32 %v3580, 0.7978846
        %v5134 = vmul.f32 %v3691, 0.7978846
        %v5135 = vmul.f32 %v3693, 0.7978846
        %v5136 = vmul.f32 %v3804, 0.7978846
        %v5137 = vmul.f32 %v3806, 0.7978846
        %v5138 = vmul.f32 %v2109, %v2109
        %v5139 = vmul.f32 %v2111, %v2111
        %v5140 = vmul.f32 %v2222, %v2222
        %v5141 = vmul.f32 %v2224, %v2224
        %v5142 = vmul.f32 %v2335, %v2335
        %v5143 = vmul.f32 %v2337, %v2337
        %v5144 = vmul.f32 %v2448, %v2448
        %v5145 = vmul.f32 %v2450, %v2450
        %v5146 = vmul.f32 %v2561, %v2561
        %v5147 = vmul.f32 %v2563, %v2563
        %v5148 = vmul.f32 %v2674, %v2674
        %v5149 = vmul.f32 %v2676, %v2676
        %v5150 = vmul.f32 %v2787, %v2787
        %v5151 = vmul.f32 %v2789, %v2789
        %v5152 = vmul.f32 %v2900, %v2900
        %v5153 = vmul.f32 %v2902, %v2902
        %v5154 = vmul.f32 %v3013, %v3013
        %v5155 = vmul.f32 %v3015, %v3015
        %v5156 = vmul.f32 %v3126, %v3126
        %v5157 = vmul.f32 %v3128, %v3128
        %v5158 = vmul.f32 %v3239, %v3239
        %v5159 = vmul.f32 %v3241, %v3241
        %v5160 = vmul.f32 %v3352, %v3352
        %v5161 = vmul.f32 %v3354, %v3354
        %v5162 = vmul.f32 %v3465, %v3465
        %v5163 = vmul.f32 %v3467, %v3467
        %v5164 = vmul.f32 %v3578, %v3578
        %v5165 = vmul.f32 %v3580, %v3580
        %v5166 = vmul.f32 %v3691, %v3691
        %v5167 = vmul.f32 %v3693, %v3693
        %v5168 = vmul.f32 %v3804, %v3804
        %v5169 = vmul.f32 %v3806, %v3806
        %v5170 = vmul.f32 %v5138, 0.044715
        %v5171 = vmul.f32 %v5139, 0.044715
        %v5172 = vmul.f32 %v5140, 0.044715
        %v5173 = vmul.f32 %v5141, 0.044715
        %v5174 = vmul.f32 %v5142, 0.044715
        %v5175 = vmul.f32 %v5143, 0.044715
        %v5176 = vmul.f32 %v5144, 0.044715
        %v5177 = vmul.f32 %v5145, 0.044715
        %v5178 = vmul.f32 %v5146, 0.044715
        %v5179 = vmul.f32 %v5147, 0.044715
        %v5180 = vmul.f32 %v5148, 0.044715
        %v5181 = vmul.f32 %v5149, 0.044715
        %v5182 = vmul.f32 %v5150, 0.044715
        %v5183 = vmul.f32 %v5151, 0.044715
        %v5184 = vmul.f32 %v5152, 0.044715
        %v5185 = vmul.f32 %v5153, 0.044715
        %v5186 = vmul.f32 %v5154, 0.044715
        %v5187 = vmul.f32 %v5155, 0.044715
        %v5188 = vmul.f32 %v5156, 0.044715
        %v5189 = vmul.f32 %v5157, 0.044715
        %v5190 = vmul.f32 %v5158, 0.044715
        %v5191 = vmul.f32 %v5159, 0.044715
        %v5192 = vmul.f32 %v5160, 0.044715
        %v5193 = vmul.f32 %v5161, 0.044715
        %v5194 = vmul.f32 %v5162, 0.044715
        %v5195 = vmul.f32 %v5163, 0.044715
        %v5196 = vmul.f32 %v5164, 0.044715
        %v5197 = vmul.f32 %v5165, 0.044715
        %v5198 = vmul.f32 %v5166, 0.044715
        %v5199 = vmul.f32 %v5167, 0.044715
        %v5200 = vmul.f32 %v5168, 0.044715
        %v5201 = vmul.f32 %v5169, 0.044715
        %v5202 = vadd.f32 %v5170, 1.0
        %v5203 = vadd.f32 %v5171, 1.0
        %v5204 = vadd.f32 %v5172, 1.0
        %v5205 = vadd.f32 %v5173, 1.0
        %v5206 = vadd.f32 %v5174, 1.0
        %v5207 = vadd.f32 %v5175, 1.0
        %v5208 = vadd.f32 %v5176, 1.0
        %v5209 = vadd.f32 %v5177, 1.0
        %v5210 = vadd.f32 %v5178, 1.0
        %v5211 = vadd.f32 %v5179, 1.0
        %v5212 = vadd.f32 %v5180, 1.0
        %v5213 = vadd.f32 %v5181, 1.0
        %v5214 = vadd.f32 %v5182, 1.0
        %v5215 = vadd.f32 %v5183, 1.0
        %v5216 = vadd.f32 %v5184, 1.0
        %v5217 = vadd.f32 %v5185, 1.0
        %v5218 = vadd.f32 %v5186, 1.0
        %v5219 = vadd.f32 %v5187, 1.0
        %v5220 = vadd.f32 %v5188, 1.0
        %v5221 = vadd.f32 %v5189, 1.0
        %v5222 = vadd.f32 %v5190, 1.0
        %v5223 = vadd.f32 %v5191, 1.0
        %v5224 = vadd.f32 %v5192, 1.0
        %v5225 = vadd.f32 %v5193, 1.0
        %v5226 = vadd.f32 %v5194, 1.0
        %v5227 = vadd.f32 %v5195, 1.0
        %v5228 = vadd.f32 %v5196, 1.0
        %v5229 = vadd.f32 %v5197, 1.0
        %v5230 = vadd.f32 %v5198, 1.0
        %v5231 = vadd.f32 %v5199, 1.0
        %v5232 = vadd.f32 %v5200, 1.0
        %v5233 = vadd.f32 %v5201, 1.0
        %v5234 = vmul.f32 %v5106, %v5202
        %v5235 = vmul.f32 %v5107, %v5203
        %v5236 = vmul.f32 %v5108, %v5204
        %v5237 = vmul.f32 %v5109, %v5205
        %v5238 = vmul.f32 %v5110, %v5206
        %v5239 = vmul.f32 %v5111, %v5207
        %v5240 = vmul.f32 %v5112, %v5208
        %v5241 = vmul.f32 %v5113, %v5209
        %v5242 = vmul.f32 %v5114, %v5210
        %v5243 = vmul.f32 %v5115, %v5211
        %v5244 = vmul.f32 %v5116, %v5212
        %v5245 = vmul.f32 %v5117, %v5213
        %v5246 = vmul.f32 %v5118, %v5214
        %v5247 = vmul.f32 %v5119, %v5215
        %v5248 = vmul.f32 %v5120, %v5216
        %v5249 = vmul.f32 %v5121, %v5217
        %v5250 = vmul.f32 %v5122, %v5218
        %v5251 = vmul.f32 %v5123, %v5219
        %v5252 = vmul.f32 %v5124, %v5220
        %v5253 = vmul.f32 %v5125, %v5221
        %v5254 = vmul.f32 %v5126, %v5222
        %v5255 = vmul.f32 %v5127, %v5223
        %v5256 = vmul.f32 %v5128, %v5224
        %v5257 = vmul.f32 %v5129, %v5225
        %v5258 = vmul.f32 %v5130, %v5226
        %v5259 = vmul.f32 %v5131, %v5227
        %v5260 = vmul.f32 %v5132, %v5228
        %v5261 = vmul.f32 %v5133, %v5229
        %v5262 = vmul.f32 %v5134, %v5230
        %v5263 = vmul.f32 %v5135, %v5231
        %v5264 = vmul.f32 %v5136, %v5232
        %v5265 = vmul.f32 %v5137, %v5233
        %v5266 = vmul.f32 %v2109, 0.5
        %v5267 = vmul.f32 %v2111, 0.5
        %v5268 = vmul.f32 %v2222, 0.5
        %v5269 = vmul.f32 %v2224, 0.5
        %v5270 = vmul.f32 %v2335, 0.5
        %v5271 = vmul.f32 %v2337, 0.5
        %v5272 = vmul.f32 %v2448, 0.5
        %v5273 = vmul.f32 %v2450, 0.5
        %v5274 = vmul.f32 %v2561, 0.5
        %v5275 = vmul.f32 %v2563, 0.5
        %v5276 = vmul.f32 %v2674, 0.5
        %v5277 = vmul.f32 %v2676, 0.5
        %v5278 = vmul.f32 %v2787, 0.5
        %v5279 = vmul.f32 %v2789, 0.5
        %v5280 = vmul.f32 %v2900, 0.5
        %v5281 = vmul.f32 %v2902, 0.5
        %v5282 = vmul.f32 %v3013, 0.5
        %v5283 = vmul.f32 %v3015, 0.5
        %v5284 = vmul.f32 %v3126, 0.5
        %v5285 = vmul.f32 %v3128, 0.5
        %v5286 = vmul.f32 %v3239, 0.5
        %v5287 = vmul.f32 %v3241, 0.5
        %v5288 = vmul.f32 %v3352, 0.5
        %v5289 = vmul.f32 %v3354, 0.5
        %v5290 = vmul.f32 %v3465, 0.5
        %v5291 = vmul.f32 %v3467, 0.5
        %v5292 = vmul.f32 %v3578, 0.5
        %v5293 = vmul.f32 %v3580, 0.5
        %v5294 = vmul.f32 %v3691, 0.5
        %v5295 = vmul.f32 %v3693, 0.5
        %v5296 = vmul.f32 %v3804, 0.5
        %v5297 = vmul.f32 %v3806, 0.5
        %v5298 = vtanh.pop %v5234
        %v5299 = vtanh.pop %v5235
        %v5300 = vtanh.pop %v5236
        %v5301 = vtanh.pop %v5237
        %v5302 = vtanh.pop %v5238
        %v5303 = vtanh.pop %v5239
        %v5304 = vtanh.pop %v5240
        %v5305 = vtanh.pop %v5241
        %v5306 = vtanh.pop %v5242
        %v5307 = vtanh.pop %v5243
        %v5308 = vtanh.pop %v5244
        %v5309 = vtanh.pop %v5245
        %v5310 = vtanh.pop %v5246
        %v5311 = vtanh.pop %v5247
        %v5312 = vtanh.pop %v5248
        %v5313 = vtanh.pop %v5249
        %v5314 = vtanh.pop %v5250
        %v5315 = vtanh.pop %v5251
        %v5316 = vtanh.pop %v5252
        %v5317 = vtanh.pop %v5253
        %v5318 = vtanh.pop %v5254
        %v5319 = vtanh.pop %v5255
        %v5320 = vtanh.pop %v5256
        %v5321 = vtanh.pop %v5257
        %v5322 = vtanh.pop %v5258
        %v5323 = vtanh.pop %v5259
        %v5324 = vtanh.pop %v5260
        %v5325 = vtanh.pop %v5261
        %v5326 = vtanh.pop %v5262
        %v5327 = vtanh.pop %v5263
        %v5328 = vtanh.pop %v5264
        %v5329 = vtanh.pop %v5265
        %v5330 = vadd.f32 %v5298, 1.0
        %v5331 = vadd.f32 %v5299, 1.0
        %v5332 = vadd.f32 %v5300, 1.0
        %v5333 = vadd.f32 %v5301, 1.0
        %v5334 = vadd.f32 %v5302, 1.0
        %v5335 = vadd.f32 %v5303, 1.0
        %v5336 = vadd.f32 %v5304, 1.0
        %v5337 = vadd.f32 %v5305, 1.0
        %v5338 = vadd.f32 %v5306, 1.0
        %v5339 = vadd.f32 %v5307, 1.0
        %v5340 = vadd.f32 %v5308, 1.0
        %v5341 = vadd.f32 %v5309, 1.0
        %v5342 = vadd.f32 %v5310, 1.0
        %v5343 = vadd.f32 %v5311, 1.0
        %v5344 = vadd.f32 %v5312, 1.0
        %v5345 = vadd.f32 %v5313, 1.0
        %v5346 = vadd.f32 %v5314, 1.0
        %v5347 = vadd.f32 %v5315, 1.0
        %v5348 = vadd.f32 %v5316, 1.0
        %v5349 = vadd.f32 %v5317, 1.0
        %v5350 = vadd.f32 %v5318, 1.0
        %v5351 = vadd.f32 %v5319, 1.0
        %v5352 = vadd.f32 %v5320, 1.0
        %v5353 = vadd.f32 %v5321, 1.0
        %v5354 = vadd.f32 %v5322, 1.0
        %v5355 = vadd.f32 %v5323, 1.0
        %v5356 = vadd.f32 %v5324, 1.0
        %v5357 = vadd.f32 %v5325, 1.0
        %v5358 = vadd.f32 %v5326, 1.0
        %v5359 = vadd.f32 %v5327, 1.0
        %v5360 = vadd.f32 %v5328, 1.0
        %v5361 = vadd.f32 %v5329, 1.0
        %v5362 = vmul.f32 %v5266, %v5330
        %v5363 = vmul.f32 %v5267, %v5331
        %v5364 = vmul.f32 %v5268, %v5332
        %v5365 = vmul.f32 %v5269, %v5333
        %v5366 = vmul.f32 %v5270, %v5334
        %v5367 = vmul.f32 %v5271, %v5335
        %v5368 = vmul.f32 %v5272, %v5336
        %v5369 = vmul.f32 %v5273, %v5337
        %v5370 = vmul.f32 %v5274, %v5338
        %v5371 = vmul.f32 %v5275, %v5339
        %v5372 = vmul.f32 %v5276, %v5340
        %v5373 = vmul.f32 %v5277, %v5341
        %v5374 = vmul.f32 %v5278, %v5342
        %v5375 = vmul.f32 %v5279, %v5343
        %v5376 = vmul.f32 %v5280, %v5344
        %v5377 = vmul.f32 %v5281, %v5345
        %v5378 = vmul.f32 %v5282, %v5346
        %v5379 = vmul.f32 %v5283, %v5347
        %v5380 = vmul.f32 %v5284, %v5348
        %v5381 = vmul.f32 %v5285, %v5349
        %v5382 = vmul.f32 %v5286, %v5350
        %v5383 = vmul.f32 %v5287, %v5351
        %v5384 = vmul.f32 %v5288, %v5352
        %v5385 = vmul.f32 %v5289, %v5353
        %v5386 = vmul.f32 %v5290, %v5354
        %v5387 = vmul.f32 %v5291, %v5355
        %v5388 = vmul.f32 %v5292, %v5356
        %v5389 = vmul.f32 %v5293, %v5357
        %v5390 = vmul.f32 %v5294, %v5358
        %v5391 = vmul.f32 %v5295, %v5359
        %v5392 = vmul.f32 %v5296, %v5360
        %v5393 = vmul.f32 %v5297, %v5361
        %5394 = vst [vmem:[%s221 + $0x400] sm:$0xff] %v5362
        %5395 = vst [vmem:[%s221 + $0x408] sm:$0xff] %v5363
        %5396 = vst [vmem:[%s221 + $0x410] sm:$0xff] %v5364
        %5397 = vst [vmem:[%s221 + $0x418] sm:$0xff] %v5365
        %5398 = vst [vmem:[%s221 + $0x420] sm:$0xff] %v5366
        %5399 = vst [vmem:[%s221 + $0x428] sm:$0xff] %v5367
        %5400 = vst [vmem:[%s221 + $0x430] sm:$0xff] %v5368
        %5401 = vst [vmem:[%s221 + $0x438] sm:$0xff] %v5369
        %5402 = vst [vmem:[%s221 + $0x440] sm:$0xff] %v5370
        %5403 = vst [vmem:[%s221 + $0x448] sm:$0xff] %v5371
        %5404 = vst [vmem:[%s221 + $0x450] sm:$0xff] %v5372
        %5405 = vst [vmem:[%s221 + $0x458] sm:$0xff] %v5373
        %5406 = vst [vmem:[%s221 + $0x460] sm:$0xff] %v5374
        %5407 = vst [vmem:[%s221 + $0x468] sm:$0xff] %v5375
        %5408 = vst [vmem:[%s221 + $0x470] sm:$0xff] %v5376
        %5409 = vst [vmem:[%s221 + $0x478] sm:$0xff] %v5377
        %5410 = vst [vmem:[%s221 + $0x480] sm:$0xff] %v5378
        %5411 = vst [vmem:[%s221 + $0x488] sm:$0xff] %v5379
        %5412 = vst [vmem:[%s221 + $0x490] sm:$0xff] %v5380
        %5413 = vst [vmem:[%s221 + $0x498] sm:$0xff] %v5381
        %5414 = vst [vmem:[%s221 + $0x4a0] sm:$0xff] %v5382
        %5415 = vst [vmem:[%s221 + $0x4a8] sm:$0xff] %v5383
        %5416 = vst [vmem:[%s221 + $0x4b0] sm:$0xff] %v5384
        %5417 = vst [vmem:[%s221 + $0x4b8] sm:$0xff] %v5385
        %5418 = vst [vmem:[%s221 + $0x4c0] sm:$0xff] %v5386
        %5419 = vst [vmem:[%s221 + $0x4c8] sm:$0xff] %v5387
        %5420 = vst [vmem:[%s221 + $0x4d0] sm:$0xff] %v5388
        %5421 = vst [vmem:[%s221 + $0x4d8] sm:$0xff] %v5389
        %5422 = vst [vmem:[%s221 + $0x4e0] sm:$0xff] %v5390
        %5423 = vst [vmem:[%s221 + $0x4e8] sm:$0xff] %v5391
        %5424 = vst [vmem:[%s221 + $0x4f0] sm:$0xff] %v5392
        %5425 = vst [vmem:[%s221 + $0x4f8] sm:$0xff] %v5393
        %v5426 = vmul.f32 %v2115, 0.7978846
        %v5427 = vmul.f32 %v2117, 0.7978846
        %v5428 = vmul.f32 %v2228, 0.7978846
        %v5429 = vmul.f32 %v2230, 0.7978846
        %v5430 = vmul.f32 %v2341, 0.7978846
        %v5431 = vmul.f32 %v2343, 0.7978846
        %v5432 = vmul.f32 %v2454, 0.7978846
        %v5433 = vmul.f32 %v2456, 0.7978846
        %v5434 = vmul.f32 %v2567, 0.7978846
        %v5435 = vmul.f32 %v2569, 0.7978846
        %v5436 = vmul.f32 %v2680, 0.7978846
        %v5437 = vmul.f32 %v2682, 0.7978846
        %v5438 = vmul.f32 %v2793, 0.7978846
        %v5439 = vmul.f32 %v2795, 0.7978846
        %v5440 = vmul.f32 %v2906, 0.7978846
        %v5441 = vmul.f32 %v2908, 0.7978846
        %v5442 = vmul.f32 %v3019, 0.7978846
        %v5443 = vmul.f32 %v3021, 0.7978846
        %v5444 = vmul.f32 %v3132, 0.7978846
        %v5445 = vmul.f32 %v3134, 0.7978846
        %v5446 = vmul.f32 %v3245, 0.7978846
        %v5447 = vmul.f32 %v3247, 0.7978846
        %v5448 = vmul.f32 %v3358, 0.7978846
        %v5449 = vmul.f32 %v3360, 0.7978846
        %v5450 = vmul.f32 %v3471, 0.7978846
        %v5451 = vmul.f32 %v3473, 0.7978846
        %v5452 = vmul.f32 %v3584, 0.7978846
        %v5453 = vmul.f32 %v3586, 0.7978846
        %v5454 = vmul.f32 %v3697, 0.7978846
        %v5455 = vmul.f32 %v3699, 0.7978846
        %v5456 = vmul.f32 %v3810, 0.7978846
        %v5457 = vmul.f32 %v3812, 0.7978846
        %v5458 = vmul.f32 %v2115, %v2115
        %v5459 = vmul.f32 %v2117, %v2117
        %v5460 = vmul.f32 %v2228, %v2228
        %v5461 = vmul.f32 %v2230, %v2230
        %v5462 = vmul.f32 %v2341, %v2341
        %v5463 = vmul.f32 %v2343, %v2343
        %v5464 = vmul.f32 %v2454, %v2454
        %v5465 = vmul.f32 %v2456, %v2456
        %v5466 = vmul.f32 %v2567, %v2567
        %v5467 = vmul.f32 %v2569, %v2569
        %v5468 = vmul.f32 %v2680, %v2680
        %v5469 = vmul.f32 %v2682, %v2682
        %v5470 = vmul.f32 %v2793, %v2793
        %v5471 = vmul.f32 %v2795, %v2795
        %v5472 = vmul.f32 %v2906, %v2906
        %v5473 = vmul.f32 %v2908, %v2908
        %v5474 = vmul.f32 %v3019, %v3019
        %v5475 = vmul.f32 %v3021, %v3021
        %v5476 = vmul.f32 %v3132, %v3132
        %v5477 = vmul.f32 %v3134, %v3134
        %v5478 = vmul.f32 %v3245, %v3245
        %v5479 = vmul.f32 %v3247, %v3247
        %v5480 = vmul.f32 %v3358, %v3358
        %v5481 = vmul.f32 %v3360, %v3360
        %v5482 = vmul.f32 %v3471, %v3471
        %v5483 = vmul.f32 %v3473, %v3473
        %v5484 = vmul.f32 %v3584, %v3584
        %v5485 = vmul.f32 %v3586, %v3586
        %v5486 = vmul.f32 %v3697, %v3697
        %v5487 = vmul.f32 %v3699, %v3699
        %v5488 = vmul.f32 %v3810, %v3810
        %v5489 = vmul.f32 %v3812, %v3812
        %v5490 = vmul.f32 %v5458, 0.044715
        %v5491 = vmul.f32 %v5459, 0.044715
        %v5492 = vmul.f32 %v5460, 0.044715
        %v5493 = vmul.f32 %v5461, 0.044715
        %v5494 = vmul.f32 %v5462, 0.044715
        %v5495 = vmul.f32 %v5463, 0.044715
        %v5496 = vmul.f32 %v5464, 0.044715
        %v5497 = vmul.f32 %v5465, 0.044715
        %v5498 = vmul.f32 %v5466, 0.044715
        %v5499 = vmul.f32 %v5467, 0.044715
        %v5500 = vmul.f32 %v5468, 0.044715
        %v5501 = vmul.f32 %v5469, 0.044715
        %v5502 = vmul.f32 %v5470, 0.044715
        %v5503 = vmul.f32 %v5471, 0.044715
        %v5504 = vmul.f32 %v5472, 0.044715
        %v5505 = vmul.f32 %v5473, 0.044715
        %v5506 = vmul.f32 %v5474, 0.044715
        %v5507 = vmul.f32 %v5475, 0.044715
        %v5508 = vmul.f32 %v5476, 0.044715
        %v5509 = vmul.f32 %v5477, 0.044715
        %v5510 = vmul.f32 %v5478, 0.044715
        %v5511 = vmul.f32 %v5479, 0.044715
        %v5512 = vmul.f32 %v5480, 0.044715
        %v5513 = vmul.f32 %v5481, 0.044715
        %v5514 = vmul.f32 %v5482, 0.044715
        %v5515 = vmul.f32 %v5483, 0.044715
        %v5516 = vmul.f32 %v5484, 0.044715
        %v5517 = vmul.f32 %v5485, 0.044715
        %v5518 = vmul.f32 %v5486, 0.044715
        %v5519 = vmul.f32 %v5487, 0.044715
        %v5520 = vmul.f32 %v5488, 0.044715
        %v5521 = vmul.f32 %v5489, 0.044715
        %v5522 = vadd.f32 %v5490, 1.0
        %v5523 = vadd.f32 %v5491, 1.0
        %v5524 = vadd.f32 %v5492, 1.0
        %v5525 = vadd.f32 %v5493, 1.0
        %v5526 = vadd.f32 %v5494, 1.0
        %v5527 = vadd.f32 %v5495, 1.0
        %v5528 = vadd.f32 %v5496, 1.0
        %v5529 = vadd.f32 %v5497, 1.0
        %v5530 = vadd.f32 %v5498, 1.0
        %v5531 = vadd.f32 %v5499, 1.0
        %v5532 = vadd.f32 %v5500, 1.0
        %v5533 = vadd.f32 %v5501, 1.0
        %v5534 = vadd.f32 %v5502, 1.0
        %v5535 = vadd.f32 %v5503, 1.0
        %v5536 = vadd.f32 %v5504, 1.0
        %v5537 = vadd.f32 %v5505, 1.0
        %v5538 = vadd.f32 %v5506, 1.0
        %v5539 = vadd.f32 %v5507, 1.0
        %v5540 = vadd.f32 %v5508, 1.0
        %v5541 = vadd.f32 %v5509, 1.0
        %v5542 = vadd.f32 %v5510, 1.0
        %v5543 = vadd.f32 %v5511, 1.0
        %v5544 = vadd.f32 %v5512, 1.0
        %v5545 = vadd.f32 %v5513, 1.0
        %v5546 = vadd.f32 %v5514, 1.0
        %v5547 = vadd.f32 %v5515, 1.0
        %v5548 = vadd.f32 %v5516, 1.0
        %v5549 = vadd.f32 %v5517, 1.0
        %v5550 = vadd.f32 %v5518, 1.0
        %v5551 = vadd.f32 %v5519, 1.0
        %v5552 = vadd.f32 %v5520, 1.0
        %v5553 = vadd.f32 %v5521, 1.0
        %v5554 = vmul.f32 %v5426, %v5522
        %v5555 = vmul.f32 %v5427, %v5523
        %v5556 = vmul.f32 %v5428, %v5524
        %v5557 = vmul.f32 %v5429, %v5525
        %v5558 = vmul.f32 %v5430, %v5526
        %v5559 = vmul.f32 %v5431, %v5527
        %v5560 = vmul.f32 %v5432, %v5528
        %v5561 = vmul.f32 %v5433, %v5529
        %v5562 = vmul.f32 %v5434, %v5530
        %v5563 = vmul.f32 %v5435, %v5531
        %v5564 = vmul.f32 %v5436, %v5532
        %v5565 = vmul.f32 %v5437, %v5533
        %v5566 = vmul.f32 %v5438, %v5534
        %v5567 = vmul.f32 %v5439, %v5535
        %v5568 = vmul.f32 %v5440, %v5536
        %v5569 = vmul.f32 %v5441, %v5537
        %v5570 = vmul.f32 %v5442, %v5538
        %v5571 = vmul.f32 %v5443, %v5539
        %v5572 = vmul.f32 %v5444, %v5540
        %v5573 = vmul.f32 %v5445, %v5541
        %v5574 = vmul.f32 %v5446, %v5542
        %v5575 = vmul.f32 %v5447, %v5543
        %v5576 = vmul.f32 %v5448, %v5544
        %v5577 = vmul.f32 %v5449, %v5545
        %v5578 = vmul.f32 %v5450, %v5546
        %v5579 = vmul.f32 %v5451, %v5547
        %v5580 = vmul.f32 %v5452, %v5548
        %v5581 = vmul.f32 %v5453, %v5549
        %v5582 = vmul.f32 %v5454, %v5550
        %v5583 = vmul.f32 %v5455, %v5551
        %v5584 = vmul.f32 %v5456, %v5552
        %v5585 = vmul.f32 %v5457, %v5553
        %v5586 = vmul.f32 %v2115, 0.5
        %v5587 = vmul.f32 %v2117, 0.5
        %v5588 = vmul.f32 %v2228, 0.5
        %v5589 = vmul.f32 %v2230, 0.5
        %v5590 = vmul.f32 %v2341, 0.5
        %v5591 = vmul.f32 %v2343, 0.5
        %v5592 = vmul.f32 %v2454, 0.5
        %v5593 = vmul.f32 %v2456, 0.5
        %v5594 = vmul.f32 %v2567, 0.5
        %v5595 = vmul.f32 %v2569, 0.5
        %v5596 = vmul.f32 %v2680, 0.5
        %v5597 = vmul.f32 %v2682, 0.5
        %v5598 = vmul.f32 %v2793, 0.5
        %v5599 = vmul.f32 %v2795, 0.5
        %v5600 = vmul.f32 %v2906, 0.5
        %v5601 = vmul.f32 %v2908, 0.5
        %v5602 = vmul.f32 %v3019, 0.5
        %v5603 = vmul.f32 %v3021, 0.5
        %v5604 = vmul.f32 %v3132, 0.5
        %v5605 = vmul.f32 %v3134, 0.5
        %v5606 = vmul.f32 %v3245, 0.5
        %v5607 = vmul.f32 %v3247, 0.5
        %v5608 = vmul.f32 %v3358, 0.5
        %v5609 = vmul.f32 %v3360, 0.5
        %v5610 = vmul.f32 %v3471, 0.5
        %v5611 = vmul.f32 %v3473, 0.5
        %v5612 = vmul.f32 %v3584, 0.5
        %v5613 = vmul.f32 %v3586, 0.5
        %v5614 = vmul.f32 %v3697, 0.5
        %v5615 = vmul.f32 %v3699, 0.5
        %v5616 = vmul.f32 %v3810, 0.5
        %v5617 = vmul.f32 %v3812, 0.5
        %v5618 = vtanh.pop %v5554
        %v5619 = vtanh.pop %v5555
        %v5620 = vtanh.pop %v5556
        %v5621 = vtanh.pop %v5557
        %v5622 = vtanh.pop %v5558
        %v5623 = vtanh.pop %v5559
        %v5624 = vtanh.pop %v5560
        %v5625 = vtanh.pop %v5561
        %v5626 = vtanh.pop %v5562
        %v5627 = vtanh.pop %v5563
        %v5628 = vtanh.pop %v5564
        %v5629 = vtanh.pop %v5565
        %v5630 = vtanh.pop %v5566
        %v5631 = vtanh.pop %v5567
        %v5632 = vtanh.pop %v5568
        %v5633 = vtanh.pop %v5569
        %v5634 = vtanh.pop %v5570
        %v5635 = vtanh.pop %v5571
        %v5636 = vtanh.pop %v5572
        %v5637 = vtanh.pop %v5573
        %v5638 = vtanh.pop %v5574
        %v5639 = vtanh.pop %v5575
        %v5640 = vtanh.pop %v5576
        %v5641 = vtanh.pop %v5577
        %v5642 = vtanh.pop %v5578
        %v5643 = vtanh.pop %v5579
        %v5644 = vtanh.pop %v5580
        %v5645 = vtanh.pop %v5581
        %v5646 = vtanh.pop %v5582
        %v5647 = vtanh.pop %v5583
        %v5648 = vtanh.pop %v5584
        %v5649 = vtanh.pop %v5585
        %v5650 = vadd.f32 %v5618, 1.0
        %v5651 = vadd.f32 %v5619, 1.0
        %v5652 = vadd.f32 %v5620, 1.0
        %v5653 = vadd.f32 %v5621, 1.0
        %v5654 = vadd.f32 %v5622, 1.0
        %v5655 = vadd.f32 %v5623, 1.0
        %v5656 = vadd.f32 %v5624, 1.0
        %v5657 = vadd.f32 %v5625, 1.0
        %v5658 = vadd.f32 %v5626, 1.0
        %v5659 = vadd.f32 %v5627, 1.0
        %v5660 = vadd.f32 %v5628, 1.0
        %v5661 = vadd.f32 %v5629, 1.0
        %v5662 = vadd.f32 %v5630, 1.0
        %v5663 = vadd.f32 %v5631, 1.0
        %v5664 = vadd.f32 %v5632, 1.0
        %v5665 = vadd.f32 %v5633, 1.0
        %v5666 = vadd.f32 %v5634, 1.0
        %v5667 = vadd.f32 %v5635, 1.0
        %v5668 = vadd.f32 %v5636, 1.0
        %v5669 = vadd.f32 %v5637, 1.0
        %v5670 = vadd.f32 %v5638, 1.0
        %v5671 = vadd.f32 %v5639, 1.0
        %v5672 = vadd.f32 %v5640, 1.0
        %v5673 = vadd.f32 %v5641, 1.0
        %v5674 = vadd.f32 %v5642, 1.0
        %v5675 = vadd.f32 %v5643, 1.0
        %v5676 = vadd.f32 %v5644, 1.0
        %v5677 = vadd.f32 %v5645, 1.0
        %v5678 = vadd.f32 %v5646, 1.0
        %v5679 = vadd.f32 %v5647, 1.0
        %v5680 = vadd.f32 %v5648, 1.0
        %v5681 = vadd.f32 %v5649, 1.0
        %v5682 = vmul.f32 %v5586, %v5650
        %v5683 = vmul.f32 %v5587, %v5651
        %v5684 = vmul.f32 %v5588, %v5652
        %v5685 = vmul.f32 %v5589, %v5653
        %v5686 = vmul.f32 %v5590, %v5654
        %v5687 = vmul.f32 %v5591, %v5655
        %v5688 = vmul.f32 %v5592, %v5656
        %v5689 = vmul.f32 %v5593, %v5657
        %v5690 = vmul.f32 %v5594, %v5658
        %v5691 = vmul.f32 %v5595, %v5659
        %v5692 = vmul.f32 %v5596, %v5660
        %v5693 = vmul.f32 %v5597, %v5661
        %v5694 = vmul.f32 %v5598, %v5662
        %v5695 = vmul.f32 %v5599, %v5663
        %v5696 = vmul.f32 %v5600, %v5664
        %v5697 = vmul.f32 %v5601, %v5665
        %v5698 = vmul.f32 %v5602, %v5666
        %v5699 = vmul.f32 %v5603, %v5667
        %v5700 = vmul.f32 %v5604, %v5668
        %v5701 = vmul.f32 %v5605, %v5669
        %v5702 = vmul.f32 %v5606, %v5670
        %v5703 = vmul.f32 %v5607, %v5671
        %v5704 = vmul.f32 %v5608, %v5672
        %v5705 = vmul.f32 %v5609, %v5673
        %v5706 = vmul.f32 %v5610, %v5674
        %v5707 = vmul.f32 %v5611, %v5675
        %v5708 = vmul.f32 %v5612, %v5676
        %v5709 = vmul.f32 %v5613, %v5677
        %v5710 = vmul.f32 %v5614, %v5678
        %v5711 = vmul.f32 %v5615, %v5679
        %v5712 = vmul.f32 %v5616, %v5680
        %v5713 = vmul.f32 %v5617, %v5681
        %5714 = vst [vmem:[%s221 + $0x500] sm:$0xff] %v5682
        %5715 = vst [vmem:[%s221 + $0x508] sm:$0xff] %v5683
        %5716 = vst [vmem:[%s221 + $0x510] sm:$0xff] %v5684
        %5717 = vst [vmem:[%s221 + $0x518] sm:$0xff] %v5685
        %5718 = vst [vmem:[%s221 + $0x520] sm:$0xff] %v5686
        %5719 = vst [vmem:[%s221 + $0x528] sm:$0xff] %v5687
        %5720 = vst [vmem:[%s221 + $0x530] sm:$0xff] %v5688
        %5721 = vst [vmem:[%s221 + $0x538] sm:$0xff] %v5689
        %5722 = vst [vmem:[%s221 + $0x540] sm:$0xff] %v5690
        %5723 = vst [vmem:[%s221 + $0x548] sm:$0xff] %v5691
        %5724 = vst [vmem:[%s221 + $0x550] sm:$0xff] %v5692
        %5725 = vst [vmem:[%s221 + $0x558] sm:$0xff] %v5693
        %5726 = vst [vmem:[%s221 + $0x560] sm:$0xff] %v5694
        %5727 = vst [vmem:[%s221 + $0x568] sm:$0xff] %v5695
        %5728 = vst [vmem:[%s221 + $0x570] sm:$0xff] %v5696
        %5729 = vst [vmem:[%s221 + $0x578] sm:$0xff] %v5697
        %5730 = vst [vmem:[%s221 + $0x580] sm:$0xff] %v5698
        %5731 = vst [vmem:[%s221 + $0x588] sm:$0xff] %v5699
        %5732 = vst [vmem:[%s221 + $0x590] sm:$0xff] %v5700
        %5733 = vst [vmem:[%s221 + $0x598] sm:$0xff] %v5701
        %5734 = vst [vmem:[%s221 + $0x5a0] sm:$0xff] %v5702
        %5735 = vst [vmem:[%s221 + $0x5a8] sm:$0xff] %v5703
        %5736 = vst [vmem:[%s221 + $0x5b0] sm:$0xff] %v5704
        %5737 = vst [vmem:[%s221 + $0x5b8] sm:$0xff] %v5705
        %5738 = vst [vmem:[%s221 + $0x5c0] sm:$0xff] %v5706
        %5739 = vst [vmem:[%s221 + $0x5c8] sm:$0xff] %v5707
        %5740 = vst [vmem:[%s221 + $0x5d0] sm:$0xff] %v5708
        %5741 = vst [vmem:[%s221 + $0x5d8] sm:$0xff] %v5709
        %5742 = vst [vmem:[%s221 + $0x5e0] sm:$0xff] %v5710
        %5743 = vst [vmem:[%s221 + $0x5e8] sm:$0xff] %v5711
        %5744 = vst [vmem:[%s221 + $0x5f0] sm:$0xff] %v5712
        %5745 = vst [vmem:[%s221 + $0x5f8] sm:$0xff] %v5713
        %v5746 = vmul.f32 %v2121, 0.7978846
        %v5747 = vmul.f32 %v2123, 0.7978846
        %v5748 = vmul.f32 %v2234, 0.7978846
        %v5749 = vmul.f32 %v2236, 0.7978846
        %v5750 = vmul.f32 %v2347, 0.7978846
        %v5751 = vmul.f32 %v2349, 0.7978846
        %v5752 = vmul.f32 %v2460, 0.7978846
        %v5753 = vmul.f32 %v2462, 0.7978846
        %v5754 = vmul.f32 %v2573, 0.7978846
        %v5755 = vmul.f32 %v2575, 0.7978846
        %v5756 = vmul.f32 %v2686, 0.7978846
        %v5757 = vmul.f32 %v2688, 0.7978846
        %v5758 = vmul.f32 %v2799, 0.7978846
        %v5759 = vmul.f32 %v2801, 0.7978846
        %v5760 = vmul.f32 %v2912, 0.7978846
        %v5761 = vmul.f32 %v2914, 0.7978846
        %v5762 = vmul.f32 %v3025, 0.7978846
        %v5763 = vmul.f32 %v3027, 0.7978846
        %v5764 = vmul.f32 %v3138, 0.7978846
        %v5765 = vmul.f32 %v3140, 0.7978846
        %v5766 = vmul.f32 %v3251, 0.7978846
        %v5767 = vmul.f32 %v3253, 0.7978846
        %v5768 = vmul.f32 %v3364, 0.7978846
        %v5769 = vmul.f32 %v3366, 0.7978846
        %v5770 = vmul.f32 %v3477, 0.7978846
        %v5771 = vmul.f32 %v3479, 0.7978846
        %v5772 = vmul.f32 %v3590, 0.7978846
        %v5773 = vmul.f32 %v3592, 0.7978846
        %v5774 = vmul.f32 %v3703, 0.7978846
        %v5775 = vmul.f32 %v3705, 0.7978846
        %v5776 = vmul.f32 %v3816, 0.7978846
        %v5777 = vmul.f32 %v3818, 0.7978846
        %v5778 = vmul.f32 %v2121, %v2121
        %v5779 = vmul.f32 %v2123, %v2123
        %v5780 = vmul.f32 %v2234, %v2234
        %v5781 = vmul.f32 %v2236, %v2236
        %v5782 = vmul.f32 %v2347, %v2347
        %v5783 = vmul.f32 %v2349, %v2349
        %v5784 = vmul.f32 %v2460, %v2460
        %v5785 = vmul.f32 %v2462, %v2462
        %v5786 = vmul.f32 %v2573, %v2573
        %v5787 = vmul.f32 %v2575, %v2575
        %v5788 = vmul.f32 %v2686, %v2686
        %v5789 = vmul.f32 %v2688, %v2688
        %v5790 = vmul.f32 %v2799, %v2799
        %v5791 = vmul.f32 %v2801, %v2801
        %v5792 = vmul.f32 %v2912, %v2912
        %v5793 = vmul.f32 %v2914, %v2914
        %v5794 = vmul.f32 %v3025, %v3025
        %v5795 = vmul.f32 %v3027, %v3027
        %v5796 = vmul.f32 %v3138, %v3138
        %v5797 = vmul.f32 %v3140, %v3140
        %v5798 = vmul.f32 %v3251, %v3251
        %v5799 = vmul.f32 %v3253, %v3253
        %v5800 = vmul.f32 %v3364, %v3364
        %v5801 = vmul.f32 %v3366, %v3366
        %v5802 = vmul.f32 %v3477, %v3477
        %v5803 = vmul.f32 %v3479, %v3479
        %v5804 = vmul.f32 %v3590, %v3590
        %v5805 = vmul.f32 %v3592, %v3592
        %v5806 = vmul.f32 %v3703, %v3703
        %v5807 = vmul.f32 %v3705, %v3705
        %v5808 = vmul.f32 %v3816, %v3816
        %v5809 = vmul.f32 %v3818, %v3818
        %v5810 = vmul.f32 %v5778, 0.044715
        %v5811 = vmul.f32 %v5779, 0.044715
        %v5812 = vmul.f32 %v5780, 0.044715
        %v5813 = vmul.f32 %v5781, 0.044715
        %v5814 = vmul.f32 %v5782, 0.044715
        %v5815 = vmul.f32 %v5783, 0.044715
        %v5816 = vmul.f32 %v5784, 0.044715
        %v5817 = vmul.f32 %v5785, 0.044715
        %v5818 = vmul.f32 %v5786, 0.044715
        %v5819 = vmul.f32 %v5787, 0.044715
        %v5820 = vmul.f32 %v5788, 0.044715
        %v5821 = vmul.f32 %v5789, 0.044715
        %v5822 = vmul.f32 %v5790, 0.044715
        %v5823 = vmul.f32 %v5791, 0.044715
        %v5824 = vmul.f32 %v5792, 0.044715
        %v5825 = vmul.f32 %v5793, 0.044715
        %v5826 = vmul.f32 %v5794, 0.044715
        %v5827 = vmul.f32 %v5795, 0.044715
        %v5828 = vmul.f32 %v5796, 0.044715
        %v5829 = vmul.f32 %v5797, 0.044715
        %v5830 = vmul.f32 %v5798, 0.044715
        %v5831 = vmul.f32 %v5799, 0.044715
        %v5832 = vmul.f32 %v5800, 0.044715
        %v5833 = vmul.f32 %v5801, 0.044715
        %v5834 = vmul.f32 %v5802, 0.044715
        %v5835 = vmul.f32 %v5803, 0.044715
        %v5836 = vmul.f32 %v5804, 0.044715
        %v5837 = vmul.f32 %v5805, 0.044715
        %v5838 = vmul.f32 %v5806, 0.044715
        %v5839 = vmul.f32 %v5807, 0.044715
        %v5840 = vmul.f32 %v5808, 0.044715
        %v5841 = vmul.f32 %v5809, 0.044715
        %v5842 = vadd.f32 %v5810, 1.0
        %v5843 = vadd.f32 %v5811, 1.0
        %v5844 = vadd.f32 %v5812, 1.0
        %v5845 = vadd.f32 %v5813, 1.0
        %v5846 = vadd.f32 %v5814, 1.0
        %v5847 = vadd.f32 %v5815, 1.0
        %v5848 = vadd.f32 %v5816, 1.0
        %v5849 = vadd.f32 %v5817, 1.0
        %v5850 = vadd.f32 %v5818, 1.0
        %v5851 = vadd.f32 %v5819, 1.0
        %v5852 = vadd.f32 %v5820, 1.0
        %v5853 = vadd.f32 %v5821, 1.0
        %v5854 = vadd.f32 %v5822, 1.0
        %v5855 = vadd.f32 %v5823, 1.0
        %v5856 = vadd.f32 %v5824, 1.0
        %v5857 = vadd.f32 %v5825, 1.0
        %v5858 = vadd.f32 %v5826, 1.0
        %v5859 = vadd.f32 %v5827, 1.0
        %v5860 = vadd.f32 %v5828, 1.0
        %v5861 = vadd.f32 %v5829, 1.0
        %v5862 = vadd.f32 %v5830, 1.0
        %v5863 = vadd.f32 %v5831, 1.0
        %v5864 = vadd.f32 %v5832, 1.0
        %v5865 = vadd.f32 %v5833, 1.0
        %v5866 = vadd.f32 %v5834, 1.0
        %v5867 = vadd.f32 %v5835, 1.0
        %v5868 = vadd.f32 %v5836, 1.0
        %v5869 = vadd.f32 %v5837, 1.0
        %v5870 = vadd.f32 %v5838, 1.0
        %v5871 = vadd.f32 %v5839, 1.0
        %v5872 = vadd.f32 %v5840, 1.0
        %v5873 = vadd.f32 %v5841, 1.0
        %v5874 = vmul.f32 %v5746, %v5842
        %v5875 = vmul.f32 %v5747, %v5843
        %v5876 = vmul.f32 %v5748, %v5844
        %v5877 = vmul.f32 %v5749, %v5845
        %v5878 = vmul.f32 %v5750, %v5846
        %v5879 = vmul.f32 %v5751, %v5847
        %v5880 = vmul.f32 %v5752, %v5848
        %v5881 = vmul.f32 %v5753, %v5849
        %v5882 = vmul.f32 %v5754, %v5850
        %v5883 = vmul.f32 %v5755, %v5851
        %v5884 = vmul.f32 %v5756, %v5852
        %v5885 = vmul.f32 %v5757, %v5853
        %v5886 = vmul.f32 %v5758, %v5854
        %v5887 = vmul.f32 %v5759, %v5855
        %v5888 = vmul.f32 %v5760, %v5856
        %v5889 = vmul.f32 %v5761, %v5857
        %v5890 = vmul.f32 %v5762, %v5858
        %v5891 = vmul.f32 %v5763, %v5859
        %v5892 = vmul.f32 %v5764, %v5860
        %v5893 = vmul.f32 %v5765, %v5861
        %v5894 = vmul.f32 %v5766, %v5862
        %v5895 = vmul.f32 %v5767, %v5863
        %v5896 = vmul.f32 %v5768, %v5864
        %v5897 = vmul.f32 %v5769, %v5865
        %v5898 = vmul.f32 %v5770, %v5866
        %v5899 = vmul.f32 %v5771, %v5867
        %v5900 = vmul.f32 %v5772, %v5868
        %v5901 = vmul.f32 %v5773, %v5869
        %v5902 = vmul.f32 %v5774, %v5870
        %v5903 = vmul.f32 %v5775, %v5871
        %v5904 = vmul.f32 %v5776, %v5872
        %v5905 = vmul.f32 %v5777, %v5873
        %v5906 = vmul.f32 %v2121, 0.5
        %v5907 = vmul.f32 %v2123, 0.5
        %v5908 = vmul.f32 %v2234, 0.5
        %v5909 = vmul.f32 %v2236, 0.5
        %v5910 = vmul.f32 %v2347, 0.5
        %v5911 = vmul.f32 %v2349, 0.5
        %v5912 = vmul.f32 %v2460, 0.5
        %v5913 = vmul.f32 %v2462, 0.5
        %v5914 = vmul.f32 %v2573, 0.5
        %v5915 = vmul.f32 %v2575, 0.5
        %v5916 = vmul.f32 %v2686, 0.5
        %v5917 = vmul.f32 %v2688, 0.5
        %v5918 = vmul.f32 %v2799, 0.5
        %v5919 = vmul.f32 %v2801, 0.5
        %v5920 = vmul.f32 %v2912, 0.5
        %v5921 = vmul.f32 %v2914, 0.5
        %v5922 = vmul.f32 %v3025, 0.5
        %v5923 = vmul.f32 %v3027, 0.5
        %v5924 = vmul.f32 %v3138, 0.5
        %v5925 = vmul.f32 %v3140, 0.5
        %v5926 = vmul.f32 %v3251, 0.5
        %v5927 = vmul.f32 %v3253, 0.5
        %v5928 = vmul.f32 %v3364, 0.5
        %v5929 = vmul.f32 %v3366, 0.5
        %v5930 = vmul.f32 %v3477, 0.5
        %v5931 = vmul.f32 %v3479, 0.5
        %v5932 = vmul.f32 %v3590, 0.5
        %v5933 = vmul.f32 %v3592, 0.5
        %v5934 = vmul.f32 %v3703, 0.5
        %v5935 = vmul.f32 %v3705, 0.5
        %v5936 = vmul.f32 %v3816, 0.5
        %v5937 = vmul.f32 %v3818, 0.5
        %v5938 = vtanh.pop %v5874
        %v5939 = vtanh.pop %v5875
        %v5940 = vtanh.pop %v5876
        %v5941 = vtanh.pop %v5877
        %v5942 = vtanh.pop %v5878
        %v5943 = vtanh.pop %v5879
        %v5944 = vtanh.pop %v5880
        %v5945 = vtanh.pop %v5881
        %v5946 = vtanh.pop %v5882
        %v5947 = vtanh.pop %v5883
        %v5948 = vtanh.pop %v5884
        %v5949 = vtanh.pop %v5885
        %v5950 = vtanh.pop %v5886
        %v5951 = vtanh.pop %v5887
        %v5952 = vtanh.pop %v5888
        %v5953 = vtanh.pop %v5889
        %v5954 = vtanh.pop %v5890
        %v5955 = vtanh.pop %v5891
        %v5956 = vtanh.pop %v5892
        %v5957 = vtanh.pop %v5893
        %v5958 = vtanh.pop %v5894
        %v5959 = vtanh.pop %v5895
        %v5960 = vtanh.pop %v5896
        %v5961 = vtanh.pop %v5897
        %v5962 = vtanh.pop %v5898
        %v5963 = vtanh.pop %v5899
        %v5964 = vtanh.pop %v5900
        %v5965 = vtanh.pop %v5901
        %v5966 = vtanh.pop %v5902
        %v5967 = vtanh.pop %v5903
        %v5968 = vtanh.pop %v5904
        %v5969 = vtanh.pop %v5905
        %v5970 = vadd.f32 %v5938, 1.0
        %v5971 = vadd.f32 %v5939, 1.0
        %v5972 = vadd.f32 %v5940, 1.0
        %v5973 = vadd.f32 %v5941, 1.0
        %v5974 = vadd.f32 %v5942, 1.0
        %v5975 = vadd.f32 %v5943, 1.0
        %v5976 = vadd.f32 %v5944, 1.0
        %v5977 = vadd.f32 %v5945, 1.0
        %v5978 = vadd.f32 %v5946, 1.0
        %v5979 = vadd.f32 %v5947, 1.0
        %v5980 = vadd.f32 %v5948, 1.0
        %v5981 = vadd.f32 %v5949, 1.0
        %v5982 = vadd.f32 %v5950, 1.0
        %v5983 = vadd.f32 %v5951, 1.0
        %v5984 = vadd.f32 %v5952, 1.0
        %v5985 = vadd.f32 %v5953, 1.0
        %v5986 = vadd.f32 %v5954, 1.0
        %v5987 = vadd.f32 %v5955, 1.0
        %v5988 = vadd.f32 %v5956, 1.0
        %v5989 = vadd.f32 %v5957, 1.0
        %v5990 = vadd.f32 %v5958, 1.0
        %v5991 = vadd.f32 %v5959, 1.0
        %v5992 = vadd.f32 %v5960, 1.0
        %v5993 = vadd.f32 %v5961, 1.0
        %v5994 = vadd.f32 %v5962, 1.0
        %v5995 = vadd.f32 %v5963, 1.0
        %v5996 = vadd.f32 %v5964, 1.0
        %v5997 = vadd.f32 %v5965, 1.0
        %v5998 = vadd.f32 %v5966, 1.0
        %v5999 = vadd.f32 %v5967, 1.0
        %v6000 = vadd.f32 %v5968, 1.0
        %v6001 = vadd.f32 %v5969, 1.0
        %v6002 = vmul.f32 %v5906, %v5970
        %v6003 = vmul.f32 %v5907, %v5971
        %v6004 = vmul.f32 %v5908, %v5972
        %v6005 = vmul.f32 %v5909, %v5973
        %v6006 = vmul.f32 %v5910, %v5974
        %v6007 = vmul.f32 %v5911, %v5975
        %v6008 = vmul.f32 %v5912, %v5976
        %v6009 = vmul.f32 %v5913, %v5977
        %v6010 = vmul.f32 %v5914, %v5978
        %v6011 = vmul.f32 %v5915, %v5979
        %v6012 = vmul.f32 %v5916, %v5980
        %v6013 = vmul.f32 %v5917, %v5981
        %v6014 = vmul.f32 %v5918, %v5982
        %v6015 = vmul.f32 %v5919, %v5983
        %v6016 = vmul.f32 %v5920, %v5984
        %v6017 = vmul.f32 %v5921, %v5985
        %v6018 = vmul.f32 %v5922, %v5986
        %v6019 = vmul.f32 %v5923, %v5987
        %v6020 = vmul.f32 %v5924, %v5988
        %v6021 = vmul.f32 %v5925, %v5989
        %v6022 = vmul.f32 %v5926, %v5990
        %v6023 = vmul.f32 %v5927, %v5991
        %v6024 = vmul.f32 %v5928, %v5992
        %v6025 = vmul.f32 %v5929, %v5993
        %v6026 = vmul.f32 %v5930, %v5994
        %v6027 = vmul.f32 %v5931, %v5995
        %v6028 = vmul.f32 %v5932, %v5996
        %v6029 = vmul.f32 %v5933, %v5997
        %v6030 = vmul.f32 %v5934, %v5998
        %v6031 = vmul.f32 %v5935, %v5999
        %v6032 = vmul.f32 %v5936, %v6000
        %v6033 = vmul.f32 %v5937, %v6001
        %6034 = vst [vmem:[%s221 + $0x600] sm:$0xff] %v6002
        %6035 = vst [vmem:[%s221 + $0x608] sm:$0xff] %v6003
        %6036 = vst [vmem:[%s221 + $0x610] sm:$0xff] %v6004
        %6037 = vst [vmem:[%s221 + $0x618] sm:$0xff] %v6005
        %6038 = vst [vmem:[%s221 + $0x620] sm:$0xff] %v6006
        %6039 = vst [vmem:[%s221 + $0x628] sm:$0xff] %v6007
        %6040 = vst [vmem:[%s221 + $0x630] sm:$0xff] %v6008
        %6041 = vst [vmem:[%s221 + $0x638] sm:$0xff] %v6009
        %6042 = vst [vmem:[%s221 + $0x640] sm:$0xff] %v6010
        %6043 = vst [vmem:[%s221 + $0x648] sm:$0xff] %v6011
        %6044 = vst [vmem:[%s221 + $0x650] sm:$0xff] %v6012
        %6045 = vst [vmem:[%s221 + $0x658] sm:$0xff] %v6013
        %6046 = vst [vmem:[%s221 + $0x660] sm:$0xff] %v6014
        %6047 = vst [vmem:[%s221 + $0x668] sm:$0xff] %v6015
        %6048 = vst [vmem:[%s221 + $0x670] sm:$0xff] %v6016
        %6049 = vst [vmem:[%s221 + $0x678] sm:$0xff] %v6017
        %6050 = vst [vmem:[%s221 + $0x680] sm:$0xff] %v6018
        %6051 = vst [vmem:[%s221 + $0x688] sm:$0xff] %v6019
        %6052 = vst [vmem:[%s221 + $0x690] sm:$0xff] %v6020
        %6053 = vst [vmem:[%s221 + $0x698] sm:$0xff] %v6021
        %6054 = vst [vmem:[%s221 + $0x6a0] sm:$0xff] %v6022
        %6055 = vst [vmem:[%s221 + $0x6a8] sm:$0xff] %v6023
        %6056 = vst [vmem:[%s221 + $0x6b0] sm:$0xff] %v6024
        %6057 = vst [vmem:[%s221 + $0x6b8] sm:$0xff] %v6025
        %6058 = vst [vmem:[%s221 + $0x6c0] sm:$0xff] %v6026
        %6059 = vst [vmem:[%s221 + $0x6c8] sm:$0xff] %v6027
        %6060 = vst [vmem:[%s221 + $0x6d0] sm:$0xff] %v6028
        %6061 = vst [vmem:[%s221 + $0x6d8] sm:$0xff] %v6029
        %6062 = vst [vmem:[%s221 + $0x6e0] sm:$0xff] %v6030
        %6063 = vst [vmem:[%s221 + $0x6e8] sm:$0xff] %v6031
        %6064 = vst [vmem:[%s221 + $0x6f0] sm:$0xff] %v6032
        %6065 = vst [vmem:[%s221 + $0x6f8] sm:$0xff] %v6033
        %v6066 = vmul.f32 %v2127, 0.7978846
        %v6067 = vmul.f32 %v2129, 0.7978846
        %v6068 = vmul.f32 %v2240, 0.7978846
        %v6069 = vmul.f32 %v2242, 0.7978846
        %v6070 = vmul.f32 %v2353, 0.7978846
        %v6071 = vmul.f32 %v2355, 0.7978846
        %v6072 = vmul.f32 %v2466, 0.7978846
        %v6073 = vmul.f32 %v2468, 0.7978846
        %v6074 = vmul.f32 %v2579, 0.7978846
        %v6075 = vmul.f32 %v2581, 0.7978846
        %v6076 = vmul.f32 %v2692, 0.7978846
        %v6077 = vmul.f32 %v2694, 0.7978846
        %v6078 = vmul.f32 %v2805, 0.7978846
        %v6079 = vmul.f32 %v2807, 0.7978846
        %v6080 = vmul.f32 %v2918, 0.7978846
        %v6081 = vmul.f32 %v2920, 0.7978846
        %v6082 = vmul.f32 %v3031, 0.7978846
        %v6083 = vmul.f32 %v3033, 0.7978846
        %v6084 = vmul.f32 %v3144, 0.7978846
        %v6085 = vmul.f32 %v3146, 0.7978846
        %v6086 = vmul.f32 %v3257, 0.7978846
        %v6087 = vmul.f32 %v3259, 0.7978846
        %v6088 = vmul.f32 %v3370, 0.7978846
        %v6089 = vmul.f32 %v3372, 0.7978846
        %v6090 = vmul.f32 %v3483, 0.7978846
        %v6091 = vmul.f32 %v3485, 0.7978846
        %v6092 = vmul.f32 %v3596, 0.7978846
        %v6093 = vmul.f32 %v3598, 0.7978846
        %v6094 = vmul.f32 %v3709, 0.7978846
        %v6095 = vmul.f32 %v3711, 0.7978846
        %v6096 = vmul.f32 %v3822, 0.7978846
        %v6097 = vmul.f32 %v3824, 0.7978846
        %v6098 = vmul.f32 %v2127, %v2127
        %v6099 = vmul.f32 %v2129, %v2129
        %v6100 = vmul.f32 %v2240, %v2240
        %v6101 = vmul.f32 %v2242, %v2242
        %v6102 = vmul.f32 %v2353, %v2353
        %v6103 = vmul.f32 %v2355, %v2355
        %v6104 = vmul.f32 %v2466, %v2466
        %v6105 = vmul.f32 %v2468, %v2468
        %v6106 = vmul.f32 %v2579, %v2579
        %v6107 = vmul.f32 %v2581, %v2581
        %v6108 = vmul.f32 %v2692, %v2692
        %v6109 = vmul.f32 %v2694, %v2694
        %v6110 = vmul.f32 %v2805, %v2805
        %v6111 = vmul.f32 %v2807, %v2807
        %v6112 = vmul.f32 %v2918, %v2918
        %v6113 = vmul.f32 %v2920, %v2920
        %v6114 = vmul.f32 %v3031, %v3031
        %v6115 = vmul.f32 %v3033, %v3033
        %v6116 = vmul.f32 %v3144, %v3144
        %v6117 = vmul.f32 %v3146, %v3146
        %v6118 = vmul.f32 %v3257, %v3257
        %v6119 = vmul.f32 %v3259, %v3259
        %v6120 = vmul.f32 %v3370, %v3370
        %v6121 = vmul.f32 %v3372, %v3372
        %v6122 = vmul.f32 %v3483, %v3483
        %v6123 = vmul.f32 %v3485, %v3485
        %v6124 = vmul.f32 %v3596, %v3596
        %v6125 = vmul.f32 %v3598, %v3598
        %v6126 = vmul.f32 %v3709, %v3709
        %v6127 = vmul.f32 %v3711, %v3711
        %v6128 = vmul.f32 %v3822, %v3822
        %v6129 = vmul.f32 %v3824, %v3824
        %v6130 = vmul.f32 %v6098, 0.044715
        %v6131 = vmul.f32 %v6099, 0.044715
        %v6132 = vmul.f32 %v6100, 0.044715
        %v6133 = vmul.f32 %v6101, 0.044715
        %v6134 = vmul.f32 %v6102, 0.044715
        %v6135 = vmul.f32 %v6103, 0.044715
        %v6136 = vmul.f32 %v6104, 0.044715
        %v6137 = vmul.f32 %v6105, 0.044715
        %v6138 = vmul.f32 %v6106, 0.044715
        %v6139 = vmul.f32 %v6107, 0.044715
        %v6140 = vmul.f32 %v6108, 0.044715
        %v6141 = vmul.f32 %v6109, 0.044715
        %v6142 = vmul.f32 %v6110, 0.044715
        %v6143 = vmul.f32 %v6111, 0.044715
        %v6144 = vmul.f32 %v6112, 0.044715
        %v6145 = vmul.f32 %v6113, 0.044715
        %v6146 = vmul.f32 %v6114, 0.044715
        %v6147 = vmul.f32 %v6115, 0.044715
        %v6148 = vmul.f32 %v6116, 0.044715
        %v6149 = vmul.f32 %v6117, 0.044715
        %v6150 = vmul.f32 %v6118, 0.044715
        %v6151 = vmul.f32 %v6119, 0.044715
        %v6152 = vmul.f32 %v6120, 0.044715
        %v6153 = vmul.f32 %v6121, 0.044715
        %v6154 = vmul.f32 %v6122, 0.044715
        %v6155 = vmul.f32 %v6123, 0.044715
        %v6156 = vmul.f32 %v6124, 0.044715
        %v6157 = vmul.f32 %v6125, 0.044715
        %v6158 = vmul.f32 %v6126, 0.044715
        %v6159 = vmul.f32 %v6127, 0.044715
        %v6160 = vmul.f32 %v6128, 0.044715
        %v6161 = vmul.f32 %v6129, 0.044715
        %v6162 = vadd.f32 %v6130, 1.0
        %v6163 = vadd.f32 %v6131, 1.0
        %v6164 = vadd.f32 %v6132, 1.0
        %v6165 = vadd.f32 %v6133, 1.0
        %v6166 = vadd.f32 %v6134, 1.0
        %v6167 = vadd.f32 %v6135, 1.0
        %v6168 = vadd.f32 %v6136, 1.0
        %v6169 = vadd.f32 %v6137, 1.0
        %v6170 = vadd.f32 %v6138, 1.0
        %v6171 = vadd.f32 %v6139, 1.0
        %v6172 = vadd.f32 %v6140, 1.0
        %v6173 = vadd.f32 %v6141, 1.0
        %v6174 = vadd.f32 %v6142, 1.0
        %v6175 = vadd.f32 %v6143, 1.0
        %v6176 = vadd.f32 %v6144, 1.0
        %v6177 = vadd.f32 %v6145, 1.0
        %v6178 = vadd.f32 %v6146, 1.0
        %v6179 = vadd.f32 %v6147, 1.0
        %v6180 = vadd.f32 %v6148, 1.0
        %v6181 = vadd.f32 %v6149, 1.0
        %v6182 = vadd.f32 %v6150, 1.0
        %v6183 = vadd.f32 %v6151, 1.0
        %v6184 = vadd.f32 %v6152, 1.0
        %v6185 = vadd.f32 %v6153, 1.0
        %v6186 = vadd.f32 %v6154, 1.0
        %v6187 = vadd.f32 %v6155, 1.0
        %v6188 = vadd.f32 %v6156, 1.0
        %v6189 = vadd.f32 %v6157, 1.0
        %v6190 = vadd.f32 %v6158, 1.0
        %v6191 = vadd.f32 %v6159, 1.0
        %v6192 = vadd.f32 %v6160, 1.0
        %v6193 = vadd.f32 %v6161, 1.0
        %v6194 = vmul.f32 %v6066, %v6162
        %v6195 = vmul.f32 %v6067, %v6163
        %v6196 = vmul.f32 %v6068, %v6164
        %v6197 = vmul.f32 %v6069, %v6165
        %v6198 = vmul.f32 %v6070, %v6166
        %v6199 = vmul.f32 %v6071, %v6167
        %v6200 = vmul.f32 %v6072, %v6168
        %v6201 = vmul.f32 %v6073, %v6169
        %v6202 = vmul.f32 %v6074, %v6170
        %v6203 = vmul.f32 %v6075, %v6171
        %v6204 = vmul.f32 %v6076, %v6172
        %v6205 = vmul.f32 %v6077, %v6173
        %v6206 = vmul.f32 %v6078, %v6174
        %v6207 = vmul.f32 %v6079, %v6175
        %v6208 = vmul.f32 %v6080, %v6176
        %v6209 = vmul.f32 %v6081, %v6177
        %v6210 = vmul.f32 %v6082, %v6178
        %v6211 = vmul.f32 %v6083, %v6179
        %v6212 = vmul.f32 %v6084, %v6180
        %v6213 = vmul.f32 %v6085, %v6181
        %v6214 = vmul.f32 %v6086, %v6182
        %v6215 = vmul.f32 %v6087, %v6183
        %v6216 = vmul.f32 %v6088, %v6184
        %v6217 = vmul.f32 %v6089, %v6185
        %v6218 = vmul.f32 %v6090, %v6186
        %v6219 = vmul.f32 %v6091, %v6187
        %v6220 = vmul.f32 %v6092, %v6188
        %v6221 = vmul.f32 %v6093, %v6189
        %v6222 = vmul.f32 %v6094, %v6190
        %v6223 = vmul.f32 %v6095, %v6191
        %v6224 = vmul.f32 %v6096, %v6192
        %v6225 = vmul.f32 %v6097, %v6193
        %v6226 = vmul.f32 %v2127, 0.5
        %v6227 = vmul.f32 %v2129, 0.5
        %v6228 = vmul.f32 %v2240, 0.5
        %v6229 = vmul.f32 %v2242, 0.5
        %v6230 = vmul.f32 %v2353, 0.5
        %v6231 = vmul.f32 %v2355, 0.5
        %v6232 = vmul.f32 %v2466, 0.5
        %v6233 = vmul.f32 %v2468, 0.5
        %v6234 = vmul.f32 %v2579, 0.5
        %v6235 = vmul.f32 %v2581, 0.5
        %v6236 = vmul.f32 %v2692, 0.5
        %v6237 = vmul.f32 %v2694, 0.5
        %v6238 = vmul.f32 %v2805, 0.5
        %v6239 = vmul.f32 %v2807, 0.5
        %v6240 = vmul.f32 %v2918, 0.5
        %v6241 = vmul.f32 %v2920, 0.5
        %v6242 = vmul.f32 %v3031, 0.5
        %v6243 = vmul.f32 %v3033, 0.5
        %v6244 = vmul.f32 %v3144, 0.5
        %v6245 = vmul.f32 %v3146, 0.5
        %v6246 = vmul.f32 %v3257, 0.5
        %v6247 = vmul.f32 %v3259, 0.5
        %v6248 = vmul.f32 %v3370, 0.5
        %v6249 = vmul.f32 %v3372, 0.5
        %v6250 = vmul.f32 %v3483, 0.5
        %v6251 = vmul.f32 %v3485, 0.5
        %v6252 = vmul.f32 %v3596, 0.5
        %v6253 = vmul.f32 %v3598, 0.5
        %v6254 = vmul.f32 %v3709, 0.5
        %v6255 = vmul.f32 %v3711, 0.5
        %v6256 = vmul.f32 %v3822, 0.5
        %v6257 = vmul.f32 %v3824, 0.5
        %v6258 = vtanh.pop %v6194
        %v6259 = vtanh.pop %v6195
        %v6260 = vtanh.pop %v6196
        %v6261 = vtanh.pop %v6197
        %v6262 = vtanh.pop %v6198
        %v6263 = vtanh.pop %v6199
        %v6264 = vtanh.pop %v6200
        %v6265 = vtanh.pop %v6201
        %v6266 = vtanh.pop %v6202
        %v6267 = vtanh.pop %v6203
        %v6268 = vtanh.pop %v6204
        %v6269 = vtanh.pop %v6205
        %v6270 = vtanh.pop %v6206
        %v6271 = vtanh.pop %v6207
        %v6272 = vtanh.pop %v6208
        %v6273 = vtanh.pop %v6209
        %v6274 = vtanh.pop %v6210
        %v6275 = vtanh.pop %v6211
        %v6276 = vtanh.pop %v6212
        %v6277 = vtanh.pop %v6213
        %v6278 = vtanh.pop %v6214
        %v6279 = vtanh.pop %v6215
        %v6280 = vtanh.pop %v6216
        %v6281 = vtanh.pop %v6217
        %v6282 = vtanh.pop %v6218
        %v6283 = vtanh.pop %v6219
        %v6284 = vtanh.pop %v6220
        %v6285 = vtanh.pop %v6221
        %v6286 = vtanh.pop %v6222
        %v6287 = vtanh.pop %v6223
        %v6288 = vtanh.pop %v6224
        %v6289 = vtanh.pop %v6225
        %v6290 = vadd.f32 %v6258, 1.0
        %v6291 = vadd.f32 %v6259, 1.0
        %v6292 = vadd.f32 %v6260, 1.0
        %v6293 = vadd.f32 %v6261, 1.0
        %v6294 = vadd.f32 %v6262, 1.0
        %v6295 = vadd.f32 %v6263, 1.0
        %v6296 = vadd.f32 %v6264, 1.0
        %v6297 = vadd.f32 %v6265, 1.0
        %v6298 = vadd.f32 %v6266, 1.0
        %v6299 = vadd.f32 %v6267, 1.0
        %v6300 = vadd.f32 %v6268, 1.0
        %v6301 = vadd.f32 %v6269, 1.0
        %v6302 = vadd.f32 %v6270, 1.0
        %v6303 = vadd.f32 %v6271, 1.0
        %v6304 = vadd.f32 %v6272, 1.0
        %v6305 = vadd.f32 %v6273, 1.0
        %v6306 = vadd.f32 %v6274, 1.0
        %v6307 = vadd.f32 %v6275, 1.0
        %v6308 = vadd.f32 %v6276, 1.0
        %v6309 = vadd.f32 %v6277, 1.0
        %v6310 = vadd.f32 %v6278, 1.0
        %v6311 = vadd.f32 %v6279, 1.0
        %v6312 = vadd.f32 %v6280, 1.0
        %v6313 = vadd.f32 %v6281, 1.0
        %v6314 = vadd.f32 %v6282, 1.0
        %v6315 = vadd.f32 %v6283, 1.0
        %v6316 = vadd.f32 %v6284, 1.0
        %v6317 = vadd.f32 %v6285, 1.0
        %v6318 = vadd.f32 %v6286, 1.0
        %v6319 = vadd.f32 %v6287, 1.0
        %v6320 = vadd.f32 %v6288, 1.0
        %v6321 = vadd.f32 %v6289, 1.0
        %v6322 = vmul.f32 %v6226, %v6290
        %v6323 = vmul.f32 %v6227, %v6291
        %v6324 = vmul.f32 %v6228, %v6292
        %v6325 = vmul.f32 %v6229, %v6293
        %v6326 = vmul.f32 %v6230, %v6294
        %v6327 = vmul.f32 %v6231, %v6295
        %v6328 = vmul.f32 %v6232, %v6296
        %v6329 = vmul.f32 %v6233, %v6297
        %v6330 = vmul.f32 %v6234, %v6298
        %v6331 = vmul.f32 %v6235, %v6299
        %v6332 = vmul.f32 %v6236, %v6300
        %v6333 = vmul.f32 %v6237, %v6301
        %v6334 = vmul.f32 %v6238, %v6302
        %v6335 = vmul.f32 %v6239, %v6303
        %v6336 = vmul.f32 %v6240, %v6304
        %v6337 = vmul.f32 %v6241, %v6305
        %v6338 = vmul.f32 %v6242, %v6306
        %v6339 = vmul.f32 %v6243, %v6307
        %v6340 = vmul.f32 %v6244, %v6308
        %v6341 = vmul.f32 %v6245, %v6309
        %v6342 = vmul.f32 %v6246, %v6310
        %v6343 = vmul.f32 %v6247, %v6311
        %v6344 = vmul.f32 %v6248, %v6312
        %v6345 = vmul.f32 %v6249, %v6313
        %v6346 = vmul.f32 %v6250, %v6314
        %v6347 = vmul.f32 %v6251, %v6315
        %v6348 = vmul.f32 %v6252, %v6316
        %v6349 = vmul.f32 %v6253, %v6317
        %v6350 = vmul.f32 %v6254, %v6318
        %v6351 = vmul.f32 %v6255, %v6319
        %v6352 = vmul.f32 %v6256, %v6320
        %v6353 = vmul.f32 %v6257, %v6321
        %6354 = vst [vmem:[%s221 + $0x700] sm:$0xff] %v6322
        %6355 = vst [vmem:[%s221 + $0x708] sm:$0xff] %v6323
        %6356 = vst [vmem:[%s221 + $0x710] sm:$0xff] %v6324
        %6357 = vst [vmem:[%s221 + $0x718] sm:$0xff] %v6325
        %6358 = vst [vmem:[%s221 + $0x720] sm:$0xff] %v6326
        %6359 = vst [vmem:[%s221 + $0x728] sm:$0xff] %v6327
        %6360 = vst [vmem:[%s221 + $0x730] sm:$0xff] %v6328
        %6361 = vst [vmem:[%s221 + $0x738] sm:$0xff] %v6329
        %6362 = vst [vmem:[%s221 + $0x740] sm:$0xff] %v6330
        %6363 = vst [vmem:[%s221 + $0x748] sm:$0xff] %v6331
        %6364 = vst [vmem:[%s221 + $0x750] sm:$0xff] %v6332
        %6365 = vst [vmem:[%s221 + $0x758] sm:$0xff] %v6333
        %6366 = vst [vmem:[%s221 + $0x760] sm:$0xff] %v6334
        %6367 = vst [vmem:[%s221 + $0x768] sm:$0xff] %v6335
        %6368 = vst [vmem:[%s221 + $0x770] sm:$0xff] %v6336
        %6369 = vst [vmem:[%s221 + $0x778] sm:$0xff] %v6337
        %6370 = vst [vmem:[%s221 + $0x780] sm:$0xff] %v6338
        %6371 = vst [vmem:[%s221 + $0x788] sm:$0xff] %v6339
        %6372 = vst [vmem:[%s221 + $0x790] sm:$0xff] %v6340
        %6373 = vst [vmem:[%s221 + $0x798] sm:$0xff] %v6341
        %6374 = vst [vmem:[%s221 + $0x7a0] sm:$0xff] %v6342
        %6375 = vst [vmem:[%s221 + $0x7a8] sm:$0xff] %v6343
        %6376 = vst [vmem:[%s221 + $0x7b0] sm:$0xff] %v6344
        %6377 = vst [vmem:[%s221 + $0x7b8] sm:$0xff] %v6345
        %6378 = vst [vmem:[%s221 + $0x7c0] sm:$0xff] %v6346
        %6379 = vst [vmem:[%s221 + $0x7c8] sm:$0xff] %v6347
        %6380 = vst [vmem:[%s221 + $0x7d0] sm:$0xff] %v6348
        %6381 = vst [vmem:[%s221 + $0x7d8] sm:$0xff] %v6349
        %6382 = vst [vmem:[%s221 + $0x7e0] sm:$0xff] %v6350
        %6383 = vst [vmem:[%s221 + $0x7e8] sm:$0xff] %v6351
        %6384 = vst [vmem:[%s221 + $0x7f0] sm:$0xff] %v6352
        %6385 = vst [vmem:[%s221 + $0x7f8] sm:$0xff] %v6353
        %s6386 = sand.u32 %s116, 1
        %s6387 = scalar_lea.sflag [#allocation3], %s6386
        %s6388 = sand.u32 %s116, 1
        %s6389 = smul.addr %s6388, 2048
        %s6390 = scalar_lea.vmem [#allocation2], %s6389
        // Predicated region
        $region33: #{tpu_custom_call.1} parent=31 // pred_check
          %p6391 = pneg %p126
        $region34: #{tpu_custom_call.1} parent=31 // pred_check_branch
          %6393 = sbr.rel (%p6391) target = $region36
        $region35: #{tpu_custom_call.1} parent=31 // pred_region
          %s6394 = smul.u32 32, %s21
          %s6395 = ssub.s32 33, %s6394
          %p6396 = scmp.lt.s32.totalorder %s6395, 32
          %s6397 = scalar_select %p6396, %s6395, 32
          %s6398 = smul.u32 1024, %s6397
          %s6400 = ssub.s32 32768, %s6398
          %6401 = vsyncadd %s6387, %s6400
          %p6402 = scmp.ne.s32.totalorder 0, %s6398
          %s6403 = smul.addr %s22, 264
          %s6404 = sadd.s32 %s6394, %s6403
          %s6405 = smul.addr %s6404, 128
          %s6406 = scalar_lea.hbm %s3, %s6405
          %s6407 = smul.u32 %s6397, 8
          %s6408 = smul.u32 %s6407, 8
          %s6409 = sshll.u32 %s6390, 4
          %s6410 = int_to_ptr.vmem [resolvable:$true] %s6409
          %s6411 = sshll.u32 %s6408, 4
          %6415 = dma.vmem_to_hbm [thread:$0]  (%p6402), %s6410, %s6411, %s6406, %s6387, 4096, 4224, %s6407
        $region36: #{tpu_custom_call.1} parent=31 // pred_fallthru
          _
      $region32: #{tpu_custom_call.1} parent=5 // pred_fallthru
        _
      %p6416 = scmp.le.s32.totalorder 2, %s12
      // Predicated region
      $region37: #{tpu_custom_call.1} parent=5 // pred_check
        %p6417 = pneg %p6416
      $region38: #{tpu_custom_call.1} parent=5 // pred_check_branch
        %6419 = sbr.rel (%p6417) target = $region40
      $region39: #{tpu_custom_call.1} parent=5 // pred_region
        %s6420 = ssub.s32 %s12, 2
        // Predicated region
        $region41: #{tpu_custom_call.1} parent=39 // pred_check
          %p6421 = pneg %p132
        $region42: #{tpu_custom_call.1} parent=39 // pred_check_branch
          %6423 = sbr.rel (%p6421) target = $region44
        $region43: #{tpu_custom_call.1} parent=39 // pred_region
          %s6424 = sand.u32 %s117, 1
          %s6425 = scalar_lea.sflag [#allocation3], %s6424
          %s6426 = sand.u32 %s117, 1
          %s6427 = smul.addr %s6426, 2048
          %s6428 = scalar_lea.vmem [#allocation2], %s6427
          %6429 = dma.done %s6425, 32768
        $region44: #{tpu_custom_call.1} parent=39 // pred_fallthru
          _
      $region40: #{tpu_custom_call.1} parent=5 // pred_fallthru
        _
    $region6: #{tpu_custom_call.1} parent=1 // loop_footer
      %s16 = sadd.s32 1, %s12
    $region7: #{tpu_custom_call.1} parent=1 // loop_footer_branch
      %11 = sbr.rel target = $region3
    $region8: #{tpu_custom_call.1} parent=1 // loop_exit
      _
    %6430 = vsyncpa [#allocation3], 1
    %s6431 = scalar_lea.sflag [#allocation3], 1
    %6432 = vsyncpa %s6431, 1

</llo_original>
